<compile_context>
chip_gen: v7x
topology: tpu7x:2x2x1
jax: 0.10.0
libtpu: 0.0.40
codegen_flags: <defaults>
</compile_context>

<pallas_src>
import functools

import jax
import jax.numpy as jnp
from jax import lax
from jax.experimental import pallas as pl
from jax.experimental.pallas import tpu as pltpu


# ---------------------------------------------------------------------------
# Fused BottleBlock kernel (one grid step per batch element).
# ---------------------------------------------------------------------------
def _bottle_block_kernel(x_ref, w_sc_ref, b_sc_ref, w1_ref, b1_ref,
                         wq_ref, wk_ref, wv_ref,
                         rel_h_ref, rel_w_ref, e_hw_ref,
                         w_out_ref, b2_ref, w2_ref, b3_ref,
                         o_ref, *, heads, hc, h, w):
    s = h * w
    dim = w_out_ref.shape[2]
    xb = x_ref[0]                                        # (S, dim) bf16

    # shortcut: Conv2d(dim, dim_out, 1) + BN (scale folded into w_sc) + ReLU
    sc = jnp.dot(xb, w_sc_ref[...], preferred_element_type=jnp.float32)
    sc = jnp.maximum(sc + b_sc_ref[...], 0.0)

    # net[0:3]: Conv2d(dim, dim, 1) + BN + ReLU
    h1 = jnp.dot(xb, w1_ref[...], preferred_element_type=jnp.float32)
    h1b = jnp.maximum(h1 + b1_ref[...], 0.0).astype(jnp.bfloat16)

    # MHSA with out_linear fused into the head loop (single f32 accumulator).
    h2 = jnp.zeros((s, dim), jnp.float32)
    for head in range(heads):
        # per-head projections (attention scale hc**-0.5 already folded into wq)
        q = jnp.dot(h1b, wq_ref[head], preferred_element_type=jnp.float32)   # (S, hc)
        kb = jnp.dot(h1b, wk_ref[head],
                     preferred_element_type=jnp.float32).astype(jnp.bfloat16)
        vb = jnp.dot(h1b, wv_ref[head],
                     preferred_element_type=jnp.float32).astype(jnp.bfloat16)
        qb = q.astype(jnp.bfloat16)

        # content logits: contract the hc dims directly (no k.T relayout)
        qk = lax.dot_general(qb, kb, (((1,), (1,)), ((), ())),
                             preferred_element_type=jnp.float32)             # (S, S)

        # relative-position logits, decomposed (no (S,S,hc) tensor):
        #   qr[(x,y),(u,v)] = q . rel_height[u-x+h-1] + q . rel_width[v-y+w-1]
        # height partial: x-batched bf16 MXU matmul against rel_h_exp[x, u, d]
        qr_h = jnp.einsum('xyd,xud->xyu', qb.reshape(h, w, hc), rel_h_ref[...],
                          preferred_element_type=jnp.float32).reshape(s, h)
        # width partial: per-row shifted table, exact f32 VPU multiply-reduce
        # (see TODO(synk) in the header about an MXU formulation).
        qr_w = jnp.sum(q[:, None, :] * rel_w_ref[...], axis=-1)              # (S, w)

        # broadcast both partials to (S,S) via ONE merged 0/1 expansion matmul
        partial = jnp.concatenate([qr_h, qr_w], axis=-1).astype(jnp.bfloat16)
        logits = qk + jnp.dot(partial, e_hw_ref[...],
                              preferred_element_type=jnp.float32)

        # softmax in f32; divide on the EUP
        m = jnp.max(logits, axis=-1, keepdims=True)
        p = jnp.exp(logits - m)
        l = jnp.sum(p, axis=-1, keepdims=True)
        attn = p * pl.reciprocal(l, approx=True)

        ho = jnp.dot(attn.astype(jnp.bfloat16), vb,
                     preferred_element_type=jnp.float32)                     # (S, hc)
        # out_linear slice for this head (BN scale folded); accumulate into h2.
        h2 = h2 + jnp.dot(ho.astype(jnp.bfloat16), w_out_ref[head],
                          preferred_element_type=jnp.float32)                # (S, dim)

    # net[5:7]: BN + ReLU  (AvgPool2d is Identity for downsample=False)
    h2 = jnp.maximum(h2 + b2_ref[...], 0.0)

    # net[7:9]: Conv2d(dim, dim_out, 1) + BN (zero-gamma folded -> zero w2)
    y = jnp.dot(h2.astype(jnp.bfloat16), w2_ref[...],
                preferred_element_type=jnp.float32) + b3_ref[...]

    # residual + final activation
    o_ref[0] = jnp.maximum(y + sc, 0.0).astype(o_ref.dtype)


# ---------------------------------------------------------------------------
# Wrappers.
# ---------------------------------------------------------------------------
_WEIGHT_KEYS = ("w_sc", "b_sc", "w1", "b1", "wq", "wk", "wv",
                "rel_h_exp", "rel_w_full", "e_hw", "w_out", "b2", "w2", "b3")


def _vmem_limit_bytes(x_nsc, weights, s, dim_out):
    blk = s * x_nsc.shape[-1] * x_nsc.dtype.itemsize        # one x block
    out_blk = s * dim_out * 4
    w_bytes = sum(int(a.size) * a.dtype.itemsize for a in weights)
    tmp = 6 * s * s * 4 + 8 * s * max(dim_out, 8) * 4       # logits/softmax/acc headroom
    est = 2 * (blk + out_blk) + 2 * w_bytes + tmp
    return int(min(max(2 * est, 32 << 20), 48 << 20))


def bottle_block_forward_nsc(x_nsc, params, *, heads, head_channels, h, w):
    """x_nsc: (N, S, dim) bf16 with S = h*w, rows ordered (x, y).  Returns f32."""
    n, s, dim = x_nsc.shape
    assert s == h * w
    dim_out = params["w2"].shape[1]
    weights = [params[k] for k in _WEIGHT_KEYS]

    kernel = functools.partial(_bottle_block_kernel, heads=heads,
                               hc=head_channels, h=h, w=w)
    vmem_limit = _vmem_limit_bytes(x_nsc, weights, s, dim_out)

    def call(single_buffer_consts):
        def const(arr):
            nd = arr.ndim
            idx = lambda i, _n=nd: (0,) * _n
            if single_buffer_consts:
                # Constant index_map over the grid: double-buffering these
                # would only double their VMEM footprint.
                return pl.BlockSpec(arr.shape, idx, pipeline_mode=pl.Buffered(1))
            return pl.BlockSpec(arr.shape, idx)

        return pl.pallas_call(
            kernel,
            out_shape=jax.ShapeDtypeStruct((n, s, dim_out), jnp.float32),
            grid=(n,),
            in_specs=[pl.BlockSpec((1, s, dim), lambda i: (i, 0, 0))]
                     + [const(a) for a in weights],
            out_specs=pl.BlockSpec((1, s, dim_out), lambda i: (i, 0, 0)),
            compiler_params=pltpu.CompilerParams(
                dimension_semantics=("parallel",),       # batch axis -> both v7x TCs
                vmem_limit_bytes=vmem_limit),
        )(x_nsc, *weights)

    try:
        return jax.block_until_ready(call(True))
    except Exception:  # pl.Buffered(1) not supported by this build -> default buffering
        return jax.block_until_ready(call(False))


def bottle_block_forward(x_nchw, params, *, heads, head_channels):
    # NOTE: when chaining blocks, keep activations in (N, S, C) and call
    # bottle_block_forward_nsc directly -- these transposes are pure HBM
    # relayout overhead around the kernel.
    n, dim, H, W = x_nchw.shape
    x = jnp.transpose(x_nchw, (0, 2, 3, 1)).reshape(n, H * W, dim)
    out = bottle_block_forward_nsc(x.astype(jnp.bfloat16), params,
                                   heads=heads, head_channels=head_channels,
                                   h=H, w=W)
    return out.reshape(n, H, W, -1).transpose(0, 3, 1, 2)


# ---------------------------------------------------------------------------
# Parameter construction (deterministic, synthetic).  BN is inference-mode:
# running stats + affine folded into (weight-scale, shift); the scale is folded
# directly into the conv weights (one-time parameter transform).  The attention
# scale hc**-0.5 is folded into the q weights.
# ---------------------------------------------------------------------------
def make_params(key, *, dim, dim_out, heads, head_channels, h, w):
    hc = head_channels
    ks = jax.random.split(key, 12)
    eps = 1e-5
    scale = hc ** (-0.5)          # attention scale == RelPosEmb init scale

    def conv(k, cin, cout):
        return jax.random.normal(k, (cin, cout), jnp.float32) / jnp.sqrt(float(cin))

    def bn_fold(k, c, zero_gamma=False):
        kg, kb = jax.random.split(k)
        gamma = (jnp.zeros((c,), jnp.float32) if zero_gamma
                 else 1.0 + 0.1 * jax.random.normal(kg, (c,), jnp.float32))
        beta = 0.1 * jax.random.normal(kb, (c,), jnp.float32)
        running_mean = jnp.zeros((c,), jnp.float32)
        running_var = jnp.ones((c,), jnp.float32)
        bscale = gamma / jnp.sqrt(running_var + eps)
        shift = beta - running_mean * bscale
        return bscale, shift

    def fold(w_mat, bscale):      # fold BN scale into conv weights, cast to bf16
        return (w_mat * bscale[None, :]).astype(jnp.bfloat16)

    params = {}

    # shortcut conv + BN
    sc_s, sc_b = bn_fold(ks[1], dim_out)
    params["w_sc"] = fold(conv(ks[0], dim, dim_out), sc_s)
    params["b_sc"] = sc_b.reshape(1, dim_out)

    # net conv1 + BN
    s1, b1 = bn_fold(ks[3], dim)
    params["w1"] = fold(conv(ks[2], dim, dim), s1)
    params["b1"] = b1.reshape(1, dim)

    # to_qkv (torch chunk(3, dim=1) layout: [q | k | v], channel = head*hc + d).
    w_qkv = conv(ks[4], dim, 3 * heads * hc)

    def split(block):             # (dim, heads*hc) -> (heads, dim, hc)
        return jnp.transpose(block.reshape(dim, heads, hc), (1, 0, 2))

    params["wq"] = (split(w_qkv[:, :heads * hc]) * scale).astype(jnp.bfloat16)
    params["wk"] = split(w_qkv[:, heads * hc:2 * heads * hc]).astype(jnp.bfloat16)
    params["wv"] = split(w_qkv[:, 2 * heads * hc:]).astype(jnp.bfloat16)

    # out_linear + BN; fold BN scale, reshape to per-head (heads, hc, dim)
    s2, b2 = bn_fold(ks[6], dim)
    params["w_out"] = fold(conv(ks[5], heads * hc, dim), s2).reshape(heads, hc, dim)
    params["b2"] = b2.reshape(1, dim)

    # final conv + BN (gamma zero-init per nn.init.zeros_ -> folded weights = 0)
    s3, b3 = bn_fold(ks[10], dim_out, zero_gamma=True)
    params["w2"] = fold(conv(ks[7], dim, dim_out), s3)
    params["b3"] = b3.reshape(1, dim_out)

    # RelPosEmb parameters (torch init: randn * hc**-0.5).  The q projection
    # already carries the folded hc**-0.5, so the tables handed to the kernel
    # are divided by that scale -- net effect identical to the module.
    rel_height = jax.random.normal(ks[8], (2 * h - 1, hc), jnp.float32) * scale
    rel_width = jax.random.normal(ks[9], (2 * w - 1, hc), jnp.float32) * scale
    rel_height_k = rel_height / scale
    rel_width_k = rel_width / scale

    s_ = h * w
    # rel_h_exp[x, u, :] = rel_height_k[u - x + h - 1]        (h, h, hc) bf16 MXU operand
    idx_h = jnp.arange(h)[None, :] - jnp.arange(h)[:, None] + (h - 1)
    params["rel_h_exp"] = rel_height_k[idx_h].astype(jnp.bfloat16)
    # rel_w_full[x*w + y, v, :] = rel_width_k[v - y + w - 1]   (S, w, hc) f32 (VPU mul-reduce)
    idx_w = jnp.arange(w)[None, :] - jnp.arange(w)[:, None] + (w - 1)
    params["rel_w_full"] = jnp.tile(rel_width_k[idx_w], (h, 1, 1)).astype(jnp.float32)
    # merged 0/1 expansion: rows [0,h) broadcast the height partial over columns
    # with matching u; rows [h,h+w) broadcast the width partial over matching v.
    t = jnp.arange(s_)
    e_h = (jnp.arange(h)[:, None] == (t // w)[None, :])
    e_w = (jnp.arange(w)[:, None] == (t % w)[None, :])
    params["e_hw"] = jnp.concatenate([e_h, e_w], axis=0).astype(jnp.bfloat16)

    return params


if __name__ == "__main__":
    key = jax.random.PRNGKey(0)
    kx, kp = jax.random.split(key)

    # SMALL demo config (downsample=False, is_abs=False).  N=2 keeps the
    # parallel grid extent even so both v7x TensorCores are used.
    N, dim, H, W = 2, 8, 8, 8
    dim_out, heads, head_channels = 16, 2, 16

    x = jax.random.normal(kx, (N, dim, H, W), jnp.float32)
    params = make_params(kp, dim=dim, dim_out=dim_out, heads=heads,
                         head_channels=head_channels, h=H, w=W)

    out = bottle_block_forward(x, params, heads=heads, head_channels=head_channels)
    out = jax.block_until_ready(out)
    assert out.shape == (N, dim_out, H, W), out.shape
    assert bool(jnp.all(jnp.isfinite(out)))
    print("KERNEL_OK")
</pallas_src>

<mosaic_0001>
module attributes {stable_mosaic.version = 11 : i64} {
  func.func @_bottle_block_kernel(%arg0: i32, %arg1: memref<1x64x8xbf16, #tpu.memory_space<vmem>>, %arg2: memref<8x16xbf16, #tpu.memory_space<vmem>>, %arg3: memref<1x16xf32, #tpu.memory_space<vmem>>, %arg4: memref<8x8xbf16, #tpu.memory_space<vmem>>, %arg5: memref<1x8xf32, #tpu.memory_space<vmem>>, %arg6: memref<2x8x16xbf16, #tpu.memory_space<vmem>>, %arg7: memref<2x8x16xbf16, #tpu.memory_space<vmem>>, %arg8: memref<2x8x16xbf16, #tpu.memory_space<vmem>>, %arg9: memref<8x8x16xbf16, #tpu.memory_space<vmem>>, %arg10: memref<64x8x16xf32, #tpu.memory_space<vmem>>, %arg11: memref<16x64xbf16, #tpu.memory_space<vmem>>, %arg12: memref<2x16x8xbf16, #tpu.memory_space<vmem>>, %arg13: memref<1x8xf32, #tpu.memory_space<vmem>>, %arg14: memref<8x16xbf16, #tpu.memory_space<vmem>>, %arg15: memref<1x16xf32, #tpu.memory_space<vmem>>, %arg16: memref<1x64x16xf32, #tpu.memory_space<vmem>>) attributes {dimension_semantics = [#tpu.dimension_semantics<parallel>], iteration_bounds = array<i64: 2>, scalar_prefetch = 0 : i64, scratch_operands = 0 : i64, tpu.core_type = #tpu.core_type<tc>, window_params = [{transform_indices = @transform_0, window_bounds = array<i64: 1, 64, 8>}, {pipeline_mode = #tpu.pipeline_mode<synchronous>, transform_indices = @transform_1, window_bounds = array<i64: 8, 16>}, {pipeline_mode = #tpu.pipeline_mode<synchronous>, transform_indices = @transform_2, window_bounds = array<i64: 1, 16>}, {pipeline_mode = #tpu.pipeline_mode<synchronous>, transform_indices = @transform_3, window_bounds = array<i64: 8, 8>}, {pipeline_mode = #tpu.pipeline_mode<synchronous>, transform_indices = @transform_4, window_bounds = array<i64: 1, 8>}, {pipeline_mode = #tpu.pipeline_mode<synchronous>, transform_indices = @transform_5, window_bounds = array<i64: 2, 8, 16>}, {pipeline_mode = #tpu.pipeline_mode<synchronous>, transform_indices = @transform_6, window_bounds = array<i64: 2, 8, 16>}, {pipeline_mode = #tpu.pipeline_mode<synchronous>, transform_indices = @transform_7, window_bounds = array<i64: 2, 8, 16>}, {pipeline_mode = #tpu.pipeline_mode<synchronous>, transform_indices = @transform_8, window_bounds = array<i64: 8, 8, 16>}, {pipeline_mode = #tpu.pipeline_mode<synchronous>, transform_indices = @transform_9, window_bounds = array<i64: 64, 8, 16>}, {pipeline_mode = #tpu.pipeline_mode<synchronous>, transform_indices = @transform_10, window_bounds = array<i64: 16, 64>}, {pipeline_mode = #tpu.pipeline_mode<synchronous>, transform_indices = @transform_11, window_bounds = array<i64: 2, 16, 8>}, {pipeline_mode = #tpu.pipeline_mode<synchronous>, transform_indices = @transform_12, window_bounds = array<i64: 1, 8>}, {pipeline_mode = #tpu.pipeline_mode<synchronous>, transform_indices = @transform_13, window_bounds = array<i64: 8, 16>}, {pipeline_mode = #tpu.pipeline_mode<synchronous>, transform_indices = @transform_14, window_bounds = array<i64: 1, 16>}, {transform_indices = @transform_15, window_bounds = array<i64: 1, 64, 16>}]} {
    %c0 = arith.constant 0 : index
    %c0_0 = arith.constant 0 : index
    %c0_1 = arith.constant 0 : index
    %0 = vector.load %arg1[%c0, %c0_0, %c0_1] : memref<1x64x8xbf16, #tpu.memory_space<vmem>>, vector<1x64x8xbf16>
    %1 = vector.shape_cast %0 : vector<1x64x8xbf16> to vector<64x8xbf16>
    %c0_2 = arith.constant 0 : index
    %c0_3 = arith.constant 0 : index
    %2 = vector.load %arg2[%c0_2, %c0_3] : memref<8x16xbf16, #tpu.memory_space<vmem>>, vector<8x16xbf16>
    %cst = arith.constant dense<0.000000e+00> : vector<64x16xf32>
    %3 = tpu.matmul %1, %2, %cst {dimension_numbers = #tpu.dot_dimension_numbers<[1], [0], [0], [1], [0, 0, 1, 1], [], []>} : vector<64x8xbf16>, vector<8x16xbf16>, vector<64x16xf32> -> vector<64x16xf32>
    %c0_4 = arith.constant 0 : index
    %c0_5 = arith.constant 0 : index
    %4 = vector.load %arg3[%c0_4, %c0_5] : memref<1x16xf32, #tpu.memory_space<vmem>>, vector<1x16xf32>
    %5 = vector.broadcast %4 : vector<1x16xf32> to vector<64x16xf32>
    %6 = arith.addf %3, %5 : vector<64x16xf32>
    %cst_6 = arith.constant 0.000000e+00 : f32
    %7 = vector.broadcast %cst_6 : f32 to vector<64x16xf32>
    %8 = arith.maximumf %6, %7 : vector<64x16xf32>
    %c0_7 = arith.constant 0 : index
    %c0_8 = arith.constant 0 : index
    %9 = vector.load %arg4[%c0_7, %c0_8] : memref<8x8xbf16, #tpu.memory_space<vmem>>, vector<8x8xbf16>
    %cst_9 = arith.constant dense<0.000000e+00> : vector<64x8xf32>
    %10 = tpu.matmul %1, %9, %cst_9 {dimension_numbers = #tpu.dot_dimension_numbers<[1], [0], [0], [1], [0, 0, 1, 1], [], []>} : vector<64x8xbf16>, vector<8x8xbf16>, vector<64x8xf32> -> vector<64x8xf32>
    %c0_10 = arith.constant 0 : index
    %c0_11 = arith.constant 0 : index
    %11 = vector.load %arg5[%c0_10, %c0_11] : memref<1x8xf32, #tpu.memory_space<vmem>>, vector<1x8xf32>
    %12 = vector.broadcast %11 : vector<1x8xf32> to vector<64x8xf32>
    %13 = arith.addf %10, %12 : vector<64x8xf32>
    %cst_12 = arith.constant 0.000000e+00 : f32
    %14 = vector.broadcast %cst_12 : f32 to vector<64x8xf32>
    %15 = arith.maximumf %13, %14 : vector<64x8xf32>
    %16 = arith.truncf %15 : vector<64x8xf32> to vector<64x8xbf16>
    %cst_13 = arith.constant 0.000000e+00 : f32
    %17 = vector.broadcast %cst_13 : f32 to vector<64x8xf32>
    %c0_14 = arith.constant 0 : index
    %c0_15 = arith.constant 0 : index
    %c0_16 = arith.constant 0 : index
    %18 = vector.load %arg6[%c0_14, %c0_15, %c0_16] : memref<2x8x16xbf16, #tpu.memory_space<vmem>>, vector<1x8x16xbf16>
    %19 = vector.shape_cast %18 : vector<1x8x16xbf16> to vector<8x16xbf16>
    %cst_17 = arith.constant dense<0.000000e+00> : vector<64x16xf32>
    %20 = tpu.matmul %16, %19, %cst_17 {dimension_numbers = #tpu.dot_dimension_numbers<[1], [0], [0], [1], [0, 0, 1, 1], [], []>} : vector<64x8xbf16>, vector<8x16xbf16>, vector<64x16xf32> -> vector<64x16xf32>
    %c0_18 = arith.constant 0 : index
    %c0_19 = arith.constant 0 : index
    %c0_20 = arith.constant 0 : index
    %21 = vector.load %arg7[%c0_18, %c0_19, %c0_20] : memref<2x8x16xbf16, #tpu.memory_space<vmem>>, vector<1x8x16xbf16>
    %22 = vector.shape_cast %21 : vector<1x8x16xbf16> to vector<8x16xbf16>
    %cst_21 = arith.constant dense<0.000000e+00> : vector<64x16xf32>
    %23 = tpu.matmul %16, %22, %cst_21 {dimension_numbers = #tpu.dot_dimension_numbers<[1], [0], [0], [1], [0, 0, 1, 1], [], []>} : vector<64x8xbf16>, vector<8x16xbf16>, vector<64x16xf32> -> vector<64x16xf32>
    %24 = arith.truncf %23 : vector<64x16xf32> to vector<64x16xbf16>
    %c0_22 = arith.constant 0 : index
    %c0_23 = arith.constant 0 : index
    %c0_24 = arith.constant 0 : index
    %25 = vector.load %arg8[%c0_22, %c0_23, %c0_24] : memref<2x8x16xbf16, #tpu.memory_space<vmem>>, vector<1x8x16xbf16>
    %26 = vector.shape_cast %25 : vector<1x8x16xbf16> to vector<8x16xbf16>
    %cst_25 = arith.constant dense<0.000000e+00> : vector<64x16xf32>
    %27 = tpu.matmul %16, %26, %cst_25 {dimension_numbers = #tpu.dot_dimension_numbers<[1], [0], [0], [1], [0, 0, 1, 1], [], []>} : vector<64x8xbf16>, vector<8x16xbf16>, vector<64x16xf32> -> vector<64x16xf32>
    %28 = arith.truncf %27 : vector<64x16xf32> to vector<64x16xbf16>
    %29 = arith.truncf %20 : vector<64x16xf32> to vector<64x16xbf16>
    %cst_26 = arith.constant dense<0.000000e+00> : vector<64x64xf32>
    %30 = tpu.matmul %29, %24, %cst_26 {dimension_numbers = #tpu.dot_dimension_numbers<[1], [1], [0], [0], [0, 0, 1, 0], [], []>} : vector<64x16xbf16>, vector<64x16xbf16>, vector<64x64xf32> -> vector<64x64xf32>
    %31 = vector.shape_cast %29 : vector<64x16xbf16> to vector<8x8x16xbf16>
    %c0_27 = arith.constant 0 : index
    %c0_28 = arith.constant 0 : index
    %c0_29 = arith.constant 0 : index
    %32 = vector.load %arg9[%c0_27, %c0_28, %c0_29] : memref<8x8x16xbf16, #tpu.memory_space<vmem>>, vector<8x8x16xbf16>
    "tpu.trace_start"() <{level = 10 : i32, message = "xyd,xud->xyu"}> : () -> ()
    %cst_30 = arith.constant dense<0.000000e+00> : vector<8x8x8xf32>
    %33 = tpu.matmul %31, %32, %cst_30 {dimension_numbers = #tpu.dot_dimension_numbers<[2], [2], [1], [1], [0, 0, 0, 1, 1, 1], [0], [0]>} : vector<8x8x16xbf16>, vector<8x8x16xbf16>, vector<8x8x8xf32> -> vector<8x8x8xf32>
    "tpu.trace_stop"() : () -> ()
    %34 = vector.shape_cast %33 : vector<8x8x8xf32> to vector<64x8xf32>
    %35 = vector.shape_cast %20 : vector<64x16xf32> to vector<64x1x16xf32>
    %c0_31 = arith.constant 0 : index
    %c0_32 = arith.constant 0 : index
    %c0_33 = arith.constant 0 : index
    %36 = vector.load %arg10[%c0_31, %c0_32, %c0_33] : memref<64x8x16xf32, #tpu.memory_space<vmem>>, vector<64x8x16xf32>
    %37 = vector.broadcast %35 : vector<64x1x16xf32> to vector<64x8x16xf32>
    %38 = arith.mulf %37, %36 : vector<64x8x16xf32>
    %cst_34 = arith.constant dense<0.000000e+00> : vector<64x8xf32>
    %39 = vector.multi_reduction <add>, %38, %cst_34 [2] : vector<64x8x16xf32> to vector<64x8xf32>
    %40 = tpu.concatenate %34, %39 in 1 : vector<64x8xf32>, vector<64x8xf32> -> vector<64x16xf32>
    %41 = arith.truncf %40 : vector<64x16xf32> to vector<64x16xbf16>
    %c0_35 = arith.constant 0 : index
    %c0_36 = arith.constant 0 : index
    %42 = vector.load %arg11[%c0_35, %c0_36] : memref<16x64xbf16, #tpu.memory_space<vmem>>, vector<16x64xbf16>
    %cst_37 = arith.constant dense<0.000000e+00> : vector<64x64xf32>
    %43 = tpu.matmul %41, %42, %cst_37 {dimension_numbers = #tpu.dot_dimension_numbers<[1], [0], [0], [1], [0, 0, 1, 1], [], []>} : vector<64x16xbf16>, vector<16x64xbf16>, vector<64x64xf32> -> vector<64x64xf32>
    %44 = arith.addf %30, %43 : vector<64x64xf32>
    %cst_38 = arith.constant dense<0xFF800000> : vector<64xf32>
    %45 = vector.multi_reduction <maximumf>, %44, %cst_38 [1] : vector<64x64xf32> to vector<64xf32>
    %46 = vector.shape_cast %45 : vector<64xf32> to vector<64x1xf32>
    %47 = vector.broadcast %46 : vector<64x1xf32> to vector<64x64xf32>
    %48 = arith.subf %44, %47 : vector<64x64xf32>
    %49 = math.exp %48 : vector<64x64xf32>
    %cst_39 = arith.constant dense<0.000000e+00> : vector<64xf32>
    %50 = vector.multi_reduction <add>, %49, %cst_39 [1] : vector<64x64xf32> to vector<64xf32>
    %51 = vector.shape_cast %50 : vector<64xf32> to vector<64x1xf32>
    %52 = tpu.reciprocal %51 {approx = true} : vector<64x1xf32> -> vector<64x1xf32>
    %53 = vector.broadcast %52 : vector<64x1xf32> to vector<64x64xf32>
    %54 = arith.mulf %49, %53 : vector<64x64xf32>
    %55 = arith.truncf %54 : vector<64x64xf32> to vector<64x64xbf16>
    %cst_40 = arith.constant dense<0.000000e+00> : vector<64x16xf32>
    %56 = tpu.matmul %55, %28, %cst_40 {dimension_numbers = #tpu.dot_dimension_numbers<[1], [0], [0], [1], [0, 0, 1, 1], [], []>} : vector<64x64xbf16>, vector<64x16xbf16>, vector<64x16xf32> -> vector<64x16xf32>
    %57 = arith.truncf %56 : vector<64x16xf32> to vector<64x16xbf16>
    %c0_41 = arith.constant 0 : index
    %c0_42 = arith.constant 0 : index
    %c0_43 = arith.constant 0 : index
    %58 = vector.load %arg12[%c0_41, %c0_42, %c0_43] : memref<2x16x8xbf16, #tpu.memory_space<vmem>>, vector<1x16x8xbf16>
    %59 = vector.shape_cast %58 : vector<1x16x8xbf16> to vector<16x8xbf16>
    %cst_44 = arith.constant dense<0.000000e+00> : vector<64x8xf32>
    %60 = tpu.matmul %57, %59, %cst_44 {dimension_numbers = #tpu.dot_dimension_numbers<[1], [0], [0], [1], [0, 0, 1, 1], [], []>} : vector<64x16xbf16>, vector<16x8xbf16>, vector<64x8xf32> -> vector<64x8xf32>
    %61 = arith.addf %17, %60 : vector<64x8xf32>
    %c1 = arith.constant 1 : index
    %c0_45 = arith.constant 0 : index
    %c0_46 = arith.constant 0 : index
    %62 = vector.load %arg6[%c1, %c0_45, %c0_46] : memref<2x8x16xbf16, #tpu.memory_space<vmem>>, vector<1x8x16xbf16>
    %63 = vector.shape_cast %62 : vector<1x8x16xbf16> to vector<8x16xbf16>
    %cst_47 = arith.constant dense<0.000000e+00> : vector<64x16xf32>
    %64 = tpu.matmul %16, %63, %cst_47 {dimension_numbers = #tpu.dot_dimension_numbers<[1], [0], [0], [1], [0, 0, 1, 1], [], []>} : vector<64x8xbf16>, vector<8x16xbf16>, vector<64x16xf32> -> vector<64x16xf32>
    %c1_48 = arith.constant 1 : index
    %c0_49 = arith.constant 0 : index
    %c0_50 = arith.constant 0 : index
    %65 = vector.load %arg7[%c1_48, %c0_49, %c0_50] : memref<2x8x16xbf16, #tpu.memory_space<vmem>>, vector<1x8x16xbf16>
    %66 = vector.shape_cast %65 : vector<1x8x16xbf16> to vector<8x16xbf16>
    %cst_51 = arith.constant dense<0.000000e+00> : vector<64x16xf32>
    %67 = tpu.matmul %16, %66, %cst_51 {dimension_numbers = #tpu.dot_dimension_numbers<[1], [0], [0], [1], [0, 0, 1, 1], [], []>} : vector<64x8xbf16>, vector<8x16xbf16>, vector<64x16xf32> -> vector<64x16xf32>
    %68 = arith.truncf %67 : vector<64x16xf32> to vector<64x16xbf16>
    %c1_52 = arith.constant 1 : index
    %c0_53 = arith.constant 0 : index
    %c0_54 = arith.constant 0 : index
    %69 = vector.load %arg8[%c1_52, %c0_53, %c0_54] : memref<2x8x16xbf16, #tpu.memory_space<vmem>>, vector<1x8x16xbf16>
    %70 = vector.shape_cast %69 : vector<1x8x16xbf16> to vector<8x16xbf16>
    %cst_55 = arith.constant dense<0.000000e+00> : vector<64x16xf32>
    %71 = tpu.matmul %16, %70, %cst_55 {dimension_numbers = #tpu.dot_dimension_numbers<[1], [0], [0], [1], [0, 0, 1, 1], [], []>} : vector<64x8xbf16>, vector<8x16xbf16>, vector<64x16xf32> -> vector<64x16xf32>
    %72 = arith.truncf %71 : vector<64x16xf32> to vector<64x16xbf16>
    %73 = arith.truncf %64 : vector<64x16xf32> to vector<64x16xbf16>
    %cst_56 = arith.constant dense<0.000000e+00> : vector<64x64xf32>
    %74 = tpu.matmul %73, %68, %cst_56 {dimension_numbers = #tpu.dot_dimension_numbers<[1], [1], [0], [0], [0, 0, 1, 0], [], []>} : vector<64x16xbf16>, vector<64x16xbf16>, vector<64x64xf32> -> vector<64x64xf32>
    %75 = vector.shape_cast %73 : vector<64x16xbf16> to vector<8x8x16xbf16>
    %c0_57 = arith.constant 0 : index
    %c0_58 = arith.constant 0 : index
    %c0_59 = arith.constant 0 : index
    %76 = vector.load %arg9[%c0_57, %c0_58, %c0_59] : memref<8x8x16xbf16, #tpu.memory_space<vmem>>, vector<8x8x16xbf16>
    "tpu.trace_start"() <{level = 10 : i32, message = "xyd,xud->xyu"}> : () -> ()
    %cst_60 = arith.constant dense<0.000000e+00> : vector<8x8x8xf32>
    %77 = tpu.matmul %75, %76, %cst_60 {dimension_numbers = #tpu.dot_dimension_numbers<[2], [2], [1], [1], [0, 0, 0, 1, 1, 1], [0], [0]>} : vector<8x8x16xbf16>, vector<8x8x16xbf16>, vector<8x8x8xf32> -> vector<8x8x8xf32>
    "tpu.trace_stop"() : () -> ()
    %78 = vector.shape_cast %77 : vector<8x8x8xf32> to vector<64x8xf32>
    %79 = vector.shape_cast %64 : vector<64x16xf32> to vector<64x1x16xf32>
    %c0_61 = arith.constant 0 : index
    %c0_62 = arith.constant 0 : index
    %c0_63 = arith.constant 0 : index
    %80 = vector.load %arg10[%c0_61, %c0_62, %c0_63] : memref<64x8x16xf32, #tpu.memory_space<vmem>>, vector<64x8x16xf32>
    %81 = vector.broadcast %79 : vector<64x1x16xf32> to vector<64x8x16xf32>
    %82 = arith.mulf %81, %80 : vector<64x8x16xf32>
    %cst_64 = arith.constant dense<0.000000e+00> : vector<64x8xf32>
    %83 = vector.multi_reduction <add>, %82, %cst_64 [2] : vector<64x8x16xf32> to vector<64x8xf32>
    %84 = tpu.concatenate %78, %83 in 1 : vector<64x8xf32>, vector<64x8xf32> -> vector<64x16xf32>
    %85 = arith.truncf %84 : vector<64x16xf32> to vector<64x16xbf16>
    %c0_65 = arith.constant 0 : index
    %c0_66 = arith.constant 0 : index
    %86 = vector.load %arg11[%c0_65, %c0_66] : memref<16x64xbf16, #tpu.memory_space<vmem>>, vector<16x64xbf16>
    %cst_67 = arith.constant dense<0.000000e+00> : vector<64x64xf32>
    %87 = tpu.matmul %85, %86, %cst_67 {dimension_numbers = #tpu.dot_dimension_numbers<[1], [0], [0], [1], [0, 0, 1, 1], [], []>} : vector<64x16xbf16>, vector<16x64xbf16>, vector<64x64xf32> -> vector<64x64xf32>
    %88 = arith.addf %74, %87 : vector<64x64xf32>
    %cst_68 = arith.constant dense<0xFF800000> : vector<64xf32>
    %89 = vector.multi_reduction <maximumf>, %88, %cst_68 [1] : vector<64x64xf32> to vector<64xf32>
    %90 = vector.shape_cast %89 : vector<64xf32> to vector<64x1xf32>
    %91 = vector.broadcast %90 : vector<64x1xf32> to vector<64x64xf32>
    %92 = arith.subf %88, %91 : vector<64x64xf32>
    %93 = math.exp %92 : vector<64x64xf32>
    %cst_69 = arith.constant dense<0.000000e+00> : vector<64xf32>
    %94 = vector.multi_reduction <add>, %93, %cst_69 [1] : vector<64x64xf32> to vector<64xf32>
    %95 = vector.shape_cast %94 : vector<64xf32> to vector<64x1xf32>
    %96 = tpu.reciprocal %95 {approx = true} : vector<64x1xf32> -> vector<64x1xf32>
    %97 = vector.broadcast %96 : vector<64x1xf32> to vector<64x64xf32>
    %98 = arith.mulf %93, %97 : vector<64x64xf32>
    %99 = arith.truncf %98 : vector<64x64xf32> to vector<64x64xbf16>
    %cst_70 = arith.constant dense<0.000000e+00> : vector<64x16xf32>
    %100 = tpu.matmul %99, %72, %cst_70 {dimension_numbers = #tpu.dot_dimension_numbers<[1], [0], [0], [1], [0, 0, 1, 1], [], []>} : vector<64x64xbf16>, vector<64x16xbf16>, vector<64x16xf32> -> vector<64x16xf32>
    %101 = arith.truncf %100 : vector<64x16xf32> to vector<64x16xbf16>
    %c1_71 = arith.constant 1 : index
    %c0_72 = arith.constant 0 : index
    %c0_73 = arith.constant 0 : index
    %102 = vector.load %arg12[%c1_71, %c0_72, %c0_73] : memref<2x16x8xbf16, #tpu.memory_space<vmem>>, vector<1x16x8xbf16>
    %103 = vector.shape_cast %102 : vector<1x16x8xbf16> to vector<16x8xbf16>
    %cst_74 = arith.constant dense<0.000000e+00> : vector<64x8xf32>
    %104 = tpu.matmul %101, %103, %cst_74 {dimension_numbers = #tpu.dot_dimension_numbers<[1], [0], [0], [1], [0, 0, 1, 1], [], []>} : vector<64x16xbf16>, vector<16x8xbf16>, vector<64x8xf32> -> vector<64x8xf32>
    %105 = arith.addf %61, %104 : vector<64x8xf32>
    %c0_75 = arith.constant 0 : index
    %c0_76 = arith.constant 0 : index
    %106 = vector.load %arg13[%c0_75, %c0_76] : memref<1x8xf32, #tpu.memory_space<vmem>>, vector<1x8xf32>
    %107 = vector.broadcast %106 : vector<1x8xf32> to vector<64x8xf32>
    %108 = arith.addf %105, %107 : vector<64x8xf32>
    %cst_77 = arith.constant 0.000000e+00 : f32
    %109 = vector.broadcast %cst_77 : f32 to vector<64x8xf32>
    %110 = arith.maximumf %108, %109 : vector<64x8xf32>
    %111 = arith.truncf %110 : vector<64x8xf32> to vector<64x8xbf16>
    %c0_78 = arith.constant 0 : index
    %c0_79 = arith.constant 0 : index
    %112 = vector.load %arg14[%c0_78, %c0_79] : memref<8x16xbf16, #tpu.memory_space<vmem>>, vector<8x16xbf16>
    %cst_80 = arith.constant dense<0.000000e+00> : vector<64x16xf32>
    %113 = tpu.matmul %111, %112, %cst_80 {dimension_numbers = #tpu.dot_dimension_numbers<[1], [0], [0], [1], [0, 0, 1, 1], [], []>} : vector<64x8xbf16>, vector<8x16xbf16>, vector<64x16xf32> -> vector<64x16xf32>
    %c0_81 = arith.constant 0 : index
    %c0_82 = arith.constant 0 : index
    %114 = vector.load %arg15[%c0_81, %c0_82] : memref<1x16xf32, #tpu.memory_space<vmem>>, vector<1x16xf32>
    %115 = vector.broadcast %114 : vector<1x16xf32> to vector<64x16xf32>
    %116 = arith.addf %113, %115 : vector<64x16xf32>
    %117 = arith.addf %116, %8 : vector<64x16xf32>
    %cst_83 = arith.constant 0.000000e+00 : f32
    %118 = vector.broadcast %cst_83 : f32 to vector<64x16xf32>
    %119 = arith.maximumf %117, %118 : vector<64x16xf32>
    %c0_84 = arith.constant 0 : index
    %c0_85 = arith.constant 0 : index
    %c0_86 = arith.constant 0 : index
    %120 = vector.load %arg16[%c0_84, %c0_85, %c0_86] : memref<1x64x16xf32, #tpu.memory_space<vmem>>, vector<1x64x16xf32>
    %121 = vector.shape_cast %120 : vector<1x64x16xf32> to vector<64x16xf32>
    %122 = vector.shape_cast %119 : vector<64x16xf32> to vector<1x64x16xf32>
    tpu.vector_store %arg16[%c0_84, %c0_85, %c0_86], %122 {strides = array<i32>} : memref<1x64x16xf32, #tpu.memory_space<vmem>>, vector<1x64x16xf32>,
    return
  }
  func.func @transform_0(%arg0: i32) -> (i32, i32, i32) {
    %c0_i32 = arith.constant 0 : i32
    %c0_i32_0 = arith.constant 0 : i32
    %c0_i32_1 = arith.constant 0 : i32
    return %arg0, %c0_i32, %c0_i32_0 : i32, i32, i32
  }
  func.func @transform_1(%arg0: i32) -> (i32, i32) {
    %c0_i32 = arith.constant 0 : i32
    %c0_i32_0 = arith.constant 0 : i32
    %c0_i32_1 = arith.constant 0 : i32
    return %c0_i32, %c0_i32_0 : i32, i32
  }
  func.func @transform_2(%arg0: i32) -> (i32, i32) {
    %c0_i32 = arith.constant 0 : i32
    %c0_i32_0 = arith.constant 0 : i32
    %c0_i32_1 = arith.constant 0 : i32
    return %c0_i32, %c0_i32_0 : i32, i32
  }
  func.func @transform_3(%arg0: i32) -> (i32, i32) {
    %c0_i32 = arith.constant 0 : i32
    %c0_i32_0 = arith.constant 0 : i32
    %c0_i32_1 = arith.constant 0 : i32
    return %c0_i32, %c0_i32_0 : i32, i32
  }
  func.func @transform_4(%arg0: i32) -> (i32, i32) {
    %c0_i32 = arith.constant 0 : i32
    %c0_i32_0 = arith.constant 0 : i32
    %c0_i32_1 = arith.constant 0 : i32
    return %c0_i32, %c0_i32_0 : i32, i32
  }
  func.func @transform_5(%arg0: i32) -> (i32, i32, i32) {
    %c0_i32 = arith.constant 0 : i32
    %c0_i32_0 = arith.constant 0 : i32
    %c0_i32_1 = arith.constant 0 : i32
    %c0_i32_2 = arith.constant 0 : i32
    return %c0_i32, %c0_i32_0, %c0_i32_1 : i32, i32, i32
  }
  func.func @transform_6(%arg0: i32) -> (i32, i32, i32) {
    %c0_i32 = arith.constant 0 : i32
    %c0_i32_0 = arith.constant 0 : i32
    %c0_i32_1 = arith.constant 0 : i32
    %c0_i32_2 = arith.constant 0 : i32
    return %c0_i32, %c0_i32_0, %c0_i32_1 : i32, i32, i32
  }
  func.func @transform_7(%arg0: i32) -> (i32, i32, i32) {
    %c0_i32 = arith.constant 0 : i32
    %c0_i32_0 = arith.constant 0 : i32
    %c0_i32_1 = arith.constant 0 : i32
    %c0_i32_2 = arith.constant 0 : i32
    return %c0_i32, %c0_i32_0, %c0_i32_1 : i32, i32, i32
  }
  func.func @transform_8(%arg0: i32) -> (i32, i32, i32) {
    %c0_i32 = arith.constant 0 : i32
    %c0_i32_0 = arith.constant 0 : i32
    %c0_i32_1 = arith.constant 0 : i32
    %c0_i32_2 = arith.constant 0 : i32
    return %c0_i32, %c0_i32_0, %c0_i32_1 : i32, i32, i32
  }
  func.func @transform_9(%arg0: i32) -> (i32, i32, i32) {
    %c0_i32 = arith.constant 0 : i32
    %c0_i32_0 = arith.constant 0 : i32
    %c0_i32_1 = arith.constant 0 : i32
    %c0_i32_2 = arith.constant 0 : i32
    return %c0_i32, %c0_i32_0, %c0_i32_1 : i32, i32, i32
  }
  func.func @transform_10(%arg0: i32) -> (i32, i32) {
    %c0_i32 = arith.constant 0 : i32
    %c0_i32_0 = arith.constant 0 : i32
    %c0_i32_1 = arith.constant 0 : i32
    return %c0_i32, %c0_i32_0 : i32, i32
  }
  func.func @transform_11(%arg0: i32) -> (i32, i32, i32) {
    %c0_i32 = arith.constant 0 : i32
    %c0_i32_0 = arith.constant 0 : i32
    %c0_i32_1 = arith.constant 0 : i32
    %c0_i32_2 = arith.constant 0 : i32
    return %c0_i32, %c0_i32_0, %c0_i32_1 : i32, i32, i32
  }
  func.func @transform_12(%arg0: i32) -> (i32, i32) {
    %c0_i32 = arith.constant 0 : i32
    %c0_i32_0 = arith.constant 0 : i32
    %c0_i32_1 = arith.constant 0 : i32
    return %c0_i32, %c0_i32_0 : i32, i32
  }
  func.func @transform_13(%arg0: i32) -> (i32, i32) {
    %c0_i32 = arith.constant 0 : i32
    %c0_i32_0 = arith.constant 0 : i32
    %c0_i32_1 = arith.constant 0 : i32
    return %c0_i32, %c0_i32_0 : i32, i32
  }
  func.func @transform_14(%arg0: i32) -> (i32, i32) {
    %c0_i32 = arith.constant 0 : i32
    %c0_i32_0 = arith.constant 0 : i32
    %c0_i32_1 = arith.constant 0 : i32
    return %c0_i32, %c0_i32_0 : i32, i32
  }
  func.func @transform_15(%arg0: i32) -> (i32, i32, i32) {
    %c0_i32 = arith.constant 0 : i32
    %c0_i32_0 = arith.constant 0 : i32
    %c0_i32_1 = arith.constant 0 : i32
    return %arg0, %c0_i32, %c0_i32_0 : i32, i32, i32
  }
}

module attributes {stable_mosaic.version = 11 : i64} {
  func.func @_bottle_block_kernel(%arg0: i32, %arg1: memref<1x64x8xbf16, #tpu.memory_space<vmem>>, %arg2: memref<8x16xbf16, #tpu.memory_space<vmem>>, %arg3: memref<1x16xf32, #tpu.memory_space<vmem>>, %arg4: memref<8x8xbf16, #tpu.memory_space<vmem>>, %arg5: memref<1x8xf32, #tpu.memory_space<vmem>>, %arg6: memref<2x8x16xbf16, #tpu.memory_space<vmem>>, %arg7: memref<2x8x16xbf16, #tpu.memory_space<vmem>>, %arg8: memref<2x8x16xbf16, #tpu.memory_space<vmem>>, %arg9: memref<8x8x16xbf16, #tpu.memory_space<vmem>>, %arg10: memref<64x8x16xf32, #tpu.memory_space<vmem>>, %arg11: memref<16x64xbf16, #tpu.memory_space<vmem>>, %arg12: memref<2x16x8xbf16, #tpu.memory_space<vmem>>, %arg13: memref<1x8xf32, #tpu.memory_space<vmem>>, %arg14: memref<8x16xbf16, #tpu.memory_space<vmem>>, %arg15: memref<1x16xf32, #tpu.memory_space<vmem>>, %arg16: memref<1x64x16xf32, #tpu.memory_space<vmem>>) attributes {dimension_semantics = [#tpu.dimension_semantics<parallel>], iteration_bounds = array<i64: 2>, scalar_prefetch = 0 : i64, scratch_operands = 0 : i64, tpu.core_type = #tpu.core_type<tc>, window_params = [{transform_indices = @transform_0, window_bounds = array<i64: 1, 64, 8>}, {pipeline_mode = #tpu.pipeline_mode<synchronous>, transform_indices = @transform_1, window_bounds = array<i64: 8, 16>}, {pipeline_mode = #tpu.pipeline_mode<synchronous>, transform_indices = @transform_2, window_bounds = array<i64: 1, 16>}, {pipeline_mode = #tpu.pipeline_mode<synchronous>, transform_indices = @transform_3, window_bounds = array<i64: 8, 8>}, {pipeline_mode = #tpu.pipeline_mode<synchronous>, transform_indices = @transform_4, window_bounds = array<i64: 1, 8>}, {pipeline_mode = #tpu.pipeline_mode<synchronous>, transform_indices = @transform_5, window_bounds = array<i64: 2, 8, 16>}, {pipeline_mode = #tpu.pipeline_mode<synchronous>, transform_indices = @transform_6, window_bounds = array<i64: 2, 8, 16>}, {pipeline_mode = #tpu.pipeline_mode<synchronous>, transform_indices = @transform_7, window_bounds = array<i64: 2, 8, 16>}, {pipeline_mode = #tpu.pipeline_mode<synchronous>, transform_indices = @transform_8, window_bounds = array<i64: 8, 8, 16>}, {pipeline_mode = #tpu.pipeline_mode<synchronous>, transform_indices = @transform_9, window_bounds = array<i64: 64, 8, 16>}, {pipeline_mode = #tpu.pipeline_mode<synchronous>, transform_indices = @transform_10, window_bounds = array<i64: 16, 64>}, {pipeline_mode = #tpu.pipeline_mode<synchronous>, transform_indices = @transform_11, window_bounds = array<i64: 2, 16, 8>}, {pipeline_mode = #tpu.pipeline_mode<synchronous>, transform_indices = @transform_12, window_bounds = array<i64: 1, 8>}, {pipeline_mode = #tpu.pipeline_mode<synchronous>, transform_indices = @transform_13, window_bounds = array<i64: 8, 16>}, {pipeline_mode = #tpu.pipeline_mode<synchronous>, transform_indices = @transform_14, window_bounds = array<i64: 1, 16>}, {transform_indices = @transform_15, window_bounds = array<i64: 1, 64, 16>}]} {
    %c0 = arith.constant 0 : index
    %c0_0 = arith.constant 0 : index
    %c0_1 = arith.constant 0 : index
    %0 = vector.load %arg1[%c0, %c0_0, %c0_1] : memref<1x64x8xbf16, #tpu.memory_space<vmem>>, vector<1x64x8xbf16>
    %1 = vector.shape_cast %0 : vector<1x64x8xbf16> to vector<64x8xbf16>
    %c0_2 = arith.constant 0 : index
    %c0_3 = arith.constant 0 : index
    %2 = vector.load %arg2[%c0_2, %c0_3] : memref<8x16xbf16, #tpu.memory_space<vmem>>, vector<8x16xbf16>
    %cst = arith.constant dense<0.000000e+00> : vector<64x16xf32>
    %3 = tpu.matmul %1, %2, %cst {dimension_numbers = #tpu.dot_dimension_numbers<[1], [0], [0], [1], [0, 0, 1, 1], [], []>} : vector<64x8xbf16>, vector<8x16xbf16>, vector<64x16xf32> -> vector<64x16xf32>
    %c0_4 = arith.constant 0 : index
    %c0_5 = arith.constant 0 : index
    %4 = vector.load %arg3[%c0_4, %c0_5] : memref<1x16xf32, #tpu.memory_space<vmem>>, vector<1x16xf32>
    %5 = vector.broadcast %4 : vector<1x16xf32> to vector<64x16xf32>
    %6 = arith.addf %3, %5 : vector<64x16xf32>
    %cst_6 = arith.constant 0.000000e+00 : f32
    %7 = vector.broadcast %cst_6 : f32 to vector<64x16xf32>
    %8 = arith.maximumf %6, %7 : vector<64x16xf32>
    %c0_7 = arith.constant 0 : index
    %c0_8 = arith.constant 0 : index
    %9 = vector.load %arg4[%c0_7, %c0_8] : memref<8x8xbf16, #tpu.memory_space<vmem>>, vector<8x8xbf16>
    %cst_9 = arith.constant dense<0.000000e+00> : vector<64x8xf32>
    %10 = tpu.matmul %1, %9, %cst_9 {dimension_numbers = #tpu.dot_dimension_numbers<[1], [0], [0], [1], [0, 0, 1, 1], [], []>} : vector<64x8xbf16>, vector<8x8xbf16>, vector<64x8xf32> -> vector<64x8xf32>
    %c0_10 = arith.constant 0 : index
    %c0_11 = arith.constant 0 : index
    %11 = vector.load %arg5[%c0_10, %c0_11] : memref<1x8xf32, #tpu.memory_space<vmem>>, vector<1x8xf32>
    %12 = vector.broadcast %11 : vector<1x8xf32> to vector<64x8xf32>
    %13 = arith.addf %10, %12 : vector<64x8xf32>
    %cst_12 = arith.constant 0.000000e+00 : f32
    %14 = vector.broadcast %cst_12 : f32 to vector<64x8xf32>
    %15 = arith.maximumf %13, %14 : vector<64x8xf32>
    %16 = arith.truncf %15 : vector<64x8xf32> to vector<64x8xbf16>
    %cst_13 = arith.constant 0.000000e+00 : f32
    %17 = vector.broadcast %cst_13 : f32 to vector<64x8xf32>
    %c0_14 = arith.constant 0 : index
    %c0_15 = arith.constant 0 : index
    %c0_16 = arith.constant 0 : index
    %18 = vector.load %arg6[%c0_14, %c0_15, %c0_16] : memref<2x8x16xbf16, #tpu.memory_space<vmem>>, vector<1x8x16xbf16>
    %19 = vector.shape_cast %18 : vector<1x8x16xbf16> to vector<8x16xbf16>
    %cst_17 = arith.constant dense<0.000000e+00> : vector<64x16xf32>
    %20 = tpu.matmul %16, %19, %cst_17 {dimension_numbers = #tpu.dot_dimension_numbers<[1], [0], [0], [1], [0, 0, 1, 1], [], []>} : vector<64x8xbf16>, vector<8x16xbf16>, vector<64x16xf32> -> vector<64x16xf32>
    %c0_18 = arith.constant 0 : index
    %c0_19 = arith.constant 0 : index
    %c0_20 = arith.constant 0 : index
    %21 = vector.load %arg7[%c0_18, %c0_19, %c0_20] : memref<2x8x16xbf16, #tpu.memory_space<vmem>>, vector<1x8x16xbf16>
    %22 = vector.shape_cast %21 : vector<1x8x16xbf16> to vector<8x16xbf16>
    %cst_21 = arith.constant dense<0.000000e+00> : vector<64x16xf32>
    %23 = tpu.matmul %16, %22, %cst_21 {dimension_numbers = #tpu.dot_dimension_numbers<[1], [0], [0], [1], [0, 0, 1, 1], [], []>} : vector<64x8xbf16>, vector<8x16xbf16>, vector<64x16xf32> -> vector<64x16xf32>
    %24 = arith.truncf %23 : vector<64x16xf32> to vector<64x16xbf16>
    %c0_22 = arith.constant 0 : index
    %c0_23 = arith.constant 0 : index
    %c0_24 = arith.constant 0 : index
    %25 = vector.load %arg8[%c0_22, %c0_23, %c0_24] : memref<2x8x16xbf16, #tpu.memory_space<vmem>>, vector<1x8x16xbf16>
    %26 = vector.shape_cast %25 : vector<1x8x16xbf16> to vector<8x16xbf16>
    %cst_25 = arith.constant dense<0.000000e+00> : vector<64x16xf32>
    %27 = tpu.matmul %16, %26, %cst_25 {dimension_numbers = #tpu.dot_dimension_numbers<[1], [0], [0], [1], [0, 0, 1, 1], [], []>} : vector<64x8xbf16>, vector<8x16xbf16>, vector<64x16xf32> -> vector<64x16xf32>
    %28 = arith.truncf %27 : vector<64x16xf32> to vector<64x16xbf16>
    %29 = arith.truncf %20 : vector<64x16xf32> to vector<64x16xbf16>
    %cst_26 = arith.constant dense<0.000000e+00> : vector<64x64xf32>
    %30 = tpu.matmul %29, %24, %cst_26 {dimension_numbers = #tpu.dot_dimension_numbers<[1], [1], [0], [0], [0, 0, 1, 0], [], []>} : vector<64x16xbf16>, vector<64x16xbf16>, vector<64x64xf32> -> vector<64x64xf32>
    %31 = vector.shape_cast %29 : vector<64x16xbf16> to vector<8x8x16xbf16>
    %c0_27 = arith.constant 0 : index
    %c0_28 = arith.constant 0 : index
    %c0_29 = arith.constant 0 : index
    %32 = vector.load %arg9[%c0_27, %c0_28, %c0_29] : memref<8x8x16xbf16, #tpu.memory_space<vmem>>, vector<8x8x16xbf16>
    "tpu.trace_start"() <{level = 10 : i32, message = "xyd,xud->xyu"}> : () -> ()
    %cst_30 = arith.constant dense<0.000000e+00> : vector<8x8x8xf32>
    %33 = tpu.matmul %31, %32, %cst_30 {dimension_numbers = #tpu.dot_dimension_numbers<[2], [2], [1], [1], [0, 0, 0, 1, 1, 1], [0], [0]>} : vector<8x8x16xbf16>, vector<8x8x16xbf16>, vector<8x8x8xf32> -> vector<8x8x8xf32>
    "tpu.trace_stop"() : () -> ()
    %34 = vector.shape_cast %33 : vector<8x8x8xf32> to vector<64x8xf32>
    %35 = vector.shape_cast %20 : vector<64x16xf32> to vector<64x1x16xf32>
    %c0_31 = arith.constant 0 : index
    %c0_32 = arith.constant 0 : index
    %c0_33 = arith.constant 0 : index
    %36 = vector.load %arg10[%c0_31, %c0_32, %c0_33] : memref<64x8x16xf32, #tpu.memory_space<vmem>>, vector<64x8x16xf32>
    %37 = vector.broadcast %35 : vector<64x1x16xf32> to vector<64x8x16xf32>
    %38 = arith.mulf %37, %36 : vector<64x8x16xf32>
    %cst_34 = arith.constant dense<0.000000e+00> : vector<64x8xf32>
    %39 = vector.multi_reduction <add>, %38, %cst_34 [2] : vector<64x8x16xf32> to vector<64x8xf32>
    %40 = tpu.concatenate %34, %39 in 1 : vector<64x8xf32>, vector<64x8xf32> -> vector<64x16xf32>
    %41 = arith.truncf %40 : vector<64x16xf32> to vector<64x16xbf16>
    %c0_35 = arith.constant 0 : index
    %c0_36 = arith.constant 0 : index
    %42 = vector.load %arg11[%c0_35, %c0_36] : memref<16x64xbf16, #tpu.memory_space<vmem>>, vector<16x64xbf16>
    %cst_37 = arith.constant dense<0.000000e+00> : vector<64x64xf32>
    %43 = tpu.matmul %41, %42, %cst_37 {dimension_numbers = #tpu.dot_dimension_numbers<[1], [0], [0], [1], [0, 0, 1, 1], [], []>} : vector<64x16xbf16>, vector<16x64xbf16>, vector<64x64xf32> -> vector<64x64xf32>
    %44 = arith.addf %30, %43 : vector<64x64xf32>
    %cst_38 = arith.constant dense<0xFF800000> : vector<64xf32>
    %45 = vector.multi_reduction <maximumf>, %44, %cst_38 [1] : vector<64x64xf32> to vector<64xf32>
    %46 = vector.shape_cast %45 : vector<64xf32> to vector<64x1xf32>
    %47 = vector.broadcast %46 : vector<64x1xf32> to vector<64x64xf32>
    %48 = arith.subf %44, %47 : vector<64x64xf32>
    %49 = math.exp %48 : vector<64x64xf32>
    %cst_39 = arith.constant dense<0.000000e+00> : vector<64xf32>
    %50 = vector.multi_reduction <add>, %49, %cst_39 [1] : vector<64x64xf32> to vector<64xf32>
    %51 = vector.shape_cast %50 : vector<64xf32> to vector<64x1xf32>
    %52 = tpu.reciprocal %51 {approx = true} : vector<64x1xf32> -> vector<64x1xf32>
    %53 = vector.broadcast %52 : vector<64x1xf32> to vector<64x64xf32>
    %54 = arith.mulf %49, %53 : vector<64x64xf32>
    %55 = arith.truncf %54 : vector<64x64xf32> to vector<64x64xbf16>
    %cst_40 = arith.constant dense<0.000000e+00> : vector<64x16xf32>
    %56 = tpu.matmul %55, %28, %cst_40 {dimension_numbers = #tpu.dot_dimension_numbers<[1], [0], [0], [1], [0, 0, 1, 1], [], []>} : vector<64x64xbf16>, vector<64x16xbf16>, vector<64x16xf32> -> vector<64x16xf32>
    %57 = arith.truncf %56 : vector<64x16xf32> to vector<64x16xbf16>
    %c0_41 = arith.constant 0 : index
    %c0_42 = arith.constant 0 : index
    %c0_43 = arith.constant 0 : index
    %58 = vector.load %arg12[%c0_41, %c0_42, %c0_43] : memref<2x16x8xbf16, #tpu.memory_space<vmem>>, vector<1x16x8xbf16>
    %59 = vector.shape_cast %58 : vector<1x16x8xbf16> to vector<16x8xbf16>
    %cst_44 = arith.constant dense<0.000000e+00> : vector<64x8xf32>
    %60 = tpu.matmul %57, %59, %cst_44 {dimension_numbers = #tpu.dot_dimension_numbers<[1], [0], [0], [1], [0, 0, 1, 1], [], []>} : vector<64x16xbf16>, vector<16x8xbf16>, vector<64x8xf32> -> vector<64x8xf32>
    %61 = arith.addf %17, %60 : vector<64x8xf32>
    %c1 = arith.constant 1 : index
    %c0_45 = arith.constant 0 : index
    %c0_46 = arith.constant 0 : index
    %62 = vector.load %arg6[%c1, %c0_45, %c0_46] : memref<2x8x16xbf16, #tpu.memory_space<vmem>>, vector<1x8x16xbf16>
    %63 = vector.shape_cast %62 : vector<1x8x16xbf16> to vector<8x16xbf16>
    %cst_47 = arith.constant dense<0.000000e+00> : vector<64x16xf32>
    %64 = tpu.matmul %16, %63, %cst_47 {dimension_numbers = #tpu.dot_dimension_numbers<[1], [0], [0], [1], [0, 0, 1, 1], [], []>} : vector<64x8xbf16>, vector<8x16xbf16>, vector<64x16xf32> -> vector<64x16xf32>
    %c1_48 = arith.constant 1 : index
    %c0_49 = arith.constant 0 : index
    %c0_50 = arith.constant 0 : index
    %65 = vector.load %arg7[%c1_48, %c0_49, %c0_50] : memref<2x8x16xbf16, #tpu.memory_space<vmem>>, vector<1x8x16xbf16>
    %66 = vector.shape_cast %65 : vector<1x8x16xbf16> to vector<8x16xbf16>
    %cst_51 = arith.constant dense<0.000000e+00> : vector<64x16xf32>
    %67 = tpu.matmul %16, %66, %cst_51 {dimension_numbers = #tpu.dot_dimension_numbers<[1], [0], [0], [1], [0, 0, 1, 1], [], []>} : vector<64x8xbf16>, vector<8x16xbf16>, vector<64x16xf32> -> vector<64x16xf32>
    %68 = arith.truncf %67 : vector<64x16xf32> to vector<64x16xbf16>
    %c1_52 = arith.constant 1 : index
    %c0_53 = arith.constant 0 : index
    %c0_54 = arith.constant 0 : index
    %69 = vector.load %arg8[%c1_52, %c0_53, %c0_54] : memref<2x8x16xbf16, #tpu.memory_space<vmem>>, vector<1x8x16xbf16>
    %70 = vector.shape_cast %69 : vector<1x8x16xbf16> to vector<8x16xbf16>
    %cst_55 = arith.constant dense<0.000000e+00> : vector<64x16xf32>
    %71 = tpu.matmul %16, %70, %cst_55 {dimension_numbers = #tpu.dot_dimension_numbers<[1], [0], [0], [1], [0, 0, 1, 1], [], []>} : vector<64x8xbf16>, vector<8x16xbf16>, vector<64x16xf32> -> vector<64x16xf32>
    %72 = arith.truncf %71 : vector<64x16xf32> to vector<64x16xbf16>
    %73 = arith.truncf %64 : vector<64x16xf32> to vector<64x16xbf16>
    %cst_56 = arith.constant dense<0.000000e+00> : vector<64x64xf32>
    %74 = tpu.matmul %73, %68, %cst_56 {dimension_numbers = #tpu.dot_dimension_numbers<[1], [1], [0], [0], [0, 0, 1, 0], [], []>} : vector<64x16xbf16>, vector<64x16xbf16>, vector<64x64xf32> -> vector<64x64xf32>
    %75 = vector.shape_cast %73 : vector<64x16xbf16> to vector<8x8x16xbf16>
    %c0_57 = arith.constant 0 : index
    %c0_58 = arith.constant 0 : index
    %c0_59 = arith.constant 0 : index
    %76 = vector.load %arg9[%c0_57, %c0_58, %c0_59] : memref<8x8x16xbf16, #tpu.memory_space<vmem>>, vector<8x8x16xbf16>
    "tpu.trace_start"() <{level = 10 : i32, message = "xyd,xud->xyu"}> : () -> ()
    %cst_60 = arith.constant dense<0.000000e+00> : vector<8x8x8xf32>
    %77 = tpu.matmul %75, %76, %cst_60 {dimension_numbers = #tpu.dot_dimension_numbers<[2], [2], [1], [1], [0, 0, 0, 1, 1, 1], [0], [0]>} : vector<8x8x16xbf16>, vector<8x8x16xbf16>, vector<8x8x8xf32> -> vector<8x8x8xf32>
    "tpu.trace_stop"() : () -> ()
    %78 = vector.shape_cast %77 : vector<8x8x8xf32> to vector<64x8xf32>
    %79 = vector.shape_cast %64 : vector<64x16xf32> to vector<64x1x16xf32>
    %c0_61 = arith.constant 0 : index
    %c0_62 = arith.constant 0 : index
    %c0_63 = arith.constant 0 : index
    %80 = vector.load %arg10[%c0_61, %c0_62, %c0_63] : memref<64x8x16xf32, #tpu.memory_space<vmem>>, vector<64x8x16xf32>
    %81 = vector.broadcast %79 : vector<64x1x16xf32> to vector<64x8x16xf32>
    %82 = arith.mulf %81, %80 : vector<64x8x16xf32>
    %cst_64 = arith.constant dense<0.000000e+00> : vector<64x8xf32>
    %83 = vector.multi_reduction <add>, %82, %cst_64 [2] : vector<64x8x16xf32> to vector<64x8xf32>
    %84 = tpu.concatenate %78, %83 in 1 : vector<64x8xf32>, vector<64x8xf32> -> vector<64x16xf32>
    %85 = arith.truncf %84 : vector<64x16xf32> to vector<64x16xbf16>
    %c0_65 = arith.constant 0 : index
    %c0_66 = arith.constant 0 : index
    %86 = vector.load %arg11[%c0_65, %c0_66] : memref<16x64xbf16, #tpu.memory_space<vmem>>, vector<16x64xbf16>
    %cst_67 = arith.constant dense<0.000000e+00> : vector<64x64xf32>
    %87 = tpu.matmul %85, %86, %cst_67 {dimension_numbers = #tpu.dot_dimension_numbers<[1], [0], [0], [1], [0, 0, 1, 1], [], []>} : vector<64x16xbf16>, vector<16x64xbf16>, vector<64x64xf32> -> vector<64x64xf32>
    %88 = arith.addf %74, %87 : vector<64x64xf32>
    %cst_68 = arith.constant dense<0xFF800000> : vector<64xf32>
    %89 = vector.multi_reduction <maximumf>, %88, %cst_68 [1] : vector<64x64xf32> to vector<64xf32>
    %90 = vector.shape_cast %89 : vector<64xf32> to vector<64x1xf32>
    %91 = vector.broadcast %90 : vector<64x1xf32> to vector<64x64xf32>
    %92 = arith.subf %88, %91 : vector<64x64xf32>
    %93 = math.exp %92 : vector<64x64xf32>
    %cst_69 = arith.constant dense<0.000000e+00> : vector<64xf32>
    %94 = vector.multi_reduction <add>, %93, %cst_69 [1] : vector<64x64xf32> to vector<64xf32>
    %95 = vector.shape_cast %94 : vector<64xf32> to vector<64x1xf32>
    %96 = tpu.reciprocal %95 {approx = true} : vector<64x1xf32> -> vector<64x1xf32>
    %97 = vector.broadcast %96 : vector<64x1xf32> to vector<64x64xf32>
    %98 = arith.mulf %93, %97 : vector<64x64xf32>
    %99 = arith.truncf %98 : vector<64x64xf32> to vector<64x64xbf16>
    %cst_70 = arith.constant dense<0.000000e+00> : vector<64x16xf32>
    %100 = tpu.matmul %99, %72, %cst_70 {dimension_numbers = #tpu.dot_dimension_numbers<[1], [0], [0], [1], [0, 0, 1, 1], [], []>} : vector<64x64xbf16>, vector<64x16xbf16>, vector<64x16xf32> -> vector<64x16xf32>
    %101 = arith.truncf %100 : vector<64x16xf32> to vector<64x16xbf16>
    %c1_71 = arith.constant 1 : index
    %c0_72 = arith.constant 0 : index
    %c0_73 = arith.constant 0 : index
    %102 = vector.load %arg12[%c1_71, %c0_72, %c0_73] : memref<2x16x8xbf16, #tpu.memory_space<vmem>>, vector<1x16x8xbf16>
    %103 = vector.shape_cast %102 : vector<1x16x8xbf16> to vector<16x8xbf16>
    %cst_74 = arith.constant dense<0.000000e+00> : vector<64x8xf32>
    %104 = tpu.matmul %101, %103, %cst_74 {dimension_numbers = #tpu.dot_dimension_numbers<[1], [0], [0], [1], [0, 0, 1, 1], [], []>} : vector<64x16xbf16>, vector<16x8xbf16>, vector<64x8xf32> -> vector<64x8xf32>
    %105 = arith.addf %61, %104 : vector<64x8xf32>
    %c0_75 = arith.constant 0 : index
    %c0_76 = arith.constant 0 : index
    %106 = vector.load %arg13[%c0_75, %c0_76] : memref<1x8xf32, #tpu.memory_space<vmem>>, vector<1x8xf32>
    %107 = vector.broadcast %106 : vector<1x8xf32> to vector<64x8xf32>
    %108 = arith.addf %105, %107 : vector<64x8xf32>
    %cst_77 = arith.constant 0.000000e+00 : f32
    %109 = vector.broadcast %cst_77 : f32 to vector<64x8xf32>
    %110 = arith.maximumf %108, %109 : vector<64x8xf32>
    %111 = arith.truncf %110 : vector<64x8xf32> to vector<64x8xbf16>
    %c0_78 = arith.constant 0 : index
    %c0_79 = arith.constant 0 : index
    %112 = vector.load %arg14[%c0_78, %c0_79] : memref<8x16xbf16, #tpu.memory_space<vmem>>, vector<8x16xbf16>
    %cst_80 = arith.constant dense<0.000000e+00> : vector<64x16xf32>
    %113 = tpu.matmul %111, %112, %cst_80 {dimension_numbers = #tpu.dot_dimension_numbers<[1], [0], [0], [1], [0, 0, 1, 1], [], []>} : vector<64x8xbf16>, vector<8x16xbf16>, vector<64x16xf32> -> vector<64x16xf32>
    %c0_81 = arith.constant 0 : index
    %c0_82 = arith.constant 0 : index
    %114 = vector.load %arg15[%c0_81, %c0_82] : memref<1x16xf32, #tpu.memory_space<vmem>>, vector<1x16xf32>
    %115 = vector.broadcast %114 : vector<1x16xf32> to vector<64x16xf32>
    %116 = arith.addf %113, %115 : vector<64x16xf32>
    %117 = arith.addf %116, %8 : vector<64x16xf32>
    %cst_83 = arith.constant 0.000000e+00 : f32
    %118 = vector.broadcast %cst_83 : f32 to vector<64x16xf32>
    %119 = arith.maximumf %117, %118 : vector<64x16xf32>
    %c0_84 = arith.constant 0 : index
    %c0_85 = arith.constant 0 : index
    %c0_86 = arith.constant 0 : index
    %120 = vector.load %arg16[%c0_84, %c0_85, %c0_86] : memref<1x64x16xf32, #tpu.memory_space<vmem>>, vector<1x64x16xf32>
    %121 = vector.shape_cast %120 : vector<1x64x16xf32> to vector<64x16xf32>
    %122 = vector.shape_cast %119 : vector<64x16xf32> to vector<1x64x16xf32>
    tpu.vector_store %arg16[%c0_84, %c0_85, %c0_86], %122 {strides = array<i32>} : memref<1x64x16xf32, #tpu.memory_space<vmem>>, vector<1x64x16xf32>,
    return
  }
  func.func @transform_0(%arg0: i32) -> (i32, i32, i32) {
    %c0_i32 = arith.constant 0 : i32
    %c0_i32_0 = arith.constant 0 : i32
    %c0_i32_1 = arith.constant 0 : i32
    return %arg0, %c0_i32, %c0_i32_0 : i32, i32, i32
  }
  func.func @transform_1(%arg0: i32) -> (i32, i32) {
    %c0_i32 = arith.constant 0 : i32
    %c0_i32_0 = arith.constant 0 : i32
    %c0_i32_1 = arith.constant 0 : i32
    return %c0_i32, %c0_i32_0 : i32, i32
  }
  func.func @transform_2(%arg0: i32) -> (i32, i32) {
    %c0_i32 = arith.constant 0 : i32
    %c0_i32_0 = arith.constant 0 : i32
    %c0_i32_1 = arith.constant 0 : i32
    return %c0_i32, %c0_i32_0 : i32, i32
  }
  func.func @transform_3(%arg0: i32) -> (i32, i32) {
    %c0_i32 = arith.constant 0 : i32
    %c0_i32_0 = arith.constant 0 : i32
    %c0_i32_1 = arith.constant 0 : i32
    return %c0_i32, %c0_i32_0 : i32, i32
  }
  func.func @transform_4(%arg0: i32) -> (i32, i32) {
    %c0_i32 = arith.constant 0 : i32
    %c0_i32_0 = arith.constant 0 : i32
    %c0_i32_1 = arith.constant 0 : i32
    return %c0_i32, %c0_i32_0 : i32, i32
  }
  func.func @transform_5(%arg0: i32) -> (i32, i32, i32) {
    %c0_i32 = arith.constant 0 : i32
    %c0_i32_0 = arith.constant 0 : i32
    %c0_i32_1 = arith.constant 0 : i32
    %c0_i32_2 = arith.constant 0 : i32
    return %c0_i32, %c0_i32_0, %c0_i32_1 : i32, i32, i32
  }
  func.func @transform_6(%arg0: i32) -> (i32, i32, i32) {
    %c0_i32 = arith.constant 0 : i32
    %c0_i32_0 = arith.constant 0 : i32
    %c0_i32_1 = arith.constant 0 : i32
    %c0_i32_2 = arith.constant 0 : i32
    return %c0_i32, %c0_i32_0, %c0_i32_1 : i32, i32, i32
  }
  func.func @transform_7(%arg0: i32) -> (i32, i32, i32) {
    %c0_i32 = arith.constant 0 : i32
    %c0_i32_0 = arith.constant 0 : i32
    %c0_i32_1 = arith.constant 0 : i32
    %c0_i32_2 = arith.constant 0 : i32
    return %c0_i32, %c0_i32_0, %c0_i32_1 : i32, i32, i32
  }
  func.func @transform_8(%arg0: i32) -> (i32, i32, i32) {
    %c0_i32 = arith.constant 0 : i32
    %c0_i32_0 = arith.constant 0 : i32
    %c0_i32_1 = arith.constant 0 : i32
    %c0_i32_2 = arith.constant 0 : i32
    return %c0_i32, %c0_i32_0, %c0_i32_1 : i32, i32, i32
  }
  func.func @transform_9(%arg0: i32) -> (i32, i32, i32) {
    %c0_i32 = arith.constant 0 : i32
    %c0_i32_0 = arith.constant 0 : i32
    %c0_i32_1 = arith.constant 0 : i32
    %c0_i32_2 = arith.constant 0 : i32
    return %c0_i32, %c0_i32_0, %c0_i32_1 : i32, i32, i32
  }
  func.func @transform_10(%arg0: i32) -> (i32, i32) {
    %c0_i32 = arith.constant 0 : i32
    %c0_i32_0 = arith.constant 0 : i32
    %c0_i32_1 = arith.constant 0 : i32
    return %c0_i32, %c0_i32_0 : i32, i32
  }
  func.func @transform_11(%arg0: i32) -> (i32, i32, i32) {
    %c0_i32 = arith.constant 0 : i32
    %c0_i32_0 = arith.constant 0 : i32
    %c0_i32_1 = arith.constant 0 : i32
    %c0_i32_2 = arith.constant 0 : i32
    return %c0_i32, %c0_i32_0, %c0_i32_1 : i32, i32, i32
  }
  func.func @transform_12(%arg0: i32) -> (i32, i32) {
    %c0_i32 = arith.constant 0 : i32
    %c0_i32_0 = arith.constant 0 : i32
    %c0_i32_1 = arith.constant 0 : i32
    return %c0_i32, %c0_i32_0 : i32, i32
  }
  func.func @transform_13(%arg0: i32) -> (i32, i32) {
    %c0_i32 = arith.constant 0 : i32
    %c0_i32_0 = arith.constant 0 : i32
    %c0_i32_1 = arith.constant 0 : i32
    return %c0_i32, %c0_i32_0 : i32, i32
  }
  func.func @transform_14(%arg0: i32) -> (i32, i32) {
    %c0_i32 = arith.constant 0 : i32
    %c0_i32_0 = arith.constant 0 : i32
    %c0_i32_1 = arith.constant 0 : i32
    return %c0_i32, %c0_i32_0 : i32, i32
  }
  func.func @transform_15(%arg0: i32) -> (i32, i32, i32) {
    %c0_i32 = arith.constant 0 : i32
    %c0_i32_0 = arith.constant 0 : i32
    %c0_i32_1 = arith.constant 0 : i32
    return %arg0, %c0_i32, %c0_i32_0 : i32, i32, i32
  }
}

</mosaic_0001>

<llo_original>
// kernel: tpu_custom_call.1
$region0: #{tpu_custom_call.1}
  #allocation0 [shape = 'u32[]', space=smem, size = 0x4, offset = 0x4, fixed_abs, tag = 'smem constant byte address 0x4 - core index']
  #allocation1 [shape = 'u32[144,128]{1,0:T(1,128)}', space=vmem, size = 0x12000, scoped, tag = 'internal scratch']
  %s0 = inlined_call_operand.vmem [shape: bf16[2,64,8], index: 0, kind: input, shape index: {}]
  %s1 = inlined_call_operand.vmem [shape: bf16[8,16], index: 1, kind: input, shape index: {}]
  %s2 = inlined_call_operand.vmem [shape: f32[1,16], index: 2, kind: input, shape index: {}]
  %s3 = inlined_call_operand.vmem [shape: bf16[8,8], index: 3, kind: input, shape index: {}]
  %s4 = inlined_call_operand.vmem [shape: f32[1,8], index: 4, kind: input, shape index: {}]
  %s5 = inlined_call_operand.vmem [shape: bf16[2,8,16], index: 5, kind: input, shape index: {}]
  %s6 = inlined_call_operand.vmem [shape: bf16[2,8,16], index: 6, kind: input, shape index: {}]
  %s7 = inlined_call_operand.vmem [shape: bf16[2,8,16], index: 7, kind: input, shape index: {}]
  %s8 = inlined_call_operand.vmem [shape: bf16[8,8,16], index: 8, kind: input, shape index: {}]
  %s9 = inlined_call_operand.vmem [shape: f32[64,8,16], index: 9, kind: input, shape index: {}]
  %s10 = inlined_call_operand.vmem [shape: bf16[16,64], index: 10, kind: input, shape index: {}]
  %s11 = inlined_call_operand.vmem [shape: bf16[2,16,8], index: 11, kind: input, shape index: {}]
  %s12 = inlined_call_operand.vmem [shape: f32[1,8], index: 12, kind: input, shape index: {}]
  %s13 = inlined_call_operand.vmem [shape: bf16[8,16], index: 13, kind: input, shape index: {}]
  %s14 = inlined_call_operand.vmem [shape: f32[1,16], index: 14, kind: input, shape index: {}]
  %s15 = inlined_call_operand.vmem [shape: f32[2,64,16], index: 15, kind: output, shape index: {}]
  %s16 = sld [smem:[#allocation0]]
  $region93: #{tpu_custom_call.1} parent=0
    _
  %s18 = ssub.s32 1, %s16
  %s19 = scalar_select 0, %s18, %s16
  loop: start=0, step=1, limit=4
  $region2: #{tpu_custom_call.1} parent=0 // loop_pre_header
    _
  $region3: #{tpu_custom_call.1} parent=0 // loop_header
    %s21 = sphi 0, %s25
    %p22 = scmp.ge.s32.totalorder %s21, 4
    %s31 = sphi 0, %s33
    %s34 = sphi 0, %s31
    %s35 = sphi 0, %s34
    %s51 = sphi 0, %s35
    %s55 = sphi 0, %s55
    %s57 = sphi 0, %s55
    %s58 = sphi 0, %s57
    %s72 = sphi 0, %s58
    %s76 = sphi 0, %s76
    %s78 = sphi 0, %s76
    %s79 = sphi 0, %s78
    %s93 = sphi 0, %s79
    %s97 = sphi 0, %s97
    %s99 = sphi 0, %s97
    %s100 = sphi 0, %s99
    %s114 = sphi 0, %s100
    %s118 = sphi 0, %s118
    %s120 = sphi 0, %s118
    %s121 = sphi 0, %s120
    %s135 = sphi 0, %s121
    %s139 = sphi 0, %s139
    %s141 = sphi 0, %s139
    %s142 = sphi 0, %s141
    %s156 = sphi 0, %s142
    %s160 = sphi 0, %s160
    %s162 = sphi 0, %s160
    %s163 = sphi 0, %s162
    %s177 = sphi 0, %s163
    %s181 = sphi 0, %s181
    %s183 = sphi 0, %s181
    %s184 = sphi 0, %s183
    %s198 = sphi 0, %s184
    %s202 = sphi 0, %s202
    %s204 = sphi 0, %s202
    %s205 = sphi 0, %s204
    %s219 = sphi 0, %s205
    %s223 = sphi 0, %s223
    %s225 = sphi 0, %s223
    %s226 = sphi 0, %s225
    %s240 = sphi 0, %s226
    %s244 = sphi 0, %s244
    %s246 = sphi 0, %s244
    %s247 = sphi 0, %s246
    %s261 = sphi 0, %s247
    %s265 = sphi 0, %s265
    %s267 = sphi 0, %s265
    %s268 = sphi 0, %s267
    %s282 = sphi 0, %s268
    %s286 = sphi 0, %s286
    %s288 = sphi 0, %s286
    %s289 = sphi 0, %s288
    %s303 = sphi 0, %s289
    %s307 = sphi 0, %s307
    %s309 = sphi 0, %s307
    %s310 = sphi 0, %s309
    %s324 = sphi 0, %s310
    %s328 = sphi 0, %s328
    %s330 = sphi 0, %s328
    %s331 = sphi 0, %s330
    %s345 = sphi 0, %s331
    %s351 = sphi 0, %s353
    %s354 = sphi 0, %s351
    %s355 = sphi 0, %s354
    %s371 = sphi 0, %s355
  $region4: #{tpu_custom_call.1} parent=0 // loop_header_branch
    %24 = sbr.rel (%p22) target = $region8
  $region5: #{tpu_custom_call.1} parent=0 // loop_body
    %s26 = ssub.s32 %s21, 1
    %s27 = ssub.s32 %s21, 2
    %s28 = sadd.s32 %s21, 1
    %s29 = ssub.s32 %s21, %s28
    %p30 = scmp.eq.s32.totalorder %s29, 0
    %s32 = sadd.s32 %s31, 1
    %s33 = scalar_select %p30, %s31, %s32
    %p36 = pneg %p30
    %p37 = scmp.eq.s32.totalorder %s21, 1
    %p38 = por %p36, %p37
    %p39 = scmp.ne.s32.totalorder %s31, %s34
    %p40 = scmp.eq.s32.totalorder %s21, 0
    %p41 = por %p39, %p40
    %p42 = scmp.ne.s32.totalorder %s31, %s34
    %p43 = scmp.eq.s32.totalorder %s26, 1
    %p44 = por %p42, %p43
    %p45 = scmp.ne.s32.totalorder %s34, %s35
    %p46 = scmp.eq.s32.totalorder %s26, 0
    %p47 = por %p45, %p46
    %p48 = scmp.ne.s32.totalorder %s34, %s35
    %p49 = scmp.eq.s32.totalorder %s27, 1
    %p50 = por %p48, %p49
    %p52 = scmp.ne.s32.totalorder %s35, %s51
    %p53 = scmp.eq.s32.totalorder %s27, 0
    %p54 = por %p52, %p53
    %s56 = sadd.s32 %s55, 1
    %p59 = scmp.eq.s32.totalorder %s21, 1
    %p60 = scmp.ne.s32.totalorder %s55, %s57
    %p61 = scmp.eq.s32.totalorder %s21, 0
    %p62 = por %p60, %p61
    %p63 = scmp.ne.s32.totalorder %s55, %s57
    %p64 = scmp.eq.s32.totalorder %s26, 1
    %p65 = por %p63, %p64
    %p66 = scmp.ne.s32.totalorder %s57, %s58
    %p67 = scmp.eq.s32.totalorder %s26, 0
    %p68 = por %p66, %p67
    %p69 = scmp.ne.s32.totalorder %s57, %s58
    %p70 = scmp.eq.s32.totalorder %s27, 1
    %p71 = por %p69, %p70
    %p73 = scmp.ne.s32.totalorder %s58, %s72
    %p74 = scmp.eq.s32.totalorder %s27, 0
    %p75 = por %p73, %p74
    %s77 = sadd.s32 %s76, 1
    %p80 = scmp.eq.s32.totalorder %s21, 1
    %p81 = scmp.ne.s32.totalorder %s76, %s78
    %p82 = scmp.eq.s32.totalorder %s21, 0
    %p83 = por %p81, %p82
    %p84 = scmp.ne.s32.totalorder %s76, %s78
    %p85 = scmp.eq.s32.totalorder %s26, 1
    %p86 = por %p84, %p85
    %p87 = scmp.ne.s32.totalorder %s78, %s79
    %p88 = scmp.eq.s32.totalorder %s26, 0
    %p89 = por %p87, %p88
    %p90 = scmp.ne.s32.totalorder %s78, %s79
    %p91 = scmp.eq.s32.totalorder %s27, 1
    %p92 = por %p90, %p91
    %p94 = scmp.ne.s32.totalorder %s79, %s93
    %p95 = scmp.eq.s32.totalorder %s27, 0
    %p96 = por %p94, %p95
    %s98 = sadd.s32 %s97, 1
    %p101 = scmp.eq.s32.totalorder %s21, 1
    %p102 = scmp.ne.s32.totalorder %s97, %s99
    %p103 = scmp.eq.s32.totalorder %s21, 0
    %p104 = por %p102, %p103
    %p105 = scmp.ne.s32.totalorder %s97, %s99
    %p106 = scmp.eq.s32.totalorder %s26, 1
    %p107 = por %p105, %p106
    %p108 = scmp.ne.s32.totalorder %s99, %s100
    %p109 = scmp.eq.s32.totalorder %s26, 0
    %p110 = por %p108, %p109
    %p111 = scmp.ne.s32.totalorder %s99, %s100
    %p112 = scmp.eq.s32.totalorder %s27, 1
    %p113 = por %p111, %p112
    %p115 = scmp.ne.s32.totalorder %s100, %s114
    %p116 = scmp.eq.s32.totalorder %s27, 0
    %p117 = por %p115, %p116
    %s119 = sadd.s32 %s118, 1
    %p122 = scmp.eq.s32.totalorder %s21, 1
    %p123 = scmp.ne.s32.totalorder %s118, %s120
    %p124 = scmp.eq.s32.totalorder %s21, 0
    %p125 = por %p123, %p124
    %p126 = scmp.ne.s32.totalorder %s118, %s120
    %p127 = scmp.eq.s32.totalorder %s26, 1
    %p128 = por %p126, %p127
    %p129 = scmp.ne.s32.totalorder %s120, %s121
    %p130 = scmp.eq.s32.totalorder %s26, 0
    %p131 = por %p129, %p130
    %p132 = scmp.ne.s32.totalorder %s120, %s121
    %p133 = scmp.eq.s32.totalorder %s27, 1
    %p134 = por %p132, %p133
    %p136 = scmp.ne.s32.totalorder %s121, %s135
    %p137 = scmp.eq.s32.totalorder %s27, 0
    %p138 = por %p136, %p137
    %s140 = sadd.s32 %s139, 1
    %p143 = scmp.eq.s32.totalorder %s21, 1
    %p144 = scmp.ne.s32.totalorder %s139, %s141
    %p145 = scmp.eq.s32.totalorder %s21, 0
    %p146 = por %p144, %p145
    %p147 = scmp.ne.s32.totalorder %s139, %s141
    %p148 = scmp.eq.s32.totalorder %s26, 1
    %p149 = por %p147, %p148
    %p150 = scmp.ne.s32.totalorder %s141, %s142
    %p151 = scmp.eq.s32.totalorder %s26, 0
    %p152 = por %p150, %p151
    %p153 = scmp.ne.s32.totalorder %s141, %s142
    %p154 = scmp.eq.s32.totalorder %s27, 1
    %p155 = por %p153, %p154
    %p157 = scmp.ne.s32.totalorder %s142, %s156
    %p158 = scmp.eq.s32.totalorder %s27, 0
    %p159 = por %p157, %p158
    %s161 = sadd.s32 %s160, 1
    %p164 = scmp.eq.s32.totalorder %s21, 1
    %p165 = scmp.ne.s32.totalorder %s160, %s162
    %p166 = scmp.eq.s32.totalorder %s21, 0
    %p167 = por %p165, %p166
    %p168 = scmp.ne.s32.totalorder %s160, %s162
    %p169 = scmp.eq.s32.totalorder %s26, 1
    %p170 = por %p168, %p169
    %p171 = scmp.ne.s32.totalorder %s162, %s163
    %p172 = scmp.eq.s32.totalorder %s26, 0
    %p173 = por %p171, %p172
    %p174 = scmp.ne.s32.totalorder %s162, %s163
    %p175 = scmp.eq.s32.totalorder %s27, 1
    %p176 = por %p174, %p175
    %p178 = scmp.ne.s32.totalorder %s163, %s177
    %p179 = scmp.eq.s32.totalorder %s27, 0
    %p180 = por %p178, %p179
    %s182 = sadd.s32 %s181, 1
    %p185 = scmp.eq.s32.totalorder %s21, 1
    %p186 = scmp.ne.s32.totalorder %s181, %s183
    %p187 = scmp.eq.s32.totalorder %s21, 0
    %p188 = por %p186, %p187
    %p189 = scmp.ne.s32.totalorder %s181, %s183
    %p190 = scmp.eq.s32.totalorder %s26, 1
    %p191 = por %p189, %p190
    %p192 = scmp.ne.s32.totalorder %s183, %s184
    %p193 = scmp.eq.s32.totalorder %s26, 0
    %p194 = por %p192, %p193
    %p195 = scmp.ne.s32.totalorder %s183, %s184
    %p196 = scmp.eq.s32.totalorder %s27, 1
    %p197 = por %p195, %p196
    %p199 = scmp.ne.s32.totalorder %s184, %s198
    %p200 = scmp.eq.s32.totalorder %s27, 0
    %p201 = por %p199, %p200
    %s203 = sadd.s32 %s202, 1
    %p206 = scmp.eq.s32.totalorder %s21, 1
    %p207 = scmp.ne.s32.totalorder %s202, %s204
    %p208 = scmp.eq.s32.totalorder %s21, 0
    %p209 = por %p207, %p208
    %p210 = scmp.ne.s32.totalorder %s202, %s204
    %p211 = scmp.eq.s32.totalorder %s26, 1
    %p212 = por %p210, %p211
    %p213 = scmp.ne.s32.totalorder %s204, %s205
    %p214 = scmp.eq.s32.totalorder %s26, 0
    %p215 = por %p213, %p214
    %p216 = scmp.ne.s32.totalorder %s204, %s205
    %p217 = scmp.eq.s32.totalorder %s27, 1
    %p218 = por %p216, %p217
    %p220 = scmp.ne.s32.totalorder %s205, %s219
    %p221 = scmp.eq.s32.totalorder %s27, 0
    %p222 = por %p220, %p221
    %s224 = sadd.s32 %s223, 1
    %p227 = scmp.eq.s32.totalorder %s21, 1
    %p228 = scmp.ne.s32.totalorder %s223, %s225
    %p229 = scmp.eq.s32.totalorder %s21, 0
    %p230 = por %p228, %p229
    %p231 = scmp.ne.s32.totalorder %s223, %s225
    %p232 = scmp.eq.s32.totalorder %s26, 1
    %p233 = por %p231, %p232
    %p234 = scmp.ne.s32.totalorder %s225, %s226
    %p235 = scmp.eq.s32.totalorder %s26, 0
    %p236 = por %p234, %p235
    %p237 = scmp.ne.s32.totalorder %s225, %s226
    %p238 = scmp.eq.s32.totalorder %s27, 1
    %p239 = por %p237, %p238
    %p241 = scmp.ne.s32.totalorder %s226, %s240
    %p242 = scmp.eq.s32.totalorder %s27, 0
    %p243 = por %p241, %p242
    %s245 = sadd.s32 %s244, 1
    %p248 = scmp.eq.s32.totalorder %s21, 1
    %p249 = scmp.ne.s32.totalorder %s244, %s246
    %p250 = scmp.eq.s32.totalorder %s21, 0
    %p251 = por %p249, %p250
    %p252 = scmp.ne.s32.totalorder %s244, %s246
    %p253 = scmp.eq.s32.totalorder %s26, 1
    %p254 = por %p252, %p253
    %p255 = scmp.ne.s32.totalorder %s246, %s247
    %p256 = scmp.eq.s32.totalorder %s26, 0
    %p257 = por %p255, %p256
    %p258 = scmp.ne.s32.totalorder %s246, %s247
    %p259 = scmp.eq.s32.totalorder %s27, 1
    %p260 = por %p258, %p259
    %p262 = scmp.ne.s32.totalorder %s247, %s261
    %p263 = scmp.eq.s32.totalorder %s27, 0
    %p264 = por %p262, %p263
    %s266 = sadd.s32 %s265, 1
    %p269 = scmp.eq.s32.totalorder %s21, 1
    %p270 = scmp.ne.s32.totalorder %s265, %s267
    %p271 = scmp.eq.s32.totalorder %s21, 0
    %p272 = por %p270, %p271
    %p273 = scmp.ne.s32.totalorder %s265, %s267
    %p274 = scmp.eq.s32.totalorder %s26, 1
    %p275 = por %p273, %p274
    %p276 = scmp.ne.s32.totalorder %s267, %s268
    %p277 = scmp.eq.s32.totalorder %s26, 0
    %p278 = por %p276, %p277
    %p279 = scmp.ne.s32.totalorder %s267, %s268
    %p280 = scmp.eq.s32.totalorder %s27, 1
    %p281 = por %p279, %p280
    %p283 = scmp.ne.s32.totalorder %s268, %s282
    %p284 = scmp.eq.s32.totalorder %s27, 0
    %p285 = por %p283, %p284
    %s287 = sadd.s32 %s286, 1
    %p290 = scmp.eq.s32.totalorder %s21, 1
    %p291 = scmp.ne.s32.totalorder %s286, %s288
    %p292 = scmp.eq.s32.totalorder %s21, 0
    %p293 = por %p291, %p292
    %p294 = scmp.ne.s32.totalorder %s286, %s288
    %p295 = scmp.eq.s32.totalorder %s26, 1
    %p296 = por %p294, %p295
    %p297 = scmp.ne.s32.totalorder %s288, %s289
    %p298 = scmp.eq.s32.totalorder %s26, 0
    %p299 = por %p297, %p298
    %p300 = scmp.ne.s32.totalorder %s288, %s289
    %p301 = scmp.eq.s32.totalorder %s27, 1
    %p302 = por %p300, %p301
    %p304 = scmp.ne.s32.totalorder %s289, %s303
    %p305 = scmp.eq.s32.totalorder %s27, 0
    %p306 = por %p304, %p305
    %s308 = sadd.s32 %s307, 1
    %p311 = scmp.eq.s32.totalorder %s21, 1
    %p312 = scmp.ne.s32.totalorder %s307, %s309
    %p313 = scmp.eq.s32.totalorder %s21, 0
    %p314 = por %p312, %p313
    %p315 = scmp.ne.s32.totalorder %s307, %s309
    %p316 = scmp.eq.s32.totalorder %s26, 1
    %p317 = por %p315, %p316
    %p318 = scmp.ne.s32.totalorder %s309, %s310
    %p319 = scmp.eq.s32.totalorder %s26, 0
    %p320 = por %p318, %p319
    %p321 = scmp.ne.s32.totalorder %s309, %s310
    %p322 = scmp.eq.s32.totalorder %s27, 1
    %p323 = por %p321, %p322
    %p325 = scmp.ne.s32.totalorder %s310, %s324
    %p326 = scmp.eq.s32.totalorder %s27, 0
    %p327 = por %p325, %p326
    %s329 = sadd.s32 %s328, 1
    %p332 = scmp.eq.s32.totalorder %s21, 1
    %p333 = scmp.ne.s32.totalorder %s328, %s330
    %p334 = scmp.eq.s32.totalorder %s21, 0
    %p335 = por %p333, %p334
    %p336 = scmp.ne.s32.totalorder %s328, %s330
    %p337 = scmp.eq.s32.totalorder %s26, 1
    %p338 = por %p336, %p337
    %p339 = scmp.ne.s32.totalorder %s330, %s331
    %p340 = scmp.eq.s32.totalorder %s26, 0
    %p341 = por %p339, %p340
    %p342 = scmp.ne.s32.totalorder %s330, %s331
    %p343 = scmp.eq.s32.totalorder %s27, 1
    %p344 = por %p342, %p343
    %p346 = scmp.ne.s32.totalorder %s331, %s345
    %p347 = scmp.eq.s32.totalorder %s27, 0
    %p348 = por %p346, %p347
    %s349 = ssub.s32 %s21, %s28
    %p350 = scmp.eq.s32.totalorder %s349, 0
    %s352 = sadd.s32 %s351, 1
    %s353 = scalar_select %p350, %s351, %s352
    %p356 = pneg %p350
    %p357 = scmp.eq.s32.totalorder %s21, 1
    %p358 = por %p356, %p357
    %p359 = scmp.ne.s32.totalorder %s351, %s354
    %p360 = scmp.eq.s32.totalorder %s21, 0
    %p361 = por %p359, %p360
    %p362 = scmp.ne.s32.totalorder %s351, %s354
    %p363 = scmp.eq.s32.totalorder %s26, 1
    %p364 = por %p362, %p363
    %p365 = scmp.ne.s32.totalorder %s354, %s355
    %p366 = scmp.eq.s32.totalorder %s26, 0
    %p367 = por %p365, %p366
    %p368 = scmp.ne.s32.totalorder %s354, %s355
    %p369 = scmp.eq.s32.totalorder %s27, 1
    %p370 = por %p368, %p369
    %p372 = scmp.ne.s32.totalorder %s355, %s371
    %p373 = scmp.eq.s32.totalorder %s27, 0
    %p374 = por %p372, %p373
    %p375 = scmp.le.s32.totalorder 1, %s21
    %p376 = scmp.lt.s32.totalorder %s21, 3
    %p377 = pnand %p375, %p376
    %p378 = pneg %p377
    // Predicated region
    $region9: #{tpu_custom_call.1} parent=5 // pred_check
      _
    $region10: #{tpu_custom_call.1} parent=5 // pred_check_branch
      %380 = sbr.rel (%p377) target = $region12
    $region11: #{tpu_custom_call.1} parent=5 // pred_region
      %s381 = ssub.s32 %s21, 1
      // Predicated region
      $region13: #{tpu_custom_call.1} parent=11 // pred_check
        %p382 = pneg %p68
      $region14: #{tpu_custom_call.1} parent=11 // pred_check_branch
        %384 = sbr.rel (%p382) target = $region16
      $region15: #{tpu_custom_call.1} parent=11 // pred_region
        _
      $region16: #{tpu_custom_call.1} parent=11 // pred_fallthru
        _
      // Predicated region
      $region17: #{tpu_custom_call.1} parent=11 // pred_check
        %p385 = pneg %p89
      $region18: #{tpu_custom_call.1} parent=11 // pred_check_branch
        %387 = sbr.rel (%p385) target = $region20
      $region19: #{tpu_custom_call.1} parent=11 // pred_region
        _
      $region20: #{tpu_custom_call.1} parent=11 // pred_fallthru
        _
      // Predicated region
      $region21: #{tpu_custom_call.1} parent=11 // pred_check
        %p388 = pneg %p110
      $region22: #{tpu_custom_call.1} parent=11 // pred_check_branch
        %390 = sbr.rel (%p388) target = $region24
      $region23: #{tpu_custom_call.1} parent=11 // pred_region
        _
      $region24: #{tpu_custom_call.1} parent=11 // pred_fallthru
        _
      // Predicated region
      $region25: #{tpu_custom_call.1} parent=11 // pred_check
        %p391 = pneg %p131
      $region26: #{tpu_custom_call.1} parent=11 // pred_check_branch
        %393 = sbr.rel (%p391) target = $region28
      $region27: #{tpu_custom_call.1} parent=11 // pred_region
        _
      $region28: #{tpu_custom_call.1} parent=11 // pred_fallthru
        _
      // Predicated region
      $region29: #{tpu_custom_call.1} parent=11 // pred_check
        %p394 = pneg %p152
      $region30: #{tpu_custom_call.1} parent=11 // pred_check_branch
        %396 = sbr.rel (%p394) target = $region32
      $region31: #{tpu_custom_call.1} parent=11 // pred_region
        _
      $region32: #{tpu_custom_call.1} parent=11 // pred_fallthru
        _
      // Predicated region
      $region33: #{tpu_custom_call.1} parent=11 // pred_check
        %p397 = pneg %p173
      $region34: #{tpu_custom_call.1} parent=11 // pred_check_branch
        %399 = sbr.rel (%p397) target = $region36
      $region35: #{tpu_custom_call.1} parent=11 // pred_region
        _
      $region36: #{tpu_custom_call.1} parent=11 // pred_fallthru
        _
      // Predicated region
      $region37: #{tpu_custom_call.1} parent=11 // pred_check
        %p400 = pneg %p194
      $region38: #{tpu_custom_call.1} parent=11 // pred_check_branch
        %402 = sbr.rel (%p400) target = $region40
      $region39: #{tpu_custom_call.1} parent=11 // pred_region
        _
      $region40: #{tpu_custom_call.1} parent=11 // pred_fallthru
        _
      // Predicated region
      $region41: #{tpu_custom_call.1} parent=11 // pred_check
        %p403 = pneg %p215
      $region42: #{tpu_custom_call.1} parent=11 // pred_check_branch
        %405 = sbr.rel (%p403) target = $region44
      $region43: #{tpu_custom_call.1} parent=11 // pred_region
        _
      $region44: #{tpu_custom_call.1} parent=11 // pred_fallthru
        _
      // Predicated region
      $region45: #{tpu_custom_call.1} parent=11 // pred_check
        %p406 = pneg %p236
      $region46: #{tpu_custom_call.1} parent=11 // pred_check_branch
        %408 = sbr.rel (%p406) target = $region48
      $region47: #{tpu_custom_call.1} parent=11 // pred_region
        _
      $region48: #{tpu_custom_call.1} parent=11 // pred_fallthru
        _
      // Predicated region
      $region49: #{tpu_custom_call.1} parent=11 // pred_check
        %p409 = pneg %p257
      $region50: #{tpu_custom_call.1} parent=11 // pred_check_branch
        %411 = sbr.rel (%p409) target = $region52
      $region51: #{tpu_custom_call.1} parent=11 // pred_region
        _
      $region52: #{tpu_custom_call.1} parent=11 // pred_fallthru
        _
      // Predicated region
      $region53: #{tpu_custom_call.1} parent=11 // pred_check
        %p412 = pneg %p278
      $region54: #{tpu_custom_call.1} parent=11 // pred_check_branch
        %414 = sbr.rel (%p412) target = $region56
      $region55: #{tpu_custom_call.1} parent=11 // pred_region
        _
      $region56: #{tpu_custom_call.1} parent=11 // pred_fallthru
        _
      // Predicated region
      $region57: #{tpu_custom_call.1} parent=11 // pred_check
        %p415 = pneg %p299
      $region58: #{tpu_custom_call.1} parent=11 // pred_check_branch
        %417 = sbr.rel (%p415) target = $region60
      $region59: #{tpu_custom_call.1} parent=11 // pred_region
        _
      $region60: #{tpu_custom_call.1} parent=11 // pred_fallthru
        _
      // Predicated region
      $region61: #{tpu_custom_call.1} parent=11 // pred_check
        %p418 = pneg %p320
      $region62: #{tpu_custom_call.1} parent=11 // pred_check_branch
        %420 = sbr.rel (%p418) target = $region64
      $region63: #{tpu_custom_call.1} parent=11 // pred_region
        _
      $region64: #{tpu_custom_call.1} parent=11 // pred_fallthru
        _
      // Predicated region
      $region65: #{tpu_custom_call.1} parent=11 // pred_check
        %p421 = pneg %p341
      $region66: #{tpu_custom_call.1} parent=11 // pred_check_branch
        %423 = sbr.rel (%p421) target = $region68
      $region67: #{tpu_custom_call.1} parent=11 // pred_region
        _
      $region68: #{tpu_custom_call.1} parent=11 // pred_fallthru
        _
    $region12: #{tpu_custom_call.1} parent=5 // pred_fallthru
      _
    %p424 = scmp.lt.s32.totalorder %s21, 2
    // Predicated region
    $region69: #{tpu_custom_call.1} parent=5 // pred_check
      %p425 = pneg %p424
    $region70: #{tpu_custom_call.1} parent=5 // pred_check_branch
      %427 = sbr.rel (%p425) target = $region72
    $region71: #{tpu_custom_call.1} parent=5 // pred_region
      // Predicated region
      $region73: #{tpu_custom_call.1} parent=71 // pred_check
        %p428 = pneg %p41
      $region74: #{tpu_custom_call.1} parent=71 // pred_check_branch
        %430 = sbr.rel (%p428) target = $region76
      $region75: #{tpu_custom_call.1} parent=71 // pred_region
        %p431 = scmp.lt.s32.totalorder %s21, 1
        %s432 = scalar_select %p431, %s21, 1
        %s433 = smul.addr %s432, 8
        %s434 = smul.addr %s433, 4
        %s435 = scalar_lea.vmem %s0, %s434
      $region76: #{tpu_custom_call.1} parent=71 // pred_fallthru
        _
    $region72: #{tpu_custom_call.1} parent=5 // pred_fallthru
      _
    %p436 = scmp.le.s32.totalorder 1, %s21
    %p437 = scmp.lt.s32.totalorder %s21, 3
    %p438 = pnand %p436, %p437
    %p439 = pneg %p438
    // Predicated region
    $region77: #{tpu_custom_call.1} parent=5 // pred_check
      _
    $region78: #{tpu_custom_call.1} parent=5 // pred_check_branch
      %441 = sbr.rel (%p438) target = $region80
    $region79: #{tpu_custom_call.1} parent=5 // pred_region
      %s442 = ssub.s32 %s21, 1
      %p443 = scmp.lt.s32.totalorder %s26, 1
      %s444 = scalar_select %p443, %s26, 1
      %s445 = smul.addr %s444, 8
      %s446 = smul.addr %s445, 4
      %s447 = scalar_lea.vmem %s0, %s446
      %p448 = pneg %p47
      %p449 = pneg %p44
      %p450 = pneg %p68
      %p451 = pneg %p65
      %p452 = pneg %p89
      %p453 = pneg %p86
      %p454 = pneg %p110
      %p455 = pneg %p107
      %p456 = pneg %p131
      %p457 = pneg %p128
      %p458 = pneg %p152
      %p459 = pneg %p149
      %p460 = pneg %p173
      %p461 = pneg %p170
      %p462 = pneg %p194
      %p463 = pneg %p191
      %p464 = pneg %p215
      %p465 = pneg %p212
      %p466 = pneg %p236
      %p467 = pneg %p233
      %p468 = pneg %p257
      %p469 = pneg %p254
      %p470 = pneg %p278
      %p471 = pneg %p275
      %p472 = pneg %p299
      %p473 = pneg %p296
      %p474 = pneg %p320
      %p475 = pneg %p317
      %p476 = pneg %p341
      %p477 = pneg %p338
      %p478 = pneg %p367
      %p479 = pneg %p364
      %p480 = scmp.lt.s32.totalorder %s26, 1
      %s481 = scalar_select %p480, %s26, 1
      %s482 = smul.addr %s481, 8
      %s483 = smul.addr %s482, 8
      %s484 = scalar_lea.vmem %s15, %s483
      %p485 = scmp.lt.s32.totalorder %s26, 1
      %s486 = scalar_select %p485, %s26, 1
      %s487 = smul.addr %s486, 8
      %s488 = smul.addr %s487, 4
      %s489 = scalar_lea.vmem %s0, %s488
      %p490 = scmp.lt.s32.totalorder %s26, 1
      %s491 = scalar_select %p490, %s26, 1
      %s492 = smul.addr %s491, 8
      %s493 = smul.addr %s492, 8
      %s494 = scalar_lea.vmem %s15, %s493
      %v496 = vld [vmem:[%s489] sm:$0xf]
      %v497 = vld [vmem:[%s489 + $0x4] sm:$0xf]
      %v498 = vld [vmem:[%s489 + $0x8] sm:$0xf]
      %v499 = vld [vmem:[%s489 + $0xc] sm:$0xf]
      %v500 = vld [vmem:[%s489 + $0x10] sm:$0xf]
      %v501 = vld [vmem:[%s489 + $0x14] sm:$0xf]
      %v502 = vld [vmem:[%s489 + $0x18] sm:$0xf]
      %v503 = vld [vmem:[%s489 + $0x1c] sm:$0xf]
      %v504 = vld [vmem:[%s1] sm:$0xf]
      %v505 = vld [vmem:[%s2] sm:$0x1]
      %v507 = vlaneseq
      %v508 = vshrl.u32 %v507, 7
      %v509 = vsub.s32 0, %v508
      %v510 = vrot.slane %v505, %v509
      %v520 = vunpack.c.l.b16 %v496
      %v521 = vunpack.c.l.b16 %v497
      %v522 = vunpack.c.l.b16 %v498
      %v523 = vunpack.c.l.b16 %v499
      %v524 = vunpack.c.l.b16 %v500
      %v525 = vunpack.c.l.b16 %v501
      %v526 = vunpack.c.l.b16 %v502
      %v527 = vunpack.c.l.b16 %v503
      %v528 = vpack.c.b16 %v521, %v520
      %v529 = vpack.c.b16 %v523, %v522
      %v530 = vpack.c.b16 %v525, %v524
      %v531 = vpack.c.b16 %v527, %v526
      %vm532 = vcmask 64512
      %v534 = vsel %vm532, %v528, 0
      %v537 = vsel %vm532, %v529, 0
      %v540 = vsel %vm532, %v530, 0
      %v543 = vsel %vm532, %v531, 0
      %vm545 = vcmask 1043456
      %v547 = vsel %vm545, %v504, 0
      %549 = vmatprep.subr.bf16.mxu0 0
      %550 = vmatpush1.bf16.msra.mxu0 %v547
      %551 = vmatprep.subr.bf16.mxu0 0
      %552 = vmatpush1.bf16.msra.mxu0 0
      %553 = vmatprep.subr.bf16.mxu0 0
      %554 = vmatpush1.bf16.msra.mxu0 0
      %555 = vmatprep.subr.bf16.mxu0 0
      %556 = vmatpush1.bf16.msra.mxu0 0
      %557 = vmatprep.subr.bf16.mxu0 0
      %558 = vmatpush1.bf16.msra.mxu0 0
      %559 = vmatprep.subr.bf16.mxu0 0
      %560 = vmatpush1.bf16.msra.mxu0 0
      %561 = vmatprep.subr.bf16.mxu0 0
      %562 = vmatpush1.bf16.msra.mxu0 0
      %563 = vmatprep.subr.bf16.mxu0 0
      %564 = vmatpush1.bf16.msra.mxu0 0
      %565 = vmatprep.subr.bf16.mxu0 0
      %566 = vmatpush1.bf16.msra.mxu0 0
      %567 = vmatprep.subr.bf16.mxu0 0
      %568 = vmatpush1.bf16.msra.mxu0 0
      %569 = vmatprep.subr.bf16.mxu0 0
      %570 = vmatpush1.bf16.msra.mxu0 0
      %571 = vmatprep.subr.bf16.mxu0 0
      %572 = vmatpush1.bf16.msra.mxu0 0
      %573 = vmatprep.subr.bf16.mxu0 0
      %574 = vmatpush1.bf16.msra.mxu0 0
      %575 = vmatprep.subr.bf16.mxu0 0
      %576 = vmatpush1.bf16.msra.mxu0 0
      %577 = vmatprep.subr.bf16.mxu0 0
      %578 = vmatpush1.bf16.msra.mxu0 0
      %579 = vmatprep.subr.bf16.mxu0 0
      %580 = vmatpush1.bf16.msra.mxu0 0
      %581 = vmatprep.mubr.bf16.mxu0 0
      %582 = vmatmul.mubr.bf16.gmra.mrb[0].mxu0 %v534
      %v583 = vpop.f32.mrb[0].mxu0
      %v584 = vadd.f32 %v510, %v583
      %v585 = vpop.f32.mrb[0].mxu0
      %v586 = vpop.f32.mrb[0].mxu0
      %v587 = vadd.f32 %v510, %v586
      %v588 = vpop.f32.mrb[0].mxu0
      %589 = vmatprep.mubr.bf16.mxu0 0
      %590 = vmatmul.mubr.bf16.gmra.mrb[0].mxu0 %v537
      %v591 = vpop.f32.mrb[0].mxu0
      %v592 = vadd.f32 %v510, %v591
      %v593 = vpop.f32.mrb[0].mxu0
      %v594 = vpop.f32.mrb[0].mxu0
      %v595 = vadd.f32 %v510, %v594
      %v596 = vpop.f32.mrb[0].mxu0
      %597 = vmatprep.mubr.bf16.mxu0 0
      %598 = vmatmul.mubr.bf16.gmra.mrb[0].mxu0 %v540
      %v599 = vpop.f32.mrb[0].mxu0
      %v600 = vadd.f32 %v510, %v599
      %v601 = vpop.f32.mrb[0].mxu0
      %v602 = vpop.f32.mrb[0].mxu0
      %v603 = vadd.f32 %v510, %v602
      %v604 = vpop.f32.mrb[0].mxu0
      %605 = vmatprep.mubr.bf16.mxu0 0
      %606 = vmatmul.mubr.bf16.gmra.mrb[0].mxu0 %v543
      %v607 = vpop.f32.mrb[0].mxu0
      %v608 = vadd.f32 %v510, %v607
      %v609 = vpop.f32.mrb[0].mxu0
      %v610 = vpop.f32.mrb[0].mxu0
      %v611 = vadd.f32 %v510, %v610
      %v612 = vpop.f32.mrb[0].mxu0
      %613 = vdwg.mxu0
      %v614 = vmax.f32 %v584, 0.0
      %v615 = vmax.f32 %v587, 0.0
      %v616 = vmax.f32 %v592, 0.0
      %v617 = vmax.f32 %v595, 0.0
      %v618 = vmax.f32 %v600, 0.0
      %v619 = vmax.f32 %v603, 0.0
      %v620 = vmax.f32 %v608, 0.0
      %v621 = vmax.f32 %v611, 0.0
      %v622 = vld [vmem:[%s3] sm:$0xf]
      %v623 = vld [vmem:[%s4] sm:$0x1]
      %v625 = vlaneseq
      %v626 = vshrl.u32 %v625, 7
      %v627 = vsub.s32 0, %v626
      %v628 = vrot.slane %v623, %v627
      %v631 = vsel %vm545, %v622, 0
      %633 = vmatprep.subr.bf16.mxu0 0
      %634 = vmatpush1.bf16.msra.mxu0 %v631
      %635 = vmatprep.subr.bf16.mxu0 0
      %636 = vmatpush1.bf16.msra.mxu0 0
      %637 = vmatprep.subr.bf16.mxu0 0
      %638 = vmatpush1.bf16.msra.mxu0 0
      %639 = vmatprep.subr.bf16.mxu0 0
      %640 = vmatpush1.bf16.msra.mxu0 0
      %641 = vmatprep.subr.bf16.mxu0 0
      %642 = vmatpush1.bf16.msra.mxu0 0
      %643 = vmatprep.subr.bf16.mxu0 0
      %644 = vmatpush1.bf16.msra.mxu0 0
      %645 = vmatprep.subr.bf16.mxu0 0
      %646 = vmatpush1.bf16.msra.mxu0 0
      %647 = vmatprep.subr.bf16.mxu0 0
      %648 = vmatpush1.bf16.msra.mxu0 0
      %649 = vmatprep.subr.bf16.mxu0 0
      %650 = vmatpush1.bf16.msra.mxu0 0
      %651 = vmatprep.subr.bf16.mxu0 0
      %652 = vmatpush1.bf16.msra.mxu0 0
      %653 = vmatprep.subr.bf16.mxu0 0
      %654 = vmatpush1.bf16.msra.mxu0 0
      %655 = vmatprep.subr.bf16.mxu0 0
      %656 = vmatpush1.bf16.msra.mxu0 0
      %657 = vmatprep.subr.bf16.mxu0 0
      %658 = vmatpush1.bf16.msra.mxu0 0
      %659 = vmatprep.subr.bf16.mxu0 0
      %660 = vmatpush1.bf16.msra.mxu0 0
      %661 = vmatprep.subr.bf16.mxu0 0
      %662 = vmatpush1.bf16.msra.mxu0 0
      %663 = vmatprep.subr.bf16.mxu0 0
      %664 = vmatpush1.bf16.msra.mxu0 0
      %665 = vmatprep.mubr.bf16.mxu0 0
      %666 = vmatmul.mubr.bf16.gmra.mrb[0].mxu0 %v534
      %v667 = vpop.f32.mrb[0].mxu0
      %v668 = vadd.f32 %v628, %v667
      %v669 = vpop.f32.mrb[0].mxu0
      %v670 = vpop.f32.mrb[0].mxu0
      %v671 = vadd.f32 %v628, %v670
      %v672 = vpop.f32.mrb[0].mxu0
      %673 = vmatprep.mubr.bf16.mxu0 0
      %674 = vmatmul.mubr.bf16.gmra.mrb[0].mxu0 %v537
      %v675 = vpop.f32.mrb[0].mxu0
      %v676 = vadd.f32 %v628, %v675
      %v677 = vpop.f32.mrb[0].mxu0
      %v678 = vpop.f32.mrb[0].mxu0
      %v679 = vadd.f32 %v628, %v678
      %v680 = vpop.f32.mrb[0].mxu0
      %681 = vmatprep.mubr.bf16.mxu0 0
      %682 = vmatmul.mubr.bf16.gmra.mrb[0].mxu0 %v540
      %v683 = vpop.f32.mrb[0].mxu0
      %v684 = vadd.f32 %v628, %v683
      %v685 = vpop.f32.mrb[0].mxu0
      %v686 = vpop.f32.mrb[0].mxu0
      %v687 = vadd.f32 %v628, %v686
      %v688 = vpop.f32.mrb[0].mxu0
      %689 = vmatprep.mubr.bf16.mxu0 0
      %690 = vmatmul.mubr.bf16.gmra.mrb[0].mxu0 %v543
      %v691 = vpop.f32.mrb[0].mxu0
      %v692 = vadd.f32 %v628, %v691
      %v693 = vpop.f32.mrb[0].mxu0
      %v694 = vpop.f32.mrb[0].mxu0
      %v695 = vadd.f32 %v628, %v694
      %v696 = vpop.f32.mrb[0].mxu0
      %697 = vdwg.mxu0
      %v698 = vmax.f32 %v668, 0.0
      %v699 = vmax.f32 %v671, 0.0
      %v700 = vmax.f32 %v676, 0.0
      %v701 = vmax.f32 %v679, 0.0
      %v702 = vmax.f32 %v684, 0.0
      %v703 = vmax.f32 %v687, 0.0
      %v704 = vmax.f32 %v692, 0.0
      %v705 = vmax.f32 %v695, 0.0
      %v706 = vpack.c.bf16 %v699, %v698
      %v707 = vpack.c.bf16 %v701, %v700
      %v708 = vpack.c.bf16 %v703, %v702
      %v709 = vpack.c.bf16 %v705, %v704
      %v710 = vld [vmem:[%s5] sm:$0xf]
      %v712 = vsel %vm532, %v706, 0
      %v715 = vsel %vm532, %v707, 0
      %v718 = vsel %vm532, %v708, 0
      %v721 = vsel %vm532, %v709, 0
      %v724 = vsel %vm545, %v710, 0
      %726 = vmatprep.subr.bf16.mxu0 0
      %727 = vmatpush1.bf16.msra.mxu0 %v724
      %728 = vmatprep.subr.bf16.mxu0 0
      %729 = vmatpush1.bf16.msra.mxu0 0
      %730 = vmatprep.subr.bf16.mxu0 0
      %731 = vmatpush1.bf16.msra.mxu0 0
      %732 = vmatprep.subr.bf16.mxu0 0
      %733 = vmatpush1.bf16.msra.mxu0 0
      %734 = vmatprep.subr.bf16.mxu0 0
      %735 = vmatpush1.bf16.msra.mxu0 0
      %736 = vmatprep.subr.bf16.mxu0 0
      %737 = vmatpush1.bf16.msra.mxu0 0
      %738 = vmatprep.subr.bf16.mxu0 0
      %739 = vmatpush1.bf16.msra.mxu0 0
      %740 = vmatprep.subr.bf16.mxu0 0
      %741 = vmatpush1.bf16.msra.mxu0 0
      %742 = vmatprep.subr.bf16.mxu0 0
      %743 = vmatpush1.bf16.msra.mxu0 0
      %744 = vmatprep.subr.bf16.mxu0 0
      %745 = vmatpush1.bf16.msra.mxu0 0
      %746 = vmatprep.subr.bf16.mxu0 0
      %747 = vmatpush1.bf16.msra.mxu0 0
      %748 = vmatprep.subr.bf16.mxu0 0
      %749 = vmatpush1.bf16.msra.mxu0 0
      %750 = vmatprep.subr.bf16.mxu0 0
      %751 = vmatpush1.bf16.msra.mxu0 0
      %752 = vmatprep.subr.bf16.mxu0 0
      %753 = vmatpush1.bf16.msra.mxu0 0
      %754 = vmatprep.subr.bf16.mxu0 0
      %755 = vmatpush1.bf16.msra.mxu0 0
      %756 = vmatprep.subr.bf16.mxu0 0
      %757 = vmatpush1.bf16.msra.mxu0 0
      %758 = vmatprep.mubr.bf16.mxu0 0
      %759 = vmatmul.mubr.bf16.gmra.mrb[0].mxu0 %v712
      %v760 = vpop.f32.mrb[0].mxu0
      %v761 = vadd.f32 0.0, %v760
      %v762 = vpop.f32.mrb[0].mxu0
      %v763 = vpop.f32.mrb[0].mxu0
      %v764 = vadd.f32 0.0, %v763
      %v765 = vpop.f32.mrb[0].mxu0
      %766 = vmatprep.mubr.bf16.mxu0 0
      %767 = vmatmul.mubr.bf16.gmra.mrb[0].mxu0 %v715
      %v768 = vpop.f32.mrb[0].mxu0
      %v769 = vadd.f32 0.0, %v768
      %v770 = vpop.f32.mrb[0].mxu0
      %v771 = vpop.f32.mrb[0].mxu0
      %v772 = vadd.f32 0.0, %v771
      %v773 = vpop.f32.mrb[0].mxu0
      %774 = vmatprep.mubr.bf16.mxu0 0
      %775 = vmatmul.mubr.bf16.gmra.mrb[0].mxu0 %v718
      %v776 = vpop.f32.mrb[0].mxu0
      %v777 = vadd.f32 0.0, %v776
      %v778 = vpop.f32.mrb[0].mxu0
      %v779 = vpop.f32.mrb[0].mxu0
      %v780 = vadd.f32 0.0, %v779
      %v781 = vpop.f32.mrb[0].mxu0
      %782 = vmatprep.mubr.bf16.mxu0 0
      %783 = vmatmul.mubr.bf16.gmra.mrb[0].mxu0 %v721
      %v784 = vpop.f32.mrb[0].mxu0
      %v785 = vadd.f32 0.0, %v784
      %v786 = vpop.f32.mrb[0].mxu0
      %v787 = vpop.f32.mrb[0].mxu0
      %v788 = vadd.f32 0.0, %v787
      %v789 = vpop.f32.mrb[0].mxu0
      %790 = vdwg.mxu0
      %v791 = vld [vmem:[%s6] sm:$0xf]
      %v793 = vsel %vm545, %v791, 0
      %795 = vmatprep.subr.bf16.mxu0 0
      %796 = vmatpush1.bf16.msra.mxu0 %v793
      %797 = vmatprep.subr.bf16.mxu0 0
      %798 = vmatpush1.bf16.msra.mxu0 0
      %799 = vmatprep.subr.bf16.mxu0 0
      %800 = vmatpush1.bf16.msra.mxu0 0
      %801 = vmatprep.subr.bf16.mxu0 0
      %802 = vmatpush1.bf16.msra.mxu0 0
      %803 = vmatprep.subr.bf16.mxu0 0
      %804 = vmatpush1.bf16.msra.mxu0 0
      %805 = vmatprep.subr.bf16.mxu0 0
      %806 = vmatpush1.bf16.msra.mxu0 0
      %807 = vmatprep.subr.bf16.mxu0 0
      %808 = vmatpush1.bf16.msra.mxu0 0
      %809 = vmatprep.subr.bf16.mxu0 0
      %810 = vmatpush1.bf16.msra.mxu0 0
      %811 = vmatprep.subr.bf16.mxu0 0
      %812 = vmatpush1.bf16.msra.mxu0 0
      %813 = vmatprep.subr.bf16.mxu0 0
      %814 = vmatpush1.bf16.msra.mxu0 0
      %815 = vmatprep.subr.bf16.mxu0 0
      %816 = vmatpush1.bf16.msra.mxu0 0
      %817 = vmatprep.subr.bf16.mxu0 0
      %818 = vmatpush1.bf16.msra.mxu0 0
      %819 = vmatprep.subr.bf16.mxu0 0
      %820 = vmatpush1.bf16.msra.mxu0 0
      %821 = vmatprep.subr.bf16.mxu0 0
      %822 = vmatpush1.bf16.msra.mxu0 0
      %823 = vmatprep.subr.bf16.mxu0 0
      %824 = vmatpush1.bf16.msra.mxu0 0
      %825 = vmatprep.subr.bf16.mxu0 0
      %826 = vmatpush1.bf16.msra.mxu0 0
      %827 = vmatprep.mubr.bf16.mxu0 0
      %828 = vmatmul.mubr.bf16.gmra.mrb[0].mxu0 %v712
      %v829 = vpop.f32.mrb[0].mxu0
      %v830 = vadd.f32 0.0, %v829
      %v831 = vpop.f32.mrb[0].mxu0
      %v832 = vpop.f32.mrb[0].mxu0
      %v833 = vadd.f32 0.0, %v832
      %v834 = vpop.f32.mrb[0].mxu0
      %835 = vmatprep.mubr.bf16.mxu0 0
      %836 = vmatmul.mubr.bf16.gmra.mrb[0].mxu0 %v715
      %v837 = vpop.f32.mrb[0].mxu0
      %v838 = vadd.f32 0.0, %v837
      %v839 = vpop.f32.mrb[0].mxu0
      %v840 = vpop.f32.mrb[0].mxu0
      %v841 = vadd.f32 0.0, %v840
      %v842 = vpop.f32.mrb[0].mxu0
      %843 = vmatprep.mubr.bf16.mxu0 0
      %844 = vmatmul.mubr.bf16.gmra.mrb[0].mxu0 %v718
      %v845 = vpop.f32.mrb[0].mxu0
      %v846 = vadd.f32 0.0, %v845
      %v847 = vpop.f32.mrb[0].mxu0
      %v848 = vpop.f32.mrb[0].mxu0
      %v849 = vadd.f32 0.0, %v848
      %v850 = vpop.f32.mrb[0].mxu0
      %851 = vmatprep.mubr.bf16.mxu0 0
      %852 = vmatmul.mubr.bf16.gmra.mrb[0].mxu0 %v721
      %v853 = vpop.f32.mrb[0].mxu0
      %v854 = vadd.f32 0.0, %v853
      %v855 = vpop.f32.mrb[0].mxu0
      %v856 = vpop.f32.mrb[0].mxu0
      %v857 = vadd.f32 0.0, %v856
      %v858 = vpop.f32.mrb[0].mxu0
      %859 = vdwg.mxu0
      %v860 = vpack.c.bf16 %v833, %v830
      %v861 = vpack.c.bf16 %v841, %v838
      %v862 = vpack.c.bf16 %v849, %v846
      %v863 = vpack.c.bf16 %v857, %v854
      %v864 = vld [vmem:[%s7] sm:$0xf]
      %v866 = vsel %vm545, %v864, 0
      %868 = vmatprep.subr.bf16.mxu0 0
      %869 = vmatpush1.bf16.msra.mxu0 %v866
      %870 = vmatprep.subr.bf16.mxu0 0
      %871 = vmatpush1.bf16.msra.mxu0 0
      %872 = vmatprep.subr.bf16.mxu0 0
      %873 = vmatpush1.bf16.msra.mxu0 0
      %874 = vmatprep.subr.bf16.mxu0 0
      %875 = vmatpush1.bf16.msra.mxu0 0
      %876 = vmatprep.subr.bf16.mxu0 0
      %877 = vmatpush1.bf16.msra.mxu0 0
      %878 = vmatprep.subr.bf16.mxu0 0
      %879 = vmatpush1.bf16.msra.mxu0 0
      %880 = vmatprep.subr.bf16.mxu0 0
      %881 = vmatpush1.bf16.msra.mxu0 0
      %882 = vmatprep.subr.bf16.mxu0 0
      %883 = vmatpush1.bf16.msra.mxu0 0
      %884 = vmatprep.subr.bf16.mxu0 0
      %885 = vmatpush1.bf16.msra.mxu0 0
      %886 = vmatprep.subr.bf16.mxu0 0
      %887 = vmatpush1.bf16.msra.mxu0 0
      %888 = vmatprep.subr.bf16.mxu0 0
      %889 = vmatpush1.bf16.msra.mxu0 0
      %890 = vmatprep.subr.bf16.mxu0 0
      %891 = vmatpush1.bf16.msra.mxu0 0
      %892 = vmatprep.subr.bf16.mxu0 0
      %893 = vmatpush1.bf16.msra.mxu0 0
      %894 = vmatprep.subr.bf16.mxu0 0
      %895 = vmatpush1.bf16.msra.mxu0 0
      %896 = vmatprep.subr.bf16.mxu0 0
      %897 = vmatpush1.bf16.msra.mxu0 0
      %898 = vmatprep.subr.bf16.mxu0 0
      %899 = vmatpush1.bf16.msra.mxu0 0
      %900 = vmatprep.mubr.bf16.mxu0 0
      %901 = vmatmul.mubr.bf16.gmra.mrb[0].mxu0 %v712
      %v902 = vpop.f32.mrb[0].mxu0
      %v903 = vadd.f32 0.0, %v902
      %v904 = vpop.f32.mrb[0].mxu0
      %v905 = vpop.f32.mrb[0].mxu0
      %v906 = vadd.f32 0.0, %v905
      %v907 = vpop.f32.mrb[0].mxu0
      %908 = vmatprep.mubr.bf16.mxu0 0
      %909 = vmatmul.mubr.bf16.gmra.mrb[0].mxu0 %v715
      %v910 = vpop.f32.mrb[0].mxu0
      %v911 = vadd.f32 0.0, %v910
      %v912 = vpop.f32.mrb[0].mxu0
      %v913 = vpop.f32.mrb[0].mxu0
      %v914 = vadd.f32 0.0, %v913
      %v915 = vpop.f32.mrb[0].mxu0
      %916 = vmatprep.mubr.bf16.mxu0 0
      %917 = vmatmul.mubr.bf16.gmra.mrb[0].mxu0 %v718
      %v918 = vpop.f32.mrb[0].mxu0
      %v919 = vadd.f32 0.0, %v918
      %v920 = vpop.f32.mrb[0].mxu0
      %v921 = vpop.f32.mrb[0].mxu0
      %v922 = vadd.f32 0.0, %v921
      %v923 = vpop.f32.mrb[0].mxu0
      %924 = vmatprep.mubr.bf16.mxu0 0
      %925 = vmatmul.mubr.bf16.gmra.mrb[0].mxu0 %v721
      %v926 = vpop.f32.mrb[0].mxu0
      %v927 = vadd.f32 0.0, %v926
      %v928 = vpop.f32.mrb[0].mxu0
      %v929 = vpop.f32.mrb[0].mxu0
      %v930 = vadd.f32 0.0, %v929
      %v931 = vpop.f32.mrb[0].mxu0
      %932 = vdwg.mxu0
      %v933 = vpack.c.bf16 %v906, %v903
      %v934 = vpack.c.bf16 %v914, %v911
      %v935 = vpack.c.bf16 %v922, %v919
      %v936 = vpack.c.bf16 %v930, %v927
      %v937 = vpack.c.bf16 %v764, %v761
      %v938 = vpack.c.bf16 %v772, %v769
      %v939 = vpack.c.bf16 %v780, %v777
      %v940 = vpack.c.bf16 %v788, %v785
      %v945 = vunpack.c.l.b16 %v937
      %v946 = vunpack.c.h.b16 %v937
      %v947 = vunpack.c.l.b16 %v938
      %v948 = vunpack.c.h.b16 %v938
      %v949 = vunpack.c.l.b16 %v939
      %v950 = vunpack.c.h.b16 %v939
      %v951 = vunpack.c.l.b16 %v940
      %v952 = vunpack.c.h.b16 %v940
      %v953 = vpack.c.b16 %v945, %v945
      %v954 = vpack.c.b16 %v946, %v946
      %v955 = vpack.c.b16 %v947, %v947
      %v956 = vpack.c.b16 %v948, %v948
      %v957 = vpack.c.b16 %v949, %v949
      %v958 = vpack.c.b16 %v950, %v950
      %v959 = vpack.c.b16 %v951, %v951
      %v960 = vpack.c.b16 %v952, %v952
      %v961 = vld [vmem:[%s8] sm:$0xf]
      %v962 = vld [vmem:[%s8 + $0x4] sm:$0xf]
      %v963 = vld [vmem:[%s8 + $0x8] sm:$0xf]
      %v964 = vld [vmem:[%s8 + $0xc] sm:$0xf]
      %v965 = vld [vmem:[%s8 + $0x10] sm:$0xf]
      %v966 = vld [vmem:[%s8 + $0x14] sm:$0xf]
      %v967 = vld [vmem:[%s8 + $0x18] sm:$0xf]
      %v968 = vld [vmem:[%s8 + $0x1c] sm:$0xf]
      %vm969 = vcmask 130048
      %v971 = vsel %vm969, %v953, 0
      %v974 = vsel %vm969, %v961, 0
      %976 = vmatprep.subr.bf16.mxu0 0
      %977 = vmatpush1.bf16.xpose.msra.mxu0 %v974
      %978 = vmatprep.subr.bf16.mxu0 0
      %979 = vmatpush1.bf16.xpose.msra.mxu0 0
      %980 = vmatprep.subr.bf16.mxu0 0
      %981 = vmatpush1.bf16.xpose.msra.mxu0 0
      %982 = vmatprep.subr.bf16.mxu0 0
      %983 = vmatpush1.bf16.xpose.msra.mxu0 0
      %984 = vmatprep.subr.bf16.mxu0 0
      %985 = vmatpush1.bf16.xpose.msra.mxu0 0
      %986 = vmatprep.subr.bf16.mxu0 0
      %987 = vmatpush1.bf16.xpose.msra.mxu0 0
      %988 = vmatprep.subr.bf16.mxu0 0
      %989 = vmatpush1.bf16.xpose.msra.mxu0 0
      %990 = vmatprep.subr.bf16.mxu0 0
      %991 = vmatpush1.bf16.xpose.msra.mxu0 0
      %992 = vmatprep.subr.bf16.mxu0 0
      %993 = vmatpush1.bf16.xpose.msra.mxu0 0
      %994 = vmatprep.subr.bf16.mxu0 0
      %995 = vmatpush1.bf16.xpose.msra.mxu0 0
      %996 = vmatprep.subr.bf16.mxu0 0
      %997 = vmatpush1.bf16.xpose.msra.mxu0 0
      %998 = vmatprep.subr.bf16.mxu0 0
      %999 = vmatpush1.bf16.xpose.msra.mxu0 0
      %1000 = vmatprep.subr.bf16.mxu0 0
      %1001 = vmatpush1.bf16.xpose.msra.mxu0 0
      %1002 = vmatprep.subr.bf16.mxu0 0
      %1003 = vmatpush1.bf16.xpose.msra.mxu0 0
      %1004 = vmatprep.subr.bf16.mxu0 0
      %1005 = vmatpush1.bf16.xpose.msra.mxu0 0
      %1006 = vmatprep.subr.bf16.mxu0 0
      %1007 = vmatpush1.bf16.xpose.msra.mxu0 0
      %1008 = vmatprep.mubr.bf16.mxu0 0
      %1009 = vmatmul.mubr.bf16.gmra.mrb[0].mxu0 %v971
      %v1010 = vpop.f32.mrb[0].mxu0
      %v1011 = vadd.f32 0.0, %v1010
      %v1012 = vpop.f32.mrb[0].mxu0
      %v1013 = vpop.f32.mrb[0].mxu0
      %v1014 = vpop.f32.mrb[0].mxu0
      %1015 = vdwg.mxu0
      %v1017 = vsel %vm969, %v954, 0
      %v1020 = vsel %vm969, %v962, 0
      %1022 = vmatprep.subr.bf16.mxu0 0
      %1023 = vmatpush1.bf16.xpose.msra.mxu0 %v1020
      %1024 = vmatprep.subr.bf16.mxu0 0
      %1025 = vmatpush1.bf16.xpose.msra.mxu0 0
      %1026 = vmatprep.subr.bf16.mxu0 0
      %1027 = vmatpush1.bf16.xpose.msra.mxu0 0
      %1028 = vmatprep.subr.bf16.mxu0 0
      %1029 = vmatpush1.bf16.xpose.msra.mxu0 0
      %1030 = vmatprep.subr.bf16.mxu0 0
      %1031 = vmatpush1.bf16.xpose.msra.mxu0 0
      %1032 = vmatprep.subr.bf16.mxu0 0
      %1033 = vmatpush1.bf16.xpose.msra.mxu0 0
      %1034 = vmatprep.subr.bf16.mxu0 0
      %1035 = vmatpush1.bf16.xpose.msra.mxu0 0
      %1036 = vmatprep.subr.bf16.mxu0 0
      %1037 = vmatpush1.bf16.xpose.msra.mxu0 0
      %1038 = vmatprep.subr.bf16.mxu0 0
      %1039 = vmatpush1.bf16.xpose.msra.mxu0 0
      %1040 = vmatprep.subr.bf16.mxu0 0
      %1041 = vmatpush1.bf16.xpose.msra.mxu0 0
      %1042 = vmatprep.subr.bf16.mxu0 0
      %1043 = vmatpush1.bf16.xpose.msra.mxu0 0
      %1044 = vmatprep.subr.bf16.mxu0 0
      %1045 = vmatpush1.bf16.xpose.msra.mxu0 0
      %1046 = vmatprep.subr.bf16.mxu0 0
      %1047 = vmatpush1.bf16.xpose.msra.mxu0 0
      %1048 = vmatprep.subr.bf16.mxu0 0
      %1049 = vmatpush1.bf16.xpose.msra.mxu0 0
      %1050 = vmatprep.subr.bf16.mxu0 0
      %1051 = vmatpush1.bf16.xpose.msra.mxu0 0
      %1052 = vmatprep.subr.bf16.mxu0 0
      %1053 = vmatpush1.bf16.xpose.msra.mxu0 0
      %1054 = vmatprep.mubr.bf16.mxu0 0
      %1055 = vmatmul.mubr.bf16.gmra.mrb[0].mxu0 %v1017
      %v1056 = vpop.f32.mrb[0].mxu0
      %v1057 = vadd.f32 0.0, %v1056
      %v1058 = vpop.f32.mrb[0].mxu0
      %v1059 = vpop.f32.mrb[0].mxu0
      %v1060 = vpop.f32.mrb[0].mxu0
      %1061 = vdwg.mxu0
      %v1063 = vsel %vm969, %v955, 0
      %v1066 = vsel %vm969, %v963, 0
      %1068 = vmatprep.subr.bf16.mxu0 0
      %1069 = vmatpush1.bf16.xpose.msra.mxu0 %v1066
      %1070 = vmatprep.subr.bf16.mxu0 0
      %1071 = vmatpush1.bf16.xpose.msra.mxu0 0
      %1072 = vmatprep.subr.bf16.mxu0 0
      %1073 = vmatpush1.bf16.xpose.msra.mxu0 0
      %1074 = vmatprep.subr.bf16.mxu0 0
      %1075 = vmatpush1.bf16.xpose.msra.mxu0 0
      %1076 = vmatprep.subr.bf16.mxu0 0
      %1077 = vmatpush1.bf16.xpose.msra.mxu0 0
      %1078 = vmatprep.subr.bf16.mxu0 0
      %1079 = vmatpush1.bf16.xpose.msra.mxu0 0
      %1080 = vmatprep.subr.bf16.mxu0 0
      %1081 = vmatpush1.bf16.xpose.msra.mxu0 0
      %1082 = vmatprep.subr.bf16.mxu0 0
      %1083 = vmatpush1.bf16.xpose.msra.mxu0 0
      %1084 = vmatprep.subr.bf16.mxu0 0
      %1085 = vmatpush1.bf16.xpose.msra.mxu0 0
      %1086 = vmatprep.subr.bf16.mxu0 0
      %1087 = vmatpush1.bf16.xpose.msra.mxu0 0
      %1088 = vmatprep.subr.bf16.mxu0 0
      %1089 = vmatpush1.bf16.xpose.msra.mxu0 0
      %1090 = vmatprep.subr.bf16.mxu0 0
      %1091 = vmatpush1.bf16.xpose.msra.mxu0 0
      %1092 = vmatprep.subr.bf16.mxu0 0
      %1093 = vmatpush1.bf16.xpose.msra.mxu0 0
      %1094 = vmatprep.subr.bf16.mxu0 0
      %1095 = vmatpush1.bf16.xpose.msra.mxu0 0
      %1096 = vmatprep.subr.bf16.mxu0 0
      %1097 = vmatpush1.bf16.xpose.msra.mxu0 0
      %1098 = vmatprep.subr.bf16.mxu0 0
      %1099 = vmatpush1.bf16.xpose.msra.mxu0 0
      %1100 = vmatprep.mubr.bf16.mxu0 0
      %1101 = vmatmul.mubr.bf16.gmra.mrb[0].mxu0 %v1063
      %v1102 = vpop.f32.mrb[0].mxu0
      %v1103 = vadd.f32 0.0, %v1102
      %v1104 = vpop.f32.mrb[0].mxu0
      %v1105 = vpop.f32.mrb[0].mxu0
      %v1106 = vpop.f32.mrb[0].mxu0
      %1107 = vdwg.mxu0
      %v1109 = vsel %vm969, %v956, 0
      %v1112 = vsel %vm969, %v964, 0
      %1114 = vmatprep.subr.bf16.mxu0 0
      %1115 = vmatpush1.bf16.xpose.msra.mxu0 %v1112
      %1116 = vmatprep.subr.bf16.mxu0 0
      %1117 = vmatpush1.bf16.xpose.msra.mxu0 0
      %1118 = vmatprep.subr.bf16.mxu0 0
      %1119 = vmatpush1.bf16.xpose.msra.mxu0 0
      %1120 = vmatprep.subr.bf16.mxu0 0
      %1121 = vmatpush1.bf16.xpose.msra.mxu0 0
      %1122 = vmatprep.subr.bf16.mxu0 0
      %1123 = vmatpush1.bf16.xpose.msra.mxu0 0
      %1124 = vmatprep.subr.bf16.mxu0 0
      %1125 = vmatpush1.bf16.xpose.msra.mxu0 0
      %1126 = vmatprep.subr.bf16.mxu0 0
      %1127 = vmatpush1.bf16.xpose.msra.mxu0 0
      %1128 = vmatprep.subr.bf16.mxu0 0
      %1129 = vmatpush1.bf16.xpose.msra.mxu0 0
      %1130 = vmatprep.subr.bf16.mxu0 0
      %1131 = vmatpush1.bf16.xpose.msra.mxu0 0
      %1132 = vmatprep.subr.bf16.mxu0 0
      %1133 = vmatpush1.bf16.xpose.msra.mxu0 0
      %1134 = vmatprep.subr.bf16.mxu0 0
      %1135 = vmatpush1.bf16.xpose.msra.mxu0 0
      %1136 = vmatprep.subr.bf16.mxu0 0
      %1137 = vmatpush1.bf16.xpose.msra.mxu0 0
      %1138 = vmatprep.subr.bf16.mxu0 0
      %1139 = vmatpush1.bf16.xpose.msra.mxu0 0
      %1140 = vmatprep.subr.bf16.mxu0 0
      %1141 = vmatpush1.bf16.xpose.msra.mxu0 0
      %1142 = vmatprep.subr.bf16.mxu0 0
      %1143 = vmatpush1.bf16.xpose.msra.mxu0 0
      %1144 = vmatprep.subr.bf16.mxu0 0
      %1145 = vmatpush1.bf16.xpose.msra.mxu0 0
      %1146 = vmatprep.mubr.bf16.mxu0 0
      %1147 = vmatmul.mubr.bf16.gmra.mrb[0].mxu0 %v1109
      %v1148 = vpop.f32.mrb[0].mxu0
      %v1149 = vadd.f32 0.0, %v1148
      %v1150 = vpop.f32.mrb[0].mxu0
      %v1151 = vpop.f32.mrb[0].mxu0
      %v1152 = vpop.f32.mrb[0].mxu0
      %1153 = vdwg.mxu0
      %v1155 = vsel %vm969, %v957, 0
      %v1158 = vsel %vm969, %v965, 0
      %1160 = vmatprep.subr.bf16.mxu0 0
      %1161 = vmatpush1.bf16.xpose.msra.mxu0 %v1158
      %1162 = vmatprep.subr.bf16.mxu0 0
      %1163 = vmatpush1.bf16.xpose.msra.mxu0 0
      %1164 = vmatprep.subr.bf16.mxu0 0
      %1165 = vmatpush1.bf16.xpose.msra.mxu0 0
      %1166 = vmatprep.subr.bf16.mxu0 0
      %1167 = vmatpush1.bf16.xpose.msra.mxu0 0
      %1168 = vmatprep.subr.bf16.mxu0 0
      %1169 = vmatpush1.bf16.xpose.msra.mxu0 0
      %1170 = vmatprep.subr.bf16.mxu0 0
      %1171 = vmatpush1.bf16.xpose.msra.mxu0 0
      %1172 = vmatprep.subr.bf16.mxu0 0
      %1173 = vmatpush1.bf16.xpose.msra.mxu0 0
      %1174 = vmatprep.subr.bf16.mxu0 0
      %1175 = vmatpush1.bf16.xpose.msra.mxu0 0
      %1176 = vmatprep.subr.bf16.mxu0 0
      %1177 = vmatpush1.bf16.xpose.msra.mxu0 0
      %1178 = vmatprep.subr.bf16.mxu0 0
      %1179 = vmatpush1.bf16.xpose.msra.mxu0 0
      %1180 = vmatprep.subr.bf16.mxu0 0
      %1181 = vmatpush1.bf16.xpose.msra.mxu0 0
      %1182 = vmatprep.subr.bf16.mxu0 0
      %1183 = vmatpush1.bf16.xpose.msra.mxu0 0
      %1184 = vmatprep.subr.bf16.mxu0 0
      %1185 = vmatpush1.bf16.xpose.msra.mxu0 0
      %1186 = vmatprep.subr.bf16.mxu0 0
      %1187 = vmatpush1.bf16.xpose.msra.mxu0 0
      %1188 = vmatprep.subr.bf16.mxu0 0
      %1189 = vmatpush1.bf16.xpose.msra.mxu0 0
      %1190 = vmatprep.subr.bf16.mxu0 0
      %1191 = vmatpush1.bf16.xpose.msra.mxu0 0
      %1192 = vmatprep.mubr.bf16.mxu0 0
      %1193 = vmatmul.mubr.bf16.gmra.mrb[0].mxu0 %v1155
      %v1194 = vpop.f32.mrb[0].mxu0
      %v1195 = vadd.f32 0.0, %v1194
      %v1196 = vpop.f32.mrb[0].mxu0
      %v1197 = vpop.f32.mrb[0].mxu0
      %v1198 = vpop.f32.mrb[0].mxu0
      %1199 = vdwg.mxu0
      %v1201 = vsel %vm969, %v958, 0
      %v1204 = vsel %vm969, %v966, 0
      %1206 = vmatprep.subr.bf16.mxu0 0
      %1207 = vmatpush1.bf16.xpose.msra.mxu0 %v1204
      %1208 = vmatprep.subr.bf16.mxu0 0
      %1209 = vmatpush1.bf16.xpose.msra.mxu0 0
      %1210 = vmatprep.subr.bf16.mxu0 0
      %1211 = vmatpush1.bf16.xpose.msra.mxu0 0
      %1212 = vmatprep.subr.bf16.mxu0 0
      %1213 = vmatpush1.bf16.xpose.msra.mxu0 0
      %1214 = vmatprep.subr.bf16.mxu0 0
      %1215 = vmatpush1.bf16.xpose.msra.mxu0 0
      %1216 = vmatprep.subr.bf16.mxu0 0
      %1217 = vmatpush1.bf16.xpose.msra.mxu0 0
      %1218 = vmatprep.subr.bf16.mxu0 0
      %1219 = vmatpush1.bf16.xpose.msra.mxu0 0
      %1220 = vmatprep.subr.bf16.mxu0 0
      %1221 = vmatpush1.bf16.xpose.msra.mxu0 0
      %1222 = vmatprep.subr.bf16.mxu0 0
      %1223 = vmatpush1.bf16.xpose.msra.mxu0 0
      %1224 = vmatprep.subr.bf16.mxu0 0
      %1225 = vmatpush1.bf16.xpose.msra.mxu0 0
      %1226 = vmatprep.subr.bf16.mxu0 0
      %1227 = vmatpush1.bf16.xpose.msra.mxu0 0
      %1228 = vmatprep.subr.bf16.mxu0 0
      %1229 = vmatpush1.bf16.xpose.msra.mxu0 0
      %1230 = vmatprep.subr.bf16.mxu0 0
      %1231 = vmatpush1.bf16.xpose.msra.mxu0 0
      %1232 = vmatprep.subr.bf16.mxu0 0
      %1233 = vmatpush1.bf16.xpose.msra.mxu0 0
      %1234 = vmatprep.subr.bf16.mxu0 0
      %1235 = vmatpush1.bf16.xpose.msra.mxu0 0
      %1236 = vmatprep.subr.bf16.mxu0 0
      %1237 = vmatpush1.bf16.xpose.msra.mxu0 0
      %1238 = vmatprep.mubr.bf16.mxu0 0
      %1239 = vmatmul.mubr.bf16.gmra.mrb[0].mxu0 %v1201
      %v1240 = vpop.f32.mrb[0].mxu0
      %v1241 = vadd.f32 0.0, %v1240
      %v1242 = vpop.f32.mrb[0].mxu0
      %v1243 = vpop.f32.mrb[0].mxu0
      %v1244 = vpop.f32.mrb[0].mxu0
      %1245 = vdwg.mxu0
      %v1247 = vsel %vm969, %v959, 0
      %v1250 = vsel %vm969, %v967, 0
      %1252 = vmatprep.subr.bf16.mxu0 0
      %1253 = vmatpush1.bf16.xpose.msra.mxu0 %v1250
      %1254 = vmatprep.subr.bf16.mxu0 0
      %1255 = vmatpush1.bf16.xpose.msra.mxu0 0
      %1256 = vmatprep.subr.bf16.mxu0 0
      %1257 = vmatpush1.bf16.xpose.msra.mxu0 0
      %1258 = vmatprep.subr.bf16.mxu0 0
      %1259 = vmatpush1.bf16.xpose.msra.mxu0 0
      %1260 = vmatprep.subr.bf16.mxu0 0
      %1261 = vmatpush1.bf16.xpose.msra.mxu0 0
      %1262 = vmatprep.subr.bf16.mxu0 0
      %1263 = vmatpush1.bf16.xpose.msra.mxu0 0
      %1264 = vmatprep.subr.bf16.mxu0 0
      %1265 = vmatpush1.bf16.xpose.msra.mxu0 0
      %1266 = vmatprep.subr.bf16.mxu0 0
      %1267 = vmatpush1.bf16.xpose.msra.mxu0 0
      %1268 = vmatprep.subr.bf16.mxu0 0
      %1269 = vmatpush1.bf16.xpose.msra.mxu0 0
      %1270 = vmatprep.subr.bf16.mxu0 0
      %1271 = vmatpush1.bf16.xpose.msra.mxu0 0
      %1272 = vmatprep.subr.bf16.mxu0 0
      %1273 = vmatpush1.bf16.xpose.msra.mxu0 0
      %1274 = vmatprep.subr.bf16.mxu0 0
      %1275 = vmatpush1.bf16.xpose.msra.mxu0 0
      %1276 = vmatprep.subr.bf16.mxu0 0
      %1277 = vmatpush1.bf16.xpose.msra.mxu0 0
      %1278 = vmatprep.subr.bf16.mxu0 0
      %1279 = vmatpush1.bf16.xpose.msra.mxu0 0
      %1280 = vmatprep.subr.bf16.mxu0 0
      %1281 = vmatpush1.bf16.xpose.msra.mxu0 0
      %1282 = vmatprep.subr.bf16.mxu0 0
      %1283 = vmatpush1.bf16.xpose.msra.mxu0 0
      %1284 = vmatprep.mubr.bf16.mxu0 0
      %1285 = vmatmul.mubr.bf16.gmra.mrb[0].mxu0 %v1247
      %v1286 = vpop.f32.mrb[0].mxu0
      %v1287 = vadd.f32 0.0, %v1286
      %v1288 = vpop.f32.mrb[0].mxu0
      %v1289 = vpop.f32.mrb[0].mxu0
      %v1290 = vpop.f32.mrb[0].mxu0
      %1291 = vdwg.mxu0
      %v1293 = vsel %vm969, %v960, 0
      %v1296 = vsel %vm969, %v968, 0
      %1298 = vmatprep.subr.bf16.mxu0 0
      %1299 = vmatpush1.bf16.xpose.msra.mxu0 %v1296
      %1300 = vmatprep.subr.bf16.mxu0 0
      %1301 = vmatpush1.bf16.xpose.msra.mxu0 0
      %1302 = vmatprep.subr.bf16.mxu0 0
      %1303 = vmatpush1.bf16.xpose.msra.mxu0 0
      %1304 = vmatprep.subr.bf16.mxu0 0
      %1305 = vmatpush1.bf16.xpose.msra.mxu0 0
      %1306 = vmatprep.subr.bf16.mxu0 0
      %1307 = vmatpush1.bf16.xpose.msra.mxu0 0
      %1308 = vmatprep.subr.bf16.mxu0 0
      %1309 = vmatpush1.bf16.xpose.msra.mxu0 0
      %1310 = vmatprep.subr.bf16.mxu0 0
      %1311 = vmatpush1.bf16.xpose.msra.mxu0 0
      %1312 = vmatprep.subr.bf16.mxu0 0
      %1313 = vmatpush1.bf16.xpose.msra.mxu0 0
      %1314 = vmatprep.subr.bf16.mxu0 0
      %1315 = vmatpush1.bf16.xpose.msra.mxu0 0
      %1316 = vmatprep.subr.bf16.mxu0 0
      %1317 = vmatpush1.bf16.xpose.msra.mxu0 0
      %1318 = vmatprep.subr.bf16.mxu0 0
      %1319 = vmatpush1.bf16.xpose.msra.mxu0 0
      %1320 = vmatprep.subr.bf16.mxu0 0
      %1321 = vmatpush1.bf16.xpose.msra.mxu0 0
      %1322 = vmatprep.subr.bf16.mxu0 0
      %1323 = vmatpush1.bf16.xpose.msra.mxu0 0
      %1324 = vmatprep.subr.bf16.mxu0 0
      %1325 = vmatpush1.bf16.xpose.msra.mxu0 0
      %1326 = vmatprep.subr.bf16.mxu0 0
      %1327 = vmatpush1.bf16.xpose.msra.mxu0 0
      %1328 = vmatprep.subr.bf16.mxu0 0
      %1329 = vmatpush1.bf16.xpose.msra.mxu0 0
      %1330 = vmatprep.mubr.bf16.mxu0 0
      %1331 = vmatmul.mubr.bf16.gmra.mrb[0].mxu0 %v1293
      %v1332 = vpop.f32.mrb[0].mxu0
      %v1333 = vadd.f32 0.0, %v1332
      %v1334 = vpop.f32.mrb[0].mxu0
      %v1335 = vpop.f32.mrb[0].mxu0
      %v1336 = vpop.f32.mrb[0].mxu0
      %1337 = vdwg.mxu0
      %v1346 = vcombine.high %v761, %v761
      %v1348 = vunpack.c.l.s4 1966171168
      %v1349 = vunpack.c.0.s8 %v1348
      %v1350 = vlaneseq
      %v1351 = vshrl.u32 %v1350, 7
      %v1352 = vsub.s32 %v1349, %v1351
      %v1353 = vrot.slane %v761, %v1352
      %v1355 = vunpack.c.l.s4 1966171168
      %v1356 = vunpack.c.0.s8 %v1355
      %v1357 = vlaneseq
      %v1358 = vshrl.u32 %v1357, 7
      %v1359 = vsub.s32 %v1356, %v1358
      %v1360 = vrot.slane %v1346, %v1359
      %v1361 = vcombine.high %v1353, %v1353
      %v1362 = vcombine.high %v1360, %v1360
      %v1364 = vunpack.c.l.s4 1966171168
      %v1365 = vunpack.c.0.s8 %v1364
      %v1366 = vlaneseq
      %v1367 = vshrl.u32 %v1366, 7
      %v1368 = vsub.s32 %v1365, %v1367
      %v1369 = vrot.slane %v1353, %v1368
      %v1371 = vunpack.c.l.s4 1966171168
      %v1372 = vunpack.c.0.s8 %v1371
      %v1373 = vlaneseq
      %v1374 = vshrl.u32 %v1373, 7
      %v1375 = vsub.s32 %v1372, %v1374
      %v1376 = vrot.slane %v1360, %v1375
      %v1378 = vunpack.c.l.s4 1966171168
      %v1379 = vunpack.c.0.s8 %v1378
      %v1380 = vlaneseq
      %v1381 = vshrl.u32 %v1380, 7
      %v1382 = vsub.s32 %v1379, %v1381
      %v1383 = vrot.slane %v1361, %v1382
      %v1385 = vunpack.c.l.s4 1966171168
      %v1386 = vunpack.c.0.s8 %v1385
      %v1387 = vlaneseq
      %v1388 = vshrl.u32 %v1387, 7
      %v1389 = vsub.s32 %v1386, %v1388
      %v1390 = vrot.slane %v1362, %v1389
      %v1391 = vcombine.high %v1369, %v1369
      %v1392 = vcombine.high %v1376, %v1376
      %v1393 = vcombine.high %v1383, %v1383
      %v1394 = vcombine.high %v1390, %v1390
      %v1395 = vcombine.high %v764, %v764
      %v1397 = vunpack.c.l.s4 1966171168
      %v1398 = vunpack.c.0.s8 %v1397
      %v1399 = vlaneseq
      %v1400 = vshrl.u32 %v1399, 7
      %v1401 = vsub.s32 %v1398, %v1400
      %v1402 = vrot.slane %v764, %v1401
      %v1404 = vunpack.c.l.s4 1966171168
      %v1405 = vunpack.c.0.s8 %v1404
      %v1406 = vlaneseq
      %v1407 = vshrl.u32 %v1406, 7
      %v1408 = vsub.s32 %v1405, %v1407
      %v1409 = vrot.slane %v1395, %v1408
      %v1410 = vcombine.high %v1402, %v1402
      %v1411 = vcombine.high %v1409, %v1409
      %v1413 = vunpack.c.l.s4 1966171168
      %v1414 = vunpack.c.0.s8 %v1413
      %v1415 = vlaneseq
      %v1416 = vshrl.u32 %v1415, 7
      %v1417 = vsub.s32 %v1414, %v1416
      %v1418 = vrot.slane %v1402, %v1417
      %v1420 = vunpack.c.l.s4 1966171168
      %v1421 = vunpack.c.0.s8 %v1420
      %v1422 = vlaneseq
      %v1423 = vshrl.u32 %v1422, 7
      %v1424 = vsub.s32 %v1421, %v1423
      %v1425 = vrot.slane %v1409, %v1424
      %v1427 = vunpack.c.l.s4 1966171168
      %v1428 = vunpack.c.0.s8 %v1427
      %v1429 = vlaneseq
      %v1430 = vshrl.u32 %v1429, 7
      %v1431 = vsub.s32 %v1428, %v1430
      %v1432 = vrot.slane %v1410, %v1431
      %v1434 = vunpack.c.l.s4 1966171168
      %v1435 = vunpack.c.0.s8 %v1434
      %v1436 = vlaneseq
      %v1437 = vshrl.u32 %v1436, 7
      %v1438 = vsub.s32 %v1435, %v1437
      %v1439 = vrot.slane %v1411, %v1438
      %v1440 = vcombine.high %v1418, %v1418
      %v1441 = vcombine.high %v1425, %v1425
      %v1442 = vcombine.high %v1432, %v1432
      %v1443 = vcombine.high %v1439, %v1439
      %v1444 = vcombine.high %v769, %v769
      %v1446 = vunpack.c.l.s4 1966171168
      %v1447 = vunpack.c.0.s8 %v1446
      %v1448 = vlaneseq
      %v1449 = vshrl.u32 %v1448, 7
      %v1450 = vsub.s32 %v1447, %v1449
      %v1451 = vrot.slane %v769, %v1450
      %v1453 = vunpack.c.l.s4 1966171168
      %v1454 = vunpack.c.0.s8 %v1453
      %v1455 = vlaneseq
      %v1456 = vshrl.u32 %v1455, 7
      %v1457 = vsub.s32 %v1454, %v1456
      %v1458 = vrot.slane %v1444, %v1457
      %v1459 = vcombine.high %v1451, %v1451
      %v1460 = vcombine.high %v1458, %v1458
      %v1462 = vunpack.c.l.s4 1966171168
      %v1463 = vunpack.c.0.s8 %v1462
      %v1464 = vlaneseq
      %v1465 = vshrl.u32 %v1464, 7
      %v1466 = vsub.s32 %v1463, %v1465
      %v1467 = vrot.slane %v1451, %v1466
      %v1469 = vunpack.c.l.s4 1966171168
      %v1470 = vunpack.c.0.s8 %v1469
      %v1471 = vlaneseq
      %v1472 = vshrl.u32 %v1471, 7
      %v1473 = vsub.s32 %v1470, %v1472
      %v1474 = vrot.slane %v1458, %v1473
      %v1476 = vunpack.c.l.s4 1966171168
      %v1477 = vunpack.c.0.s8 %v1476
      %v1478 = vlaneseq
      %v1479 = vshrl.u32 %v1478, 7
      %v1480 = vsub.s32 %v1477, %v1479
      %v1481 = vrot.slane %v1459, %v1480
      %v1483 = vunpack.c.l.s4 1966171168
      %v1484 = vunpack.c.0.s8 %v1483
      %v1485 = vlaneseq
      %v1486 = vshrl.u32 %v1485, 7
      %v1487 = vsub.s32 %v1484, %v1486
      %v1488 = vrot.slane %v1460, %v1487
      %v1489 = vcombine.high %v1467, %v1467
      %v1490 = vcombine.high %v1474, %v1474
      %v1491 = vcombine.high %v1481, %v1481
      %v1492 = vcombine.high %v1488, %v1488
      %v1493 = vcombine.high %v772, %v772
      %v1495 = vunpack.c.l.s4 1966171168
      %v1496 = vunpack.c.0.s8 %v1495
      %v1497 = vlaneseq
      %v1498 = vshrl.u32 %v1497, 7
      %v1499 = vsub.s32 %v1496, %v1498
      %v1500 = vrot.slane %v772, %v1499
      %v1502 = vunpack.c.l.s4 1966171168
      %v1503 = vunpack.c.0.s8 %v1502
      %v1504 = vlaneseq
      %v1505 = vshrl.u32 %v1504, 7
      %v1506 = vsub.s32 %v1503, %v1505
      %v1507 = vrot.slane %v1493, %v1506
      %v1508 = vcombine.high %v1500, %v1500
      %v1509 = vcombine.high %v1507, %v1507
      %v1511 = vunpack.c.l.s4 1966171168
      %v1512 = vunpack.c.0.s8 %v1511
      %v1513 = vlaneseq
      %v1514 = vshrl.u32 %v1513, 7
      %v1515 = vsub.s32 %v1512, %v1514
      %v1516 = vrot.slane %v1500, %v1515
      %v1518 = vunpack.c.l.s4 1966171168
      %v1519 = vunpack.c.0.s8 %v1518
      %v1520 = vlaneseq
      %v1521 = vshrl.u32 %v1520, 7
      %v1522 = vsub.s32 %v1519, %v1521
      %v1523 = vrot.slane %v1507, %v1522
      %v1525 = vunpack.c.l.s4 1966171168
      %v1526 = vunpack.c.0.s8 %v1525
      %v1527 = vlaneseq
      %v1528 = vshrl.u32 %v1527, 7
      %v1529 = vsub.s32 %v1526, %v1528
      %v1530 = vrot.slane %v1508, %v1529
      %v1532 = vunpack.c.l.s4 1966171168
      %v1533 = vunpack.c.0.s8 %v1532
      %v1534 = vlaneseq
      %v1535 = vshrl.u32 %v1534, 7
      %v1536 = vsub.s32 %v1533, %v1535
      %v1537 = vrot.slane %v1509, %v1536
      %v1538 = vcombine.high %v1516, %v1516
      %v1539 = vcombine.high %v1523, %v1523
      %v1540 = vcombine.high %v1530, %v1530
      %v1541 = vcombine.high %v1537, %v1537
      %v1542 = vcombine.high %v777, %v777
      %v1544 = vunpack.c.l.s4 1966171168
      %v1545 = vunpack.c.0.s8 %v1544
      %v1546 = vlaneseq
      %v1547 = vshrl.u32 %v1546, 7
      %v1548 = vsub.s32 %v1545, %v1547
      %v1549 = vrot.slane %v777, %v1548
      %v1551 = vunpack.c.l.s4 1966171168
      %v1552 = vunpack.c.0.s8 %v1551
      %v1553 = vlaneseq
      %v1554 = vshrl.u32 %v1553, 7
      %v1555 = vsub.s32 %v1552, %v1554
      %v1556 = vrot.slane %v1542, %v1555
      %v1557 = vcombine.high %v1549, %v1549
      %v1558 = vcombine.high %v1556, %v1556
      %v1560 = vunpack.c.l.s4 1966171168
      %v1561 = vunpack.c.0.s8 %v1560
      %v1562 = vlaneseq
      %v1563 = vshrl.u32 %v1562, 7
      %v1564 = vsub.s32 %v1561, %v1563
      %v1565 = vrot.slane %v1549, %v1564
      %v1567 = vunpack.c.l.s4 1966171168
      %v1568 = vunpack.c.0.s8 %v1567
      %v1569 = vlaneseq
      %v1570 = vshrl.u32 %v1569, 7
      %v1571 = vsub.s32 %v1568, %v1570
      %v1572 = vrot.slane %v1556, %v1571
      %v1574 = vunpack.c.l.s4 1966171168
      %v1575 = vunpack.c.0.s8 %v1574
      %v1576 = vlaneseq
      %v1577 = vshrl.u32 %v1576, 7
      %v1578 = vsub.s32 %v1575, %v1577
      %v1579 = vrot.slane %v1557, %v1578
      %v1581 = vunpack.c.l.s4 1966171168
      %v1582 = vunpack.c.0.s8 %v1581
      %v1583 = vlaneseq
      %v1584 = vshrl.u32 %v1583, 7
      %v1585 = vsub.s32 %v1582, %v1584
      %v1586 = vrot.slane %v1558, %v1585
      %v1587 = vcombine.high %v1565, %v1565
      %v1588 = vcombine.high %v1572, %v1572
      %v1589 = vcombine.high %v1579, %v1579
      %v1590 = vcombine.high %v1586, %v1586
      %v1591 = vcombine.high %v780, %v780
      %v1593 = vunpack.c.l.s4 1966171168
      %v1594 = vunpack.c.0.s8 %v1593
      %v1595 = vlaneseq
      %v1596 = vshrl.u32 %v1595, 7
      %v1597 = vsub.s32 %v1594, %v1596
      %v1598 = vrot.slane %v780, %v1597
      %v1600 = vunpack.c.l.s4 1966171168
      %v1601 = vunpack.c.0.s8 %v1600
      %v1602 = vlaneseq
      %v1603 = vshrl.u32 %v1602, 7
      %v1604 = vsub.s32 %v1601, %v1603
      %v1605 = vrot.slane %v1591, %v1604
      %v1606 = vcombine.high %v1598, %v1598
      %v1607 = vcombine.high %v1605, %v1605
      %v1609 = vunpack.c.l.s4 1966171168
      %v1610 = vunpack.c.0.s8 %v1609
      %v1611 = vlaneseq
      %v1612 = vshrl.u32 %v1611, 7
      %v1613 = vsub.s32 %v1610, %v1612
      %v1614 = vrot.slane %v1598, %v1613
      %v1616 = vunpack.c.l.s4 1966171168
      %v1617 = vunpack.c.0.s8 %v1616
      %v1618 = vlaneseq
      %v1619 = vshrl.u32 %v1618, 7
      %v1620 = vsub.s32 %v1617, %v1619
      %v1621 = vrot.slane %v1605, %v1620
      %v1623 = vunpack.c.l.s4 1966171168
      %v1624 = vunpack.c.0.s8 %v1623
      %v1625 = vlaneseq
      %v1626 = vshrl.u32 %v1625, 7
      %v1627 = vsub.s32 %v1624, %v1626
      %v1628 = vrot.slane %v1606, %v1627
      %v1630 = vunpack.c.l.s4 1966171168
      %v1631 = vunpack.c.0.s8 %v1630
      %v1632 = vlaneseq
      %v1633 = vshrl.u32 %v1632, 7
      %v1634 = vsub.s32 %v1631, %v1633
      %v1635 = vrot.slane %v1607, %v1634
      %v1636 = vcombine.high %v1614, %v1614
      %v1637 = vcombine.high %v1621, %v1621
      %v1638 = vcombine.high %v1628, %v1628
      %v1639 = vcombine.high %v1635, %v1635
      %v1640 = vcombine.high %v785, %v785
      %v1642 = vunpack.c.l.s4 1966171168
      %v1643 = vunpack.c.0.s8 %v1642
      %v1644 = vlaneseq
      %v1645 = vshrl.u32 %v1644, 7
      %v1646 = vsub.s32 %v1643, %v1645
      %v1647 = vrot.slane %v785, %v1646
      %v1649 = vunpack.c.l.s4 1966171168
      %v1650 = vunpack.c.0.s8 %v1649
      %v1651 = vlaneseq
      %v1652 = vshrl.u32 %v1651, 7
      %v1653 = vsub.s32 %v1650, %v1652
      %v1654 = vrot.slane %v1640, %v1653
      %v1655 = vcombine.high %v1647, %v1647
      %v1656 = vcombine.high %v1654, %v1654
      %v1658 = vunpack.c.l.s4 1966171168
      %v1659 = vunpack.c.0.s8 %v1658
      %v1660 = vlaneseq
      %v1661 = vshrl.u32 %v1660, 7
      %v1662 = vsub.s32 %v1659, %v1661
      %v1663 = vrot.slane %v1647, %v1662
      %v1665 = vunpack.c.l.s4 1966171168
      %v1666 = vunpack.c.0.s8 %v1665
      %v1667 = vlaneseq
      %v1668 = vshrl.u32 %v1667, 7
      %v1669 = vsub.s32 %v1666, %v1668
      %v1670 = vrot.slane %v1654, %v1669
      %v1672 = vunpack.c.l.s4 1966171168
      %v1673 = vunpack.c.0.s8 %v1672
      %v1674 = vlaneseq
      %v1675 = vshrl.u32 %v1674, 7
      %v1676 = vsub.s32 %v1673, %v1675
      %v1677 = vrot.slane %v1655, %v1676
      %v1679 = vunpack.c.l.s4 1966171168
      %v1680 = vunpack.c.0.s8 %v1679
      %v1681 = vlaneseq
      %v1682 = vshrl.u32 %v1681, 7
      %v1683 = vsub.s32 %v1680, %v1682
      %v1684 = vrot.slane %v1656, %v1683
      %v1685 = vcombine.high %v1663, %v1663
      %v1686 = vcombine.high %v1670, %v1670
      %v1687 = vcombine.high %v1677, %v1677
      %v1688 = vcombine.high %v1684, %v1684
      %v1689 = vcombine.high %v788, %v788
      %v1691 = vunpack.c.l.s4 1966171168
      %v1692 = vunpack.c.0.s8 %v1691
      %v1693 = vlaneseq
      %v1694 = vshrl.u32 %v1693, 7
      %v1695 = vsub.s32 %v1692, %v1694
      %v1696 = vrot.slane %v788, %v1695
      %v1698 = vunpack.c.l.s4 1966171168
      %v1699 = vunpack.c.0.s8 %v1698
      %v1700 = vlaneseq
      %v1701 = vshrl.u32 %v1700, 7
      %v1702 = vsub.s32 %v1699, %v1701
      %v1703 = vrot.slane %v1689, %v1702
      %v1704 = vcombine.high %v1696, %v1696
      %v1705 = vcombine.high %v1703, %v1703
      %v1707 = vunpack.c.l.s4 1966171168
      %v1708 = vunpack.c.0.s8 %v1707
      %v1709 = vlaneseq
      %v1710 = vshrl.u32 %v1709, 7
      %v1711 = vsub.s32 %v1708, %v1710
      %v1712 = vrot.slane %v1696, %v1711
      %v1714 = vunpack.c.l.s4 1966171168
      %v1715 = vunpack.c.0.s8 %v1714
      %v1716 = vlaneseq
      %v1717 = vshrl.u32 %v1716, 7
      %v1718 = vsub.s32 %v1715, %v1717
      %v1719 = vrot.slane %v1703, %v1718
      %v1721 = vunpack.c.l.s4 1966171168
      %v1722 = vunpack.c.0.s8 %v1721
      %v1723 = vlaneseq
      %v1724 = vshrl.u32 %v1723, 7
      %v1725 = vsub.s32 %v1722, %v1724
      %v1726 = vrot.slane %v1704, %v1725
      %v1728 = vunpack.c.l.s4 1966171168
      %v1729 = vunpack.c.0.s8 %v1728
      %v1730 = vlaneseq
      %v1731 = vshrl.u32 %v1730, 7
      %v1732 = vsub.s32 %v1729, %v1731
      %v1733 = vrot.slane %v1705, %v1732
      %v1734 = vcombine.high %v1712, %v1712
      %v1735 = vcombine.high %v1719, %v1719
      %v1736 = vcombine.high %v1726, %v1726
      %v1737 = vcombine.high %v1733, %v1733
      %v1738 = vld [vmem:[%s9] sm:$0xff]
      %v1739 = vld [vmem:[%s9 + $0x8] sm:$0xff]
      %v1740 = vld [vmem:[%s9 + $0x10] sm:$0xff]
      %v1741 = vld [vmem:[%s9 + $0x18] sm:$0xff]
      %v1742 = vld [vmem:[%s9 + $0x20] sm:$0xff]
      %v1743 = vld [vmem:[%s9 + $0x28] sm:$0xff]
      %v1744 = vld [vmem:[%s9 + $0x30] sm:$0xff]
      %v1745 = vld [vmem:[%s9 + $0x38] sm:$0xff]
      %v1746 = vld [vmem:[%s9 + $0x40] sm:$0xff]
      %v1747 = vld [vmem:[%s9 + $0x48] sm:$0xff]
      %v1748 = vld [vmem:[%s9 + $0x50] sm:$0xff]
      %v1749 = vld [vmem:[%s9 + $0x58] sm:$0xff]
      %v1750 = vld [vmem:[%s9 + $0x60] sm:$0xff]
      %v1751 = vld [vmem:[%s9 + $0x68] sm:$0xff]
      %v1752 = vld [vmem:[%s9 + $0x70] sm:$0xff]
      %v1753 = vld [vmem:[%s9 + $0x78] sm:$0xff]
      %v1754 = vld [vmem:[%s9 + $0x80] sm:$0xff]
      %v1755 = vld [vmem:[%s9 + $0x88] sm:$0xff]
      %v1756 = vld [vmem:[%s9 + $0x90] sm:$0xff]
      %v1757 = vld [vmem:[%s9 + $0x98] sm:$0xff]
      %v1758 = vld [vmem:[%s9 + $0xa0] sm:$0xff]
      %v1759 = vld [vmem:[%s9 + $0xa8] sm:$0xff]
      %v1760 = vld [vmem:[%s9 + $0xb0] sm:$0xff]
      %v1761 = vld [vmem:[%s9 + $0xb8] sm:$0xff]
      %v1762 = vld [vmem:[%s9 + $0xc0] sm:$0xff]
      %v1763 = vld [vmem:[%s9 + $0xc8] sm:$0xff]
      %v1764 = vld [vmem:[%s9 + $0xd0] sm:$0xff]
      %v1765 = vld [vmem:[%s9 + $0xd8] sm:$0xff]
      %v1766 = vld [vmem:[%s9 + $0xe0] sm:$0xff]
      %v1767 = vld [vmem:[%s9 + $0xe8] sm:$0xff]
      %v1768 = vld [vmem:[%s9 + $0xf0] sm:$0xff]
      %v1769 = vld [vmem:[%s9 + $0xf8] sm:$0xff]
      %v1770 = vld [vmem:[%s9 + $0x100] sm:$0xff]
      %v1771 = vld [vmem:[%s9 + $0x108] sm:$0xff]
      %v1772 = vld [vmem:[%s9 + $0x110] sm:$0xff]
      %v1773 = vld [vmem:[%s9 + $0x118] sm:$0xff]
      %v1774 = vld [vmem:[%s9 + $0x120] sm:$0xff]
      %v1775 = vld [vmem:[%s9 + $0x128] sm:$0xff]
      %v1776 = vld [vmem:[%s9 + $0x130] sm:$0xff]
      %v1777 = vld [vmem:[%s9 + $0x138] sm:$0xff]
      %v1778 = vld [vmem:[%s9 + $0x140] sm:$0xff]
      %v1779 = vld [vmem:[%s9 + $0x148] sm:$0xff]
      %v1780 = vld [vmem:[%s9 + $0x150] sm:$0xff]
      %v1781 = vld [vmem:[%s9 + $0x158] sm:$0xff]
      %v1782 = vld [vmem:[%s9 + $0x160] sm:$0xff]
      %v1783 = vld [vmem:[%s9 + $0x168] sm:$0xff]
      %v1784 = vld [vmem:[%s9 + $0x170] sm:$0xff]
      %v1785 = vld [vmem:[%s9 + $0x178] sm:$0xff]
      %v1786 = vld [vmem:[%s9 + $0x180] sm:$0xff]
      %v1787 = vld [vmem:[%s9 + $0x188] sm:$0xff]
      %v1788 = vld [vmem:[%s9 + $0x190] sm:$0xff]
      %v1789 = vld [vmem:[%s9 + $0x198] sm:$0xff]
      %v1790 = vld [vmem:[%s9 + $0x1a0] sm:$0xff]
      %v1791 = vld [vmem:[%s9 + $0x1a8] sm:$0xff]
      %v1792 = vld [vmem:[%s9 + $0x1b0] sm:$0xff]
      %v1793 = vld [vmem:[%s9 + $0x1b8] sm:$0xff]
      %v1794 = vld [vmem:[%s9 + $0x1c0] sm:$0xff]
      %v1795 = vld [vmem:[%s9 + $0x1c8] sm:$0xff]
      %v1796 = vld [vmem:[%s9 + $0x1d0] sm:$0xff]
      %v1797 = vld [vmem:[%s9 + $0x1d8] sm:$0xff]
      %v1798 = vld [vmem:[%s9 + $0x1e0] sm:$0xff]
      %v1799 = vld [vmem:[%s9 + $0x1e8] sm:$0xff]
      %v1800 = vld [vmem:[%s9 + $0x1f0] sm:$0xff]
      %v1801 = vld [vmem:[%s9 + $0x1f8] sm:$0xff]
      %v1802 = vlaneseq
      %v1803 = vshrl.u32 %v1802, 7
      %v1804 = vsub.s32 0, %v1803
      %v1805 = vrot.slane %v1369, %v1804
      %v1806 = vlaneseq
      %v1807 = vshrl.u32 %v1806, 7
      %v1808 = vsub.s32 0, %v1807
      %v1809 = vrot.slane %v1383, %v1808
      %v1810 = vlaneseq
      %v1811 = vshrl.u32 %v1810, 7
      %v1812 = vsub.s32 0, %v1811
      %v1813 = vrot.slane %v1391, %v1812
      %v1814 = vlaneseq
      %v1815 = vshrl.u32 %v1814, 7
      %v1816 = vsub.s32 0, %v1815
      %v1817 = vrot.slane %v1393, %v1816
      %v1818 = vlaneseq
      %v1819 = vshrl.u32 %v1818, 7
      %v1820 = vsub.s32 0, %v1819
      %v1821 = vrot.slane %v1376, %v1820
      %v1822 = vlaneseq
      %v1823 = vshrl.u32 %v1822, 7
      %v1824 = vsub.s32 0, %v1823
      %v1825 = vrot.slane %v1390, %v1824
      %v1826 = vlaneseq
      %v1827 = vshrl.u32 %v1826, 7
      %v1828 = vsub.s32 0, %v1827
      %v1829 = vrot.slane %v1392, %v1828
      %v1830 = vlaneseq
      %v1831 = vshrl.u32 %v1830, 7
      %v1832 = vsub.s32 0, %v1831
      %v1833 = vrot.slane %v1394, %v1832
      %v1834 = vlaneseq
      %v1835 = vshrl.u32 %v1834, 7
      %v1836 = vsub.s32 0, %v1835
      %v1837 = vrot.slane %v1418, %v1836
      %v1838 = vlaneseq
      %v1839 = vshrl.u32 %v1838, 7
      %v1840 = vsub.s32 0, %v1839
      %v1841 = vrot.slane %v1432, %v1840
      %v1842 = vlaneseq
      %v1843 = vshrl.u32 %v1842, 7
      %v1844 = vsub.s32 0, %v1843
      %v1845 = vrot.slane %v1440, %v1844
      %v1846 = vlaneseq
      %v1847 = vshrl.u32 %v1846, 7
      %v1848 = vsub.s32 0, %v1847
      %v1849 = vrot.slane %v1442, %v1848
      %v1850 = vlaneseq
      %v1851 = vshrl.u32 %v1850, 7
      %v1852 = vsub.s32 0, %v1851
      %v1853 = vrot.slane %v1425, %v1852
      %v1854 = vlaneseq
      %v1855 = vshrl.u32 %v1854, 7
      %v1856 = vsub.s32 0, %v1855
      %v1857 = vrot.slane %v1439, %v1856
      %v1858 = vlaneseq
      %v1859 = vshrl.u32 %v1858, 7
      %v1860 = vsub.s32 0, %v1859
      %v1861 = vrot.slane %v1441, %v1860
      %v1862 = vlaneseq
      %v1863 = vshrl.u32 %v1862, 7
      %v1864 = vsub.s32 0, %v1863
      %v1865 = vrot.slane %v1443, %v1864
      %v1866 = vlaneseq
      %v1867 = vshrl.u32 %v1866, 7
      %v1868 = vsub.s32 0, %v1867
      %v1869 = vrot.slane %v1467, %v1868
      %v1870 = vlaneseq
      %v1871 = vshrl.u32 %v1870, 7
      %v1872 = vsub.s32 0, %v1871
      %v1873 = vrot.slane %v1481, %v1872
      %v1874 = vlaneseq
      %v1875 = vshrl.u32 %v1874, 7
      %v1876 = vsub.s32 0, %v1875
      %v1877 = vrot.slane %v1489, %v1876
      %v1878 = vlaneseq
      %v1879 = vshrl.u32 %v1878, 7
      %v1880 = vsub.s32 0, %v1879
      %v1881 = vrot.slane %v1491, %v1880
      %v1882 = vlaneseq
      %v1883 = vshrl.u32 %v1882, 7
      %v1884 = vsub.s32 0, %v1883
      %v1885 = vrot.slane %v1474, %v1884
      %v1886 = vlaneseq
      %v1887 = vshrl.u32 %v1886, 7
      %v1888 = vsub.s32 0, %v1887
      %v1889 = vrot.slane %v1488, %v1888
      %v1890 = vlaneseq
      %v1891 = vshrl.u32 %v1890, 7
      %v1892 = vsub.s32 0, %v1891
      %v1893 = vrot.slane %v1490, %v1892
      %v1894 = vlaneseq
      %v1895 = vshrl.u32 %v1894, 7
      %v1896 = vsub.s32 0, %v1895
      %v1897 = vrot.slane %v1492, %v1896
      %v1898 = vlaneseq
      %v1899 = vshrl.u32 %v1898, 7
      %v1900 = vsub.s32 0, %v1899
      %v1901 = vrot.slane %v1516, %v1900
      %v1902 = vlaneseq
      %v1903 = vshrl.u32 %v1902, 7
      %v1904 = vsub.s32 0, %v1903
      %v1905 = vrot.slane %v1530, %v1904
      %v1906 = vlaneseq
      %v1907 = vshrl.u32 %v1906, 7
      %v1908 = vsub.s32 0, %v1907
      %v1909 = vrot.slane %v1538, %v1908
      %v1910 = vlaneseq
      %v1911 = vshrl.u32 %v1910, 7
      %v1912 = vsub.s32 0, %v1911
      %v1913 = vrot.slane %v1540, %v1912
      %v1914 = vlaneseq
      %v1915 = vshrl.u32 %v1914, 7
      %v1916 = vsub.s32 0, %v1915
      %v1917 = vrot.slane %v1523, %v1916
      %v1918 = vlaneseq
      %v1919 = vshrl.u32 %v1918, 7
      %v1920 = vsub.s32 0, %v1919
      %v1921 = vrot.slane %v1537, %v1920
      %v1922 = vlaneseq
      %v1923 = vshrl.u32 %v1922, 7
      %v1924 = vsub.s32 0, %v1923
      %v1925 = vrot.slane %v1539, %v1924
      %v1926 = vlaneseq
      %v1927 = vshrl.u32 %v1926, 7
      %v1928 = vsub.s32 0, %v1927
      %v1929 = vrot.slane %v1541, %v1928
      %v1930 = vlaneseq
      %v1931 = vshrl.u32 %v1930, 7
      %v1932 = vsub.s32 0, %v1931
      %v1933 = vrot.slane %v1565, %v1932
      %v1934 = vlaneseq
      %v1935 = vshrl.u32 %v1934, 7
      %v1936 = vsub.s32 0, %v1935
      %v1937 = vrot.slane %v1579, %v1936
      %v1938 = vlaneseq
      %v1939 = vshrl.u32 %v1938, 7
      %v1940 = vsub.s32 0, %v1939
      %v1941 = vrot.slane %v1587, %v1940
      %v1942 = vlaneseq
      %v1943 = vshrl.u32 %v1942, 7
      %v1944 = vsub.s32 0, %v1943
      %v1945 = vrot.slane %v1589, %v1944
      %v1946 = vlaneseq
      %v1947 = vshrl.u32 %v1946, 7
      %v1948 = vsub.s32 0, %v1947
      %v1949 = vrot.slane %v1572, %v1948
      %v1950 = vlaneseq
      %v1951 = vshrl.u32 %v1950, 7
      %v1952 = vsub.s32 0, %v1951
      %v1953 = vrot.slane %v1586, %v1952
      %v1954 = vlaneseq
      %v1955 = vshrl.u32 %v1954, 7
      %v1956 = vsub.s32 0, %v1955
      %v1957 = vrot.slane %v1588, %v1956
      %v1958 = vlaneseq
      %v1959 = vshrl.u32 %v1958, 7
      %v1960 = vsub.s32 0, %v1959
      %v1961 = vrot.slane %v1590, %v1960
      %v1962 = vlaneseq
      %v1963 = vshrl.u32 %v1962, 7
      %v1964 = vsub.s32 0, %v1963
      %v1965 = vrot.slane %v1614, %v1964
      %v1966 = vlaneseq
      %v1967 = vshrl.u32 %v1966, 7
      %v1968 = vsub.s32 0, %v1967
      %v1969 = vrot.slane %v1628, %v1968
      %v1970 = vlaneseq
      %v1971 = vshrl.u32 %v1970, 7
      %v1972 = vsub.s32 0, %v1971
      %v1973 = vrot.slane %v1636, %v1972
      %v1974 = vlaneseq
      %v1975 = vshrl.u32 %v1974, 7
      %v1976 = vsub.s32 0, %v1975
      %v1977 = vrot.slane %v1638, %v1976
      %v1978 = vlaneseq
      %v1979 = vshrl.u32 %v1978, 7
      %v1980 = vsub.s32 0, %v1979
      %v1981 = vrot.slane %v1621, %v1980
      %v1982 = vlaneseq
      %v1983 = vshrl.u32 %v1982, 7
      %v1984 = vsub.s32 0, %v1983
      %v1985 = vrot.slane %v1635, %v1984
      %v1986 = vlaneseq
      %v1987 = vshrl.u32 %v1986, 7
      %v1988 = vsub.s32 0, %v1987
      %v1989 = vrot.slane %v1637, %v1988
      %v1990 = vlaneseq
      %v1991 = vshrl.u32 %v1990, 7
      %v1992 = vsub.s32 0, %v1991
      %v1993 = vrot.slane %v1639, %v1992
      %v1994 = vlaneseq
      %v1995 = vshrl.u32 %v1994, 7
      %v1996 = vsub.s32 0, %v1995
      %v1997 = vrot.slane %v1663, %v1996
      %v1998 = vlaneseq
      %v1999 = vshrl.u32 %v1998, 7
      %v2000 = vsub.s32 0, %v1999
      %v2001 = vrot.slane %v1677, %v2000
      %v2002 = vlaneseq
      %v2003 = vshrl.u32 %v2002, 7
      %v2004 = vsub.s32 0, %v2003
      %v2005 = vrot.slane %v1685, %v2004
      %v2006 = vlaneseq
      %v2007 = vshrl.u32 %v2006, 7
      %v2008 = vsub.s32 0, %v2007
      %v2009 = vrot.slane %v1687, %v2008
      %v2010 = vlaneseq
      %v2011 = vshrl.u32 %v2010, 7
      %v2012 = vsub.s32 0, %v2011
      %v2013 = vrot.slane %v1670, %v2012
      %v2014 = vlaneseq
      %v2015 = vshrl.u32 %v2014, 7
      %v2016 = vsub.s32 0, %v2015
      %v2017 = vrot.slane %v1684, %v2016
      %v2018 = vlaneseq
      %v2019 = vshrl.u32 %v2018, 7
      %v2020 = vsub.s32 0, %v2019
      %v2021 = vrot.slane %v1686, %v2020
      %v2022 = vlaneseq
      %v2023 = vshrl.u32 %v2022, 7
      %v2024 = vsub.s32 0, %v2023
      %v2025 = vrot.slane %v1688, %v2024
      %v2026 = vlaneseq
      %v2027 = vshrl.u32 %v2026, 7
      %v2028 = vsub.s32 0, %v2027
      %v2029 = vrot.slane %v1712, %v2028
      %v2030 = vlaneseq
      %v2031 = vshrl.u32 %v2030, 7
      %v2032 = vsub.s32 0, %v2031
      %v2033 = vrot.slane %v1726, %v2032
      %v2034 = vlaneseq
      %v2035 = vshrl.u32 %v2034, 7
      %v2036 = vsub.s32 0, %v2035
      %v2037 = vrot.slane %v1734, %v2036
      %v2038 = vlaneseq
      %v2039 = vshrl.u32 %v2038, 7
      %v2040 = vsub.s32 0, %v2039
      %v2041 = vrot.slane %v1736, %v2040
      %v2042 = vlaneseq
      %v2043 = vshrl.u32 %v2042, 7
      %v2044 = vsub.s32 0, %v2043
      %v2045 = vrot.slane %v1719, %v2044
      %v2046 = vlaneseq
      %v2047 = vshrl.u32 %v2046, 7
      %v2048 = vsub.s32 0, %v2047
      %v2049 = vrot.slane %v1733, %v2048
      %v2050 = vlaneseq
      %v2051 = vshrl.u32 %v2050, 7
      %v2052 = vsub.s32 0, %v2051
      %v2053 = vrot.slane %v1735, %v2052
      %v2054 = vlaneseq
      %v2055 = vshrl.u32 %v2054, 7
      %v2056 = vsub.s32 0, %v2055
      %v2057 = vrot.slane %v1737, %v2056
      %v2122 = vmul.f32 %v1805, %v1738
      %v2123 = vmul.f32 %v1809, %v1739
      %v2124 = vmul.f32 %v1813, %v1740
      %v2125 = vmul.f32 %v1817, %v1741
      %v2126 = vmul.f32 %v1821, %v1742
      %v2127 = vmul.f32 %v1825, %v1743
      %v2128 = vmul.f32 %v1829, %v1744
      %v2129 = vmul.f32 %v1833, %v1745
      %v2130 = vmul.f32 %v1837, %v1746
      %v2131 = vmul.f32 %v1841, %v1747
      %v2132 = vmul.f32 %v1845, %v1748
      %v2133 = vmul.f32 %v1849, %v1749
      %v2134 = vmul.f32 %v1853, %v1750
      %v2135 = vmul.f32 %v1857, %v1751
      %v2136 = vmul.f32 %v1861, %v1752
      %v2137 = vmul.f32 %v1865, %v1753
      %v2138 = vmul.f32 %v1869, %v1754
      %v2139 = vmul.f32 %v1873, %v1755
      %v2140 = vmul.f32 %v1877, %v1756
      %v2141 = vmul.f32 %v1881, %v1757
      %v2142 = vmul.f32 %v1885, %v1758
      %v2143 = vmul.f32 %v1889, %v1759
      %v2144 = vmul.f32 %v1893, %v1760
      %v2145 = vmul.f32 %v1897, %v1761
      %v2146 = vmul.f32 %v1901, %v1762
      %v2147 = vmul.f32 %v1905, %v1763
      %v2148 = vmul.f32 %v1909, %v1764
      %v2149 = vmul.f32 %v1913, %v1765
      %v2150 = vmul.f32 %v1917, %v1766
      %v2151 = vmul.f32 %v1921, %v1767
      %v2152 = vmul.f32 %v1925, %v1768
      %v2153 = vmul.f32 %v1929, %v1769
      %v2154 = vmul.f32 %v1933, %v1770
      %v2155 = vmul.f32 %v1937, %v1771
      %v2156 = vmul.f32 %v1941, %v1772
      %v2157 = vmul.f32 %v1945, %v1773
      %v2158 = vmul.f32 %v1949, %v1774
      %v2159 = vmul.f32 %v1953, %v1775
      %v2160 = vmul.f32 %v1957, %v1776
      %v2161 = vmul.f32 %v1961, %v1777
      %v2162 = vmul.f32 %v1965, %v1778
      %v2163 = vmul.f32 %v1969, %v1779
      %v2164 = vmul.f32 %v1973, %v1780
      %v2165 = vmul.f32 %v1977, %v1781
      %v2166 = vmul.f32 %v1981, %v1782
      %v2167 = vmul.f32 %v1985, %v1783
      %v2168 = vmul.f32 %v1989, %v1784
      %v2169 = vmul.f32 %v1993, %v1785
      %v2170 = vmul.f32 %v1997, %v1786
      %v2171 = vmul.f32 %v2001, %v1787
      %v2172 = vmul.f32 %v2005, %v1788
      %v2173 = vmul.f32 %v2009, %v1789
      %v2174 = vmul.f32 %v2013, %v1790
      %v2175 = vmul.f32 %v2017, %v1791
      %v2176 = vmul.f32 %v2021, %v1792
      %v2177 = vmul.f32 %v2025, %v1793
      %v2178 = vmul.f32 %v2029, %v1794
      %v2179 = vmul.f32 %v2033, %v1795
      %v2180 = vmul.f32 %v2037, %v1796
      %v2181 = vmul.f32 %v2041, %v1797
      %v2182 = vmul.f32 %v2045, %v1798
      %v2183 = vmul.f32 %v2049, %v1799
      %v2184 = vmul.f32 %v2053, %v1800
      %v2185 = vmul.f32 %v2057, %v1801
      %v2186 = vsel %vm969, %v2122, 0.0
      %2187 = vadd.xlane.f32.xlu0 %v2186
      %v2188 = vpop.xlane.xlu0 %2187
      %v2189 = vsel %vm969, %v2123, 0.0
      %2190 = vadd.xlane.f32.xlu0 %v2189
      %v2191 = vpop.xlane.xlu0 %2190
      %v2192 = vsel %vm969, %v2124, 0.0
      %2193 = vadd.xlane.f32.xlu0 %v2192
      %v2194 = vpop.xlane.xlu0 %2193
      %v2195 = vsel %vm969, %v2125, 0.0
      %2196 = vadd.xlane.f32.xlu0 %v2195
      %v2197 = vpop.xlane.xlu0 %2196
      %v2198 = vsel %vm969, %v2126, 0.0
      %2199 = vadd.xlane.f32.xlu0 %v2198
      %v2200 = vpop.xlane.xlu0 %2199
      %v2201 = vsel %vm969, %v2127, 0.0
      %2202 = vadd.xlane.f32.xlu0 %v2201
      %v2203 = vpop.xlane.xlu0 %2202
      %v2204 = vsel %vm969, %v2128, 0.0
      %2205 = vadd.xlane.f32.xlu0 %v2204
      %v2206 = vpop.xlane.xlu0 %2205
      %v2207 = vsel %vm969, %v2129, 0.0
      %2208 = vadd.xlane.f32.xlu0 %v2207
      %v2209 = vpop.xlane.xlu0 %2208
      %v2210 = vsel %vm969, %v2130, 0.0
      %2211 = vadd.xlane.f32.xlu0 %v2210
      %v2212 = vpop.xlane.xlu0 %2211
      %v2213 = vsel %vm969, %v2131, 0.0
      %2214 = vadd.xlane.f32.xlu0 %v2213
      %v2215 = vpop.xlane.xlu0 %2214
      %v2216 = vsel %vm969, %v2132, 0.0
      %2217 = vadd.xlane.f32.xlu0 %v2216
      %v2218 = vpop.xlane.xlu0 %2217
      %v2219 = vsel %vm969, %v2133, 0.0
      %2220 = vadd.xlane.f32.xlu0 %v2219
      %v2221 = vpop.xlane.xlu0 %2220
      %v2222 = vsel %vm969, %v2134, 0.0
      %2223 = vadd.xlane.f32.xlu0 %v2222
      %v2224 = vpop.xlane.xlu0 %2223
      %v2225 = vsel %vm969, %v2135, 0.0
      %2226 = vadd.xlane.f32.xlu0 %v2225
      %v2227 = vpop.xlane.xlu0 %2226
      %v2228 = vsel %vm969, %v2136, 0.0
      %2229 = vadd.xlane.f32.xlu0 %v2228
      %v2230 = vpop.xlane.xlu0 %2229
      %v2231 = vsel %vm969, %v2137, 0.0
      %2232 = vadd.xlane.f32.xlu0 %v2231
      %v2233 = vpop.xlane.xlu0 %2232
      %v2234 = vsel %vm969, %v2138, 0.0
      %2235 = vadd.xlane.f32.xlu0 %v2234
      %v2236 = vpop.xlane.xlu0 %2235
      %v2237 = vsel %vm969, %v2139, 0.0
      %2238 = vadd.xlane.f32.xlu0 %v2237
      %v2239 = vpop.xlane.xlu0 %2238
      %v2240 = vsel %vm969, %v2140, 0.0
      %2241 = vadd.xlane.f32.xlu0 %v2240
      %v2242 = vpop.xlane.xlu0 %2241
      %v2243 = vsel %vm969, %v2141, 0.0
      %2244 = vadd.xlane.f32.xlu0 %v2243
      %v2245 = vpop.xlane.xlu0 %2244
      %v2246 = vsel %vm969, %v2142, 0.0
      %2247 = vadd.xlane.f32.xlu0 %v2246
      %v2248 = vpop.xlane.xlu0 %2247
      %v2249 = vsel %vm969, %v2143, 0.0
      %2250 = vadd.xlane.f32.xlu0 %v2249
      %v2251 = vpop.xlane.xlu0 %2250
      %v2252 = vsel %vm969, %v2144, 0.0
      %2253 = vadd.xlane.f32.xlu0 %v2252
      %v2254 = vpop.xlane.xlu0 %2253
      %v2255 = vsel %vm969, %v2145, 0.0
      %2256 = vadd.xlane.f32.xlu0 %v2255
      %v2257 = vpop.xlane.xlu0 %2256
      %v2258 = vsel %vm969, %v2146, 0.0
      %2259 = vadd.xlane.f32.xlu0 %v2258
      %v2260 = vpop.xlane.xlu0 %2259
      %v2261 = vsel %vm969, %v2147, 0.0
      %2262 = vadd.xlane.f32.xlu0 %v2261
      %v2263 = vpop.xlane.xlu0 %2262
      %v2264 = vsel %vm969, %v2148, 0.0
      %2265 = vadd.xlane.f32.xlu0 %v2264
      %v2266 = vpop.xlane.xlu0 %2265
      %v2267 = vsel %vm969, %v2149, 0.0
      %2268 = vadd.xlane.f32.xlu0 %v2267
      %v2269 = vpop.xlane.xlu0 %2268
      %v2270 = vsel %vm969, %v2150, 0.0
      %2271 = vadd.xlane.f32.xlu0 %v2270
      %v2272 = vpop.xlane.xlu0 %2271
      %v2273 = vsel %vm969, %v2151, 0.0
      %2274 = vadd.xlane.f32.xlu0 %v2273
      %v2275 = vpop.xlane.xlu0 %2274
      %v2276 = vsel %vm969, %v2152, 0.0
      %2277 = vadd.xlane.f32.xlu0 %v2276
      %v2278 = vpop.xlane.xlu0 %2277
      %v2279 = vsel %vm969, %v2153, 0.0
      %2280 = vadd.xlane.f32.xlu0 %v2279
      %v2281 = vpop.xlane.xlu0 %2280
      %v2282 = vsel %vm969, %v2154, 0.0
      %2283 = vadd.xlane.f32.xlu0 %v2282
      %v2284 = vpop.xlane.xlu0 %2283
      %v2285 = vsel %vm969, %v2155, 0.0
      %2286 = vadd.xlane.f32.xlu0 %v2285
      %v2287 = vpop.xlane.xlu0 %2286
      %v2288 = vsel %vm969, %v2156, 0.0
      %2289 = vadd.xlane.f32.xlu0 %v2288
      %v2290 = vpop.xlane.xlu0 %2289
      %v2291 = vsel %vm969, %v2157, 0.0
      %2292 = vadd.xlane.f32.xlu0 %v2291
      %v2293 = vpop.xlane.xlu0 %2292
      %v2294 = vsel %vm969, %v2158, 0.0
      %2295 = vadd.xlane.f32.xlu0 %v2294
      %v2296 = vpop.xlane.xlu0 %2295
      %v2297 = vsel %vm969, %v2159, 0.0
      %2298 = vadd.xlane.f32.xlu0 %v2297
      %v2299 = vpop.xlane.xlu0 %2298
      %v2300 = vsel %vm969, %v2160, 0.0
      %2301 = vadd.xlane.f32.xlu0 %v2300
      %v2302 = vpop.xlane.xlu0 %2301
      %v2303 = vsel %vm969, %v2161, 0.0
      %2304 = vadd.xlane.f32.xlu0 %v2303
      %v2305 = vpop.xlane.xlu0 %2304
      %v2306 = vsel %vm969, %v2162, 0.0
      %2307 = vadd.xlane.f32.xlu0 %v2306
      %v2308 = vpop.xlane.xlu0 %2307
      %v2309 = vsel %vm969, %v2163, 0.0
      %2310 = vadd.xlane.f32.xlu0 %v2309
      %v2311 = vpop.xlane.xlu0 %2310
      %v2312 = vsel %vm969, %v2164, 0.0
      %2313 = vadd.xlane.f32.xlu0 %v2312
      %v2314 = vpop.xlane.xlu0 %2313
      %v2315 = vsel %vm969, %v2165, 0.0
      %2316 = vadd.xlane.f32.xlu0 %v2315
      %v2317 = vpop.xlane.xlu0 %2316
      %v2318 = vsel %vm969, %v2166, 0.0
      %2319 = vadd.xlane.f32.xlu0 %v2318
      %v2320 = vpop.xlane.xlu0 %2319
      %v2321 = vsel %vm969, %v2167, 0.0
      %2322 = vadd.xlane.f32.xlu0 %v2321
      %v2323 = vpop.xlane.xlu0 %2322
      %v2324 = vsel %vm969, %v2168, 0.0
      %2325 = vadd.xlane.f32.xlu0 %v2324
      %v2326 = vpop.xlane.xlu0 %2325
      %v2327 = vsel %vm969, %v2169, 0.0
      %2328 = vadd.xlane.f32.xlu0 %v2327
      %v2329 = vpop.xlane.xlu0 %2328
      %v2330 = vsel %vm969, %v2170, 0.0
      %2331 = vadd.xlane.f32.xlu0 %v2330
      %v2332 = vpop.xlane.xlu0 %2331
      %v2333 = vsel %vm969, %v2171, 0.0
      %2334 = vadd.xlane.f32.xlu0 %v2333
      %v2335 = vpop.xlane.xlu0 %2334
      %v2336 = vsel %vm969, %v2172, 0.0
      %2337 = vadd.xlane.f32.xlu0 %v2336
      %v2338 = vpop.xlane.xlu0 %2337
      %v2339 = vsel %vm969, %v2173, 0.0
      %2340 = vadd.xlane.f32.xlu0 %v2339
      %v2341 = vpop.xlane.xlu0 %2340
      %v2342 = vsel %vm969, %v2174, 0.0
      %2343 = vadd.xlane.f32.xlu0 %v2342
      %v2344 = vpop.xlane.xlu0 %2343
      %v2345 = vsel %vm969, %v2175, 0.0
      %2346 = vadd.xlane.f32.xlu0 %v2345
      %v2347 = vpop.xlane.xlu0 %2346
      %v2348 = vsel %vm969, %v2176, 0.0
      %2349 = vadd.xlane.f32.xlu0 %v2348
      %v2350 = vpop.xlane.xlu0 %2349
      %v2351 = vsel %vm969, %v2177, 0.0
      %2352 = vadd.xlane.f32.xlu0 %v2351
      %v2353 = vpop.xlane.xlu0 %2352
      %v2354 = vsel %vm969, %v2178, 0.0
      %2355 = vadd.xlane.f32.xlu0 %v2354
      %v2356 = vpop.xlane.xlu0 %2355
      %v2357 = vsel %vm969, %v2179, 0.0
      %2358 = vadd.xlane.f32.xlu0 %v2357
      %v2359 = vpop.xlane.xlu0 %2358
      %v2360 = vsel %vm969, %v2180, 0.0
      %2361 = vadd.xlane.f32.xlu0 %v2360
      %v2362 = vpop.xlane.xlu0 %2361
      %v2363 = vsel %vm969, %v2181, 0.0
      %2364 = vadd.xlane.f32.xlu0 %v2363
      %v2365 = vpop.xlane.xlu0 %2364
      %v2366 = vsel %vm969, %v2182, 0.0
      %2367 = vadd.xlane.f32.xlu0 %v2366
      %v2368 = vpop.xlane.xlu0 %2367
      %v2369 = vsel %vm969, %v2183, 0.0
      %2370 = vadd.xlane.f32.xlu0 %v2369
      %v2371 = vpop.xlane.xlu0 %2370
      %v2372 = vsel %vm969, %v2184, 0.0
      %2373 = vadd.xlane.f32.xlu0 %v2372
      %v2374 = vpop.xlane.xlu0 %2373
      %v2375 = vsel %vm969, %v2185, 0.0
      %2376 = vadd.xlane.f32.xlu0 %v2375
      %v2377 = vpop.xlane.xlu0 %2376
      %v2442 = vlaneseq
      %v2443 = vand.u32 %v2442, 127
      %v2444 = vadd.s32 %v2443, 4294967288
      %v2445 = vlaneseq
      %v2446 = vshrl.u32 %v2445, 7
      %v2447 = vsub.s32 %v2444, %v2446
      %v2448 = vrot.slane %v2188, %v2447
      %v2449 = vlaneseq
      %v2450 = vshrl.u32 %v2449, 7
      %v2451 = vsub.s32 %v2444, %v2450
      %v2452 = vrot.slane %v2191, %v2451
      %v2453 = vlaneseq
      %v2454 = vshrl.u32 %v2453, 7
      %v2455 = vsub.s32 %v2444, %v2454
      %v2456 = vrot.slane %v2194, %v2455
      %v2457 = vlaneseq
      %v2458 = vshrl.u32 %v2457, 7
      %v2459 = vsub.s32 %v2444, %v2458
      %v2460 = vrot.slane %v2197, %v2459
      %v2461 = vlaneseq
      %v2462 = vshrl.u32 %v2461, 7
      %v2463 = vsub.s32 %v2444, %v2462
      %v2464 = vrot.slane %v2200, %v2463
      %v2465 = vlaneseq
      %v2466 = vshrl.u32 %v2465, 7
      %v2467 = vsub.s32 %v2444, %v2466
      %v2468 = vrot.slane %v2203, %v2467
      %v2469 = vlaneseq
      %v2470 = vshrl.u32 %v2469, 7
      %v2471 = vsub.s32 %v2444, %v2470
      %v2472 = vrot.slane %v2206, %v2471
      %v2473 = vlaneseq
      %v2474 = vshrl.u32 %v2473, 7
      %v2475 = vsub.s32 %v2444, %v2474
      %v2476 = vrot.slane %v2209, %v2475
      %v2477 = vlaneseq
      %v2478 = vshrl.u32 %v2477, 7
      %v2479 = vsub.s32 %v2444, %v2478
      %v2480 = vrot.slane %v2212, %v2479
      %v2481 = vlaneseq
      %v2482 = vshrl.u32 %v2481, 7
      %v2483 = vsub.s32 %v2444, %v2482
      %v2484 = vrot.slane %v2215, %v2483
      %v2485 = vlaneseq
      %v2486 = vshrl.u32 %v2485, 7
      %v2487 = vsub.s32 %v2444, %v2486
      %v2488 = vrot.slane %v2218, %v2487
      %v2489 = vlaneseq
      %v2490 = vshrl.u32 %v2489, 7
      %v2491 = vsub.s32 %v2444, %v2490
      %v2492 = vrot.slane %v2221, %v2491
      %v2493 = vlaneseq
      %v2494 = vshrl.u32 %v2493, 7
      %v2495 = vsub.s32 %v2444, %v2494
      %v2496 = vrot.slane %v2224, %v2495
      %v2497 = vlaneseq
      %v2498 = vshrl.u32 %v2497, 7
      %v2499 = vsub.s32 %v2444, %v2498
      %v2500 = vrot.slane %v2227, %v2499
      %v2501 = vlaneseq
      %v2502 = vshrl.u32 %v2501, 7
      %v2503 = vsub.s32 %v2444, %v2502
      %v2504 = vrot.slane %v2230, %v2503
      %v2505 = vlaneseq
      %v2506 = vshrl.u32 %v2505, 7
      %v2507 = vsub.s32 %v2444, %v2506
      %v2508 = vrot.slane %v2233, %v2507
      %v2509 = vlaneseq
      %v2510 = vshrl.u32 %v2509, 7
      %v2511 = vsub.s32 %v2444, %v2510
      %v2512 = vrot.slane %v2236, %v2511
      %v2513 = vlaneseq
      %v2514 = vshrl.u32 %v2513, 7
      %v2515 = vsub.s32 %v2444, %v2514
      %v2516 = vrot.slane %v2239, %v2515
      %v2517 = vlaneseq
      %v2518 = vshrl.u32 %v2517, 7
      %v2519 = vsub.s32 %v2444, %v2518
      %v2520 = vrot.slane %v2242, %v2519
      %v2521 = vlaneseq
      %v2522 = vshrl.u32 %v2521, 7
      %v2523 = vsub.s32 %v2444, %v2522
      %v2524 = vrot.slane %v2245, %v2523
      %v2525 = vlaneseq
      %v2526 = vshrl.u32 %v2525, 7
      %v2527 = vsub.s32 %v2444, %v2526
      %v2528 = vrot.slane %v2248, %v2527
      %v2529 = vlaneseq
      %v2530 = vshrl.u32 %v2529, 7
      %v2531 = vsub.s32 %v2444, %v2530
      %v2532 = vrot.slane %v2251, %v2531
      %v2533 = vlaneseq
      %v2534 = vshrl.u32 %v2533, 7
      %v2535 = vsub.s32 %v2444, %v2534
      %v2536 = vrot.slane %v2254, %v2535
      %v2537 = vlaneseq
      %v2538 = vshrl.u32 %v2537, 7
      %v2539 = vsub.s32 %v2444, %v2538
      %v2540 = vrot.slane %v2257, %v2539
      %v2541 = vlaneseq
      %v2542 = vshrl.u32 %v2541, 7
      %v2543 = vsub.s32 %v2444, %v2542
      %v2544 = vrot.slane %v2260, %v2543
      %v2545 = vlaneseq
      %v2546 = vshrl.u32 %v2545, 7
      %v2547 = vsub.s32 %v2444, %v2546
      %v2548 = vrot.slane %v2263, %v2547
      %v2549 = vlaneseq
      %v2550 = vshrl.u32 %v2549, 7
      %v2551 = vsub.s32 %v2444, %v2550
      %v2552 = vrot.slane %v2266, %v2551
      %v2553 = vlaneseq
      %v2554 = vshrl.u32 %v2553, 7
      %v2555 = vsub.s32 %v2444, %v2554
      %v2556 = vrot.slane %v2269, %v2555
      %v2557 = vlaneseq
      %v2558 = vshrl.u32 %v2557, 7
      %v2559 = vsub.s32 %v2444, %v2558
      %v2560 = vrot.slane %v2272, %v2559
      %v2561 = vlaneseq
      %v2562 = vshrl.u32 %v2561, 7
      %v2563 = vsub.s32 %v2444, %v2562
      %v2564 = vrot.slane %v2275, %v2563
      %v2565 = vlaneseq
      %v2566 = vshrl.u32 %v2565, 7
      %v2567 = vsub.s32 %v2444, %v2566
      %v2568 = vrot.slane %v2278, %v2567
      %v2569 = vlaneseq
      %v2570 = vshrl.u32 %v2569, 7
      %v2571 = vsub.s32 %v2444, %v2570
      %v2572 = vrot.slane %v2281, %v2571
      %v2573 = vlaneseq
      %v2574 = vshrl.u32 %v2573, 7
      %v2575 = vsub.s32 %v2444, %v2574
      %v2576 = vrot.slane %v2284, %v2575
      %v2577 = vlaneseq
      %v2578 = vshrl.u32 %v2577, 7
      %v2579 = vsub.s32 %v2444, %v2578
      %v2580 = vrot.slane %v2287, %v2579
      %v2581 = vlaneseq
      %v2582 = vshrl.u32 %v2581, 7
      %v2583 = vsub.s32 %v2444, %v2582
      %v2584 = vrot.slane %v2290, %v2583
      %v2585 = vlaneseq
      %v2586 = vshrl.u32 %v2585, 7
      %v2587 = vsub.s32 %v2444, %v2586
      %v2588 = vrot.slane %v2293, %v2587
      %v2589 = vlaneseq
      %v2590 = vshrl.u32 %v2589, 7
      %v2591 = vsub.s32 %v2444, %v2590
      %v2592 = vrot.slane %v2296, %v2591
      %v2593 = vlaneseq
      %v2594 = vshrl.u32 %v2593, 7
      %v2595 = vsub.s32 %v2444, %v2594
      %v2596 = vrot.slane %v2299, %v2595
      %v2597 = vlaneseq
      %v2598 = vshrl.u32 %v2597, 7
      %v2599 = vsub.s32 %v2444, %v2598
      %v2600 = vrot.slane %v2302, %v2599
      %v2601 = vlaneseq
      %v2602 = vshrl.u32 %v2601, 7
      %v2603 = vsub.s32 %v2444, %v2602
      %v2604 = vrot.slane %v2305, %v2603
      %v2605 = vlaneseq
      %v2606 = vshrl.u32 %v2605, 7
      %v2607 = vsub.s32 %v2444, %v2606
      %v2608 = vrot.slane %v2308, %v2607
      %v2609 = vlaneseq
      %v2610 = vshrl.u32 %v2609, 7
      %v2611 = vsub.s32 %v2444, %v2610
      %v2612 = vrot.slane %v2311, %v2611
      %v2613 = vlaneseq
      %v2614 = vshrl.u32 %v2613, 7
      %v2615 = vsub.s32 %v2444, %v2614
      %v2616 = vrot.slane %v2314, %v2615
      %v2617 = vlaneseq
      %v2618 = vshrl.u32 %v2617, 7
      %v2619 = vsub.s32 %v2444, %v2618
      %v2620 = vrot.slane %v2317, %v2619
      %v2621 = vlaneseq
      %v2622 = vshrl.u32 %v2621, 7
      %v2623 = vsub.s32 %v2444, %v2622
      %v2624 = vrot.slane %v2320, %v2623
      %v2625 = vlaneseq
      %v2626 = vshrl.u32 %v2625, 7
      %v2627 = vsub.s32 %v2444, %v2626
      %v2628 = vrot.slane %v2323, %v2627
      %v2629 = vlaneseq
      %v2630 = vshrl.u32 %v2629, 7
      %v2631 = vsub.s32 %v2444, %v2630
      %v2632 = vrot.slane %v2326, %v2631
      %v2633 = vlaneseq
      %v2634 = vshrl.u32 %v2633, 7
      %v2635 = vsub.s32 %v2444, %v2634
      %v2636 = vrot.slane %v2329, %v2635
      %v2637 = vlaneseq
      %v2638 = vshrl.u32 %v2637, 7
      %v2639 = vsub.s32 %v2444, %v2638
      %v2640 = vrot.slane %v2332, %v2639
      %v2641 = vlaneseq
      %v2642 = vshrl.u32 %v2641, 7
      %v2643 = vsub.s32 %v2444, %v2642
      %v2644 = vrot.slane %v2335, %v2643
      %v2645 = vlaneseq
      %v2646 = vshrl.u32 %v2645, 7
      %v2647 = vsub.s32 %v2444, %v2646
      %v2648 = vrot.slane %v2338, %v2647
      %v2649 = vlaneseq
      %v2650 = vshrl.u32 %v2649, 7
      %v2651 = vsub.s32 %v2444, %v2650
      %v2652 = vrot.slane %v2341, %v2651
      %v2653 = vlaneseq
      %v2654 = vshrl.u32 %v2653, 7
      %v2655 = vsub.s32 %v2444, %v2654
      %v2656 = vrot.slane %v2344, %v2655
      %v2657 = vlaneseq
      %v2658 = vshrl.u32 %v2657, 7
      %v2659 = vsub.s32 %v2444, %v2658
      %v2660 = vrot.slane %v2347, %v2659
      %v2661 = vlaneseq
      %v2662 = vshrl.u32 %v2661, 7
      %v2663 = vsub.s32 %v2444, %v2662
      %v2664 = vrot.slane %v2350, %v2663
      %v2665 = vlaneseq
      %v2666 = vshrl.u32 %v2665, 7
      %v2667 = vsub.s32 %v2444, %v2666
      %v2668 = vrot.slane %v2353, %v2667
      %v2669 = vlaneseq
      %v2670 = vshrl.u32 %v2669, 7
      %v2671 = vsub.s32 %v2444, %v2670
      %v2672 = vrot.slane %v2356, %v2671
      %v2673 = vlaneseq
      %v2674 = vshrl.u32 %v2673, 7
      %v2675 = vsub.s32 %v2444, %v2674
      %v2676 = vrot.slane %v2359, %v2675
      %v2677 = vlaneseq
      %v2678 = vshrl.u32 %v2677, 7
      %v2679 = vsub.s32 %v2444, %v2678
      %v2680 = vrot.slane %v2362, %v2679
      %v2681 = vlaneseq
      %v2682 = vshrl.u32 %v2681, 7
      %v2683 = vsub.s32 %v2444, %v2682
      %v2684 = vrot.slane %v2365, %v2683
      %v2685 = vlaneseq
      %v2686 = vshrl.u32 %v2685, 7
      %v2687 = vsub.s32 %v2444, %v2686
      %v2688 = vrot.slane %v2368, %v2687
      %v2689 = vlaneseq
      %v2690 = vshrl.u32 %v2689, 7
      %v2691 = vsub.s32 %v2444, %v2690
      %v2692 = vrot.slane %v2371, %v2691
      %v2693 = vlaneseq
      %v2694 = vshrl.u32 %v2693, 7
      %v2695 = vsub.s32 %v2444, %v2694
      %v2696 = vrot.slane %v2374, %v2695
      %v2697 = vlaneseq
      %v2698 = vshrl.u32 %v2697, 7
      %v2699 = vsub.s32 %v2444, %v2698
      %v2700 = vrot.slane %v2377, %v2699
      %vm2701 = vcmask 1041409
      %v2702 = vsel %vm2701, %v2452, %v2448
      %vm2703 = vcmask 1042434
      %v2704 = vsel %vm2703, %v2456, %v2702
      %vm2705 = vcmask 1043459
      %v2706 = vsel %vm2705, %v2460, %v2704
      %vm2707 = vcmask 1044484
      %v2708 = vsel %vm2707, %v2464, %v2706
      %vm2709 = vcmask 1045509
      %v2710 = vsel %vm2709, %v2468, %v2708
      %vm2711 = vcmask 1046534
      %v2712 = vsel %vm2711, %v2472, %v2710
      %vm2713 = vcmask 1047559
      %v2714 = vsel %vm2713, %v2476, %v2712
      %v2715 = vsel %vm2701, %v2484, %v2480
      %v2716 = vsel %vm2703, %v2488, %v2715
      %v2717 = vsel %vm2705, %v2492, %v2716
      %v2718 = vsel %vm2707, %v2496, %v2717
      %v2719 = vsel %vm2709, %v2500, %v2718
      %v2720 = vsel %vm2711, %v2504, %v2719
      %v2721 = vsel %vm2713, %v2508, %v2720
      %v2722 = vsel %vm2701, %v2516, %v2512
      %v2723 = vsel %vm2703, %v2520, %v2722
      %v2724 = vsel %vm2705, %v2524, %v2723
      %v2725 = vsel %vm2707, %v2528, %v2724
      %v2726 = vsel %vm2709, %v2532, %v2725
      %v2727 = vsel %vm2711, %v2536, %v2726
      %v2728 = vsel %vm2713, %v2540, %v2727
      %v2729 = vsel %vm2701, %v2548, %v2544
      %v2730 = vsel %vm2703, %v2552, %v2729
      %v2731 = vsel %vm2705, %v2556, %v2730
      %v2732 = vsel %vm2707, %v2560, %v2731
      %v2733 = vsel %vm2709, %v2564, %v2732
      %v2734 = vsel %vm2711, %v2568, %v2733
      %v2735 = vsel %vm2713, %v2572, %v2734
      %v2736 = vsel %vm2701, %v2580, %v2576
      %v2737 = vsel %vm2703, %v2584, %v2736
      %v2738 = vsel %vm2705, %v2588, %v2737
      %v2739 = vsel %vm2707, %v2592, %v2738
      %v2740 = vsel %vm2709, %v2596, %v2739
      %v2741 = vsel %vm2711, %v2600, %v2740
      %v2742 = vsel %vm2713, %v2604, %v2741
      %v2743 = vsel %vm2701, %v2612, %v2608
      %v2744 = vsel %vm2703, %v2616, %v2743
      %v2745 = vsel %vm2705, %v2620, %v2744
      %v2746 = vsel %vm2707, %v2624, %v2745
      %v2747 = vsel %vm2709, %v2628, %v2746
      %v2748 = vsel %vm2711, %v2632, %v2747
      %v2749 = vsel %vm2713, %v2636, %v2748
      %v2750 = vsel %vm2701, %v2644, %v2640
      %v2751 = vsel %vm2703, %v2648, %v2750
      %v2752 = vsel %vm2705, %v2652, %v2751
      %v2753 = vsel %vm2707, %v2656, %v2752
      %v2754 = vsel %vm2709, %v2660, %v2753
      %v2755 = vsel %vm2711, %v2664, %v2754
      %v2756 = vsel %vm2713, %v2668, %v2755
      %v2757 = vsel %vm2701, %v2676, %v2672
      %v2758 = vsel %vm2703, %v2680, %v2757
      %v2759 = vsel %vm2705, %v2684, %v2758
      %v2760 = vsel %vm2707, %v2688, %v2759
      %v2761 = vsel %vm2709, %v2692, %v2760
      %v2762 = vsel %vm2711, %v2696, %v2761
      %v2763 = vsel %vm2713, %v2700, %v2762
      %v2772 = vsel %vm532, %v1011, %v2714
      %v2773 = vsel %vm532, %v1057, %v2721
      %v2774 = vsel %vm532, %v1103, %v2728
      %v2775 = vsel %vm532, %v1149, %v2735
      %v2776 = vsel %vm532, %v1195, %v2742
      %v2777 = vsel %vm532, %v1241, %v2749
      %v2778 = vsel %vm532, %v1287, %v2756
      %v2779 = vsel %vm532, %v1333, %v2763
      %v2780 = vpack.c.bf16 %v2773, %v2772
      %v2781 = vpack.c.bf16 %v2775, %v2774
      %v2782 = vpack.c.bf16 %v2777, %v2776
      %v2783 = vpack.c.bf16 %v2779, %v2778
      %v2784 = vld [vmem:[%s10] sm:$0xf]
      %v2785 = vld [vmem:[%s10 + $0x4] sm:$0xf]
      %v2788 = vunpack.c.l.b16 %v2784
      %v2789 = vunpack.c.l.b16 %v2785
      %v2790 = vpack.c.b16 %v2789, %v2788
      %v2793 = vsel %vm969, %v2780, 0
      %v2796 = vsel %vm969, %v2781, 0
      %v2799 = vsel %vm969, %v2782, 0
      %v2802 = vsel %vm969, %v2783, 0
      %2804 = vmatprep.subr.bf16.mxu0 0
      %2805 = vmatpush1.bf16.msra.mxu0 %v2790
      %2806 = vmatprep.subr.bf16.mxu0 0
      %2807 = vmatpush1.bf16.msra.mxu0 0
      %2808 = vmatprep.subr.bf16.mxu0 0
      %2809 = vmatpush1.bf16.msra.mxu0 0
      %2810 = vmatprep.subr.bf16.mxu0 0
      %2811 = vmatpush1.bf16.msra.mxu0 0
      %2812 = vmatprep.subr.bf16.mxu0 0
      %2813 = vmatpush1.bf16.msra.mxu0 0
      %2814 = vmatprep.subr.bf16.mxu0 0
      %2815 = vmatpush1.bf16.msra.mxu0 0
      %2816 = vmatprep.subr.bf16.mxu0 0
      %2817 = vmatpush1.bf16.msra.mxu0 0
      %2818 = vmatprep.subr.bf16.mxu0 0
      %2819 = vmatpush1.bf16.msra.mxu0 0
      %2820 = vmatprep.subr.bf16.mxu0 0
      %2821 = vmatpush1.bf16.msra.mxu0 0
      %2822 = vmatprep.subr.bf16.mxu0 0
      %2823 = vmatpush1.bf16.msra.mxu0 0
      %2824 = vmatprep.subr.bf16.mxu0 0
      %2825 = vmatpush1.bf16.msra.mxu0 0
      %2826 = vmatprep.subr.bf16.mxu0 0
      %2827 = vmatpush1.bf16.msra.mxu0 0
      %2828 = vmatprep.subr.bf16.mxu0 0
      %2829 = vmatpush1.bf16.msra.mxu0 0
      %2830 = vmatprep.subr.bf16.mxu0 0
      %2831 = vmatpush1.bf16.msra.mxu0 0
      %2832 = vmatprep.subr.bf16.mxu0 0
      %2833 = vmatpush1.bf16.msra.mxu0 0
      %2834 = vmatprep.subr.bf16.mxu0 0
      %2835 = vmatpush1.bf16.msra.mxu0 0
      %2836 = vmatprep.mubr.bf16.mxu0 0
      %2837 = vmatmul.mubr.bf16.gmra.mrb[0].mxu0 %v2793
      %v2838 = vpop.f32.mrb[0].mxu0
      %v2839 = vadd.f32 0.0, %v2838
      %v2840 = vpop.f32.mrb[0].mxu0
      %v2841 = vpop.f32.mrb[0].mxu0
      %v2842 = vadd.f32 0.0, %v2841
      %v2843 = vpop.f32.mrb[0].mxu0
      %2844 = vmatprep.mubr.bf16.mxu0 0
      %2845 = vmatmul.mubr.bf16.gmra.mrb[0].mxu0 %v2796
      %v2846 = vpop.f32.mrb[0].mxu0
      %v2847 = vadd.f32 0.0, %v2846
      %v2848 = vpop.f32.mrb[0].mxu0
      %v2849 = vpop.f32.mrb[0].mxu0
      %v2850 = vadd.f32 0.0, %v2849
      %v2851 = vpop.f32.mrb[0].mxu0
      %2852 = vmatprep.mubr.bf16.mxu0 0
      %2853 = vmatmul.mubr.bf16.gmra.mrb[0].mxu0 %v2799
      %v2854 = vpop.f32.mrb[0].mxu0
      %v2855 = vadd.f32 0.0, %v2854
      %v2856 = vpop.f32.mrb[0].mxu0
      %v2857 = vpop.f32.mrb[0].mxu0
      %v2858 = vadd.f32 0.0, %v2857
      %v2859 = vpop.f32.mrb[0].mxu0
      %2860 = vmatprep.mubr.bf16.mxu0 0
      %2861 = vmatmul.mubr.bf16.gmra.mrb[0].mxu0 %v2802
      %v2862 = vpop.f32.mrb[0].mxu0
      %v2863 = vadd.f32 0.0, %v2862
      %v2864 = vpop.f32.mrb[0].mxu0
      %v2865 = vpop.f32.mrb[0].mxu0
      %v2866 = vadd.f32 0.0, %v2865
      %v2867 = vpop.f32.mrb[0].mxu0
      %2868 = vdwg.mxu0
      %v2870 = vsel %vm969, %v937, 0
      %v2873 = vsel %vm969, %v938, 0
      %v2876 = vsel %vm969, %v939, 0
      %v2879 = vsel %vm969, %v940, 0
      %v2882 = vsel %vm969, %v860, 0
      %v2885 = vsel %vm969, %v861, 0
      %v2888 = vsel %vm969, %v862, 0
      %v2891 = vsel %vm969, %v863, 0
      %2893 = vmatprep.subr.bf16.mxu0 0
      %2894 = vmatpush1.bf16.xpose.msra.mxu0 %v2882
      %2895 = vmatprep.subr.bf16.mxu0 0
      %2896 = vmatpush1.bf16.xpose.msra.mxu0 %v2885
      %2897 = vmatprep.subr.bf16.mxu0 0
      %2898 = vmatpush1.bf16.xpose.msra.mxu0 %v2888
      %2899 = vmatprep.subr.bf16.mxu0 0
      %2900 = vmatpush1.bf16.xpose.msra.mxu0 %v2891
      %2901 = vmatprep.subr.bf16.mxu0 0
      %2902 = vmatpush1.bf16.xpose.msra.mxu0 0
      %2903 = vmatprep.subr.bf16.mxu0 0
      %2904 = vmatpush1.bf16.xpose.msra.mxu0 0
      %2905 = vmatprep.subr.bf16.mxu0 0
      %2906 = vmatpush1.bf16.xpose.msra.mxu0 0
      %2907 = vmatprep.subr.bf16.mxu0 0
      %2908 = vmatpush1.bf16.xpose.msra.mxu0 0
      %2909 = vmatprep.subr.bf16.mxu0 0
      %2910 = vmatpush1.bf16.xpose.msra.mxu0 0
      %2911 = vmatprep.subr.bf16.mxu0 0
      %2912 = vmatpush1.bf16.xpose.msra.mxu0 0
      %2913 = vmatprep.subr.bf16.mxu0 0
      %2914 = vmatpush1.bf16.xpose.msra.mxu0 0
      %2915 = vmatprep.subr.bf16.mxu0 0
      %2916 = vmatpush1.bf16.xpose.msra.mxu0 0
      %2917 = vmatprep.subr.bf16.mxu0 0
      %2918 = vmatpush1.bf16.xpose.msra.mxu0 0
      %2919 = vmatprep.subr.bf16.mxu0 0
      %2920 = vmatpush1.bf16.xpose.msra.mxu0 0
      %2921 = vmatprep.subr.bf16.mxu0 0
      %2922 = vmatpush1.bf16.xpose.msra.mxu0 0
      %2923 = vmatprep.subr.bf16.mxu0 0
      %2924 = vmatpush1.bf16.xpose.msra.mxu0 0
      %2925 = vmatprep.mubr.bf16.mxu0 0
      %2926 = vmatmul.mubr.bf16.gmra.mrb[0].mxu0 %v2870
      %v2927 = vpop.f32.mrb[0].mxu0
      %v2928 = vadd.f32 %v2839, %v2927
      %v2929 = vpop.f32.mrb[0].mxu0
      %v2930 = vpop.f32.mrb[0].mxu0
      %v2931 = vadd.f32 %v2842, %v2930
      %v2932 = vpop.f32.mrb[0].mxu0
      %2933 = vmatprep.mubr.bf16.mxu0 0
      %2934 = vmatmul.mubr.bf16.gmra.mrb[0].mxu0 %v2873
      %v2935 = vpop.f32.mrb[0].mxu0
      %v2936 = vadd.f32 %v2847, %v2935
      %v2937 = vpop.f32.mrb[0].mxu0
      %v2938 = vpop.f32.mrb[0].mxu0
      %v2939 = vadd.f32 %v2850, %v2938
      %v2940 = vpop.f32.mrb[0].mxu0
      %2941 = vmatprep.mubr.bf16.mxu0 0
      %2942 = vmatmul.mubr.bf16.gmra.mrb[0].mxu0 %v2876
      %v2943 = vpop.f32.mrb[0].mxu0
      %v2944 = vadd.f32 %v2855, %v2943
      %v2945 = vpop.f32.mrb[0].mxu0
      %v2946 = vpop.f32.mrb[0].mxu0
      %v2947 = vadd.f32 %v2858, %v2946
      %v2948 = vpop.f32.mrb[0].mxu0
      %2949 = vmatprep.mubr.bf16.mxu0 0
      %2950 = vmatmul.mubr.bf16.gmra.mrb[0].mxu0 %v2879
      %v2951 = vpop.f32.mrb[0].mxu0
      %v2952 = vadd.f32 %v2863, %v2951
      %v2953 = vpop.f32.mrb[0].mxu0
      %v2954 = vpop.f32.mrb[0].mxu0
      %v2955 = vadd.f32 %v2866, %v2954
      %v2956 = vpop.f32.mrb[0].mxu0
      %2957 = vdwg.mxu0
      %vm2958 = vcmask 523264
      %v2959 = vsel %vm2958, %v2928, -inf
      %2960 = vmax.xlane.f32.xlu0 %v2959
      %v2961 = vpop.xlane.xlu0 %2960
      %v2962 = vsel %vm2958, %v2931, -inf
      %2963 = vmax.xlane.f32.xlu0 %v2962
      %v2964 = vpop.xlane.xlu0 %2963
      %v2965 = vsel %vm2958, %v2936, -inf
      %2966 = vmax.xlane.f32.xlu0 %v2965
      %v2967 = vpop.xlane.xlu0 %2966
      %v2968 = vsel %vm2958, %v2939, -inf
      %2969 = vmax.xlane.f32.xlu0 %v2968
      %v2970 = vpop.xlane.xlu0 %2969
      %v2971 = vsel %vm2958, %v2944, -inf
      %2972 = vmax.xlane.f32.xlu0 %v2971
      %v2973 = vpop.xlane.xlu0 %2972
      %v2974 = vsel %vm2958, %v2947, -inf
      %2975 = vmax.xlane.f32.xlu0 %v2974
      %v2976 = vpop.xlane.xlu0 %2975
      %v2977 = vsel %vm2958, %v2952, -inf
      %2978 = vmax.xlane.f32.xlu0 %v2977
      %v2979 = vpop.xlane.xlu0 %2978
      %v2980 = vsel %vm2958, %v2955, -inf
      %2981 = vmax.xlane.f32.xlu0 %v2980
      %v2982 = vpop.xlane.xlu0 %2981
      %v2983 = vsub.f32 %v2928, %v2961
      %v2984 = vsub.f32 %v2931, %v2964
      %v2985 = vsub.f32 %v2936, %v2967
      %v2986 = vsub.f32 %v2939, %v2970
      %v2987 = vsub.f32 %v2944, %v2973
      %v2988 = vsub.f32 %v2947, %v2976
      %v2989 = vsub.f32 %v2952, %v2979
      %v2990 = vsub.f32 %v2955, %v2982
      %v2991 = vmul.f32 %v2983, 1.442695
      %v2992 = vpow.pop %v2991
      %v2993 = vmul.f32 %v2984, 1.442695
      %v2994 = vpow.pop %v2993
      %v2995 = vmul.f32 %v2985, 1.442695
      %v2996 = vpow.pop %v2995
      %v2997 = vmul.f32 %v2986, 1.442695
      %v2998 = vpow.pop %v2997
      %v2999 = vmul.f32 %v2987, 1.442695
      %v3000 = vpow.pop %v2999
      %v3001 = vmul.f32 %v2988, 1.442695
      %v3002 = vpow.pop %v3001
      %v3003 = vmul.f32 %v2989, 1.442695
      %v3004 = vpow.pop %v3003
      %v3005 = vmul.f32 %v2990, 1.442695
      %v3006 = vpow.pop %v3005
      %v3007 = vsel %vm2958, %v2992, 0.0
      %3008 = vadd.xlane.f32.xlu0 %v3007
      %v3009 = vpop.xlane.xlu0 %3008
      %v3010 = vsel %vm2958, %v2994, 0.0
      %3011 = vadd.xlane.f32.xlu0 %v3010
      %v3012 = vpop.xlane.xlu0 %3011
      %v3013 = vsel %vm2958, %v2996, 0.0
      %3014 = vadd.xlane.f32.xlu0 %v3013
      %v3015 = vpop.xlane.xlu0 %3014
      %v3016 = vsel %vm2958, %v2998, 0.0
      %3017 = vadd.xlane.f32.xlu0 %v3016
      %v3018 = vpop.xlane.xlu0 %3017
      %v3019 = vsel %vm2958, %v3000, 0.0
      %3020 = vadd.xlane.f32.xlu0 %v3019
      %v3021 = vpop.xlane.xlu0 %3020
      %v3022 = vsel %vm2958, %v3002, 0.0
      %3023 = vadd.xlane.f32.xlu0 %v3022
      %v3024 = vpop.xlane.xlu0 %3023
      %v3025 = vsel %vm2958, %v3004, 0.0
      %3026 = vadd.xlane.f32.xlu0 %v3025
      %v3027 = vpop.xlane.xlu0 %3026
      %v3028 = vsel %vm2958, %v3006, 0.0
      %3029 = vadd.xlane.f32.xlu0 %v3028
      %v3030 = vpop.xlane.xlu0 %3029
      %v3031 = vrcp.pop %v3009
      %v3032 = vrcp.pop %v3012
      %v3033 = vrcp.pop %v3015
      %v3034 = vrcp.pop %v3018
      %v3035 = vrcp.pop %v3021
      %v3036 = vrcp.pop %v3024
      %v3037 = vrcp.pop %v3027
      %v3038 = vrcp.pop %v3030
      %v3039 = vmul.f32 %v2992, %v3031
      %v3040 = vmul.f32 %v2994, %v3032
      %v3041 = vmul.f32 %v2996, %v3033
      %v3042 = vmul.f32 %v2998, %v3034
      %v3043 = vmul.f32 %v3000, %v3035
      %v3044 = vmul.f32 %v3002, %v3036
      %v3045 = vmul.f32 %v3004, %v3037
      %v3046 = vmul.f32 %v3006, %v3038
      %v3047 = vpack.c.bf16 %v3040, %v3039
      %v3048 = vpack.c.bf16 %v3042, %v3041
      %v3049 = vpack.c.bf16 %v3044, %v3043
      %v3050 = vpack.c.bf16 %v3046, %v3045
      %v3052 = vsel %vm2958, %v3047, 0
      %v3055 = vsel %vm2958, %v3048, 0
      %v3058 = vsel %vm2958, %v3049, 0
      %v3061 = vsel %vm2958, %v3050, 0
      %3063 = vmatprep.subr.bf16.mxu0 0
      %3064 = vmatpush1.bf16.msra.mxu0 %v933
      %3065 = vmatprep.subr.bf16.mxu0 0
      %3066 = vmatpush1.bf16.msra.mxu0 %v934
      %3067 = vmatprep.subr.bf16.mxu0 0
      %3068 = vmatpush1.bf16.msra.mxu0 %v935
      %3069 = vmatprep.subr.bf16.mxu0 0
      %3070 = vmatpush1.bf16.msra.mxu0 %v936
      %3071 = vmatprep.subr.bf16.mxu0 0
      %3072 = vmatpush1.bf16.msra.mxu0 0
      %3073 = vmatprep.subr.bf16.mxu0 0
      %3074 = vmatpush1.bf16.msra.mxu0 0
      %3075 = vmatprep.subr.bf16.mxu0 0
      %3076 = vmatpush1.bf16.msra.mxu0 0
      %3077 = vmatprep.subr.bf16.mxu0 0
      %3078 = vmatpush1.bf16.msra.mxu0 0
      %3079 = vmatprep.subr.bf16.mxu0 0
      %3080 = vmatpush1.bf16.msra.mxu0 0
      %3081 = vmatprep.subr.bf16.mxu0 0
      %3082 = vmatpush1.bf16.msra.mxu0 0
      %3083 = vmatprep.subr.bf16.mxu0 0
      %3084 = vmatpush1.bf16.msra.mxu0 0
      %3085 = vmatprep.subr.bf16.mxu0 0
      %3086 = vmatpush1.bf16.msra.mxu0 0
      %3087 = vmatprep.subr.bf16.mxu0 0
      %3088 = vmatpush1.bf16.msra.mxu0 0
      %3089 = vmatprep.subr.bf16.mxu0 0
      %3090 = vmatpush1.bf16.msra.mxu0 0
      %3091 = vmatprep.subr.bf16.mxu0 0
      %3092 = vmatpush1.bf16.msra.mxu0 0
      %3093 = vmatprep.subr.bf16.mxu0 0
      %3094 = vmatpush1.bf16.msra.mxu0 0
      %3095 = vmatprep.mubr.bf16.mxu0 0
      %3096 = vmatmul.mubr.bf16.gmra.mrb[0].mxu0 %v3052
      %v3097 = vpop.f32.mrb[0].mxu0
      %v3098 = vadd.f32 0.0, %v3097
      %v3099 = vpop.f32.mrb[0].mxu0
      %v3100 = vpop.f32.mrb[0].mxu0
      %v3101 = vadd.f32 0.0, %v3100
      %v3102 = vpop.f32.mrb[0].mxu0
      %3103 = vmatprep.mubr.bf16.mxu0 0
      %3104 = vmatmul.mubr.bf16.gmra.mrb[0].mxu0 %v3055
      %v3105 = vpop.f32.mrb[0].mxu0
      %v3106 = vadd.f32 0.0, %v3105
      %v3107 = vpop.f32.mrb[0].mxu0
      %v3108 = vpop.f32.mrb[0].mxu0
      %v3109 = vadd.f32 0.0, %v3108
      %v3110 = vpop.f32.mrb[0].mxu0
      %3111 = vmatprep.mubr.bf16.mxu0 0
      %3112 = vmatmul.mubr.bf16.gmra.mrb[0].mxu0 %v3058
      %v3113 = vpop.f32.mrb[0].mxu0
      %v3114 = vadd.f32 0.0, %v3113
      %v3115 = vpop.f32.mrb[0].mxu0
      %v3116 = vpop.f32.mrb[0].mxu0
      %v3117 = vadd.f32 0.0, %v3116
      %v3118 = vpop.f32.mrb[0].mxu0
      %3119 = vmatprep.mubr.bf16.mxu0 0
      %3120 = vmatmul.mubr.bf16.gmra.mrb[0].mxu0 %v3061
      %v3121 = vpop.f32.mrb[0].mxu0
      %v3122 = vadd.f32 0.0, %v3121
      %v3123 = vpop.f32.mrb[0].mxu0
      %v3124 = vpop.f32.mrb[0].mxu0
      %v3125 = vadd.f32 0.0, %v3124
      %v3126 = vpop.f32.mrb[0].mxu0
      %3127 = vdwg.mxu0
      %v3128 = vpack.c.bf16 %v3101, %v3098
      %v3129 = vpack.c.bf16 %v3109, %v3106
      %v3130 = vpack.c.bf16 %v3117, %v3114
      %v3131 = vpack.c.bf16 %v3125, %v3122
      %v3132 = vld [vmem:[%s11] sm:$0xf]
      %v3133 = vld [vmem:[%s11 + $0x4] sm:$0xf]
      %s3134 = scalar_lea.vmem %s5, 4
      %v3135 = vld [vmem:[%s3134] sm:$0xf]
      %v3137 = vsel %vm545, %v3135, 0
      %3139 = vmatprep.subr.bf16.mxu0 0
      %3140 = vmatpush1.bf16.msra.mxu0 %v3137
      %3141 = vmatprep.subr.bf16.mxu0 0
      %3142 = vmatpush1.bf16.msra.mxu0 0
      %3143 = vmatprep.subr.bf16.mxu0 0
      %3144 = vmatpush1.bf16.msra.mxu0 0
      %3145 = vmatprep.subr.bf16.mxu0 0
      %3146 = vmatpush1.bf16.msra.mxu0 0
      %3147 = vmatprep.subr.bf16.mxu0 0
      %3148 = vmatpush1.bf16.msra.mxu0 0
      %3149 = vmatprep.subr.bf16.mxu0 0
      %3150 = vmatpush1.bf16.msra.mxu0 0
      %3151 = vmatprep.subr.bf16.mxu0 0
      %3152 = vmatpush1.bf16.msra.mxu0 0
      %3153 = vmatprep.subr.bf16.mxu0 0
      %3154 = vmatpush1.bf16.msra.mxu0 0
      %3155 = vmatprep.subr.bf16.mxu0 0
      %3156 = vmatpush1.bf16.msra.mxu0 0
      %3157 = vmatprep.subr.bf16.mxu0 0
      %3158 = vmatpush1.bf16.msra.mxu0 0
      %3159 = vmatprep.subr.bf16.mxu0 0
      %3160 = vmatpush1.bf16.msra.mxu0 0
      %3161 = vmatprep.subr.bf16.mxu0 0
      %3162 = vmatpush1.bf16.msra.mxu0 0
      %3163 = vmatprep.subr.bf16.mxu0 0
      %3164 = vmatpush1.bf16.msra.mxu0 0
      %3165 = vmatprep.subr.bf16.mxu0 0
      %3166 = vmatpush1.bf16.msra.mxu0 0
      %3167 = vmatprep.subr.bf16.mxu0 0
      %3168 = vmatpush1.bf16.msra.mxu0 0
      %3169 = vmatprep.subr.bf16.mxu0 0
      %3170 = vmatpush1.bf16.msra.mxu0 0
      %3171 = vmatprep.mubr.bf16.mxu0 0
      %3172 = vmatmul.mubr.bf16.gmra.mrb[0].mxu0 %v712
      %v3173 = vpop.f32.mrb[0].mxu0
      %v3174 = vadd.f32 0.0, %v3173
      %v3175 = vpop.f32.mrb[0].mxu0
      %v3176 = vpop.f32.mrb[0].mxu0
      %v3177 = vadd.f32 0.0, %v3176
      %v3178 = vpop.f32.mrb[0].mxu0
      %3179 = vmatprep.mubr.bf16.mxu0 0
      %3180 = vmatmul.mubr.bf16.gmra.mrb[0].mxu0 %v715
      %v3181 = vpop.f32.mrb[0].mxu0
      %v3182 = vadd.f32 0.0, %v3181
      %v3183 = vpop.f32.mrb[0].mxu0
      %v3184 = vpop.f32.mrb[0].mxu0
      %v3185 = vadd.f32 0.0, %v3184
      %v3186 = vpop.f32.mrb[0].mxu0
      %3187 = vmatprep.mubr.bf16.mxu0 0
      %3188 = vmatmul.mubr.bf16.gmra.mrb[0].mxu0 %v718
      %v3189 = vpop.f32.mrb[0].mxu0
      %v3190 = vadd.f32 0.0, %v3189
      %v3191 = vpop.f32.mrb[0].mxu0
      %v3192 = vpop.f32.mrb[0].mxu0
      %v3193 = vadd.f32 0.0, %v3192
      %v3194 = vpop.f32.mrb[0].mxu0
      %3195 = vmatprep.mubr.bf16.mxu0 0
      %3196 = vmatmul.mubr.bf16.gmra.mrb[0].mxu0 %v721
      %v3197 = vpop.f32.mrb[0].mxu0
      %v3198 = vadd.f32 0.0, %v3197
      %v3199 = vpop.f32.mrb[0].mxu0
      %v3200 = vpop.f32.mrb[0].mxu0
      %v3201 = vadd.f32 0.0, %v3200
      %v3202 = vpop.f32.mrb[0].mxu0
      %3203 = vdwg.mxu0
      %s3204 = scalar_lea.vmem %s6, 4
      %v3205 = vld [vmem:[%s3204] sm:$0xf]
      %v3207 = vsel %vm545, %v3205, 0
      %3209 = vmatprep.subr.bf16.mxu0 0
      %3210 = vmatpush1.bf16.msra.mxu0 %v3207
      %3211 = vmatprep.subr.bf16.mxu0 0
      %3212 = vmatpush1.bf16.msra.mxu0 0
      %3213 = vmatprep.subr.bf16.mxu0 0
      %3214 = vmatpush1.bf16.msra.mxu0 0
      %3215 = vmatprep.subr.bf16.mxu0 0
      %3216 = vmatpush1.bf16.msra.mxu0 0
      %3217 = vmatprep.subr.bf16.mxu0 0
      %3218 = vmatpush1.bf16.msra.mxu0 0
      %3219 = vmatprep.subr.bf16.mxu0 0
      %3220 = vmatpush1.bf16.msra.mxu0 0
      %3221 = vmatprep.subr.bf16.mxu0 0
      %3222 = vmatpush1.bf16.msra.mxu0 0
      %3223 = vmatprep.subr.bf16.mxu0 0
      %3224 = vmatpush1.bf16.msra.mxu0 0
      %3225 = vmatprep.subr.bf16.mxu0 0
      %3226 = vmatpush1.bf16.msra.mxu0 0
      %3227 = vmatprep.subr.bf16.mxu0 0
      %3228 = vmatpush1.bf16.msra.mxu0 0
      %3229 = vmatprep.subr.bf16.mxu0 0
      %3230 = vmatpush1.bf16.msra.mxu0 0
      %3231 = vmatprep.subr.bf16.mxu0 0
      %3232 = vmatpush1.bf16.msra.mxu0 0
      %3233 = vmatprep.subr.bf16.mxu0 0
      %3234 = vmatpush1.bf16.msra.mxu0 0
      %3235 = vmatprep.subr.bf16.mxu0 0
      %3236 = vmatpush1.bf16.msra.mxu0 0
      %3237 = vmatprep.subr.bf16.mxu0 0
      %3238 = vmatpush1.bf16.msra.mxu0 0
      %3239 = vmatprep.subr.bf16.mxu0 0
      %3240 = vmatpush1.bf16.msra.mxu0 0
      %3241 = vmatprep.mubr.bf16.mxu0 0
      %3242 = vmatmul.mubr.bf16.gmra.mrb[0].mxu0 %v712
      %v3243 = vpop.f32.mrb[0].mxu0
      %v3244 = vadd.f32 0.0, %v3243
      %v3245 = vpop.f32.mrb[0].mxu0
      %v3246 = vpop.f32.mrb[0].mxu0
      %v3247 = vadd.f32 0.0, %v3246
      %v3248 = vpop.f32.mrb[0].mxu0
      %3249 = vmatprep.mubr.bf16.mxu0 0
      %3250 = vmatmul.mubr.bf16.gmra.mrb[0].mxu0 %v715
      %v3251 = vpop.f32.mrb[0].mxu0
      %v3252 = vadd.f32 0.0, %v3251
      %v3253 = vpop.f32.mrb[0].mxu0
      %v3254 = vpop.f32.mrb[0].mxu0
      %v3255 = vadd.f32 0.0, %v3254
      %v3256 = vpop.f32.mrb[0].mxu0
      %3257 = vmatprep.mubr.bf16.mxu0 0
      %3258 = vmatmul.mubr.bf16.gmra.mrb[0].mxu0 %v718
      %v3259 = vpop.f32.mrb[0].mxu0
      %v3260 = vadd.f32 0.0, %v3259
      %v3261 = vpop.f32.mrb[0].mxu0
      %v3262 = vpop.f32.mrb[0].mxu0
      %v3263 = vadd.f32 0.0, %v3262
      %v3264 = vpop.f32.mrb[0].mxu0
      %3265 = vmatprep.mubr.bf16.mxu0 0
      %3266 = vmatmul.mubr.bf16.gmra.mrb[0].mxu0 %v721
      %v3267 = vpop.f32.mrb[0].mxu0
      %v3268 = vadd.f32 0.0, %v3267
      %v3269 = vpop.f32.mrb[0].mxu0
      %v3270 = vpop.f32.mrb[0].mxu0
      %v3271 = vadd.f32 0.0, %v3270
      %v3272 = vpop.f32.mrb[0].mxu0
      %3273 = vdwg.mxu0
      %v3274 = vpack.c.bf16 %v3247, %v3244
      %v3275 = vpack.c.bf16 %v3255, %v3252
      %v3276 = vpack.c.bf16 %v3263, %v3260
      %v3277 = vpack.c.bf16 %v3271, %v3268
      %s3278 = scalar_lea.vmem %s7, 4
      %v3279 = vld [vmem:[%s3278] sm:$0xf]
      %v3281 = vsel %vm545, %v3279, 0
      %3283 = vmatprep.subr.bf16.mxu0 0
      %3284 = vmatpush1.bf16.msra.mxu0 %v3281
      %3285 = vmatprep.subr.bf16.mxu0 0
      %3286 = vmatpush1.bf16.msra.mxu0 0
      %3287 = vmatprep.subr.bf16.mxu0 0
      %3288 = vmatpush1.bf16.msra.mxu0 0
      %3289 = vmatprep.subr.bf16.mxu0 0
      %3290 = vmatpush1.bf16.msra.mxu0 0
      %3291 = vmatprep.subr.bf16.mxu0 0
      %3292 = vmatpush1.bf16.msra.mxu0 0
      %3293 = vmatprep.subr.bf16.mxu0 0
      %3294 = vmatpush1.bf16.msra.mxu0 0
      %3295 = vmatprep.subr.bf16.mxu0 0
      %3296 = vmatpush1.bf16.msra.mxu0 0
      %3297 = vmatprep.subr.bf16.mxu0 0
      %3298 = vmatpush1.bf16.msra.mxu0 0
      %3299 = vmatprep.subr.bf16.mxu0 0
      %3300 = vmatpush1.bf16.msra.mxu0 0
      %3301 = vmatprep.subr.bf16.mxu0 0
      %3302 = vmatpush1.bf16.msra.mxu0 0
      %3303 = vmatprep.subr.bf16.mxu0 0
      %3304 = vmatpush1.bf16.msra.mxu0 0
      %3305 = vmatprep.subr.bf16.mxu0 0
      %3306 = vmatpush1.bf16.msra.mxu0 0
      %3307 = vmatprep.subr.bf16.mxu0 0
      %3308 = vmatpush1.bf16.msra.mxu0 0
      %3309 = vmatprep.subr.bf16.mxu0 0
      %3310 = vmatpush1.bf16.msra.mxu0 0
      %3311 = vmatprep.subr.bf16.mxu0 0
      %3312 = vmatpush1.bf16.msra.mxu0 0
      %3313 = vmatprep.subr.bf16.mxu0 0
      %3314 = vmatpush1.bf16.msra.mxu0 0
      %3315 = vmatprep.mubr.bf16.mxu0 0
      %3316 = vmatmul.mubr.bf16.gmra.mrb[0].mxu0 %v712
      %v3317 = vpop.f32.mrb[0].mxu0
      %v3318 = vadd.f32 0.0, %v3317
      %v3319 = vpop.f32.mrb[0].mxu0
      %v3320 = vpop.f32.mrb[0].mxu0
      %v3321 = vadd.f32 0.0, %v3320
      %v3322 = vpop.f32.mrb[0].mxu0
      %3323 = vmatprep.mubr.bf16.mxu0 0
      %3324 = vmatmul.mubr.bf16.gmra.mrb[0].mxu0 %v715
      %v3325 = vpop.f32.mrb[0].mxu0
      %v3326 = vadd.f32 0.0, %v3325
      %v3327 = vpop.f32.mrb[0].mxu0
      %v3328 = vpop.f32.mrb[0].mxu0
      %v3329 = vadd.f32 0.0, %v3328
      %v3330 = vpop.f32.mrb[0].mxu0
      %3331 = vmatprep.mubr.bf16.mxu0 0
      %3332 = vmatmul.mubr.bf16.gmra.mrb[0].mxu0 %v718
      %v3333 = vpop.f32.mrb[0].mxu0
      %v3334 = vadd.f32 0.0, %v3333
      %v3335 = vpop.f32.mrb[0].mxu0
      %v3336 = vpop.f32.mrb[0].mxu0
      %v3337 = vadd.f32 0.0, %v3336
      %v3338 = vpop.f32.mrb[0].mxu0
      %3339 = vmatprep.mubr.bf16.mxu0 0
      %3340 = vmatmul.mubr.bf16.gmra.mrb[0].mxu0 %v721
      %v3341 = vpop.f32.mrb[0].mxu0
      %v3342 = vadd.f32 0.0, %v3341
      %v3343 = vpop.f32.mrb[0].mxu0
      %v3344 = vpop.f32.mrb[0].mxu0
      %v3345 = vadd.f32 0.0, %v3344
      %v3346 = vpop.f32.mrb[0].mxu0
      %3347 = vdwg.mxu0
      %v3348 = vpack.c.bf16 %v3321, %v3318
      %v3349 = vpack.c.bf16 %v3329, %v3326
      %v3350 = vpack.c.bf16 %v3337, %v3334
      %v3351 = vpack.c.bf16 %v3345, %v3342
      %v3352 = vpack.c.bf16 %v3177, %v3174
      %v3353 = vpack.c.bf16 %v3185, %v3182
      %v3354 = vpack.c.bf16 %v3193, %v3190
      %v3355 = vpack.c.bf16 %v3201, %v3198
      %v3360 = vunpack.c.l.b16 %v3352
      %v3361 = vunpack.c.h.b16 %v3352
      %v3362 = vunpack.c.l.b16 %v3353
      %v3363 = vunpack.c.h.b16 %v3353
      %v3364 = vunpack.c.l.b16 %v3354
      %v3365 = vunpack.c.h.b16 %v3354
      %v3366 = vunpack.c.l.b16 %v3355
      %v3367 = vunpack.c.h.b16 %v3355
      %v3368 = vpack.c.b16 %v3360, %v3360
      %v3369 = vpack.c.b16 %v3361, %v3361
      %v3370 = vpack.c.b16 %v3362, %v3362
      %v3371 = vpack.c.b16 %v3363, %v3363
      %v3372 = vpack.c.b16 %v3364, %v3364
      %v3373 = vpack.c.b16 %v3365, %v3365
      %v3374 = vpack.c.b16 %v3366, %v3366
      %v3375 = vpack.c.b16 %v3367, %v3367
      %v3376 = vld [vmem:[%s8] sm:$0xf]
      %v3377 = vld [vmem:[%s8 + $0x4] sm:$0xf]
      %v3378 = vld [vmem:[%s8 + $0x8] sm:$0xf]
      %v3379 = vld [vmem:[%s8 + $0xc] sm:$0xf]
      %v3380 = vld [vmem:[%s8 + $0x10] sm:$0xf]
      %v3381 = vld [vmem:[%s8 + $0x14] sm:$0xf]
      %v3382 = vld [vmem:[%s8 + $0x18] sm:$0xf]
      %v3383 = vld [vmem:[%s8 + $0x1c] sm:$0xf]
      %v3385 = vsel %vm969, %v3368, 0
      %v3388 = vsel %vm969, %v3376, 0
      %3390 = vmatprep.subr.bf16.mxu0 0
      %3391 = vmatpush1.bf16.xpose.msra.mxu0 %v3388
      %3392 = vmatprep.subr.bf16.mxu0 0
      %3393 = vmatpush1.bf16.xpose.msra.mxu0 0
      %3394 = vmatprep.subr.bf16.mxu0 0
      %3395 = vmatpush1.bf16.xpose.msra.mxu0 0
      %3396 = vmatprep.subr.bf16.mxu0 0
      %3397 = vmatpush1.bf16.xpose.msra.mxu0 0
      %3398 = vmatprep.subr.bf16.mxu0 0
      %3399 = vmatpush1.bf16.xpose.msra.mxu0 0
      %3400 = vmatprep.subr.bf16.mxu0 0
      %3401 = vmatpush1.bf16.xpose.msra.mxu0 0
      %3402 = vmatprep.subr.bf16.mxu0 0
      %3403 = vmatpush1.bf16.xpose.msra.mxu0 0
      %3404 = vmatprep.subr.bf16.mxu0 0
      %3405 = vmatpush1.bf16.xpose.msra.mxu0 0
      %3406 = vmatprep.subr.bf16.mxu0 0
      %3407 = vmatpush1.bf16.xpose.msra.mxu0 0
      %3408 = vmatprep.subr.bf16.mxu0 0
      %3409 = vmatpush1.bf16.xpose.msra.mxu0 0
      %3410 = vmatprep.subr.bf16.mxu0 0
      %3411 = vmatpush1.bf16.xpose.msra.mxu0 0
      %3412 = vmatprep.subr.bf16.mxu0 0
      %3413 = vmatpush1.bf16.xpose.msra.mxu0 0
      %3414 = vmatprep.subr.bf16.mxu0 0
      %3415 = vmatpush1.bf16.xpose.msra.mxu0 0
      %3416 = vmatprep.subr.bf16.mxu0 0
      %3417 = vmatpush1.bf16.xpose.msra.mxu0 0
      %3418 = vmatprep.subr.bf16.mxu0 0
      %3419 = vmatpush1.bf16.xpose.msra.mxu0 0
      %3420 = vmatprep.subr.bf16.mxu0 0
      %3421 = vmatpush1.bf16.xpose.msra.mxu0 0
      %3422 = vmatprep.mubr.bf16.mxu0 0
      %3423 = vmatmul.mubr.bf16.gmra.mrb[0].mxu0 %v3385
      %v3424 = vpop.f32.mrb[0].mxu0
      %v3425 = vadd.f32 0.0, %v3424
      %v3426 = vpop.f32.mrb[0].mxu0
      %v3427 = vpop.f32.mrb[0].mxu0
      %v3428 = vpop.f32.mrb[0].mxu0
      %3429 = vdwg.mxu0
      %v3431 = vsel %vm969, %v3369, 0
      %v3434 = vsel %vm969, %v3377, 0
      %3436 = vmatprep.subr.bf16.mxu0 0
      %3437 = vmatpush1.bf16.xpose.msra.mxu0 %v3434
      %3438 = vmatprep.subr.bf16.mxu0 0
      %3439 = vmatpush1.bf16.xpose.msra.mxu0 0
      %3440 = vmatprep.subr.bf16.mxu0 0
      %3441 = vmatpush1.bf16.xpose.msra.mxu0 0
      %3442 = vmatprep.subr.bf16.mxu0 0
      %3443 = vmatpush1.bf16.xpose.msra.mxu0 0
      %3444 = vmatprep.subr.bf16.mxu0 0
      %3445 = vmatpush1.bf16.xpose.msra.mxu0 0
      %3446 = vmatprep.subr.bf16.mxu0 0
      %3447 = vmatpush1.bf16.xpose.msra.mxu0 0
      %3448 = vmatprep.subr.bf16.mxu0 0
      %3449 = vmatpush1.bf16.xpose.msra.mxu0 0
      %3450 = vmatprep.subr.bf16.mxu0 0
      %3451 = vmatpush1.bf16.xpose.msra.mxu0 0
      %3452 = vmatprep.subr.bf16.mxu0 0
      %3453 = vmatpush1.bf16.xpose.msra.mxu0 0
      %3454 = vmatprep.subr.bf16.mxu0 0
      %3455 = vmatpush1.bf16.xpose.msra.mxu0 0
      %3456 = vmatprep.subr.bf16.mxu0 0
      %3457 = vmatpush1.bf16.xpose.msra.mxu0 0
      %3458 = vmatprep.subr.bf16.mxu0 0
      %3459 = vmatpush1.bf16.xpose.msra.mxu0 0
      %3460 = vmatprep.subr.bf16.mxu0 0
      %3461 = vmatpush1.bf16.xpose.msra.mxu0 0
      %3462 = vmatprep.subr.bf16.mxu0 0
      %3463 = vmatpush1.bf16.xpose.msra.mxu0 0
      %3464 = vmatprep.subr.bf16.mxu0 0
      %3465 = vmatpush1.bf16.xpose.msra.mxu0 0
      %3466 = vmatprep.subr.bf16.mxu0 0
      %3467 = vmatpush1.bf16.xpose.msra.mxu0 0
      %3468 = vmatprep.mubr.bf16.mxu0 0
      %3469 = vmatmul.mubr.bf16.gmra.mrb[0].mxu0 %v3431
      %v3470 = vpop.f32.mrb[0].mxu0
      %v3471 = vadd.f32 0.0, %v3470
      %v3472 = vpop.f32.mrb[0].mxu0
      %v3473 = vpop.f32.mrb[0].mxu0
      %v3474 = vpop.f32.mrb[0].mxu0
      %3475 = vdwg.mxu0
      %v3477 = vsel %vm969, %v3370, 0
      %v3480 = vsel %vm969, %v3378, 0
      %3482 = vmatprep.subr.bf16.mxu0 0
      %3483 = vmatpush1.bf16.xpose.msra.mxu0 %v3480
      %3484 = vmatprep.subr.bf16.mxu0 0
      %3485 = vmatpush1.bf16.xpose.msra.mxu0 0
      %3486 = vmatprep.subr.bf16.mxu0 0
      %3487 = vmatpush1.bf16.xpose.msra.mxu0 0
      %3488 = vmatprep.subr.bf16.mxu0 0
      %3489 = vmatpush1.bf16.xpose.msra.mxu0 0
      %3490 = vmatprep.subr.bf16.mxu0 0
      %3491 = vmatpush1.bf16.xpose.msra.mxu0 0
      %3492 = vmatprep.subr.bf16.mxu0 0
      %3493 = vmatpush1.bf16.xpose.msra.mxu0 0
      %3494 = vmatprep.subr.bf16.mxu0 0
      %3495 = vmatpush1.bf16.xpose.msra.mxu0 0
      %3496 = vmatprep.subr.bf16.mxu0 0
      %3497 = vmatpush1.bf16.xpose.msra.mxu0 0
      %3498 = vmatprep.subr.bf16.mxu0 0
      %3499 = vmatpush1.bf16.xpose.msra.mxu0 0
      %3500 = vmatprep.subr.bf16.mxu0 0
      %3501 = vmatpush1.bf16.xpose.msra.mxu0 0
      %3502 = vmatprep.subr.bf16.mxu0 0
      %3503 = vmatpush1.bf16.xpose.msra.mxu0 0
      %3504 = vmatprep.subr.bf16.mxu0 0
      %3505 = vmatpush1.bf16.xpose.msra.mxu0 0
      %3506 = vmatprep.subr.bf16.mxu0 0
      %3507 = vmatpush1.bf16.xpose.msra.mxu0 0
      %3508 = vmatprep.subr.bf16.mxu0 0
      %3509 = vmatpush1.bf16.xpose.msra.mxu0 0
      %3510 = vmatprep.subr.bf16.mxu0 0
      %3511 = vmatpush1.bf16.xpose.msra.mxu0 0
      %3512 = vmatprep.subr.bf16.mxu0 0
      %3513 = vmatpush1.bf16.xpose.msra.mxu0 0
      %3514 = vmatprep.mubr.bf16.mxu0 0
      %3515 = vmatmul.mubr.bf16.gmra.mrb[0].mxu0 %v3477
      %v3516 = vpop.f32.mrb[0].mxu0
      %v3517 = vadd.f32 0.0, %v3516
      %v3518 = vpop.f32.mrb[0].mxu0
      %v3519 = vpop.f32.mrb[0].mxu0
      %v3520 = vpop.f32.mrb[0].mxu0
      %3521 = vdwg.mxu0
      %v3523 = vsel %vm969, %v3371, 0
      %v3526 = vsel %vm969, %v3379, 0
      %3528 = vmatprep.subr.bf16.mxu0 0
      %3529 = vmatpush1.bf16.xpose.msra.mxu0 %v3526
      %3530 = vmatprep.subr.bf16.mxu0 0
      %3531 = vmatpush1.bf16.xpose.msra.mxu0 0
      %3532 = vmatprep.subr.bf16.mxu0 0
      %3533 = vmatpush1.bf16.xpose.msra.mxu0 0
      %3534 = vmatprep.subr.bf16.mxu0 0
      %3535 = vmatpush1.bf16.xpose.msra.mxu0 0
      %3536 = vmatprep.subr.bf16.mxu0 0
      %3537 = vmatpush1.bf16.xpose.msra.mxu0 0
      %3538 = vmatprep.subr.bf16.mxu0 0
      %3539 = vmatpush1.bf16.xpose.msra.mxu0 0
      %3540 = vmatprep.subr.bf16.mxu0 0
      %3541 = vmatpush1.bf16.xpose.msra.mxu0 0
      %3542 = vmatprep.subr.bf16.mxu0 0
      %3543 = vmatpush1.bf16.xpose.msra.mxu0 0
      %3544 = vmatprep.subr.bf16.mxu0 0
      %3545 = vmatpush1.bf16.xpose.msra.mxu0 0
      %3546 = vmatprep.subr.bf16.mxu0 0
      %3547 = vmatpush1.bf16.xpose.msra.mxu0 0
      %3548 = vmatprep.subr.bf16.mxu0 0
      %3549 = vmatpush1.bf16.xpose.msra.mxu0 0
      %3550 = vmatprep.subr.bf16.mxu0 0
      %3551 = vmatpush1.bf16.xpose.msra.mxu0 0
      %3552 = vmatprep.subr.bf16.mxu0 0
      %3553 = vmatpush1.bf16.xpose.msra.mxu0 0
      %3554 = vmatprep.subr.bf16.mxu0 0
      %3555 = vmatpush1.bf16.xpose.msra.mxu0 0
      %3556 = vmatprep.subr.bf16.mxu0 0
      %3557 = vmatpush1.bf16.xpose.msra.mxu0 0
      %3558 = vmatprep.subr.bf16.mxu0 0
      %3559 = vmatpush1.bf16.xpose.msra.mxu0 0
      %3560 = vmatprep.mubr.bf16.mxu0 0
      %3561 = vmatmul.mubr.bf16.gmra.mrb[0].mxu0 %v3523
      %v3562 = vpop.f32.mrb[0].mxu0
      %v3563 = vadd.f32 0.0, %v3562
      %v3564 = vpop.f32.mrb[0].mxu0
      %v3565 = vpop.f32.mrb[0].mxu0
      %v3566 = vpop.f32.mrb[0].mxu0
      %3567 = vdwg.mxu0
      %v3569 = vsel %vm969, %v3372, 0
      %v3572 = vsel %vm969, %v3380, 0
      %3574 = vmatprep.subr.bf16.mxu0 0
      %3575 = vmatpush1.bf16.xpose.msra.mxu0 %v3572
      %3576 = vmatprep.subr.bf16.mxu0 0
      %3577 = vmatpush1.bf16.xpose.msra.mxu0 0
      %3578 = vmatprep.subr.bf16.mxu0 0
      %3579 = vmatpush1.bf16.xpose.msra.mxu0 0
      %3580 = vmatprep.subr.bf16.mxu0 0
      %3581 = vmatpush1.bf16.xpose.msra.mxu0 0
      %3582 = vmatprep.subr.bf16.mxu0 0
      %3583 = vmatpush1.bf16.xpose.msra.mxu0 0
      %3584 = vmatprep.subr.bf16.mxu0 0
      %3585 = vmatpush1.bf16.xpose.msra.mxu0 0
      %3586 = vmatprep.subr.bf16.mxu0 0
      %3587 = vmatpush1.bf16.xpose.msra.mxu0 0
      %3588 = vmatprep.subr.bf16.mxu0 0
      %3589 = vmatpush1.bf16.xpose.msra.mxu0 0
      %3590 = vmatprep.subr.bf16.mxu0 0
      %3591 = vmatpush1.bf16.xpose.msra.mxu0 0
      %3592 = vmatprep.subr.bf16.mxu0 0
      %3593 = vmatpush1.bf16.xpose.msra.mxu0 0
      %3594 = vmatprep.subr.bf16.mxu0 0
      %3595 = vmatpush1.bf16.xpose.msra.mxu0 0
      %3596 = vmatprep.subr.bf16.mxu0 0
      %3597 = vmatpush1.bf16.xpose.msra.mxu0 0
      %3598 = vmatprep.subr.bf16.mxu0 0
      %3599 = vmatpush1.bf16.xpose.msra.mxu0 0
      %3600 = vmatprep.subr.bf16.mxu0 0
      %3601 = vmatpush1.bf16.xpose.msra.mxu0 0
      %3602 = vmatprep.subr.bf16.mxu0 0
      %3603 = vmatpush1.bf16.xpose.msra.mxu0 0
      %3604 = vmatprep.subr.bf16.mxu0 0
      %3605 = vmatpush1.bf16.xpose.msra.mxu0 0
      %3606 = vmatprep.mubr.bf16.mxu0 0
      %3607 = vmatmul.mubr.bf16.gmra.mrb[0].mxu0 %v3569
      %v3608 = vpop.f32.mrb[0].mxu0
      %v3609 = vadd.f32 0.0, %v3608
      %v3610 = vpop.f32.mrb[0].mxu0
      %v3611 = vpop.f32.mrb[0].mxu0
      %v3612 = vpop.f32.mrb[0].mxu0
      %3613 = vdwg.mxu0
      %v3615 = vsel %vm969, %v3373, 0
      %v3618 = vsel %vm969, %v3381, 0
      %3620 = vmatprep.subr.bf16.mxu0 0
      %3621 = vmatpush1.bf16.xpose.msra.mxu0 %v3618
      %3622 = vmatprep.subr.bf16.mxu0 0
      %3623 = vmatpush1.bf16.xpose.msra.mxu0 0
      %3624 = vmatprep.subr.bf16.mxu0 0
      %3625 = vmatpush1.bf16.xpose.msra.mxu0 0
      %3626 = vmatprep.subr.bf16.mxu0 0
      %3627 = vmatpush1.bf16.xpose.msra.mxu0 0
      %3628 = vmatprep.subr.bf16.mxu0 0
      %3629 = vmatpush1.bf16.xpose.msra.mxu0 0
      %3630 = vmatprep.subr.bf16.mxu0 0
      %3631 = vmatpush1.bf16.xpose.msra.mxu0 0
      %3632 = vmatprep.subr.bf16.mxu0 0
      %3633 = vmatpush1.bf16.xpose.msra.mxu0 0
      %3634 = vmatprep.subr.bf16.mxu0 0
      %3635 = vmatpush1.bf16.xpose.msra.mxu0 0
      %3636 = vmatprep.subr.bf16.mxu0 0
      %3637 = vmatpush1.bf16.xpose.msra.mxu0 0
      %3638 = vmatprep.subr.bf16.mxu0 0
      %3639 = vmatpush1.bf16.xpose.msra.mxu0 0
      %3640 = vmatprep.subr.bf16.mxu0 0
      %3641 = vmatpush1.bf16.xpose.msra.mxu0 0
      %3642 = vmatprep.subr.bf16.mxu0 0
      %3643 = vmatpush1.bf16.xpose.msra.mxu0 0
      %3644 = vmatprep.subr.bf16.mxu0 0
      %3645 = vmatpush1.bf16.xpose.msra.mxu0 0
      %3646 = vmatprep.subr.bf16.mxu0 0
      %3647 = vmatpush1.bf16.xpose.msra.mxu0 0
      %3648 = vmatprep.subr.bf16.mxu0 0
      %3649 = vmatpush1.bf16.xpose.msra.mxu0 0
      %3650 = vmatprep.subr.bf16.mxu0 0
      %3651 = vmatpush1.bf16.xpose.msra.mxu0 0
      %3652 = vmatprep.mubr.bf16.mxu0 0
      %3653 = vmatmul.mubr.bf16.gmra.mrb[0].mxu0 %v3615
      %v3654 = vpop.f32.mrb[0].mxu0
      %v3655 = vadd.f32 0.0, %v3654
      %v3656 = vpop.f32.mrb[0].mxu0
      %v3657 = vpop.f32.mrb[0].mxu0
      %v3658 = vpop.f32.mrb[0].mxu0
      %3659 = vdwg.mxu0
      %v3661 = vsel %vm969, %v3374, 0
      %v3664 = vsel %vm969, %v3382, 0
      %3666 = vmatprep.subr.bf16.mxu0 0
      %3667 = vmatpush1.bf16.xpose.msra.mxu0 %v3664
      %3668 = vmatprep.subr.bf16.mxu0 0
      %3669 = vmatpush1.bf16.xpose.msra.mxu0 0
      %3670 = vmatprep.subr.bf16.mxu0 0
      %3671 = vmatpush1.bf16.xpose.msra.mxu0 0
      %3672 = vmatprep.subr.bf16.mxu0 0
      %3673 = vmatpush1.bf16.xpose.msra.mxu0 0
      %3674 = vmatprep.subr.bf16.mxu0 0
      %3675 = vmatpush1.bf16.xpose.msra.mxu0 0
      %3676 = vmatprep.subr.bf16.mxu0 0
      %3677 = vmatpush1.bf16.xpose.msra.mxu0 0
      %3678 = vmatprep.subr.bf16.mxu0 0
      %3679 = vmatpush1.bf16.xpose.msra.mxu0 0
      %3680 = vmatprep.subr.bf16.mxu0 0
      %3681 = vmatpush1.bf16.xpose.msra.mxu0 0
      %3682 = vmatprep.subr.bf16.mxu0 0
      %3683 = vmatpush1.bf16.xpose.msra.mxu0 0
      %3684 = vmatprep.subr.bf16.mxu0 0
      %3685 = vmatpush1.bf16.xpose.msra.mxu0 0
      %3686 = vmatprep.subr.bf16.mxu0 0
      %3687 = vmatpush1.bf16.xpose.msra.mxu0 0
      %3688 = vmatprep.subr.bf16.mxu0 0
      %3689 = vmatpush1.bf16.xpose.msra.mxu0 0
      %3690 = vmatprep.subr.bf16.mxu0 0
      %3691 = vmatpush1.bf16.xpose.msra.mxu0 0
      %3692 = vmatprep.subr.bf16.mxu0 0
      %3693 = vmatpush1.bf16.xpose.msra.mxu0 0
      %3694 = vmatprep.subr.bf16.mxu0 0
      %3695 = vmatpush1.bf16.xpose.msra.mxu0 0
      %3696 = vmatprep.subr.bf16.mxu0 0
      %3697 = vmatpush1.bf16.xpose.msra.mxu0 0
      %3698 = vmatprep.mubr.bf16.mxu0 0
      %3699 = vmatmul.mubr.bf16.gmra.mrb[0].mxu0 %v3661
      %v3700 = vpop.f32.mrb[0].mxu0
      %v3701 = vadd.f32 0.0, %v3700
      %v3702 = vpop.f32.mrb[0].mxu0
      %v3703 = vpop.f32.mrb[0].mxu0
      %v3704 = vpop.f32.mrb[0].mxu0
      %3705 = vdwg.mxu0
      %v3707 = vsel %vm969, %v3375, 0
      %v3710 = vsel %vm969, %v3383, 0
      %3712 = vmatprep.subr.bf16.mxu0 0
      %3713 = vmatpush1.bf16.xpose.msra.mxu0 %v3710
      %3714 = vmatprep.subr.bf16.mxu0 0
      %3715 = vmatpush1.bf16.xpose.msra.mxu0 0
      %3716 = vmatprep.subr.bf16.mxu0 0
      %3717 = vmatpush1.bf16.xpose.msra.mxu0 0
      %3718 = vmatprep.subr.bf16.mxu0 0
      %3719 = vmatpush1.bf16.xpose.msra.mxu0 0
      %3720 = vmatprep.subr.bf16.mxu0 0
      %3721 = vmatpush1.bf16.xpose.msra.mxu0 0
      %3722 = vmatprep.subr.bf16.mxu0 0
      %3723 = vmatpush1.bf16.xpose.msra.mxu0 0
      %3724 = vmatprep.subr.bf16.mxu0 0
      %3725 = vmatpush1.bf16.xpose.msra.mxu0 0
      %3726 = vmatprep.subr.bf16.mxu0 0
      %3727 = vmatpush1.bf16.xpose.msra.mxu0 0
      %3728 = vmatprep.subr.bf16.mxu0 0
      %3729 = vmatpush1.bf16.xpose.msra.mxu0 0
      %3730 = vmatprep.subr.bf16.mxu0 0
      %3731 = vmatpush1.bf16.xpose.msra.mxu0 0
      %3732 = vmatprep.subr.bf16.mxu0 0
      %3733 = vmatpush1.bf16.xpose.msra.mxu0 0
      %3734 = vmatprep.subr.bf16.mxu0 0
      %3735 = vmatpush1.bf16.xpose.msra.mxu0 0
      %3736 = vmatprep.subr.bf16.mxu0 0
      %3737 = vmatpush1.bf16.xpose.msra.mxu0 0
      %3738 = vmatprep.subr.bf16.mxu0 0
      %3739 = vmatpush1.bf16.xpose.msra.mxu0 0
      %3740 = vmatprep.subr.bf16.mxu0 0
      %3741 = vmatpush1.bf16.xpose.msra.mxu0 0
      %3742 = vmatprep.subr.bf16.mxu0 0
      %3743 = vmatpush1.bf16.xpose.msra.mxu0 0
      %3744 = vmatprep.mubr.bf16.mxu0 0
      %3745 = vmatmul.mubr.bf16.gmra.mrb[0].mxu0 %v3707
      %v3746 = vpop.f32.mrb[0].mxu0
      %v3747 = vadd.f32 0.0, %v3746
      %v3748 = vpop.f32.mrb[0].mxu0
      %v3749 = vpop.f32.mrb[0].mxu0
      %v3750 = vpop.f32.mrb[0].mxu0
      %3751 = vdwg.mxu0
      %v3760 = vcombine.high %v3174, %v3174
      %v3762 = vunpack.c.l.s4 1966171168
      %v3763 = vunpack.c.0.s8 %v3762
      %v3764 = vlaneseq
      %v3765 = vshrl.u32 %v3764, 7
      %v3766 = vsub.s32 %v3763, %v3765
      %v3767 = vrot.slane %v3174, %v3766
      %v3769 = vunpack.c.l.s4 1966171168
      %v3770 = vunpack.c.0.s8 %v3769
      %v3771 = vlaneseq
      %v3772 = vshrl.u32 %v3771, 7
      %v3773 = vsub.s32 %v3770, %v3772
      %v3774 = vrot.slane %v3760, %v3773
      %v3775 = vcombine.high %v3767, %v3767
      %v3776 = vcombine.high %v3774, %v3774
      %v3778 = vunpack.c.l.s4 1966171168
      %v3779 = vunpack.c.0.s8 %v3778
      %v3780 = vlaneseq
      %v3781 = vshrl.u32 %v3780, 7
      %v3782 = vsub.s32 %v3779, %v3781
      %v3783 = vrot.slane %v3767, %v3782
      %v3785 = vunpack.c.l.s4 1966171168
      %v3786 = vunpack.c.0.s8 %v3785
      %v3787 = vlaneseq
      %v3788 = vshrl.u32 %v3787, 7
      %v3789 = vsub.s32 %v3786, %v3788
      %v3790 = vrot.slane %v3774, %v3789
      %v3792 = vunpack.c.l.s4 1966171168
      %v3793 = vunpack.c.0.s8 %v3792
      %v3794 = vlaneseq
      %v3795 = vshrl.u32 %v3794, 7
      %v3796 = vsub.s32 %v3793, %v3795
      %v3797 = vrot.slane %v3775, %v3796
      %v3799 = vunpack.c.l.s4 1966171168
      %v3800 = vunpack.c.0.s8 %v3799
      %v3801 = vlaneseq
      %v3802 = vshrl.u32 %v3801, 7
      %v3803 = vsub.s32 %v3800, %v3802
      %v3804 = vrot.slane %v3776, %v3803
      %v3805 = vcombine.high %v3783, %v3783
      %v3806 = vcombine.high %v3790, %v3790
      %v3807 = vcombine.high %v3797, %v3797
      %v3808 = vcombine.high %v3804, %v3804
      %v3809 = vcombine.high %v3177, %v3177
      %v3811 = vunpack.c.l.s4 1966171168
      %v3812 = vunpack.c.0.s8 %v3811
      %v3813 = vlaneseq
      %v3814 = vshrl.u32 %v3813, 7
      %v3815 = vsub.s32 %v3812, %v3814
      %v3816 = vrot.slane %v3177, %v3815
      %v3818 = vunpack.c.l.s4 1966171168
      %v3819 = vunpack.c.0.s8 %v3818
      %v3820 = vlaneseq
      %v3821 = vshrl.u32 %v3820, 7
      %v3822 = vsub.s32 %v3819, %v3821
      %v3823 = vrot.slane %v3809, %v3822
      %v3824 = vcombine.high %v3816, %v3816
      %v3825 = vcombine.high %v3823, %v3823
      %v3827 = vunpack.c.l.s4 1966171168
      %v3828 = vunpack.c.0.s8 %v3827
      %v3829 = vlaneseq
      %v3830 = vshrl.u32 %v3829, 7
      %v3831 = vsub.s32 %v3828, %v3830
      %v3832 = vrot.slane %v3816, %v3831
      %v3834 = vunpack.c.l.s4 1966171168
      %v3835 = vunpack.c.0.s8 %v3834
      %v3836 = vlaneseq
      %v3837 = vshrl.u32 %v3836, 7
      %v3838 = vsub.s32 %v3835, %v3837
      %v3839 = vrot.slane %v3823, %v3838
      %v3841 = vunpack.c.l.s4 1966171168
      %v3842 = vunpack.c.0.s8 %v3841
      %v3843 = vlaneseq
      %v3844 = vshrl.u32 %v3843, 7
      %v3845 = vsub.s32 %v3842, %v3844
      %v3846 = vrot.slane %v3824, %v3845
      %v3848 = vunpack.c.l.s4 1966171168
      %v3849 = vunpack.c.0.s8 %v3848
      %v3850 = vlaneseq
      %v3851 = vshrl.u32 %v3850, 7
      %v3852 = vsub.s32 %v3849, %v3851
      %v3853 = vrot.slane %v3825, %v3852
      %v3854 = vcombine.high %v3832, %v3832
      %v3855 = vcombine.high %v3839, %v3839
      %v3856 = vcombine.high %v3846, %v3846
      %v3857 = vcombine.high %v3853, %v3853
      %v3858 = vcombine.high %v3182, %v3182
      %v3860 = vunpack.c.l.s4 1966171168
      %v3861 = vunpack.c.0.s8 %v3860
      %v3862 = vlaneseq
      %v3863 = vshrl.u32 %v3862, 7
      %v3864 = vsub.s32 %v3861, %v3863
      %v3865 = vrot.slane %v3182, %v3864
      %v3867 = vunpack.c.l.s4 1966171168
      %v3868 = vunpack.c.0.s8 %v3867
      %v3869 = vlaneseq
      %v3870 = vshrl.u32 %v3869, 7
      %v3871 = vsub.s32 %v3868, %v3870
      %v3872 = vrot.slane %v3858, %v3871
      %v3873 = vcombine.high %v3865, %v3865
      %v3874 = vcombine.high %v3872, %v3872
      %v3876 = vunpack.c.l.s4 1966171168
      %v3877 = vunpack.c.0.s8 %v3876
      %v3878 = vlaneseq
      %v3879 = vshrl.u32 %v3878, 7
      %v3880 = vsub.s32 %v3877, %v3879
      %v3881 = vrot.slane %v3865, %v3880
      %v3883 = vunpack.c.l.s4 1966171168
      %v3884 = vunpack.c.0.s8 %v3883
      %v3885 = vlaneseq
      %v3886 = vshrl.u32 %v3885, 7
      %v3887 = vsub.s32 %v3884, %v3886
      %v3888 = vrot.slane %v3872, %v3887
      %v3890 = vunpack.c.l.s4 1966171168
      %v3891 = vunpack.c.0.s8 %v3890
      %v3892 = vlaneseq
      %v3893 = vshrl.u32 %v3892, 7
      %v3894 = vsub.s32 %v3891, %v3893
      %v3895 = vrot.slane %v3873, %v3894
      %v3897 = vunpack.c.l.s4 1966171168
      %v3898 = vunpack.c.0.s8 %v3897
      %v3899 = vlaneseq
      %v3900 = vshrl.u32 %v3899, 7
      %v3901 = vsub.s32 %v3898, %v3900
      %v3902 = vrot.slane %v3874, %v3901
      %v3903 = vcombine.high %v3881, %v3881
      %v3904 = vcombine.high %v3888, %v3888
      %v3905 = vcombine.high %v3895, %v3895
      %v3906 = vcombine.high %v3902, %v3902
      %v3907 = vcombine.high %v3185, %v3185
      %v3909 = vunpack.c.l.s4 1966171168
      %v3910 = vunpack.c.0.s8 %v3909
      %v3911 = vlaneseq
      %v3912 = vshrl.u32 %v3911, 7
      %v3913 = vsub.s32 %v3910, %v3912
      %v3914 = vrot.slane %v3185, %v3913
      %v3916 = vunpack.c.l.s4 1966171168
      %v3917 = vunpack.c.0.s8 %v3916
      %v3918 = vlaneseq
      %v3919 = vshrl.u32 %v3918, 7
      %v3920 = vsub.s32 %v3917, %v3919
      %v3921 = vrot.slane %v3907, %v3920
      %v3922 = vcombine.high %v3914, %v3914
      %v3923 = vcombine.high %v3921, %v3921
      %v3925 = vunpack.c.l.s4 1966171168
      %v3926 = vunpack.c.0.s8 %v3925
      %v3927 = vlaneseq
      %v3928 = vshrl.u32 %v3927, 7
      %v3929 = vsub.s32 %v3926, %v3928
      %v3930 = vrot.slane %v3914, %v3929
      %v3932 = vunpack.c.l.s4 1966171168
      %v3933 = vunpack.c.0.s8 %v3932
      %v3934 = vlaneseq
      %v3935 = vshrl.u32 %v3934, 7
      %v3936 = vsub.s32 %v3933, %v3935
      %v3937 = vrot.slane %v3921, %v3936
      %v3939 = vunpack.c.l.s4 1966171168
      %v3940 = vunpack.c.0.s8 %v3939
      %v3941 = vlaneseq
      %v3942 = vshrl.u32 %v3941, 7
      %v3943 = vsub.s32 %v3940, %v3942
      %v3944 = vrot.slane %v3922, %v3943
      %v3946 = vunpack.c.l.s4 1966171168
      %v3947 = vunpack.c.0.s8 %v3946
      %v3948 = vlaneseq
      %v3949 = vshrl.u32 %v3948, 7
      %v3950 = vsub.s32 %v3947, %v3949
      %v3951 = vrot.slane %v3923, %v3950
      %v3952 = vcombine.high %v3930, %v3930
      %v3953 = vcombine.high %v3937, %v3937
      %v3954 = vcombine.high %v3944, %v3944
      %v3955 = vcombine.high %v3951, %v3951
      %v3956 = vcombine.high %v3190, %v3190
      %v3958 = vunpack.c.l.s4 1966171168
      %v3959 = vunpack.c.0.s8 %v3958
      %v3960 = vlaneseq
      %v3961 = vshrl.u32 %v3960, 7
      %v3962 = vsub.s32 %v3959, %v3961
      %v3963 = vrot.slane %v3190, %v3962
      %v3965 = vunpack.c.l.s4 1966171168
      %v3966 = vunpack.c.0.s8 %v3965
      %v3967 = vlaneseq
      %v3968 = vshrl.u32 %v3967, 7
      %v3969 = vsub.s32 %v3966, %v3968
      %v3970 = vrot.slane %v3956, %v3969
      %v3971 = vcombine.high %v3963, %v3963
      %v3972 = vcombine.high %v3970, %v3970
      %v3974 = vunpack.c.l.s4 1966171168
      %v3975 = vunpack.c.0.s8 %v3974
      %v3976 = vlaneseq
      %v3977 = vshrl.u32 %v3976, 7
      %v3978 = vsub.s32 %v3975, %v3977
      %v3979 = vrot.slane %v3963, %v3978
      %v3981 = vunpack.c.l.s4 1966171168
      %v3982 = vunpack.c.0.s8 %v3981
      %v3983 = vlaneseq
      %v3984 = vshrl.u32 %v3983, 7
      %v3985 = vsub.s32 %v3982, %v3984
      %v3986 = vrot.slane %v3970, %v3985
      %v3988 = vunpack.c.l.s4 1966171168
      %v3989 = vunpack.c.0.s8 %v3988
      %v3990 = vlaneseq
      %v3991 = vshrl.u32 %v3990, 7
      %v3992 = vsub.s32 %v3989, %v3991
      %v3993 = vrot.slane %v3971, %v3992
      %v3995 = vunpack.c.l.s4 1966171168
      %v3996 = vunpack.c.0.s8 %v3995
      %v3997 = vlaneseq
      %v3998 = vshrl.u32 %v3997, 7
      %v3999 = vsub.s32 %v3996, %v3998
      %v4000 = vrot.slane %v3972, %v3999
      %v4001 = vcombine.high %v3979, %v3979
      %v4002 = vcombine.high %v3986, %v3986
      %v4003 = vcombine.high %v3993, %v3993
      %v4004 = vcombine.high %v4000, %v4000
      %v4005 = vcombine.high %v3193, %v3193
      %v4007 = vunpack.c.l.s4 1966171168
      %v4008 = vunpack.c.0.s8 %v4007
      %v4009 = vlaneseq
      %v4010 = vshrl.u32 %v4009, 7
      %v4011 = vsub.s32 %v4008, %v4010
      %v4012 = vrot.slane %v3193, %v4011
      %v4014 = vunpack.c.l.s4 1966171168
      %v4015 = vunpack.c.0.s8 %v4014
      %v4016 = vlaneseq
      %v4017 = vshrl.u32 %v4016, 7
      %v4018 = vsub.s32 %v4015, %v4017
      %v4019 = vrot.slane %v4005, %v4018
      %v4020 = vcombine.high %v4012, %v4012
      %v4021 = vcombine.high %v4019, %v4019
      %v4023 = vunpack.c.l.s4 1966171168
      %v4024 = vunpack.c.0.s8 %v4023
      %v4025 = vlaneseq
      %v4026 = vshrl.u32 %v4025, 7
      %v4027 = vsub.s32 %v4024, %v4026
      %v4028 = vrot.slane %v4012, %v4027
      %v4030 = vunpack.c.l.s4 1966171168
      %v4031 = vunpack.c.0.s8 %v4030
      %v4032 = vlaneseq
      %v4033 = vshrl.u32 %v4032, 7
      %v4034 = vsub.s32 %v4031, %v4033
      %v4035 = vrot.slane %v4019, %v4034
      %v4037 = vunpack.c.l.s4 1966171168
      %v4038 = vunpack.c.0.s8 %v4037
      %v4039 = vlaneseq
      %v4040 = vshrl.u32 %v4039, 7
      %v4041 = vsub.s32 %v4038, %v4040
      %v4042 = vrot.slane %v4020, %v4041
      %v4044 = vunpack.c.l.s4 1966171168
      %v4045 = vunpack.c.0.s8 %v4044
      %v4046 = vlaneseq
      %v4047 = vshrl.u32 %v4046, 7
      %v4048 = vsub.s32 %v4045, %v4047
      %v4049 = vrot.slane %v4021, %v4048
      %v4050 = vcombine.high %v4028, %v4028
      %v4051 = vcombine.high %v4035, %v4035
      %v4052 = vcombine.high %v4042, %v4042
      %v4053 = vcombine.high %v4049, %v4049
      %v4054 = vcombine.high %v3198, %v3198
      %v4056 = vunpack.c.l.s4 1966171168
      %v4057 = vunpack.c.0.s8 %v4056
      %v4058 = vlaneseq
      %v4059 = vshrl.u32 %v4058, 7
      %v4060 = vsub.s32 %v4057, %v4059
      %v4061 = vrot.slane %v3198, %v4060
      %v4063 = vunpack.c.l.s4 1966171168
      %v4064 = vunpack.c.0.s8 %v4063
      %v4065 = vlaneseq
      %v4066 = vshrl.u32 %v4065, 7
      %v4067 = vsub.s32 %v4064, %v4066
      %v4068 = vrot.slane %v4054, %v4067
      %v4069 = vcombine.high %v4061, %v4061
      %v4070 = vcombine.high %v4068, %v4068
      %v4072 = vunpack.c.l.s4 1966171168
      %v4073 = vunpack.c.0.s8 %v4072
      %v4074 = vlaneseq
      %v4075 = vshrl.u32 %v4074, 7
      %v4076 = vsub.s32 %v4073, %v4075
      %v4077 = vrot.slane %v4061, %v4076
      %v4079 = vunpack.c.l.s4 1966171168
      %v4080 = vunpack.c.0.s8 %v4079
      %v4081 = vlaneseq
      %v4082 = vshrl.u32 %v4081, 7
      %v4083 = vsub.s32 %v4080, %v4082
      %v4084 = vrot.slane %v4068, %v4083
      %v4086 = vunpack.c.l.s4 1966171168
      %v4087 = vunpack.c.0.s8 %v4086
      %v4088 = vlaneseq
      %v4089 = vshrl.u32 %v4088, 7
      %v4090 = vsub.s32 %v4087, %v4089
      %v4091 = vrot.slane %v4069, %v4090
      %v4093 = vunpack.c.l.s4 1966171168
      %v4094 = vunpack.c.0.s8 %v4093
      %v4095 = vlaneseq
      %v4096 = vshrl.u32 %v4095, 7
      %v4097 = vsub.s32 %v4094, %v4096
      %v4098 = vrot.slane %v4070, %v4097
      %v4099 = vcombine.high %v4077, %v4077
      %v4100 = vcombine.high %v4084, %v4084
      %v4101 = vcombine.high %v4091, %v4091
      %v4102 = vcombine.high %v4098, %v4098
      %v4103 = vcombine.high %v3201, %v3201
      %v4105 = vunpack.c.l.s4 1966171168
      %v4106 = vunpack.c.0.s8 %v4105
      %v4107 = vlaneseq
      %v4108 = vshrl.u32 %v4107, 7
      %v4109 = vsub.s32 %v4106, %v4108
      %v4110 = vrot.slane %v3201, %v4109
      %v4112 = vunpack.c.l.s4 1966171168
      %v4113 = vunpack.c.0.s8 %v4112
      %v4114 = vlaneseq
      %v4115 = vshrl.u32 %v4114, 7
      %v4116 = vsub.s32 %v4113, %v4115
      %v4117 = vrot.slane %v4103, %v4116
      %v4118 = vcombine.high %v4110, %v4110
      %v4119 = vcombine.high %v4117, %v4117
      %v4121 = vunpack.c.l.s4 1966171168
      %v4122 = vunpack.c.0.s8 %v4121
      %v4123 = vlaneseq
      %v4124 = vshrl.u32 %v4123, 7
      %v4125 = vsub.s32 %v4122, %v4124
      %v4126 = vrot.slane %v4110, %v4125
      %v4128 = vunpack.c.l.s4 1966171168
      %v4129 = vunpack.c.0.s8 %v4128
      %v4130 = vlaneseq
      %v4131 = vshrl.u32 %v4130, 7
      %v4132 = vsub.s32 %v4129, %v4131
      %v4133 = vrot.slane %v4117, %v4132
      %v4135 = vunpack.c.l.s4 1966171168
      %v4136 = vunpack.c.0.s8 %v4135
      %v4137 = vlaneseq
      %v4138 = vshrl.u32 %v4137, 7
      %v4139 = vsub.s32 %v4136, %v4138
      %v4140 = vrot.slane %v4118, %v4139
      %v4142 = vunpack.c.l.s4 1966171168
      %v4143 = vunpack.c.0.s8 %v4142
      %v4144 = vlaneseq
      %v4145 = vshrl.u32 %v4144, 7
      %v4146 = vsub.s32 %v4143, %v4145
      %v4147 = vrot.slane %v4119, %v4146
      %v4148 = vcombine.high %v4126, %v4126
      %v4149 = vcombine.high %v4133, %v4133
      %v4150 = vcombine.high %v4140, %v4140
      %v4151 = vcombine.high %v4147, %v4147
      %v4152 = vld [vmem:[%s9] sm:$0xff]
      %v4153 = vld [vmem:[%s9 + $0x8] sm:$0xff]
      %v4154 = vld [vmem:[%s9 + $0x10] sm:$0xff]
      %v4155 = vld [vmem:[%s9 + $0x18] sm:$0xff]
      %v4156 = vld [vmem:[%s9 + $0x20] sm:$0xff]
      %v4157 = vld [vmem:[%s9 + $0x28] sm:$0xff]
      %v4158 = vld [vmem:[%s9 + $0x30] sm:$0xff]
      %v4159 = vld [vmem:[%s9 + $0x38] sm:$0xff]
      %v4160 = vld [vmem:[%s9 + $0x40] sm:$0xff]
      %v4161 = vld [vmem:[%s9 + $0x48] sm:$0xff]
      %v4162 = vld [vmem:[%s9 + $0x50] sm:$0xff]
      %v4163 = vld [vmem:[%s9 + $0x58] sm:$0xff]
      %v4164 = vld [vmem:[%s9 + $0x60] sm:$0xff]
      %v4165 = vld [vmem:[%s9 + $0x68] sm:$0xff]
      %v4166 = vld [vmem:[%s9 + $0x70] sm:$0xff]
      %v4167 = vld [vmem:[%s9 + $0x78] sm:$0xff]
      %v4168 = vld [vmem:[%s9 + $0x80] sm:$0xff]
      %v4169 = vld [vmem:[%s9 + $0x88] sm:$0xff]
      %v4170 = vld [vmem:[%s9 + $0x90] sm:$0xff]
      %v4171 = vld [vmem:[%s9 + $0x98] sm:$0xff]
      %v4172 = vld [vmem:[%s9 + $0xa0] sm:$0xff]
      %v4173 = vld [vmem:[%s9 + $0xa8] sm:$0xff]
      %v4174 = vld [vmem:[%s9 + $0xb0] sm:$0xff]
      %v4175 = vld [vmem:[%s9 + $0xb8] sm:$0xff]
      %v4176 = vld [vmem:[%s9 + $0xc0] sm:$0xff]
      %v4177 = vld [vmem:[%s9 + $0xc8] sm:$0xff]
      %v4178 = vld [vmem:[%s9 + $0xd0] sm:$0xff]
      %v4179 = vld [vmem:[%s9 + $0xd8] sm:$0xff]
      %v4180 = vld [vmem:[%s9 + $0xe0] sm:$0xff]
      %v4181 = vld [vmem:[%s9 + $0xe8] sm:$0xff]
      %v4182 = vld [vmem:[%s9 + $0xf0] sm:$0xff]
      %v4183 = vld [vmem:[%s9 + $0xf8] sm:$0xff]
      %v4184 = vld [vmem:[%s9 + $0x100] sm:$0xff]
      %v4185 = vld [vmem:[%s9 + $0x108] sm:$0xff]
      %v4186 = vld [vmem:[%s9 + $0x110] sm:$0xff]
      %v4187 = vld [vmem:[%s9 + $0x118] sm:$0xff]
      %v4188 = vld [vmem:[%s9 + $0x120] sm:$0xff]
      %v4189 = vld [vmem:[%s9 + $0x128] sm:$0xff]
      %v4190 = vld [vmem:[%s9 + $0x130] sm:$0xff]
      %v4191 = vld [vmem:[%s9 + $0x138] sm:$0xff]
      %v4192 = vld [vmem:[%s9 + $0x140] sm:$0xff]
      %v4193 = vld [vmem:[%s9 + $0x148] sm:$0xff]
      %v4194 = vld [vmem:[%s9 + $0x150] sm:$0xff]
      %v4195 = vld [vmem:[%s9 + $0x158] sm:$0xff]
      %v4196 = vld [vmem:[%s9 + $0x160] sm:$0xff]
      %v4197 = vld [vmem:[%s9 + $0x168] sm:$0xff]
      %v4198 = vld [vmem:[%s9 + $0x170] sm:$0xff]
      %v4199 = vld [vmem:[%s9 + $0x178] sm:$0xff]
      %v4200 = vld [vmem:[%s9 + $0x180] sm:$0xff]
      %v4201 = vld [vmem:[%s9 + $0x188] sm:$0xff]
      %v4202 = vld [vmem:[%s9 + $0x190] sm:$0xff]
      %v4203 = vld [vmem:[%s9 + $0x198] sm:$0xff]
      %v4204 = vld [vmem:[%s9 + $0x1a0] sm:$0xff]
      %v4205 = vld [vmem:[%s9 + $0x1a8] sm:$0xff]
      %v4206 = vld [vmem:[%s9 + $0x1b0] sm:$0xff]
      %v4207 = vld [vmem:[%s9 + $0x1b8] sm:$0xff]
      %v4208 = vld [vmem:[%s9 + $0x1c0] sm:$0xff]
      %v4209 = vld [vmem:[%s9 + $0x1c8] sm:$0xff]
      %v4210 = vld [vmem:[%s9 + $0x1d0] sm:$0xff]
      %v4211 = vld [vmem:[%s9 + $0x1d8] sm:$0xff]
      %v4212 = vld [vmem:[%s9 + $0x1e0] sm:$0xff]
      %v4213 = vld [vmem:[%s9 + $0x1e8] sm:$0xff]
      %v4214 = vld [vmem:[%s9 + $0x1f0] sm:$0xff]
      %v4215 = vld [vmem:[%s9 + $0x1f8] sm:$0xff]
      %v4216 = vlaneseq
      %v4217 = vshrl.u32 %v4216, 7
      %v4218 = vsub.s32 0, %v4217
      %v4219 = vrot.slane %v3783, %v4218
      %v4220 = vlaneseq
      %v4221 = vshrl.u32 %v4220, 7
      %v4222 = vsub.s32 0, %v4221
      %v4223 = vrot.slane %v3797, %v4222
      %v4224 = vlaneseq
      %v4225 = vshrl.u32 %v4224, 7
      %v4226 = vsub.s32 0, %v4225
      %v4227 = vrot.slane %v3805, %v4226
      %v4228 = vlaneseq
      %v4229 = vshrl.u32 %v4228, 7
      %v4230 = vsub.s32 0, %v4229
      %v4231 = vrot.slane %v3807, %v4230
      %v4232 = vlaneseq
      %v4233 = vshrl.u32 %v4232, 7
      %v4234 = vsub.s32 0, %v4233
      %v4235 = vrot.slane %v3790, %v4234
      %v4236 = vlaneseq
      %v4237 = vshrl.u32 %v4236, 7
      %v4238 = vsub.s32 0, %v4237
      %v4239 = vrot.slane %v3804, %v4238
      %v4240 = vlaneseq
      %v4241 = vshrl.u32 %v4240, 7
      %v4242 = vsub.s32 0, %v4241
      %v4243 = vrot.slane %v3806, %v4242
      %v4244 = vlaneseq
      %v4245 = vshrl.u32 %v4244, 7
      %v4246 = vsub.s32 0, %v4245
      %v4247 = vrot.slane %v3808, %v4246
      %v4248 = vlaneseq
      %v4249 = vshrl.u32 %v4248, 7
      %v4250 = vsub.s32 0, %v4249
      %v4251 = vrot.slane %v3832, %v4250
      %v4252 = vlaneseq
      %v4253 = vshrl.u32 %v4252, 7
      %v4254 = vsub.s32 0, %v4253
      %v4255 = vrot.slane %v3846, %v4254
      %v4256 = vlaneseq
      %v4257 = vshrl.u32 %v4256, 7
      %v4258 = vsub.s32 0, %v4257
      %v4259 = vrot.slane %v3854, %v4258
      %v4260 = vlaneseq
      %v4261 = vshrl.u32 %v4260, 7
      %v4262 = vsub.s32 0, %v4261
      %v4263 = vrot.slane %v3856, %v4262
      %v4264 = vlaneseq
      %v4265 = vshrl.u32 %v4264, 7
      %v4266 = vsub.s32 0, %v4265
      %v4267 = vrot.slane %v3839, %v4266
      %v4268 = vlaneseq
      %v4269 = vshrl.u32 %v4268, 7
      %v4270 = vsub.s32 0, %v4269
      %v4271 = vrot.slane %v3853, %v4270
      %v4272 = vlaneseq
      %v4273 = vshrl.u32 %v4272, 7
      %v4274 = vsub.s32 0, %v4273
      %v4275 = vrot.slane %v3855, %v4274
      %v4276 = vlaneseq
      %v4277 = vshrl.u32 %v4276, 7
      %v4278 = vsub.s32 0, %v4277
      %v4279 = vrot.slane %v3857, %v4278
      %v4280 = vlaneseq
      %v4281 = vshrl.u32 %v4280, 7
      %v4282 = vsub.s32 0, %v4281
      %v4283 = vrot.slane %v3881, %v4282
      %v4284 = vlaneseq
      %v4285 = vshrl.u32 %v4284, 7
      %v4286 = vsub.s32 0, %v4285
      %v4287 = vrot.slane %v3895, %v4286
      %v4288 = vlaneseq
      %v4289 = vshrl.u32 %v4288, 7
      %v4290 = vsub.s32 0, %v4289
      %v4291 = vrot.slane %v3903, %v4290
      %v4292 = vlaneseq
      %v4293 = vshrl.u32 %v4292, 7
      %v4294 = vsub.s32 0, %v4293
      %v4295 = vrot.slane %v3905, %v4294
      %v4296 = vlaneseq
      %v4297 = vshrl.u32 %v4296, 7
      %v4298 = vsub.s32 0, %v4297
      %v4299 = vrot.slane %v3888, %v4298
      %v4300 = vlaneseq
      %v4301 = vshrl.u32 %v4300, 7
      %v4302 = vsub.s32 0, %v4301
      %v4303 = vrot.slane %v3902, %v4302
      %v4304 = vlaneseq
      %v4305 = vshrl.u32 %v4304, 7
      %v4306 = vsub.s32 0, %v4305
      %v4307 = vrot.slane %v3904, %v4306
      %v4308 = vlaneseq
      %v4309 = vshrl.u32 %v4308, 7
      %v4310 = vsub.s32 0, %v4309
      %v4311 = vrot.slane %v3906, %v4310
      %v4312 = vlaneseq
      %v4313 = vshrl.u32 %v4312, 7
      %v4314 = vsub.s32 0, %v4313
      %v4315 = vrot.slane %v3930, %v4314
      %v4316 = vlaneseq
      %v4317 = vshrl.u32 %v4316, 7
      %v4318 = vsub.s32 0, %v4317
      %v4319 = vrot.slane %v3944, %v4318
      %v4320 = vlaneseq
      %v4321 = vshrl.u32 %v4320, 7
      %v4322 = vsub.s32 0, %v4321
      %v4323 = vrot.slane %v3952, %v4322
      %v4324 = vlaneseq
      %v4325 = vshrl.u32 %v4324, 7
      %v4326 = vsub.s32 0, %v4325
      %v4327 = vrot.slane %v3954, %v4326
      %v4328 = vlaneseq
      %v4329 = vshrl.u32 %v4328, 7
      %v4330 = vsub.s32 0, %v4329
      %v4331 = vrot.slane %v3937, %v4330
      %v4332 = vlaneseq
      %v4333 = vshrl.u32 %v4332, 7
      %v4334 = vsub.s32 0, %v4333
      %v4335 = vrot.slane %v3951, %v4334
      %v4336 = vlaneseq
      %v4337 = vshrl.u32 %v4336, 7
      %v4338 = vsub.s32 0, %v4337
      %v4339 = vrot.slane %v3953, %v4338
      %v4340 = vlaneseq
      %v4341 = vshrl.u32 %v4340, 7
      %v4342 = vsub.s32 0, %v4341
      %v4343 = vrot.slane %v3955, %v4342
      %v4344 = vlaneseq
      %v4345 = vshrl.u32 %v4344, 7
      %v4346 = vsub.s32 0, %v4345
      %v4347 = vrot.slane %v3979, %v4346
      %v4348 = vlaneseq
      %v4349 = vshrl.u32 %v4348, 7
      %v4350 = vsub.s32 0, %v4349
      %v4351 = vrot.slane %v3993, %v4350
      %v4352 = vlaneseq
      %v4353 = vshrl.u32 %v4352, 7
      %v4354 = vsub.s32 0, %v4353
      %v4355 = vrot.slane %v4001, %v4354
      %v4356 = vlaneseq
      %v4357 = vshrl.u32 %v4356, 7
      %v4358 = vsub.s32 0, %v4357
      %v4359 = vrot.slane %v4003, %v4358
      %v4360 = vlaneseq
      %v4361 = vshrl.u32 %v4360, 7
      %v4362 = vsub.s32 0, %v4361
      %v4363 = vrot.slane %v3986, %v4362
      %v4364 = vlaneseq
      %v4365 = vshrl.u32 %v4364, 7
      %v4366 = vsub.s32 0, %v4365
      %v4367 = vrot.slane %v4000, %v4366
      %v4368 = vlaneseq
      %v4369 = vshrl.u32 %v4368, 7
      %v4370 = vsub.s32 0, %v4369
      %v4371 = vrot.slane %v4002, %v4370
      %v4372 = vlaneseq
      %v4373 = vshrl.u32 %v4372, 7
      %v4374 = vsub.s32 0, %v4373
      %v4375 = vrot.slane %v4004, %v4374
      %v4376 = vlaneseq
      %v4377 = vshrl.u32 %v4376, 7
      %v4378 = vsub.s32 0, %v4377
      %v4379 = vrot.slane %v4028, %v4378
      %v4380 = vlaneseq
      %v4381 = vshrl.u32 %v4380, 7
      %v4382 = vsub.s32 0, %v4381
      %v4383 = vrot.slane %v4042, %v4382
      %v4384 = vlaneseq
      %v4385 = vshrl.u32 %v4384, 7
      %v4386 = vsub.s32 0, %v4385
      %v4387 = vrot.slane %v4050, %v4386
      %v4388 = vlaneseq
      %v4389 = vshrl.u32 %v4388, 7
      %v4390 = vsub.s32 0, %v4389
      %v4391 = vrot.slane %v4052, %v4390
      %v4392 = vlaneseq
      %v4393 = vshrl.u32 %v4392, 7
      %v4394 = vsub.s32 0, %v4393
      %v4395 = vrot.slane %v4035, %v4394
      %v4396 = vlaneseq
      %v4397 = vshrl.u32 %v4396, 7
      %v4398 = vsub.s32 0, %v4397
      %v4399 = vrot.slane %v4049, %v4398
      %v4400 = vlaneseq
      %v4401 = vshrl.u32 %v4400, 7
      %v4402 = vsub.s32 0, %v4401
      %v4403 = vrot.slane %v4051, %v4402
      %v4404 = vlaneseq
      %v4405 = vshrl.u32 %v4404, 7
      %v4406 = vsub.s32 0, %v4405
      %v4407 = vrot.slane %v4053, %v4406
      %v4408 = vlaneseq
      %v4409 = vshrl.u32 %v4408, 7
      %v4410 = vsub.s32 0, %v4409
      %v4411 = vrot.slane %v4077, %v4410
      %v4412 = vlaneseq
      %v4413 = vshrl.u32 %v4412, 7
      %v4414 = vsub.s32 0, %v4413
      %v4415 = vrot.slane %v4091, %v4414
      %v4416 = vlaneseq
      %v4417 = vshrl.u32 %v4416, 7
      %v4418 = vsub.s32 0, %v4417
      %v4419 = vrot.slane %v4099, %v4418
      %v4420 = vlaneseq
      %v4421 = vshrl.u32 %v4420, 7
      %v4422 = vsub.s32 0, %v4421
      %v4423 = vrot.slane %v4101, %v4422
      %v4424 = vlaneseq
      %v4425 = vshrl.u32 %v4424, 7
      %v4426 = vsub.s32 0, %v4425
      %v4427 = vrot.slane %v4084, %v4426
      %v4428 = vlaneseq
      %v4429 = vshrl.u32 %v4428, 7
      %v4430 = vsub.s32 0, %v4429
      %v4431 = vrot.slane %v4098, %v4430
      %v4432 = vlaneseq
      %v4433 = vshrl.u32 %v4432, 7
      %v4434 = vsub.s32 0, %v4433
      %v4435 = vrot.slane %v4100, %v4434
      %v4436 = vlaneseq
      %v4437 = vshrl.u32 %v4436, 7
      %v4438 = vsub.s32 0, %v4437
      %v4439 = vrot.slane %v4102, %v4438
      %v4440 = vlaneseq
      %v4441 = vshrl.u32 %v4440, 7
      %v4442 = vsub.s32 0, %v4441
      %v4443 = vrot.slane %v4126, %v4442
      %v4444 = vlaneseq
      %v4445 = vshrl.u32 %v4444, 7
      %v4446 = vsub.s32 0, %v4445
      %v4447 = vrot.slane %v4140, %v4446
      %v4448 = vlaneseq
      %v4449 = vshrl.u32 %v4448, 7
      %v4450 = vsub.s32 0, %v4449
      %v4451 = vrot.slane %v4148, %v4450
      %v4452 = vlaneseq
      %v4453 = vshrl.u32 %v4452, 7
      %v4454 = vsub.s32 0, %v4453
      %v4455 = vrot.slane %v4150, %v4454
      %v4456 = vlaneseq
      %v4457 = vshrl.u32 %v4456, 7
      %v4458 = vsub.s32 0, %v4457
      %v4459 = vrot.slane %v4133, %v4458
      %v4460 = vlaneseq
      %v4461 = vshrl.u32 %v4460, 7
      %v4462 = vsub.s32 0, %v4461
      %v4463 = vrot.slane %v4147, %v4462
      %v4464 = vlaneseq
      %v4465 = vshrl.u32 %v4464, 7
      %v4466 = vsub.s32 0, %v4465
      %v4467 = vrot.slane %v4149, %v4466
      %v4468 = vlaneseq
      %v4469 = vshrl.u32 %v4468, 7
      %v4470 = vsub.s32 0, %v4469
      %v4471 = vrot.slane %v4151, %v4470
      %v4536 = vmul.f32 %v4219, %v4152
      %v4537 = vmul.f32 %v4223, %v4153
      %v4538 = vmul.f32 %v4227, %v4154
      %v4539 = vmul.f32 %v4231, %v4155
      %v4540 = vmul.f32 %v4235, %v4156
      %v4541 = vmul.f32 %v4239, %v4157
      %v4542 = vmul.f32 %v4243, %v4158
      %v4543 = vmul.f32 %v4247, %v4159
      %v4544 = vmul.f32 %v4251, %v4160
      %v4545 = vmul.f32 %v4255, %v4161
      %v4546 = vmul.f32 %v4259, %v4162
      %v4547 = vmul.f32 %v4263, %v4163
      %v4548 = vmul.f32 %v4267, %v4164
      %v4549 = vmul.f32 %v4271, %v4165
      %v4550 = vmul.f32 %v4275, %v4166
      %v4551 = vmul.f32 %v4279, %v4167
      %v4552 = vmul.f32 %v4283, %v4168
      %v4553 = vmul.f32 %v4287, %v4169
      %v4554 = vmul.f32 %v4291, %v4170
      %v4555 = vmul.f32 %v4295, %v4171
      %v4556 = vmul.f32 %v4299, %v4172
      %v4557 = vmul.f32 %v4303, %v4173
      %v4558 = vmul.f32 %v4307, %v4174
      %v4559 = vmul.f32 %v4311, %v4175
      %v4560 = vmul.f32 %v4315, %v4176
      %v4561 = vmul.f32 %v4319, %v4177
      %v4562 = vmul.f32 %v4323, %v4178
      %v4563 = vmul.f32 %v4327, %v4179
      %v4564 = vmul.f32 %v4331, %v4180
      %v4565 = vmul.f32 %v4335, %v4181
      %v4566 = vmul.f32 %v4339, %v4182
      %v4567 = vmul.f32 %v4343, %v4183
      %v4568 = vmul.f32 %v4347, %v4184
      %v4569 = vmul.f32 %v4351, %v4185
      %v4570 = vmul.f32 %v4355, %v4186
      %v4571 = vmul.f32 %v4359, %v4187
      %v4572 = vmul.f32 %v4363, %v4188
      %v4573 = vmul.f32 %v4367, %v4189
      %v4574 = vmul.f32 %v4371, %v4190
      %v4575 = vmul.f32 %v4375, %v4191
      %v4576 = vmul.f32 %v4379, %v4192
      %v4577 = vmul.f32 %v4383, %v4193
      %v4578 = vmul.f32 %v4387, %v4194
      %v4579 = vmul.f32 %v4391, %v4195
      %v4580 = vmul.f32 %v4395, %v4196
      %v4581 = vmul.f32 %v4399, %v4197
      %v4582 = vmul.f32 %v4403, %v4198
      %v4583 = vmul.f32 %v4407, %v4199
      %v4584 = vmul.f32 %v4411, %v4200
      %v4585 = vmul.f32 %v4415, %v4201
      %v4586 = vmul.f32 %v4419, %v4202
      %v4587 = vmul.f32 %v4423, %v4203
      %v4588 = vmul.f32 %v4427, %v4204
      %v4589 = vmul.f32 %v4431, %v4205
      %v4590 = vmul.f32 %v4435, %v4206
      %v4591 = vmul.f32 %v4439, %v4207
      %v4592 = vmul.f32 %v4443, %v4208
      %v4593 = vmul.f32 %v4447, %v4209
      %v4594 = vmul.f32 %v4451, %v4210
      %v4595 = vmul.f32 %v4455, %v4211
      %v4596 = vmul.f32 %v4459, %v4212
      %v4597 = vmul.f32 %v4463, %v4213
      %v4598 = vmul.f32 %v4467, %v4214
      %v4599 = vmul.f32 %v4471, %v4215
      %v4600 = vsel %vm969, %v4536, 0.0
      %4601 = vadd.xlane.f32.xlu0 %v4600
      %v4602 = vpop.xlane.xlu0 %4601
      %v4603 = vsel %vm969, %v4537, 0.0
      %4604 = vadd.xlane.f32.xlu0 %v4603
      %v4605 = vpop.xlane.xlu0 %4604
      %v4606 = vsel %vm969, %v4538, 0.0
      %4607 = vadd.xlane.f32.xlu0 %v4606
      %v4608 = vpop.xlane.xlu0 %4607
      %v4609 = vsel %vm969, %v4539, 0.0
      %4610 = vadd.xlane.f32.xlu0 %v4609
      %v4611 = vpop.xlane.xlu0 %4610
      %v4612 = vsel %vm969, %v4540, 0.0
      %4613 = vadd.xlane.f32.xlu0 %v4612
      %v4614 = vpop.xlane.xlu0 %4613
      %v4615 = vsel %vm969, %v4541, 0.0
      %4616 = vadd.xlane.f32.xlu0 %v4615
      %v4617 = vpop.xlane.xlu0 %4616
      %v4618 = vsel %vm969, %v4542, 0.0
      %4619 = vadd.xlane.f32.xlu0 %v4618
      %v4620 = vpop.xlane.xlu0 %4619
      %v4621 = vsel %vm969, %v4543, 0.0
      %4622 = vadd.xlane.f32.xlu0 %v4621
      %v4623 = vpop.xlane.xlu0 %4622
      %v4624 = vsel %vm969, %v4544, 0.0
      %4625 = vadd.xlane.f32.xlu0 %v4624
      %v4626 = vpop.xlane.xlu0 %4625
      %v4627 = vsel %vm969, %v4545, 0.0
      %4628 = vadd.xlane.f32.xlu0 %v4627
      %v4629 = vpop.xlane.xlu0 %4628
      %v4630 = vsel %vm969, %v4546, 0.0
      %4631 = vadd.xlane.f32.xlu0 %v4630
      %v4632 = vpop.xlane.xlu0 %4631
      %v4633 = vsel %vm969, %v4547, 0.0
      %4634 = vadd.xlane.f32.xlu0 %v4633
      %v4635 = vpop.xlane.xlu0 %4634
      %v4636 = vsel %vm969, %v4548, 0.0
      %4637 = vadd.xlane.f32.xlu0 %v4636
      %v4638 = vpop.xlane.xlu0 %4637
      %v4639 = vsel %vm969, %v4549, 0.0
      %4640 = vadd.xlane.f32.xlu0 %v4639
      %v4641 = vpop.xlane.xlu0 %4640
      %v4642 = vsel %vm969, %v4550, 0.0
      %4643 = vadd.xlane.f32.xlu0 %v4642
      %v4644 = vpop.xlane.xlu0 %4643
      %v4645 = vsel %vm969, %v4551, 0.0
      %4646 = vadd.xlane.f32.xlu0 %v4645
      %v4647 = vpop.xlane.xlu0 %4646
      %v4648 = vsel %vm969, %v4552, 0.0
      %4649 = vadd.xlane.f32.xlu0 %v4648
      %v4650 = vpop.xlane.xlu0 %4649
      %v4651 = vsel %vm969, %v4553, 0.0
      %4652 = vadd.xlane.f32.xlu0 %v4651
      %v4653 = vpop.xlane.xlu0 %4652
      %v4654 = vsel %vm969, %v4554, 0.0
      %4655 = vadd.xlane.f32.xlu0 %v4654
      %v4656 = vpop.xlane.xlu0 %4655
      %v4657 = vsel %vm969, %v4555, 0.0
      %4658 = vadd.xlane.f32.xlu0 %v4657
      %v4659 = vpop.xlane.xlu0 %4658
      %v4660 = vsel %vm969, %v4556, 0.0
      %4661 = vadd.xlane.f32.xlu0 %v4660
      %v4662 = vpop.xlane.xlu0 %4661
      %v4663 = vsel %vm969, %v4557, 0.0
      %4664 = vadd.xlane.f32.xlu0 %v4663
      %v4665 = vpop.xlane.xlu0 %4664
      %v4666 = vsel %vm969, %v4558, 0.0
      %4667 = vadd.xlane.f32.xlu0 %v4666
      %v4668 = vpop.xlane.xlu0 %4667
      %v4669 = vsel %vm969, %v4559, 0.0
      %4670 = vadd.xlane.f32.xlu0 %v4669
      %v4671 = vpop.xlane.xlu0 %4670
      %v4672 = vsel %vm969, %v4560, 0.0
      %4673 = vadd.xlane.f32.xlu0 %v4672
      %v4674 = vpop.xlane.xlu0 %4673
      %v4675 = vsel %vm969, %v4561, 0.0
      %4676 = vadd.xlane.f32.xlu0 %v4675
      %v4677 = vpop.xlane.xlu0 %4676
      %v4678 = vsel %vm969, %v4562, 0.0
      %4679 = vadd.xlane.f32.xlu0 %v4678
      %v4680 = vpop.xlane.xlu0 %4679
      %v4681 = vsel %vm969, %v4563, 0.0
      %4682 = vadd.xlane.f32.xlu0 %v4681
      %v4683 = vpop.xlane.xlu0 %4682
      %v4684 = vsel %vm969, %v4564, 0.0
      %4685 = vadd.xlane.f32.xlu0 %v4684
      %v4686 = vpop.xlane.xlu0 %4685
      %v4687 = vsel %vm969, %v4565, 0.0
      %4688 = vadd.xlane.f32.xlu0 %v4687
      %v4689 = vpop.xlane.xlu0 %4688
      %v4690 = vsel %vm969, %v4566, 0.0
      %4691 = vadd.xlane.f32.xlu0 %v4690
      %v4692 = vpop.xlane.xlu0 %4691
      %v4693 = vsel %vm969, %v4567, 0.0
      %4694 = vadd.xlane.f32.xlu0 %v4693
      %v4695 = vpop.xlane.xlu0 %4694
      %v4696 = vsel %vm969, %v4568, 0.0
      %4697 = vadd.xlane.f32.xlu0 %v4696
      %v4698 = vpop.xlane.xlu0 %4697
      %v4699 = vsel %vm969, %v4569, 0.0
      %4700 = vadd.xlane.f32.xlu0 %v4699
      %v4701 = vpop.xlane.xlu0 %4700
      %v4702 = vsel %vm969, %v4570, 0.0
      %4703 = vadd.xlane.f32.xlu0 %v4702
      %v4704 = vpop.xlane.xlu0 %4703
      %v4705 = vsel %vm969, %v4571, 0.0
      %4706 = vadd.xlane.f32.xlu0 %v4705
      %v4707 = vpop.xlane.xlu0 %4706
      %v4708 = vsel %vm969, %v4572, 0.0
      %4709 = vadd.xlane.f32.xlu0 %v4708
      %v4710 = vpop.xlane.xlu0 %4709
      %v4711 = vsel %vm969, %v4573, 0.0
      %4712 = vadd.xlane.f32.xlu0 %v4711
      %v4713 = vpop.xlane.xlu0 %4712
      %v4714 = vsel %vm969, %v4574, 0.0
      %4715 = vadd.xlane.f32.xlu0 %v4714
      %v4716 = vpop.xlane.xlu0 %4715
      %v4717 = vsel %vm969, %v4575, 0.0
      %4718 = vadd.xlane.f32.xlu0 %v4717
      %v4719 = vpop.xlane.xlu0 %4718
      %v4720 = vsel %vm969, %v4576, 0.0
      %4721 = vadd.xlane.f32.xlu0 %v4720
      %v4722 = vpop.xlane.xlu0 %4721
      %v4723 = vsel %vm969, %v4577, 0.0
      %4724 = vadd.xlane.f32.xlu0 %v4723
      %v4725 = vpop.xlane.xlu0 %4724
      %v4726 = vsel %vm969, %v4578, 0.0
      %4727 = vadd.xlane.f32.xlu0 %v4726
      %v4728 = vpop.xlane.xlu0 %4727
      %v4729 = vsel %vm969, %v4579, 0.0
      %4730 = vadd.xlane.f32.xlu0 %v4729
      %v4731 = vpop.xlane.xlu0 %4730
      %v4732 = vsel %vm969, %v4580, 0.0
      %4733 = vadd.xlane.f32.xlu0 %v4732
      %v4734 = vpop.xlane.xlu0 %4733
      %v4735 = vsel %vm969, %v4581, 0.0
      %4736 = vadd.xlane.f32.xlu0 %v4735
      %v4737 = vpop.xlane.xlu0 %4736
      %v4738 = vsel %vm969, %v4582, 0.0
      %4739 = vadd.xlane.f32.xlu0 %v4738
      %v4740 = vpop.xlane.xlu0 %4739
      %v4741 = vsel %vm969, %v4583, 0.0
      %4742 = vadd.xlane.f32.xlu0 %v4741
      %v4743 = vpop.xlane.xlu0 %4742
      %v4744 = vsel %vm969, %v4584, 0.0
      %4745 = vadd.xlane.f32.xlu0 %v4744
      %v4746 = vpop.xlane.xlu0 %4745
      %v4747 = vsel %vm969, %v4585, 0.0
      %4748 = vadd.xlane.f32.xlu0 %v4747
      %v4749 = vpop.xlane.xlu0 %4748
      %v4750 = vsel %vm969, %v4586, 0.0
      %4751 = vadd.xlane.f32.xlu0 %v4750
      %v4752 = vpop.xlane.xlu0 %4751
      %v4753 = vsel %vm969, %v4587, 0.0
      %4754 = vadd.xlane.f32.xlu0 %v4753
      %v4755 = vpop.xlane.xlu0 %4754
      %v4756 = vsel %vm969, %v4588, 0.0
      %4757 = vadd.xlane.f32.xlu0 %v4756
      %v4758 = vpop.xlane.xlu0 %4757
      %v4759 = vsel %vm969, %v4589, 0.0
      %4760 = vadd.xlane.f32.xlu0 %v4759
      %v4761 = vpop.xlane.xlu0 %4760
      %v4762 = vsel %vm969, %v4590, 0.0
      %4763 = vadd.xlane.f32.xlu0 %v4762
      %v4764 = vpop.xlane.xlu0 %4763
      %v4765 = vsel %vm969, %v4591, 0.0
      %4766 = vadd.xlane.f32.xlu0 %v4765
      %v4767 = vpop.xlane.xlu0 %4766
      %v4768 = vsel %vm969, %v4592, 0.0
      %4769 = vadd.xlane.f32.xlu0 %v4768
      %v4770 = vpop.xlane.xlu0 %4769
      %v4771 = vsel %vm969, %v4593, 0.0
      %4772 = vadd.xlane.f32.xlu0 %v4771
      %v4773 = vpop.xlane.xlu0 %4772
      %v4774 = vsel %vm969, %v4594, 0.0
      %4775 = vadd.xlane.f32.xlu0 %v4774
      %v4776 = vpop.xlane.xlu0 %4775
      %v4777 = vsel %vm969, %v4595, 0.0
      %4778 = vadd.xlane.f32.xlu0 %v4777
      %v4779 = vpop.xlane.xlu0 %4778
      %v4780 = vsel %vm969, %v4596, 0.0
      %4781 = vadd.xlane.f32.xlu0 %v4780
      %v4782 = vpop.xlane.xlu0 %4781
      %v4783 = vsel %vm969, %v4597, 0.0
      %4784 = vadd.xlane.f32.xlu0 %v4783
      %v4785 = vpop.xlane.xlu0 %4784
      %v4786 = vsel %vm969, %v4598, 0.0
      %4787 = vadd.xlane.f32.xlu0 %v4786
      %v4788 = vpop.xlane.xlu0 %4787
      %v4789 = vsel %vm969, %v4599, 0.0
      %4790 = vadd.xlane.f32.xlu0 %v4789
      %v4791 = vpop.xlane.xlu0 %4790
      %v4856 = vlaneseq
      %v4857 = vshrl.u32 %v4856, 7
      %v4858 = vsub.s32 %v2444, %v4857
      %v4859 = vrot.slane %v4602, %v4858
      %v4860 = vlaneseq
      %v4861 = vshrl.u32 %v4860, 7
      %v4862 = vsub.s32 %v2444, %v4861
      %v4863 = vrot.slane %v4605, %v4862
      %v4864 = vlaneseq
      %v4865 = vshrl.u32 %v4864, 7
      %v4866 = vsub.s32 %v2444, %v4865
      %v4867 = vrot.slane %v4608, %v4866
      %v4868 = vlaneseq
      %v4869 = vshrl.u32 %v4868, 7
      %v4870 = vsub.s32 %v2444, %v4869
      %v4871 = vrot.slane %v4611, %v4870
      %v4872 = vlaneseq
      %v4873 = vshrl.u32 %v4872, 7
      %v4874 = vsub.s32 %v2444, %v4873
      %v4875 = vrot.slane %v4614, %v4874
      %v4876 = vlaneseq
      %v4877 = vshrl.u32 %v4876, 7
      %v4878 = vsub.s32 %v2444, %v4877
      %v4879 = vrot.slane %v4617, %v4878
      %v4880 = vlaneseq
      %v4881 = vshrl.u32 %v4880, 7
      %v4882 = vsub.s32 %v2444, %v4881
      %v4883 = vrot.slane %v4620, %v4882
      %v4884 = vlaneseq
      %v4885 = vshrl.u32 %v4884, 7
      %v4886 = vsub.s32 %v2444, %v4885
      %v4887 = vrot.slane %v4623, %v4886
      %v4888 = vlaneseq
      %v4889 = vshrl.u32 %v4888, 7
      %v4890 = vsub.s32 %v2444, %v4889
      %v4891 = vrot.slane %v4626, %v4890
      %v4892 = vlaneseq
      %v4893 = vshrl.u32 %v4892, 7
      %v4894 = vsub.s32 %v2444, %v4893
      %v4895 = vrot.slane %v4629, %v4894
      %v4896 = vlaneseq
      %v4897 = vshrl.u32 %v4896, 7
      %v4898 = vsub.s32 %v2444, %v4897
      %v4899 = vrot.slane %v4632, %v4898
      %v4900 = vlaneseq
      %v4901 = vshrl.u32 %v4900, 7
      %v4902 = vsub.s32 %v2444, %v4901
      %v4903 = vrot.slane %v4635, %v4902
      %v4904 = vlaneseq
      %v4905 = vshrl.u32 %v4904, 7
      %v4906 = vsub.s32 %v2444, %v4905
      %v4907 = vrot.slane %v4638, %v4906
      %v4908 = vlaneseq
      %v4909 = vshrl.u32 %v4908, 7
      %v4910 = vsub.s32 %v2444, %v4909
      %v4911 = vrot.slane %v4641, %v4910
      %v4912 = vlaneseq
      %v4913 = vshrl.u32 %v4912, 7
      %v4914 = vsub.s32 %v2444, %v4913
      %v4915 = vrot.slane %v4644, %v4914
      %v4916 = vlaneseq
      %v4917 = vshrl.u32 %v4916, 7
      %v4918 = vsub.s32 %v2444, %v4917
      %v4919 = vrot.slane %v4647, %v4918
      %v4920 = vlaneseq
      %v4921 = vshrl.u32 %v4920, 7
      %v4922 = vsub.s32 %v2444, %v4921
      %v4923 = vrot.slane %v4650, %v4922
      %v4924 = vlaneseq
      %v4925 = vshrl.u32 %v4924, 7
      %v4926 = vsub.s32 %v2444, %v4925
      %v4927 = vrot.slane %v4653, %v4926
      %v4928 = vlaneseq
      %v4929 = vshrl.u32 %v4928, 7
      %v4930 = vsub.s32 %v2444, %v4929
      %v4931 = vrot.slane %v4656, %v4930
      %v4932 = vlaneseq
      %v4933 = vshrl.u32 %v4932, 7
      %v4934 = vsub.s32 %v2444, %v4933
      %v4935 = vrot.slane %v4659, %v4934
      %v4936 = vlaneseq
      %v4937 = vshrl.u32 %v4936, 7
      %v4938 = vsub.s32 %v2444, %v4937
      %v4939 = vrot.slane %v4662, %v4938
      %v4940 = vlaneseq
      %v4941 = vshrl.u32 %v4940, 7
      %v4942 = vsub.s32 %v2444, %v4941
      %v4943 = vrot.slane %v4665, %v4942
      %v4944 = vlaneseq
      %v4945 = vshrl.u32 %v4944, 7
      %v4946 = vsub.s32 %v2444, %v4945
      %v4947 = vrot.slane %v4668, %v4946
      %v4948 = vlaneseq
      %v4949 = vshrl.u32 %v4948, 7
      %v4950 = vsub.s32 %v2444, %v4949
      %v4951 = vrot.slane %v4671, %v4950
      %v4952 = vlaneseq
      %v4953 = vshrl.u32 %v4952, 7
      %v4954 = vsub.s32 %v2444, %v4953
      %v4955 = vrot.slane %v4674, %v4954
      %v4956 = vlaneseq
      %v4957 = vshrl.u32 %v4956, 7
      %v4958 = vsub.s32 %v2444, %v4957
      %v4959 = vrot.slane %v4677, %v4958
      %v4960 = vlaneseq
      %v4961 = vshrl.u32 %v4960, 7
      %v4962 = vsub.s32 %v2444, %v4961
      %v4963 = vrot.slane %v4680, %v4962
      %v4964 = vlaneseq
      %v4965 = vshrl.u32 %v4964, 7
      %v4966 = vsub.s32 %v2444, %v4965
      %v4967 = vrot.slane %v4683, %v4966
      %v4968 = vlaneseq
      %v4969 = vshrl.u32 %v4968, 7
      %v4970 = vsub.s32 %v2444, %v4969
      %v4971 = vrot.slane %v4686, %v4970
      %v4972 = vlaneseq
      %v4973 = vshrl.u32 %v4972, 7
      %v4974 = vsub.s32 %v2444, %v4973
      %v4975 = vrot.slane %v4689, %v4974
      %v4976 = vlaneseq
      %v4977 = vshrl.u32 %v4976, 7
      %v4978 = vsub.s32 %v2444, %v4977
      %v4979 = vrot.slane %v4692, %v4978
      %v4980 = vlaneseq
      %v4981 = vshrl.u32 %v4980, 7
      %v4982 = vsub.s32 %v2444, %v4981
      %v4983 = vrot.slane %v4695, %v4982
      %v4984 = vlaneseq
      %v4985 = vshrl.u32 %v4984, 7
      %v4986 = vsub.s32 %v2444, %v4985
      %v4987 = vrot.slane %v4698, %v4986
      %v4988 = vlaneseq
      %v4989 = vshrl.u32 %v4988, 7
      %v4990 = vsub.s32 %v2444, %v4989
      %v4991 = vrot.slane %v4701, %v4990
      %v4992 = vlaneseq
      %v4993 = vshrl.u32 %v4992, 7
      %v4994 = vsub.s32 %v2444, %v4993
      %v4995 = vrot.slane %v4704, %v4994
      %v4996 = vlaneseq
      %v4997 = vshrl.u32 %v4996, 7
      %v4998 = vsub.s32 %v2444, %v4997
      %v4999 = vrot.slane %v4707, %v4998
      %v5000 = vlaneseq
      %v5001 = vshrl.u32 %v5000, 7
      %v5002 = vsub.s32 %v2444, %v5001
      %v5003 = vrot.slane %v4710, %v5002
      %v5004 = vlaneseq
      %v5005 = vshrl.u32 %v5004, 7
      %v5006 = vsub.s32 %v2444, %v5005
      %v5007 = vrot.slane %v4713, %v5006
      %v5008 = vlaneseq
      %v5009 = vshrl.u32 %v5008, 7
      %v5010 = vsub.s32 %v2444, %v5009
      %v5011 = vrot.slane %v4716, %v5010
      %v5012 = vlaneseq
      %v5013 = vshrl.u32 %v5012, 7
      %v5014 = vsub.s32 %v2444, %v5013
      %v5015 = vrot.slane %v4719, %v5014
      %v5016 = vlaneseq
      %v5017 = vshrl.u32 %v5016, 7
      %v5018 = vsub.s32 %v2444, %v5017
      %v5019 = vrot.slane %v4722, %v5018
      %v5020 = vlaneseq
      %v5021 = vshrl.u32 %v5020, 7
      %v5022 = vsub.s32 %v2444, %v5021
      %v5023 = vrot.slane %v4725, %v5022
      %v5024 = vlaneseq
      %v5025 = vshrl.u32 %v5024, 7
      %v5026 = vsub.s32 %v2444, %v5025
      %v5027 = vrot.slane %v4728, %v5026
      %v5028 = vlaneseq
      %v5029 = vshrl.u32 %v5028, 7
      %v5030 = vsub.s32 %v2444, %v5029
      %v5031 = vrot.slane %v4731, %v5030
      %v5032 = vlaneseq
      %v5033 = vshrl.u32 %v5032, 7
      %v5034 = vsub.s32 %v2444, %v5033
      %v5035 = vrot.slane %v4734, %v5034
      %v5036 = vlaneseq
      %v5037 = vshrl.u32 %v5036, 7
      %v5038 = vsub.s32 %v2444, %v5037
      %v5039 = vrot.slane %v4737, %v5038
      %v5040 = vlaneseq
      %v5041 = vshrl.u32 %v5040, 7
      %v5042 = vsub.s32 %v2444, %v5041
      %v5043 = vrot.slane %v4740, %v5042
      %v5044 = vlaneseq
      %v5045 = vshrl.u32 %v5044, 7
      %v5046 = vsub.s32 %v2444, %v5045
      %v5047 = vrot.slane %v4743, %v5046
      %v5048 = vlaneseq
      %v5049 = vshrl.u32 %v5048, 7
      %v5050 = vsub.s32 %v2444, %v5049
      %v5051 = vrot.slane %v4746, %v5050
      %v5052 = vlaneseq
      %v5053 = vshrl.u32 %v5052, 7
      %v5054 = vsub.s32 %v2444, %v5053
      %v5055 = vrot.slane %v4749, %v5054
      %v5056 = vlaneseq
      %v5057 = vshrl.u32 %v5056, 7
      %v5058 = vsub.s32 %v2444, %v5057
      %v5059 = vrot.slane %v4752, %v5058
      %v5060 = vlaneseq
      %v5061 = vshrl.u32 %v5060, 7
      %v5062 = vsub.s32 %v2444, %v5061
      %v5063 = vrot.slane %v4755, %v5062
      %v5064 = vlaneseq
      %v5065 = vshrl.u32 %v5064, 7
      %v5066 = vsub.s32 %v2444, %v5065
      %v5067 = vrot.slane %v4758, %v5066
      %v5068 = vlaneseq
      %v5069 = vshrl.u32 %v5068, 7
      %v5070 = vsub.s32 %v2444, %v5069
      %v5071 = vrot.slane %v4761, %v5070
      %v5072 = vlaneseq
      %v5073 = vshrl.u32 %v5072, 7
      %v5074 = vsub.s32 %v2444, %v5073
      %v5075 = vrot.slane %v4764, %v5074
      %v5076 = vlaneseq
      %v5077 = vshrl.u32 %v5076, 7
      %v5078 = vsub.s32 %v2444, %v5077
      %v5079 = vrot.slane %v4767, %v5078
      %v5080 = vlaneseq
      %v5081 = vshrl.u32 %v5080, 7
      %v5082 = vsub.s32 %v2444, %v5081
      %v5083 = vrot.slane %v4770, %v5082
      %v5084 = vlaneseq
      %v5085 = vshrl.u32 %v5084, 7
      %v5086 = vsub.s32 %v2444, %v5085
      %v5087 = vrot.slane %v4773, %v5086
      %v5088 = vlaneseq
      %v5089 = vshrl.u32 %v5088, 7
      %v5090 = vsub.s32 %v2444, %v5089
      %v5091 = vrot.slane %v4776, %v5090
      %v5092 = vlaneseq
      %v5093 = vshrl.u32 %v5092, 7
      %v5094 = vsub.s32 %v2444, %v5093
      %v5095 = vrot.slane %v4779, %v5094
      %v5096 = vlaneseq
      %v5097 = vshrl.u32 %v5096, 7
      %v5098 = vsub.s32 %v2444, %v5097
      %v5099 = vrot.slane %v4782, %v5098
      %v5100 = vlaneseq
      %v5101 = vshrl.u32 %v5100, 7
      %v5102 = vsub.s32 %v2444, %v5101
      %v5103 = vrot.slane %v4785, %v5102
      %v5104 = vlaneseq
      %v5105 = vshrl.u32 %v5104, 7
      %v5106 = vsub.s32 %v2444, %v5105
      %v5107 = vrot.slane %v4788, %v5106
      %v5108 = vlaneseq
      %v5109 = vshrl.u32 %v5108, 7
      %v5110 = vsub.s32 %v2444, %v5109
      %v5111 = vrot.slane %v4791, %v5110
      %v5112 = vsel %vm2701, %v4863, %v4859
      %v5113 = vsel %vm2703, %v4867, %v5112
      %v5114 = vsel %vm2705, %v4871, %v5113
      %v5115 = vsel %vm2707, %v4875, %v5114
      %v5116 = vsel %vm2709, %v4879, %v5115
      %v5117 = vsel %vm2711, %v4883, %v5116
      %v5118 = vsel %vm2713, %v4887, %v5117
      %v5119 = vsel %vm2701, %v4895, %v4891
      %v5120 = vsel %vm2703, %v4899, %v5119
      %v5121 = vsel %vm2705, %v4903, %v5120
      %v5122 = vsel %vm2707, %v4907, %v5121
      %v5123 = vsel %vm2709, %v4911, %v5122
      %v5124 = vsel %vm2711, %v4915, %v5123
      %v5125 = vsel %vm2713, %v4919, %v5124
      %v5126 = vsel %vm2701, %v4927, %v4923
      %v5127 = vsel %vm2703, %v4931, %v5126
      %v5128 = vsel %vm2705, %v4935, %v5127
      %v5129 = vsel %vm2707, %v4939, %v5128
      %v5130 = vsel %vm2709, %v4943, %v5129
      %v5131 = vsel %vm2711, %v4947, %v5130
      %v5132 = vsel %vm2713, %v4951, %v5131
      %v5133 = vsel %vm2701, %v4959, %v4955
      %v5134 = vsel %vm2703, %v4963, %v5133
      %v5135 = vsel %vm2705, %v4967, %v5134
      %v5136 = vsel %vm2707, %v4971, %v5135
      %v5137 = vsel %vm2709, %v4975, %v5136
      %v5138 = vsel %vm2711, %v4979, %v5137
      %v5139 = vsel %vm2713, %v4983, %v5138
      %v5140 = vsel %vm2701, %v4991, %v4987
      %v5141 = vsel %vm2703, %v4995, %v5140
      %v5142 = vsel %vm2705, %v4999, %v5141
      %v5143 = vsel %vm2707, %v5003, %v5142
      %v5144 = vsel %vm2709, %v5007, %v5143
      %v5145 = vsel %vm2711, %v5011, %v5144
      %v5146 = vsel %vm2713, %v5015, %v5145
      %v5147 = vsel %vm2701, %v5023, %v5019
      %v5148 = vsel %vm2703, %v5027, %v5147
      %v5149 = vsel %vm2705, %v5031, %v5148
      %v5150 = vsel %vm2707, %v5035, %v5149
      %v5151 = vsel %vm2709, %v5039, %v5150
      %v5152 = vsel %vm2711, %v5043, %v5151
      %v5153 = vsel %vm2713, %v5047, %v5152
      %v5154 = vsel %vm2701, %v5055, %v5051
      %v5155 = vsel %vm2703, %v5059, %v5154
      %v5156 = vsel %vm2705, %v5063, %v5155
      %v5157 = vsel %vm2707, %v5067, %v5156
      %v5158 = vsel %vm2709, %v5071, %v5157
      %v5159 = vsel %vm2711, %v5075, %v5158
      %v5160 = vsel %vm2713, %v5079, %v5159
      %v5161 = vsel %vm2701, %v5087, %v5083
      %v5162 = vsel %vm2703, %v5091, %v5161
      %v5163 = vsel %vm2705, %v5095, %v5162
      %v5164 = vsel %vm2707, %v5099, %v5163
      %v5165 = vsel %vm2709, %v5103, %v5164
      %v5166 = vsel %vm2711, %v5107, %v5165
      %v5167 = vsel %vm2713, %v5111, %v5166
      %v5176 = vsel %vm532, %v3425, %v5118
      %v5177 = vsel %vm532, %v3471, %v5125
      %v5178 = vsel %vm532, %v3517, %v5132
      %v5179 = vsel %vm532, %v3563, %v5139
      %v5180 = vsel %vm532, %v3609, %v5146
      %v5181 = vsel %vm532, %v3655, %v5153
      %v5182 = vsel %vm532, %v3701, %v5160
      %v5183 = vsel %vm532, %v3747, %v5167
      %v5184 = vpack.c.bf16 %v5177, %v5176
      %v5185 = vpack.c.bf16 %v5179, %v5178
      %v5186 = vpack.c.bf16 %v5181, %v5180
      %v5187 = vpack.c.bf16 %v5183, %v5182
      %v5188 = vld [vmem:[%s10] sm:$0xf]
      %v5189 = vld [vmem:[%s10 + $0x4] sm:$0xf]
      %v5192 = vunpack.c.l.b16 %v5188
      %v5193 = vunpack.c.l.b16 %v5189
      %v5194 = vpack.c.b16 %v5193, %v5192
      %v5197 = vsel %vm969, %v5184, 0
      %v5200 = vsel %vm969, %v5185, 0
      %v5203 = vsel %vm969, %v5186, 0
      %v5206 = vsel %vm969, %v5187, 0
      %5208 = vmatprep.subr.bf16.mxu0 0
      %5209 = vmatpush1.bf16.msra.mxu0 %v5194
      %5210 = vmatprep.subr.bf16.mxu0 0
      %5211 = vmatpush1.bf16.msra.mxu0 0
      %5212 = vmatprep.subr.bf16.mxu0 0
      %5213 = vmatpush1.bf16.msra.mxu0 0
      %5214 = vmatprep.subr.bf16.mxu0 0
      %5215 = vmatpush1.bf16.msra.mxu0 0
      %5216 = vmatprep.subr.bf16.mxu0 0
      %5217 = vmatpush1.bf16.msra.mxu0 0
      %5218 = vmatprep.subr.bf16.mxu0 0
      %5219 = vmatpush1.bf16.msra.mxu0 0
      %5220 = vmatprep.subr.bf16.mxu0 0
      %5221 = vmatpush1.bf16.msra.mxu0 0
      %5222 = vmatprep.subr.bf16.mxu0 0
      %5223 = vmatpush1.bf16.msra.mxu0 0
      %5224 = vmatprep.subr.bf16.mxu0 0
      %5225 = vmatpush1.bf16.msra.mxu0 0
      %5226 = vmatprep.subr.bf16.mxu0 0
      %5227 = vmatpush1.bf16.msra.mxu0 0
      %5228 = vmatprep.subr.bf16.mxu0 0
      %5229 = vmatpush1.bf16.msra.mxu0 0
      %5230 = vmatprep.subr.bf16.mxu0 0
      %5231 = vmatpush1.bf16.msra.mxu0 0
      %5232 = vmatprep.subr.bf16.mxu0 0
      %5233 = vmatpush1.bf16.msra.mxu0 0
      %5234 = vmatprep.subr.bf16.mxu0 0
      %5235 = vmatpush1.bf16.msra.mxu0 0
      %5236 = vmatprep.subr.bf16.mxu0 0
      %5237 = vmatpush1.bf16.msra.mxu0 0
      %5238 = vmatprep.subr.bf16.mxu0 0
      %5239 = vmatpush1.bf16.msra.mxu0 0
      %5240 = vmatprep.mubr.bf16.mxu0 0
      %5241 = vmatmul.mubr.bf16.gmra.mrb[0].mxu0 %v5197
      %v5242 = vpop.f32.mrb[0].mxu0
      %v5243 = vadd.f32 0.0, %v5242
      %v5244 = vpop.f32.mrb[0].mxu0
      %v5245 = vpop.f32.mrb[0].mxu0
      %v5246 = vadd.f32 0.0, %v5245
      %v5247 = vpop.f32.mrb[0].mxu0
      %5248 = vmatprep.mubr.bf16.mxu0 0
      %5249 = vmatmul.mubr.bf16.gmra.mrb[0].mxu0 %v5200
      %v5250 = vpop.f32.mrb[0].mxu0
      %v5251 = vadd.f32 0.0, %v5250
      %v5252 = vpop.f32.mrb[0].mxu0
      %v5253 = vpop.f32.mrb[0].mxu0
      %v5254 = vadd.f32 0.0, %v5253
      %v5255 = vpop.f32.mrb[0].mxu0
      %5256 = vmatprep.mubr.bf16.mxu0 0
      %5257 = vmatmul.mubr.bf16.gmra.mrb[0].mxu0 %v5203
      %v5258 = vpop.f32.mrb[0].mxu0
      %v5259 = vadd.f32 0.0, %v5258
      %v5260 = vpop.f32.mrb[0].mxu0
      %v5261 = vpop.f32.mrb[0].mxu0
      %v5262 = vadd.f32 0.0, %v5261
      %v5263 = vpop.f32.mrb[0].mxu0
      %5264 = vmatprep.mubr.bf16.mxu0 0
      %5265 = vmatmul.mubr.bf16.gmra.mrb[0].mxu0 %v5206
      %v5266 = vpop.f32.mrb[0].mxu0
      %v5267 = vadd.f32 0.0, %v5266
      %v5268 = vpop.f32.mrb[0].mxu0
      %v5269 = vpop.f32.mrb[0].mxu0
      %v5270 = vadd.f32 0.0, %v5269
      %v5271 = vpop.f32.mrb[0].mxu0
      %5272 = vdwg.mxu0
      %v5274 = vsel %vm969, %v3352, 0
      %v5277 = vsel %vm969, %v3353, 0
      %v5280 = vsel %vm969, %v3354, 0
      %v5283 = vsel %vm969, %v3355, 0
      %v5286 = vsel %vm969, %v3274, 0
      %v5289 = vsel %vm969, %v3275, 0
      %v5292 = vsel %vm969, %v3276, 0
      %v5295 = vsel %vm969, %v3277, 0
      %5297 = vmatprep.subr.bf16.mxu0 0
      %5298 = vmatpush1.bf16.xpose.msra.mxu0 %v5286
      %5299 = vmatprep.subr.bf16.mxu0 0
      %5300 = vmatpush1.bf16.xpose.msra.mxu0 %v5289
      %5301 = vmatprep.subr.bf16.mxu0 0
      %5302 = vmatpush1.bf16.xpose.msra.mxu0 %v5292
      %5303 = vmatprep.subr.bf16.mxu0 0
      %5304 = vmatpush1.bf16.xpose.msra.mxu0 %v5295
      %5305 = vmatprep.subr.bf16.mxu0 0
      %5306 = vmatpush1.bf16.xpose.msra.mxu0 0
      %5307 = vmatprep.subr.bf16.mxu0 0
      %5308 = vmatpush1.bf16.xpose.msra.mxu0 0
      %5309 = vmatprep.subr.bf16.mxu0 0
      %5310 = vmatpush1.bf16.xpose.msra.mxu0 0
      %5311 = vmatprep.subr.bf16.mxu0 0
      %5312 = vmatpush1.bf16.xpose.msra.mxu0 0
      %5313 = vmatprep.subr.bf16.mxu0 0
      %5314 = vmatpush1.bf16.xpose.msra.mxu0 0
      %5315 = vmatprep.subr.bf16.mxu0 0
      %5316 = vmatpush1.bf16.xpose.msra.mxu0 0
      %5317 = vmatprep.subr.bf16.mxu0 0
      %5318 = vmatpush1.bf16.xpose.msra.mxu0 0
      %5319 = vmatprep.subr.bf16.mxu0 0
      %5320 = vmatpush1.bf16.xpose.msra.mxu0 0
      %5321 = vmatprep.subr.bf16.mxu0 0
      %5322 = vmatpush1.bf16.xpose.msra.mxu0 0
      %5323 = vmatprep.subr.bf16.mxu0 0
      %5324 = vmatpush1.bf16.xpose.msra.mxu0 0
      %5325 = vmatprep.subr.bf16.mxu0 0
      %5326 = vmatpush1.bf16.xpose.msra.mxu0 0
      %5327 = vmatprep.subr.bf16.mxu0 0
      %5328 = vmatpush1.bf16.xpose.msra.mxu0 0
      %5329 = vmatprep.mubr.bf16.mxu0 0
      %5330 = vmatmul.mubr.bf16.gmra.mrb[0].mxu0 %v5274
      %v5331 = vpop.f32.mrb[0].mxu0
      %v5332 = vadd.f32 %v5243, %v5331
      %v5333 = vpop.f32.mrb[0].mxu0
      %v5334 = vpop.f32.mrb[0].mxu0
      %v5335 = vadd.f32 %v5246, %v5334
      %v5336 = vpop.f32.mrb[0].mxu0
      %5337 = vmatprep.mubr.bf16.mxu0 0
      %5338 = vmatmul.mubr.bf16.gmra.mrb[0].mxu0 %v5277
      %v5339 = vpop.f32.mrb[0].mxu0
      %v5340 = vadd.f32 %v5251, %v5339
      %v5341 = vpop.f32.mrb[0].mxu0
      %v5342 = vpop.f32.mrb[0].mxu0
      %v5343 = vadd.f32 %v5254, %v5342
      %v5344 = vpop.f32.mrb[0].mxu0
      %5345 = vmatprep.mubr.bf16.mxu0 0
      %5346 = vmatmul.mubr.bf16.gmra.mrb[0].mxu0 %v5280
      %v5347 = vpop.f32.mrb[0].mxu0
      %v5348 = vadd.f32 %v5259, %v5347
      %v5349 = vpop.f32.mrb[0].mxu0
      %v5350 = vpop.f32.mrb[0].mxu0
      %v5351 = vadd.f32 %v5262, %v5350
      %v5352 = vpop.f32.mrb[0].mxu0
      %5353 = vmatprep.mubr.bf16.mxu0 0
      %5354 = vmatmul.mubr.bf16.gmra.mrb[0].mxu0 %v5283
      %v5355 = vpop.f32.mrb[0].mxu0
      %v5356 = vadd.f32 %v5267, %v5355
      %v5357 = vpop.f32.mrb[0].mxu0
      %v5358 = vpop.f32.mrb[0].mxu0
      %v5359 = vadd.f32 %v5270, %v5358
      %v5360 = vpop.f32.mrb[0].mxu0
      %5361 = vdwg.mxu0
      %v5362 = vsel %vm2958, %v5332, -inf
      %5363 = vmax.xlane.f32.xlu0 %v5362
      %v5364 = vpop.xlane.xlu0 %5363
      %v5365 = vsel %vm2958, %v5335, -inf
      %5366 = vmax.xlane.f32.xlu0 %v5365
      %v5367 = vpop.xlane.xlu0 %5366
      %v5368 = vsel %vm2958, %v5340, -inf
      %5369 = vmax.xlane.f32.xlu0 %v5368
      %v5370 = vpop.xlane.xlu0 %5369
      %v5371 = vsel %vm2958, %v5343, -inf
      %5372 = vmax.xlane.f32.xlu0 %v5371
      %v5373 = vpop.xlane.xlu0 %5372
      %v5374 = vsel %vm2958, %v5348, -inf
      %5375 = vmax.xlane.f32.xlu0 %v5374
      %v5376 = vpop.xlane.xlu0 %5375
      %v5377 = vsel %vm2958, %v5351, -inf
      %5378 = vmax.xlane.f32.xlu0 %v5377
      %v5379 = vpop.xlane.xlu0 %5378
      %v5380 = vsel %vm2958, %v5356, -inf
      %5381 = vmax.xlane.f32.xlu0 %v5380
      %v5382 = vpop.xlane.xlu0 %5381
      %v5383 = vsel %vm2958, %v5359, -inf
      %5384 = vmax.xlane.f32.xlu0 %v5383
      %v5385 = vpop.xlane.xlu0 %5384
      %v5386 = vsub.f32 %v5332, %v5364
      %v5387 = vsub.f32 %v5335, %v5367
      %v5388 = vsub.f32 %v5340, %v5370
      %v5389 = vsub.f32 %v5343, %v5373
      %v5390 = vsub.f32 %v5348, %v5376
      %v5391 = vsub.f32 %v5351, %v5379
      %v5392 = vsub.f32 %v5356, %v5382
      %v5393 = vsub.f32 %v5359, %v5385
      %v5394 = vmul.f32 %v5386, 1.442695
      %v5395 = vpow.pop %v5394
      %v5396 = vmul.f32 %v5387, 1.442695
      %v5397 = vpow.pop %v5396
      %v5398 = vmul.f32 %v5388, 1.442695
      %v5399 = vpow.pop %v5398
      %v5400 = vmul.f32 %v5389, 1.442695
      %v5401 = vpow.pop %v5400
      %v5402 = vmul.f32 %v5390, 1.442695
      %v5403 = vpow.pop %v5402
      %v5404 = vmul.f32 %v5391, 1.442695
      %v5405 = vpow.pop %v5404
      %v5406 = vmul.f32 %v5392, 1.442695
      %v5407 = vpow.pop %v5406
      %v5408 = vmul.f32 %v5393, 1.442695
      %v5409 = vpow.pop %v5408
      %v5410 = vsel %vm2958, %v5395, 0.0
      %5411 = vadd.xlane.f32.xlu0 %v5410
      %v5412 = vpop.xlane.xlu0 %5411
      %v5413 = vsel %vm2958, %v5397, 0.0
      %5414 = vadd.xlane.f32.xlu0 %v5413
      %v5415 = vpop.xlane.xlu0 %5414
      %v5416 = vsel %vm2958, %v5399, 0.0
      %5417 = vadd.xlane.f32.xlu0 %v5416
      %v5418 = vpop.xlane.xlu0 %5417
      %v5419 = vsel %vm2958, %v5401, 0.0
      %5420 = vadd.xlane.f32.xlu0 %v5419
      %v5421 = vpop.xlane.xlu0 %5420
      %v5422 = vsel %vm2958, %v5403, 0.0
      %5423 = vadd.xlane.f32.xlu0 %v5422
      %v5424 = vpop.xlane.xlu0 %5423
      %v5425 = vsel %vm2958, %v5405, 0.0
      %5426 = vadd.xlane.f32.xlu0 %v5425
      %v5427 = vpop.xlane.xlu0 %5426
      %v5428 = vsel %vm2958, %v5407, 0.0
      %5429 = vadd.xlane.f32.xlu0 %v5428
      %v5430 = vpop.xlane.xlu0 %5429
      %v5431 = vsel %vm2958, %v5409, 0.0
      %5432 = vadd.xlane.f32.xlu0 %v5431
      %v5433 = vpop.xlane.xlu0 %5432
      %v5434 = vrcp.pop %v5412
      %v5435 = vrcp.pop %v5415
      %v5436 = vrcp.pop %v5418
      %v5437 = vrcp.pop %v5421
      %v5438 = vrcp.pop %v5424
      %v5439 = vrcp.pop %v5427
      %v5440 = vrcp.pop %v5430
      %v5441 = vrcp.pop %v5433
      %v5442 = vmul.f32 %v5395, %v5434
      %v5443 = vmul.f32 %v5397, %v5435
      %v5444 = vmul.f32 %v5399, %v5436
      %v5445 = vmul.f32 %v5401, %v5437
      %v5446 = vmul.f32 %v5403, %v5438
      %v5447 = vmul.f32 %v5405, %v5439
      %v5448 = vmul.f32 %v5407, %v5440
      %v5449 = vmul.f32 %v5409, %v5441
      %v5450 = vpack.c.bf16 %v5443, %v5442
      %v5451 = vpack.c.bf16 %v5445, %v5444
      %v5452 = vpack.c.bf16 %v5447, %v5446
      %v5453 = vpack.c.bf16 %v5449, %v5448
      %v5455 = vsel %vm2958, %v5450, 0
      %v5458 = vsel %vm2958, %v5451, 0
      %v5461 = vsel %vm2958, %v5452, 0
      %v5464 = vsel %vm2958, %v5453, 0
      %5466 = vmatprep.subr.bf16.mxu0 0
      %5467 = vmatpush1.bf16.msra.mxu0 %v3348
      %5468 = vmatprep.subr.bf16.mxu0 0
      %5469 = vmatpush1.bf16.msra.mxu0 %v3349
      %5470 = vmatprep.subr.bf16.mxu0 0
      %5471 = vmatpush1.bf16.msra.mxu0 %v3350
      %5472 = vmatprep.subr.bf16.mxu0 0
      %5473 = vmatpush1.bf16.msra.mxu0 %v3351
      %5474 = vmatprep.subr.bf16.mxu0 0
      %5475 = vmatpush1.bf16.msra.mxu0 0
      %5476 = vmatprep.subr.bf16.mxu0 0
      %5477 = vmatpush1.bf16.msra.mxu0 0
      %5478 = vmatprep.subr.bf16.mxu0 0
      %5479 = vmatpush1.bf16.msra.mxu0 0
      %5480 = vmatprep.subr.bf16.mxu0 0
      %5481 = vmatpush1.bf16.msra.mxu0 0
      %5482 = vmatprep.subr.bf16.mxu0 0
      %5483 = vmatpush1.bf16.msra.mxu0 0
      %5484 = vmatprep.subr.bf16.mxu0 0
      %5485 = vmatpush1.bf16.msra.mxu0 0
      %5486 = vmatprep.subr.bf16.mxu0 0
      %5487 = vmatpush1.bf16.msra.mxu0 0
      %5488 = vmatprep.subr.bf16.mxu0 0
      %5489 = vmatpush1.bf16.msra.mxu0 0
      %5490 = vmatprep.subr.bf16.mxu0 0
      %5491 = vmatpush1.bf16.msra.mxu0 0
      %5492 = vmatprep.subr.bf16.mxu0 0
      %5493 = vmatpush1.bf16.msra.mxu0 0
      %5494 = vmatprep.subr.bf16.mxu0 0
      %5495 = vmatpush1.bf16.msra.mxu0 0
      %5496 = vmatprep.subr.bf16.mxu0 0
      %5497 = vmatpush1.bf16.msra.mxu0 0
      %5498 = vmatprep.mubr.bf16.mxu0 0
      %5499 = vmatmul.mubr.bf16.gmra.mrb[0].mxu0 %v5455
      %v5500 = vpop.f32.mrb[0].mxu0
      %v5501 = vadd.f32 0.0, %v5500
      %v5502 = vpop.f32.mrb[0].mxu0
      %v5503 = vpop.f32.mrb[0].mxu0
      %v5504 = vadd.f32 0.0, %v5503
      %v5505 = vpop.f32.mrb[0].mxu0
      %5506 = vmatprep.mubr.bf16.mxu0 0
      %5507 = vmatmul.mubr.bf16.gmra.mrb[0].mxu0 %v5458
      %v5508 = vpop.f32.mrb[0].mxu0
      %v5509 = vadd.f32 0.0, %v5508
      %v5510 = vpop.f32.mrb[0].mxu0
      %v5511 = vpop.f32.mrb[0].mxu0
      %v5512 = vadd.f32 0.0, %v5511
      %v5513 = vpop.f32.mrb[0].mxu0
      %5514 = vmatprep.mubr.bf16.mxu0 0
      %5515 = vmatmul.mubr.bf16.gmra.mrb[0].mxu0 %v5461
      %v5516 = vpop.f32.mrb[0].mxu0
      %v5517 = vadd.f32 0.0, %v5516
      %v5518 = vpop.f32.mrb[0].mxu0
      %v5519 = vpop.f32.mrb[0].mxu0
      %v5520 = vadd.f32 0.0, %v5519
      %v5521 = vpop.f32.mrb[0].mxu0
      %5522 = vmatprep.mubr.bf16.mxu0 0
      %5523 = vmatmul.mubr.bf16.gmra.mrb[0].mxu0 %v5464
      %v5524 = vpop.f32.mrb[0].mxu0
      %v5525 = vadd.f32 0.0, %v5524
      %v5526 = vpop.f32.mrb[0].mxu0
      %v5527 = vpop.f32.mrb[0].mxu0
      %v5528 = vadd.f32 0.0, %v5527
      %v5529 = vpop.f32.mrb[0].mxu0
      %5530 = vdwg.mxu0
      %v5531 = vpack.c.bf16 %v5504, %v5501
      %v5532 = vpack.c.bf16 %v5512, %v5509
      %v5533 = vpack.c.bf16 %v5520, %v5517
      %v5534 = vpack.c.bf16 %v5528, %v5525
      %s5535 = scalar_lea.vmem %s11, 8
      %v5536 = vld [vmem:[%s5535] sm:$0xf]
      %v5537 = vld [vmem:[%s5535 + $0x4] sm:$0xf]
      %v5540 = vunpack.c.l.b16 %v5536
      %v5541 = vunpack.c.l.b16 %v5537
      %v5542 = vpack.c.b16 %v5541, %v5540
      %v5545 = vsel %vm969, %v5531, 0
      %v5548 = vsel %vm969, %v5532, 0
      %v5551 = vsel %vm969, %v5533, 0
      %v5554 = vsel %vm969, %v5534, 0
      %5556 = vmatprep.subr.bf16.mxu0 0
      %5557 = vmatpush1.bf16.msra.mxu0 %v5542
      %5558 = vmatprep.subr.bf16.mxu0 0
      %5559 = vmatpush1.bf16.msra.mxu0 0
      %5560 = vmatprep.subr.bf16.mxu0 0
      %5561 = vmatpush1.bf16.msra.mxu0 0
      %5562 = vmatprep.subr.bf16.mxu0 0
      %5563 = vmatpush1.bf16.msra.mxu0 0
      %5564 = vmatprep.subr.bf16.mxu0 0
      %5565 = vmatpush1.bf16.msra.mxu0 0
      %5566 = vmatprep.subr.bf16.mxu0 0
      %5567 = vmatpush1.bf16.msra.mxu0 0
      %5568 = vmatprep.subr.bf16.mxu0 0
      %5569 = vmatpush1.bf16.msra.mxu0 0
      %5570 = vmatprep.subr.bf16.mxu0 0
      %5571 = vmatpush1.bf16.msra.mxu0 0
      %5572 = vmatprep.subr.bf16.mxu0 0
      %5573 = vmatpush1.bf16.msra.mxu0 0
      %5574 = vmatprep.subr.bf16.mxu0 0
      %5575 = vmatpush1.bf16.msra.mxu0 0
      %5576 = vmatprep.subr.bf16.mxu0 0
      %5577 = vmatpush1.bf16.msra.mxu0 0
      %5578 = vmatprep.subr.bf16.mxu0 0
      %5579 = vmatpush1.bf16.msra.mxu0 0
      %5580 = vmatprep.subr.bf16.mxu0 0
      %5581 = vmatpush1.bf16.msra.mxu0 0
      %5582 = vmatprep.subr.bf16.mxu0 0
      %5583 = vmatpush1.bf16.msra.mxu0 0
      %5584 = vmatprep.subr.bf16.mxu0 0
      %5585 = vmatpush1.bf16.msra.mxu0 0
      %5586 = vmatprep.subr.bf16.mxu0 0
      %5587 = vmatpush1.bf16.msra.mxu0 0
      %5588 = vmatprep.mubr.bf16.mxu0 0
      %5589 = vmatmul.mubr.bf16.gmra.mrb[0].mxu0 %v5545
      %v5590 = vpop.f32.mrb[0].mxu0
      %v5591 = vadd.f32 0.0, %v5590
      %v5592 = vpop.f32.mrb[0].mxu0
      %v5593 = vpop.f32.mrb[0].mxu0
      %v5594 = vadd.f32 0.0, %v5593
      %v5595 = vpop.f32.mrb[0].mxu0
      %5596 = vmatprep.mubr.bf16.mxu0 0
      %5597 = vmatmul.mubr.bf16.gmra.mrb[0].mxu0 %v5548
      %v5598 = vpop.f32.mrb[0].mxu0
      %v5599 = vadd.f32 0.0, %v5598
      %v5600 = vpop.f32.mrb[0].mxu0
      %v5601 = vpop.f32.mrb[0].mxu0
      %v5602 = vadd.f32 0.0, %v5601
      %v5603 = vpop.f32.mrb[0].mxu0
      %5604 = vmatprep.mubr.bf16.mxu0 0
      %5605 = vmatmul.mubr.bf16.gmra.mrb[0].mxu0 %v5551
      %v5606 = vpop.f32.mrb[0].mxu0
      %v5607 = vadd.f32 0.0, %v5606
      %v5608 = vpop.f32.mrb[0].mxu0
      %v5609 = vpop.f32.mrb[0].mxu0
      %v5610 = vadd.f32 0.0, %v5609
      %v5611 = vpop.f32.mrb[0].mxu0
      %5612 = vmatprep.mubr.bf16.mxu0 0
      %5613 = vmatmul.mubr.bf16.gmra.mrb[0].mxu0 %v5554
      %v5614 = vpop.f32.mrb[0].mxu0
      %v5615 = vadd.f32 0.0, %v5614
      %v5616 = vpop.f32.mrb[0].mxu0
      %v5617 = vpop.f32.mrb[0].mxu0
      %v5618 = vadd.f32 0.0, %v5617
      %v5619 = vpop.f32.mrb[0].mxu0
      %5620 = vdwg.mxu0
      %v5623 = vunpack.c.l.b16 %v3132
      %v5624 = vunpack.c.l.b16 %v3133
      %v5625 = vpack.c.b16 %v5624, %v5623
      %v5628 = vsel %vm969, %v3128, 0
      %v5631 = vsel %vm969, %v3129, 0
      %v5634 = vsel %vm969, %v3130, 0
      %v5637 = vsel %vm969, %v3131, 0
      %5639 = vmatprep.subr.bf16.mxu0 0
      %5640 = vmatpush1.bf16.msra.mxu0 %v5625
      %5641 = vmatprep.subr.bf16.mxu0 0
      %5642 = vmatpush1.bf16.msra.mxu0 0
      %5643 = vmatprep.subr.bf16.mxu0 0
      %5644 = vmatpush1.bf16.msra.mxu0 0
      %5645 = vmatprep.subr.bf16.mxu0 0
      %5646 = vmatpush1.bf16.msra.mxu0 0
      %5647 = vmatprep.subr.bf16.mxu0 0
      %5648 = vmatpush1.bf16.msra.mxu0 0
      %5649 = vmatprep.subr.bf16.mxu0 0
      %5650 = vmatpush1.bf16.msra.mxu0 0
      %5651 = vmatprep.subr.bf16.mxu0 0
      %5652 = vmatpush1.bf16.msra.mxu0 0
      %5653 = vmatprep.subr.bf16.mxu0 0
      %5654 = vmatpush1.bf16.msra.mxu0 0
      %5655 = vmatprep.subr.bf16.mxu0 0
      %5656 = vmatpush1.bf16.msra.mxu0 0
      %5657 = vmatprep.subr.bf16.mxu0 0
      %5658 = vmatpush1.bf16.msra.mxu0 0
      %5659 = vmatprep.subr.bf16.mxu0 0
      %5660 = vmatpush1.bf16.msra.mxu0 0
      %5661 = vmatprep.subr.bf16.mxu0 0
      %5662 = vmatpush1.bf16.msra.mxu0 0
      %5663 = vmatprep.subr.bf16.mxu0 0
      %5664 = vmatpush1.bf16.msra.mxu0 0
      %5665 = vmatprep.subr.bf16.mxu0 0
      %5666 = vmatpush1.bf16.msra.mxu0 0
      %5667 = vmatprep.subr.bf16.mxu0 0
      %5668 = vmatpush1.bf16.msra.mxu0 0
      %5669 = vmatprep.subr.bf16.mxu0 0
      %5670 = vmatpush1.bf16.msra.mxu0 0
      %5671 = vmatprep.mubr.bf16.mxu0 0
      %5672 = vmatmul.mubr.bf16.gmra.mrb[0].mxu0 %v5628
      %v5673 = vpop.f32.mrb[0].mxu0
      %v5674 = vadd.f32 %v5591, %v5673
      %v5675 = vpop.f32.mrb[0].mxu0
      %v5676 = vpop.f32.mrb[0].mxu0
      %v5677 = vadd.f32 %v5594, %v5676
      %v5678 = vpop.f32.mrb[0].mxu0
      %5679 = vmatprep.mubr.bf16.mxu0 0
      %5680 = vmatmul.mubr.bf16.gmra.mrb[0].mxu0 %v5631
      %v5681 = vpop.f32.mrb[0].mxu0
      %v5682 = vadd.f32 %v5599, %v5681
      %v5683 = vpop.f32.mrb[0].mxu0
      %v5684 = vpop.f32.mrb[0].mxu0
      %v5685 = vadd.f32 %v5602, %v5684
      %v5686 = vpop.f32.mrb[0].mxu0
      %5687 = vmatprep.mubr.bf16.mxu0 0
      %5688 = vmatmul.mubr.bf16.gmra.mrb[0].mxu0 %v5634
      %v5689 = vpop.f32.mrb[0].mxu0
      %v5690 = vadd.f32 %v5607, %v5689
      %v5691 = vpop.f32.mrb[0].mxu0
      %v5692 = vpop.f32.mrb[0].mxu0
      %v5693 = vadd.f32 %v5610, %v5692
      %v5694 = vpop.f32.mrb[0].mxu0
      %5695 = vmatprep.mubr.bf16.mxu0 0
      %5696 = vmatmul.mubr.bf16.gmra.mrb[0].mxu0 %v5637
      %v5697 = vpop.f32.mrb[0].mxu0
      %v5698 = vadd.f32 %v5615, %v5697
      %v5699 = vpop.f32.mrb[0].mxu0
      %v5700 = vpop.f32.mrb[0].mxu0
      %v5701 = vadd.f32 %v5618, %v5700
      %v5702 = vpop.f32.mrb[0].mxu0
      %5703 = vdwg.mxu0
      %v5704 = vld [vmem:[%s12] sm:$0x1]
      %v5706 = vlaneseq
      %v5707 = vshrl.u32 %v5706, 7
      %v5708 = vsub.s32 0, %v5707
      %v5709 = vrot.slane %v5704, %v5708
      %v5711 = vadd.f32 %v5674, %v5709
      %v5712 = vadd.f32 %v5677, %v5709
      %v5713 = vadd.f32 %v5682, %v5709
      %v5714 = vadd.f32 %v5685, %v5709
      %v5715 = vadd.f32 %v5690, %v5709
      %v5716 = vadd.f32 %v5693, %v5709
      %v5717 = vadd.f32 %v5698, %v5709
      %v5718 = vadd.f32 %v5701, %v5709
      %v5719 = vmax.f32 %v5711, 0.0
      %v5720 = vmax.f32 %v5712, 0.0
      %v5721 = vmax.f32 %v5713, 0.0
      %v5722 = vmax.f32 %v5714, 0.0
      %v5723 = vmax.f32 %v5715, 0.0
      %v5724 = vmax.f32 %v5716, 0.0
      %v5725 = vmax.f32 %v5717, 0.0
      %v5726 = vmax.f32 %v5718, 0.0
      %v5727 = vpack.c.bf16 %v5720, %v5719
      %v5728 = vpack.c.bf16 %v5722, %v5721
      %v5729 = vpack.c.bf16 %v5724, %v5723
      %v5730 = vpack.c.bf16 %v5726, %v5725
      %v5731 = vld [vmem:[%s13] sm:$0xf]
      %v5732 = vld [vmem:[%s14] sm:$0x1]
      %v5734 = vlaneseq
      %v5735 = vshrl.u32 %v5734, 7
      %v5736 = vsub.s32 0, %v5735
      %v5737 = vrot.slane %v5732, %v5736
      %v5740 = vsel %vm532, %v5727, 0
      %v5743 = vsel %vm532, %v5728, 0
      %v5746 = vsel %vm532, %v5729, 0
      %v5749 = vsel %vm532, %v5730, 0
      %v5752 = vsel %vm545, %v5731, 0
      %5754 = vmatprep.subr.bf16.mxu0 0
      %5755 = vmatpush1.bf16.msra.mxu0 %v5752
      %5756 = vmatprep.subr.bf16.mxu0 0
      %5757 = vmatpush1.bf16.msra.mxu0 0
      %5758 = vmatprep.subr.bf16.mxu0 0
      %5759 = vmatpush1.bf16.msra.mxu0 0
      %5760 = vmatprep.subr.bf16.mxu0 0
      %5761 = vmatpush1.bf16.msra.mxu0 0
      %5762 = vmatprep.subr.bf16.mxu0 0
      %5763 = vmatpush1.bf16.msra.mxu0 0
      %5764 = vmatprep.subr.bf16.mxu0 0
      %5765 = vmatpush1.bf16.msra.mxu0 0
      %5766 = vmatprep.subr.bf16.mxu0 0
      %5767 = vmatpush1.bf16.msra.mxu0 0
      %5768 = vmatprep.subr.bf16.mxu0 0
      %5769 = vmatpush1.bf16.msra.mxu0 0
      %5770 = vmatprep.subr.bf16.mxu0 0
      %5771 = vmatpush1.bf16.msra.mxu0 0
      %5772 = vmatprep.subr.bf16.mxu0 0
      %5773 = vmatpush1.bf16.msra.mxu0 0
      %5774 = vmatprep.subr.bf16.mxu0 0
      %5775 = vmatpush1.bf16.msra.mxu0 0
      %5776 = vmatprep.subr.bf16.mxu0 0
      %5777 = vmatpush1.bf16.msra.mxu0 0
      %5778 = vmatprep.subr.bf16.mxu0 0
      %5779 = vmatpush1.bf16.msra.mxu0 0
      %5780 = vmatprep.subr.bf16.mxu0 0
      %5781 = vmatpush1.bf16.msra.mxu0 0
      %5782 = vmatprep.subr.bf16.mxu0 0
      %5783 = vmatpush1.bf16.msra.mxu0 0
      %5784 = vmatprep.subr.bf16.mxu0 0
      %5785 = vmatpush1.bf16.msra.mxu0 0
      %5786 = vmatprep.mubr.bf16.mxu0 0
      %5787 = vmatmul.mubr.bf16.gmra.mrb[0].mxu0 %v5740
      %v5788 = vpop.f32.mrb[0].mxu0
      %v5789 = vadd.f32 %v5737, %v5788
      %v5790 = vpop.f32.mrb[0].mxu0
      %v5791 = vpop.f32.mrb[0].mxu0
      %v5792 = vadd.f32 %v5737, %v5791
      %v5793 = vpop.f32.mrb[0].mxu0
      %5794 = vmatprep.mubr.bf16.mxu0 0
      %5795 = vmatmul.mubr.bf16.gmra.mrb[0].mxu0 %v5743
      %v5796 = vpop.f32.mrb[0].mxu0
      %v5797 = vadd.f32 %v5737, %v5796
      %v5798 = vpop.f32.mrb[0].mxu0
      %v5799 = vpop.f32.mrb[0].mxu0
      %v5800 = vadd.f32 %v5737, %v5799
      %v5801 = vpop.f32.mrb[0].mxu0
      %5802 = vmatprep.mubr.bf16.mxu0 0
      %5803 = vmatmul.mubr.bf16.gmra.mrb[0].mxu0 %v5746
      %v5804 = vpop.f32.mrb[0].mxu0
      %v5805 = vadd.f32 %v5737, %v5804
      %v5806 = vpop.f32.mrb[0].mxu0
      %v5807 = vpop.f32.mrb[0].mxu0
      %v5808 = vadd.f32 %v5737, %v5807
      %v5809 = vpop.f32.mrb[0].mxu0
      %5810 = vmatprep.mubr.bf16.mxu0 0
      %5811 = vmatmul.mubr.bf16.gmra.mrb[0].mxu0 %v5749
      %v5812 = vpop.f32.mrb[0].mxu0
      %v5813 = vadd.f32 %v5737, %v5812
      %v5814 = vpop.f32.mrb[0].mxu0
      %v5815 = vpop.f32.mrb[0].mxu0
      %v5816 = vadd.f32 %v5737, %v5815
      %v5817 = vpop.f32.mrb[0].mxu0
      %5818 = vdwg.mxu0
      %v5819 = vadd.f32 %v5789, %v614
      %v5820 = vadd.f32 %v5792, %v615
      %v5821 = vadd.f32 %v5797, %v616
      %v5822 = vadd.f32 %v5800, %v617
      %v5823 = vadd.f32 %v5805, %v618
      %v5824 = vadd.f32 %v5808, %v619
      %v5825 = vadd.f32 %v5813, %v620
      %v5826 = vadd.f32 %v5816, %v621
      %v5827 = vmax.f32 %v5819, 0.0
      %v5828 = vmax.f32 %v5820, 0.0
      %v5829 = vmax.f32 %v5821, 0.0
      %v5830 = vmax.f32 %v5822, 0.0
      %v5831 = vmax.f32 %v5823, 0.0
      %v5832 = vmax.f32 %v5824, 0.0
      %v5833 = vmax.f32 %v5825, 0.0
      %v5834 = vmax.f32 %v5826, 0.0
      %5835 = vst.msk [vmem:[%s494] sm:$0xff] %vm969, %v5827
      %5836 = vst.msk [vmem:[%s494 + $0x8] sm:$0xff] %vm969, %v5828
      %5837 = vst.msk [vmem:[%s494 + $0x10] sm:$0xff] %vm969, %v5829
      %5838 = vst.msk [vmem:[%s494 + $0x18] sm:$0xff] %vm969, %v5830
      %5839 = vst.msk [vmem:[%s494 + $0x20] sm:$0xff] %vm969, %v5831
      %5840 = vst.msk [vmem:[%s494 + $0x28] sm:$0xff] %vm969, %v5832
      %5841 = vst.msk [vmem:[%s494 + $0x30] sm:$0xff] %vm969, %v5833
      %5842 = vst.msk [vmem:[%s494 + $0x38] sm:$0xff] %vm969, %v5834
      %p5843 = scmp.lt.s32.totalorder %s26, 1
      %s5844 = scalar_select %p5843, %s26, 1
      %s5845 = smul.addr %s5844, 8
      %s5846 = smul.addr %s5845, 8
      %s5847 = scalar_lea.vmem %s15, %s5846
      // Predicated region
      $region81: #{tpu_custom_call.1} parent=79 // pred_check
        %p5848 = pneg %p364
      $region82: #{tpu_custom_call.1} parent=79 // pred_check_branch
        %5850 = sbr.rel (%p5848) target = $region84
      $region83: #{tpu_custom_call.1} parent=79 // pred_region
        _
      $region84: #{tpu_custom_call.1} parent=79 // pred_fallthru
        _
    $region80: #{tpu_custom_call.1} parent=5 // pred_fallthru
      _
    %p5851 = scmp.le.s32.totalorder 2, %s21
    // Predicated region
    $region85: #{tpu_custom_call.1} parent=5 // pred_check
      %p5852 = pneg %p5851
    $region86: #{tpu_custom_call.1} parent=5 // pred_check_branch
      %5854 = sbr.rel (%p5852) target = $region88
    $region87: #{tpu_custom_call.1} parent=5 // pred_region
      %s5855 = ssub.s32 %s21, 2
      // Predicated region
      $region89: #{tpu_custom_call.1} parent=87 // pred_check
        %p5856 = pneg %p370
      $region90: #{tpu_custom_call.1} parent=87 // pred_check_branch
        %5858 = sbr.rel (%p5856) target = $region92
      $region91: #{tpu_custom_call.1} parent=87 // pred_region
        %p5859 = scmp.lt.s32.totalorder %s27, 1
        %s5860 = scalar_select %p5859, %s27, 1
        %s5861 = smul.addr %s5860, 8
        %s5862 = smul.addr %s5861, 8
        %s5863 = scalar_lea.vmem %s15, %s5862
      $region92: #{tpu_custom_call.1} parent=87 // pred_fallthru
        _
    $region88: #{tpu_custom_call.1} parent=5 // pred_fallthru
      _
  $region6: #{tpu_custom_call.1} parent=0 // loop_footer
    %s25 = sadd.s32 1, %s21
  $region7: #{tpu_custom_call.1} parent=0 // loop_footer_branch
    %20 = sbr.rel target = $region3
  $region8: #{tpu_custom_call.1} parent=0 // loop_exit
    _

// kernel: tpu_custom_call.1
$region0: #{tpu_custom_call.1}
  #allocation0 [shape = 'u32[]', space=smem, size = 0x4, offset = 0x4, fixed_abs, tag = 'smem constant byte address 0x4 - core index']
  #allocation1 [shape = 'u32[144,128]{1,0:T(1,128)}', space=vmem, size = 0x12000, scoped, tag = 'internal scratch']
  %s0 = inlined_call_operand.vmem [shape: bf16[2,64,8], index: 0, kind: input, shape index: {}]
  %s1 = inlined_call_operand.vmem [shape: bf16[8,16], index: 1, kind: input, shape index: {}]
  %s2 = inlined_call_operand.vmem [shape: f32[1,16], index: 2, kind: input, shape index: {}]
  %s3 = inlined_call_operand.vmem [shape: bf16[8,8], index: 3, kind: input, shape index: {}]
  %s4 = inlined_call_operand.vmem [shape: f32[1,8], index: 4, kind: input, shape index: {}]
  %s5 = inlined_call_operand.vmem [shape: bf16[2,8,16], index: 5, kind: input, shape index: {}]
  %s6 = inlined_call_operand.vmem [shape: bf16[2,8,16], index: 6, kind: input, shape index: {}]
  %s7 = inlined_call_operand.vmem [shape: bf16[2,8,16], index: 7, kind: input, shape index: {}]
  %s8 = inlined_call_operand.vmem [shape: bf16[8,8,16], index: 8, kind: input, shape index: {}]
  %s9 = inlined_call_operand.vmem [shape: f32[64,8,16], index: 9, kind: input, shape index: {}]
  %s10 = inlined_call_operand.vmem [shape: bf16[16,64], index: 10, kind: input, shape index: {}]
  %s11 = inlined_call_operand.vmem [shape: bf16[2,16,8], index: 11, kind: input, shape index: {}]
  %s12 = inlined_call_operand.vmem [shape: f32[1,8], index: 12, kind: input, shape index: {}]
  %s13 = inlined_call_operand.vmem [shape: bf16[8,16], index: 13, kind: input, shape index: {}]
  %s14 = inlined_call_operand.vmem [shape: f32[1,16], index: 14, kind: input, shape index: {}]
  %s15 = inlined_call_operand.vmem [shape: f32[2,64,16], index: 15, kind: output, shape index: {}]
  %s16 = sld [smem:[#allocation0]]
  $region93: #{tpu_custom_call.1} parent=0
    _
  %s18 = ssub.s32 1, %s16
  %s19 = scalar_select 0, %s18, %s16
  loop: start=0, step=1, limit=4
  $region2: #{tpu_custom_call.1} parent=0 // loop_pre_header
    _
  $region3: #{tpu_custom_call.1} parent=0 // loop_header
    %s21 = sphi 0, %s25
    %p22 = scmp.ge.s32.totalorder %s21, 4
    %s31 = sphi 0, %s33
    %s34 = sphi 0, %s31
    %s35 = sphi 0, %s34
    %s51 = sphi 0, %s35
    %s55 = sphi 0, %s55
    %s57 = sphi 0, %s55
    %s58 = sphi 0, %s57
    %s72 = sphi 0, %s58
    %s76 = sphi 0, %s76
    %s78 = sphi 0, %s76
    %s79 = sphi 0, %s78
    %s93 = sphi 0, %s79
    %s97 = sphi 0, %s97
    %s99 = sphi 0, %s97
    %s100 = sphi 0, %s99
    %s114 = sphi 0, %s100
    %s118 = sphi 0, %s118
    %s120 = sphi 0, %s118
    %s121 = sphi 0, %s120
    %s135 = sphi 0, %s121
    %s139 = sphi 0, %s139
    %s141 = sphi 0, %s139
    %s142 = sphi 0, %s141
    %s156 = sphi 0, %s142
    %s160 = sphi 0, %s160
    %s162 = sphi 0, %s160
    %s163 = sphi 0, %s162
    %s177 = sphi 0, %s163
    %s181 = sphi 0, %s181
    %s183 = sphi 0, %s181
    %s184 = sphi 0, %s183
    %s198 = sphi 0, %s184
    %s202 = sphi 0, %s202
    %s204 = sphi 0, %s202
    %s205 = sphi 0, %s204
    %s219 = sphi 0, %s205
    %s223 = sphi 0, %s223
    %s225 = sphi 0, %s223
    %s226 = sphi 0, %s225
    %s240 = sphi 0, %s226
    %s244 = sphi 0, %s244
    %s246 = sphi 0, %s244
    %s247 = sphi 0, %s246
    %s261 = sphi 0, %s247
    %s265 = sphi 0, %s265
    %s267 = sphi 0, %s265
    %s268 = sphi 0, %s267
    %s282 = sphi 0, %s268
    %s286 = sphi 0, %s286
    %s288 = sphi 0, %s286
    %s289 = sphi 0, %s288
    %s303 = sphi 0, %s289
    %s307 = sphi 0, %s307
    %s309 = sphi 0, %s307
    %s310 = sphi 0, %s309
    %s324 = sphi 0, %s310
    %s328 = sphi 0, %s328
    %s330 = sphi 0, %s328
    %s331 = sphi 0, %s330
    %s345 = sphi 0, %s331
    %s351 = sphi 0, %s353
    %s354 = sphi 0, %s351
    %s355 = sphi 0, %s354
    %s371 = sphi 0, %s355
  $region4: #{tpu_custom_call.1} parent=0 // loop_header_branch
    %24 = sbr.rel (%p22) target = $region8
  $region5: #{tpu_custom_call.1} parent=0 // loop_body
    %s26 = ssub.s32 %s21, 1
    %s27 = ssub.s32 %s21, 2
    %s28 = sadd.s32 %s21, 1
    %s29 = ssub.s32 %s21, %s28
    %p30 = scmp.eq.s32.totalorder %s29, 0
    %s32 = sadd.s32 %s31, 1
    %s33 = scalar_select %p30, %s31, %s32
    %p36 = pneg %p30
    %p37 = scmp.eq.s32.totalorder %s21, 1
    %p38 = por %p36, %p37
    %p39 = scmp.ne.s32.totalorder %s31, %s34
    %p40 = scmp.eq.s32.totalorder %s21, 0
    %p41 = por %p39, %p40
    %p42 = scmp.ne.s32.totalorder %s31, %s34
    %p43 = scmp.eq.s32.totalorder %s26, 1
    %p44 = por %p42, %p43
    %p45 = scmp.ne.s32.totalorder %s34, %s35
    %p46 = scmp.eq.s32.totalorder %s26, 0
    %p47 = por %p45, %p46
    %p48 = scmp.ne.s32.totalorder %s34, %s35
    %p49 = scmp.eq.s32.totalorder %s27, 1
    %p50 = por %p48, %p49
    %p52 = scmp.ne.s32.totalorder %s35, %s51
    %p53 = scmp.eq.s32.totalorder %s27, 0
    %p54 = por %p52, %p53
    %s56 = sadd.s32 %s55, 1
    %p59 = scmp.eq.s32.totalorder %s21, 1
    %p60 = scmp.ne.s32.totalorder %s55, %s57
    %p61 = scmp.eq.s32.totalorder %s21, 0
    %p62 = por %p60, %p61
    %p63 = scmp.ne.s32.totalorder %s55, %s57
    %p64 = scmp.eq.s32.totalorder %s26, 1
    %p65 = por %p63, %p64
    %p66 = scmp.ne.s32.totalorder %s57, %s58
    %p67 = scmp.eq.s32.totalorder %s26, 0
    %p68 = por %p66, %p67
    %p69 = scmp.ne.s32.totalorder %s57, %s58
    %p70 = scmp.eq.s32.totalorder %s27, 1
    %p71 = por %p69, %p70
    %p73 = scmp.ne.s32.totalorder %s58, %s72
    %p74 = scmp.eq.s32.totalorder %s27, 0
    %p75 = por %p73, %p74
    %s77 = sadd.s32 %s76, 1
    %p80 = scmp.eq.s32.totalorder %s21, 1
    %p81 = scmp.ne.s32.totalorder %s76, %s78
    %p82 = scmp.eq.s32.totalorder %s21, 0
    %p83 = por %p81, %p82
    %p84 = scmp.ne.s32.totalorder %s76, %s78
    %p85 = scmp.eq.s32.totalorder %s26, 1
    %p86 = por %p84, %p85
    %p87 = scmp.ne.s32.totalorder %s78, %s79
    %p88 = scmp.eq.s32.totalorder %s26, 0
    %p89 = por %p87, %p88
    %p90 = scmp.ne.s32.totalorder %s78, %s79
    %p91 = scmp.eq.s32.totalorder %s27, 1
    %p92 = por %p90, %p91
    %p94 = scmp.ne.s32.totalorder %s79, %s93
    %p95 = scmp.eq.s32.totalorder %s27, 0
    %p96 = por %p94, %p95
    %s98 = sadd.s32 %s97, 1
    %p101 = scmp.eq.s32.totalorder %s21, 1
    %p102 = scmp.ne.s32.totalorder %s97, %s99
    %p103 = scmp.eq.s32.totalorder %s21, 0
    %p104 = por %p102, %p103
    %p105 = scmp.ne.s32.totalorder %s97, %s99
    %p106 = scmp.eq.s32.totalorder %s26, 1
    %p107 = por %p105, %p106
    %p108 = scmp.ne.s32.totalorder %s99, %s100
    %p109 = scmp.eq.s32.totalorder %s26, 0
    %p110 = por %p108, %p109
    %p111 = scmp.ne.s32.totalorder %s99, %s100
    %p112 = scmp.eq.s32.totalorder %s27, 1
    %p113 = por %p111, %p112
    %p115 = scmp.ne.s32.totalorder %s100, %s114
    %p116 = scmp.eq.s32.totalorder %s27, 0
    %p117 = por %p115, %p116
    %s119 = sadd.s32 %s118, 1
    %p122 = scmp.eq.s32.totalorder %s21, 1
    %p123 = scmp.ne.s32.totalorder %s118, %s120
    %p124 = scmp.eq.s32.totalorder %s21, 0
    %p125 = por %p123, %p124
    %p126 = scmp.ne.s32.totalorder %s118, %s120
    %p127 = scmp.eq.s32.totalorder %s26, 1
    %p128 = por %p126, %p127
    %p129 = scmp.ne.s32.totalorder %s120, %s121
    %p130 = scmp.eq.s32.totalorder %s26, 0
    %p131 = por %p129, %p130
    %p132 = scmp.ne.s32.totalorder %s120, %s121
    %p133 = scmp.eq.s32.totalorder %s27, 1
    %p134 = por %p132, %p133
    %p136 = scmp.ne.s32.totalorder %s121, %s135
    %p137 = scmp.eq.s32.totalorder %s27, 0
    %p138 = por %p136, %p137
    %s140 = sadd.s32 %s139, 1
    %p143 = scmp.eq.s32.totalorder %s21, 1
    %p144 = scmp.ne.s32.totalorder %s139, %s141
    %p145 = scmp.eq.s32.totalorder %s21, 0
    %p146 = por %p144, %p145
    %p147 = scmp.ne.s32.totalorder %s139, %s141
    %p148 = scmp.eq.s32.totalorder %s26, 1
    %p149 = por %p147, %p148
    %p150 = scmp.ne.s32.totalorder %s141, %s142
    %p151 = scmp.eq.s32.totalorder %s26, 0
    %p152 = por %p150, %p151
    %p153 = scmp.ne.s32.totalorder %s141, %s142
    %p154 = scmp.eq.s32.totalorder %s27, 1
    %p155 = por %p153, %p154
    %p157 = scmp.ne.s32.totalorder %s142, %s156
    %p158 = scmp.eq.s32.totalorder %s27, 0
    %p159 = por %p157, %p158
    %s161 = sadd.s32 %s160, 1
    %p164 = scmp.eq.s32.totalorder %s21, 1
    %p165 = scmp.ne.s32.totalorder %s160, %s162
    %p166 = scmp.eq.s32.totalorder %s21, 0
    %p167 = por %p165, %p166
    %p168 = scmp.ne.s32.totalorder %s160, %s162
    %p169 = scmp.eq.s32.totalorder %s26, 1
    %p170 = por %p168, %p169
    %p171 = scmp.ne.s32.totalorder %s162, %s163
    %p172 = scmp.eq.s32.totalorder %s26, 0
    %p173 = por %p171, %p172
    %p174 = scmp.ne.s32.totalorder %s162, %s163
    %p175 = scmp.eq.s32.totalorder %s27, 1
    %p176 = por %p174, %p175
    %p178 = scmp.ne.s32.totalorder %s163, %s177
    %p179 = scmp.eq.s32.totalorder %s27, 0
    %p180 = por %p178, %p179
    %s182 = sadd.s32 %s181, 1
    %p185 = scmp.eq.s32.totalorder %s21, 1
    %p186 = scmp.ne.s32.totalorder %s181, %s183
    %p187 = scmp.eq.s32.totalorder %s21, 0
    %p188 = por %p186, %p187
    %p189 = scmp.ne.s32.totalorder %s181, %s183
    %p190 = scmp.eq.s32.totalorder %s26, 1
    %p191 = por %p189, %p190
    %p192 = scmp.ne.s32.totalorder %s183, %s184
    %p193 = scmp.eq.s32.totalorder %s26, 0
    %p194 = por %p192, %p193
    %p195 = scmp.ne.s32.totalorder %s183, %s184
    %p196 = scmp.eq.s32.totalorder %s27, 1
    %p197 = por %p195, %p196
    %p199 = scmp.ne.s32.totalorder %s184, %s198
    %p200 = scmp.eq.s32.totalorder %s27, 0
    %p201 = por %p199, %p200
    %s203 = sadd.s32 %s202, 1
    %p206 = scmp.eq.s32.totalorder %s21, 1
    %p207 = scmp.ne.s32.totalorder %s202, %s204
    %p208 = scmp.eq.s32.totalorder %s21, 0
    %p209 = por %p207, %p208
    %p210 = scmp.ne.s32.totalorder %s202, %s204
    %p211 = scmp.eq.s32.totalorder %s26, 1
    %p212 = por %p210, %p211
    %p213 = scmp.ne.s32.totalorder %s204, %s205
    %p214 = scmp.eq.s32.totalorder %s26, 0
    %p215 = por %p213, %p214
    %p216 = scmp.ne.s32.totalorder %s204, %s205
    %p217 = scmp.eq.s32.totalorder %s27, 1
    %p218 = por %p216, %p217
    %p220 = scmp.ne.s32.totalorder %s205, %s219
    %p221 = scmp.eq.s32.totalorder %s27, 0
    %p222 = por %p220, %p221
    %s224 = sadd.s32 %s223, 1
    %p227 = scmp.eq.s32.totalorder %s21, 1
    %p228 = scmp.ne.s32.totalorder %s223, %s225
    %p229 = scmp.eq.s32.totalorder %s21, 0
    %p230 = por %p228, %p229
    %p231 = scmp.ne.s32.totalorder %s223, %s225
    %p232 = scmp.eq.s32.totalorder %s26, 1
    %p233 = por %p231, %p232
    %p234 = scmp.ne.s32.totalorder %s225, %s226
    %p235 = scmp.eq.s32.totalorder %s26, 0
    %p236 = por %p234, %p235
    %p237 = scmp.ne.s32.totalorder %s225, %s226
    %p238 = scmp.eq.s32.totalorder %s27, 1
    %p239 = por %p237, %p238
    %p241 = scmp.ne.s32.totalorder %s226, %s240
    %p242 = scmp.eq.s32.totalorder %s27, 0
    %p243 = por %p241, %p242
    %s245 = sadd.s32 %s244, 1
    %p248 = scmp.eq.s32.totalorder %s21, 1
    %p249 = scmp.ne.s32.totalorder %s244, %s246
    %p250 = scmp.eq.s32.totalorder %s21, 0
    %p251 = por %p249, %p250
    %p252 = scmp.ne.s32.totalorder %s244, %s246
    %p253 = scmp.eq.s32.totalorder %s26, 1
    %p254 = por %p252, %p253
    %p255 = scmp.ne.s32.totalorder %s246, %s247
    %p256 = scmp.eq.s32.totalorder %s26, 0
    %p257 = por %p255, %p256
    %p258 = scmp.ne.s32.totalorder %s246, %s247
    %p259 = scmp.eq.s32.totalorder %s27, 1
    %p260 = por %p258, %p259
    %p262 = scmp.ne.s32.totalorder %s247, %s261
    %p263 = scmp.eq.s32.totalorder %s27, 0
    %p264 = por %p262, %p263
    %s266 = sadd.s32 %s265, 1
    %p269 = scmp.eq.s32.totalorder %s21, 1
    %p270 = scmp.ne.s32.totalorder %s265, %s267
    %p271 = scmp.eq.s32.totalorder %s21, 0
    %p272 = por %p270, %p271
    %p273 = scmp.ne.s32.totalorder %s265, %s267
    %p274 = scmp.eq.s32.totalorder %s26, 1
    %p275 = por %p273, %p274
    %p276 = scmp.ne.s32.totalorder %s267, %s268
    %p277 = scmp.eq.s32.totalorder %s26, 0
    %p278 = por %p276, %p277
    %p279 = scmp.ne.s32.totalorder %s267, %s268
    %p280 = scmp.eq.s32.totalorder %s27, 1
    %p281 = por %p279, %p280
    %p283 = scmp.ne.s32.totalorder %s268, %s282
    %p284 = scmp.eq.s32.totalorder %s27, 0
    %p285 = por %p283, %p284
    %s287 = sadd.s32 %s286, 1
    %p290 = scmp.eq.s32.totalorder %s21, 1
    %p291 = scmp.ne.s32.totalorder %s286, %s288
    %p292 = scmp.eq.s32.totalorder %s21, 0
    %p293 = por %p291, %p292
    %p294 = scmp.ne.s32.totalorder %s286, %s288
    %p295 = scmp.eq.s32.totalorder %s26, 1
    %p296 = por %p294, %p295
    %p297 = scmp.ne.s32.totalorder %s288, %s289
    %p298 = scmp.eq.s32.totalorder %s26, 0
    %p299 = por %p297, %p298
    %p300 = scmp.ne.s32.totalorder %s288, %s289
    %p301 = scmp.eq.s32.totalorder %s27, 1
    %p302 = por %p300, %p301
    %p304 = scmp.ne.s32.totalorder %s289, %s303
    %p305 = scmp.eq.s32.totalorder %s27, 0
    %p306 = por %p304, %p305
    %s308 = sadd.s32 %s307, 1
    %p311 = scmp.eq.s32.totalorder %s21, 1
    %p312 = scmp.ne.s32.totalorder %s307, %s309
    %p313 = scmp.eq.s32.totalorder %s21, 0
    %p314 = por %p312, %p313
    %p315 = scmp.ne.s32.totalorder %s307, %s309
    %p316 = scmp.eq.s32.totalorder %s26, 1
    %p317 = por %p315, %p316
    %p318 = scmp.ne.s32.totalorder %s309, %s310
    %p319 = scmp.eq.s32.totalorder %s26, 0
    %p320 = por %p318, %p319
    %p321 = scmp.ne.s32.totalorder %s309, %s310
    %p322 = scmp.eq.s32.totalorder %s27, 1
    %p323 = por %p321, %p322
    %p325 = scmp.ne.s32.totalorder %s310, %s324
    %p326 = scmp.eq.s32.totalorder %s27, 0
    %p327 = por %p325, %p326
    %s329 = sadd.s32 %s328, 1
    %p332 = scmp.eq.s32.totalorder %s21, 1
    %p333 = scmp.ne.s32.totalorder %s328, %s330
    %p334 = scmp.eq.s32.totalorder %s21, 0
    %p335 = por %p333, %p334
    %p336 = scmp.ne.s32.totalorder %s328, %s330
    %p337 = scmp.eq.s32.totalorder %s26, 1
    %p338 = por %p336, %p337
    %p339 = scmp.ne.s32.totalorder %s330, %s331
    %p340 = scmp.eq.s32.totalorder %s26, 0
    %p341 = por %p339, %p340
    %p342 = scmp.ne.s32.totalorder %s330, %s331
    %p343 = scmp.eq.s32.totalorder %s27, 1
    %p344 = por %p342, %p343
    %p346 = scmp.ne.s32.totalorder %s331, %s345
    %p347 = scmp.eq.s32.totalorder %s27, 0
    %p348 = por %p346, %p347
    %s349 = ssub.s32 %s21, %s28
    %p350 = scmp.eq.s32.totalorder %s349, 0
    %s352 = sadd.s32 %s351, 1
    %s353 = scalar_select %p350, %s351, %s352
    %p356 = pneg %p350
    %p357 = scmp.eq.s32.totalorder %s21, 1
    %p358 = por %p356, %p357
    %p359 = scmp.ne.s32.totalorder %s351, %s354
    %p360 = scmp.eq.s32.totalorder %s21, 0
    %p361 = por %p359, %p360
    %p362 = scmp.ne.s32.totalorder %s351, %s354
    %p363 = scmp.eq.s32.totalorder %s26, 1
    %p364 = por %p362, %p363
    %p365 = scmp.ne.s32.totalorder %s354, %s355
    %p366 = scmp.eq.s32.totalorder %s26, 0
    %p367 = por %p365, %p366
    %p368 = scmp.ne.s32.totalorder %s354, %s355
    %p369 = scmp.eq.s32.totalorder %s27, 1
    %p370 = por %p368, %p369
    %p372 = scmp.ne.s32.totalorder %s355, %s371
    %p373 = scmp.eq.s32.totalorder %s27, 0
    %p374 = por %p372, %p373
    %p375 = scmp.le.s32.totalorder 1, %s21
    %p376 = scmp.lt.s32.totalorder %s21, 3
    %p377 = pnand %p375, %p376
    %p378 = pneg %p377
    // Predicated region
    $region9: #{tpu_custom_call.1} parent=5 // pred_check
      _
    $region10: #{tpu_custom_call.1} parent=5 // pred_check_branch
      %380 = sbr.rel (%p377) target = $region12
    $region11: #{tpu_custom_call.1} parent=5 // pred_region
      %s381 = ssub.s32 %s21, 1
      // Predicated region
      $region13: #{tpu_custom_call.1} parent=11 // pred_check
        %p382 = pneg %p68
      $region14: #{tpu_custom_call.1} parent=11 // pred_check_branch
        %384 = sbr.rel (%p382) target = $region16
      $region15: #{tpu_custom_call.1} parent=11 // pred_region
        _
      $region16: #{tpu_custom_call.1} parent=11 // pred_fallthru
        _
      // Predicated region
      $region17: #{tpu_custom_call.1} parent=11 // pred_check
        %p385 = pneg %p89
      $region18: #{tpu_custom_call.1} parent=11 // pred_check_branch
        %387 = sbr.rel (%p385) target = $region20
      $region19: #{tpu_custom_call.1} parent=11 // pred_region
        _
      $region20: #{tpu_custom_call.1} parent=11 // pred_fallthru
        _
      // Predicated region
      $region21: #{tpu_custom_call.1} parent=11 // pred_check
        %p388 = pneg %p110
      $region22: #{tpu_custom_call.1} parent=11 // pred_check_branch
        %390 = sbr.rel (%p388) target = $region24
      $region23: #{tpu_custom_call.1} parent=11 // pred_region
        _
      $region24: #{tpu_custom_call.1} parent=11 // pred_fallthru
        _
      // Predicated region
      $region25: #{tpu_custom_call.1} parent=11 // pred_check
        %p391 = pneg %p131
      $region26: #{tpu_custom_call.1} parent=11 // pred_check_branch
        %393 = sbr.rel (%p391) target = $region28
      $region27: #{tpu_custom_call.1} parent=11 // pred_region
        _
      $region28: #{tpu_custom_call.1} parent=11 // pred_fallthru
        _
      // Predicated region
      $region29: #{tpu_custom_call.1} parent=11 // pred_check
        %p394 = pneg %p152
      $region30: #{tpu_custom_call.1} parent=11 // pred_check_branch
        %396 = sbr.rel (%p394) target = $region32
      $region31: #{tpu_custom_call.1} parent=11 // pred_region
        _
      $region32: #{tpu_custom_call.1} parent=11 // pred_fallthru
        _
      // Predicated region
      $region33: #{tpu_custom_call.1} parent=11 // pred_check
        %p397 = pneg %p173
      $region34: #{tpu_custom_call.1} parent=11 // pred_check_branch
        %399 = sbr.rel (%p397) target = $region36
      $region35: #{tpu_custom_call.1} parent=11 // pred_region
        _
      $region36: #{tpu_custom_call.1} parent=11 // pred_fallthru
        _
      // Predicated region
      $region37: #{tpu_custom_call.1} parent=11 // pred_check
        %p400 = pneg %p194
      $region38: #{tpu_custom_call.1} parent=11 // pred_check_branch
        %402 = sbr.rel (%p400) target = $region40
      $region39: #{tpu_custom_call.1} parent=11 // pred_region
        _
      $region40: #{tpu_custom_call.1} parent=11 // pred_fallthru
        _
      // Predicated region
      $region41: #{tpu_custom_call.1} parent=11 // pred_check
        %p403 = pneg %p215
      $region42: #{tpu_custom_call.1} parent=11 // pred_check_branch
        %405 = sbr.rel (%p403) target = $region44
      $region43: #{tpu_custom_call.1} parent=11 // pred_region
        _
      $region44: #{tpu_custom_call.1} parent=11 // pred_fallthru
        _
      // Predicated region
      $region45: #{tpu_custom_call.1} parent=11 // pred_check
        %p406 = pneg %p236
      $region46: #{tpu_custom_call.1} parent=11 // pred_check_branch
        %408 = sbr.rel (%p406) target = $region48
      $region47: #{tpu_custom_call.1} parent=11 // pred_region
        _
      $region48: #{tpu_custom_call.1} parent=11 // pred_fallthru
        _
      // Predicated region
      $region49: #{tpu_custom_call.1} parent=11 // pred_check
        %p409 = pneg %p257
      $region50: #{tpu_custom_call.1} parent=11 // pred_check_branch
        %411 = sbr.rel (%p409) target = $region52
      $region51: #{tpu_custom_call.1} parent=11 // pred_region
        _
      $region52: #{tpu_custom_call.1} parent=11 // pred_fallthru
        _
      // Predicated region
      $region53: #{tpu_custom_call.1} parent=11 // pred_check
        %p412 = pneg %p278
      $region54: #{tpu_custom_call.1} parent=11 // pred_check_branch
        %414 = sbr.rel (%p412) target = $region56
      $region55: #{tpu_custom_call.1} parent=11 // pred_region
        _
      $region56: #{tpu_custom_call.1} parent=11 // pred_fallthru
        _
      // Predicated region
      $region57: #{tpu_custom_call.1} parent=11 // pred_check
        %p415 = pneg %p299
      $region58: #{tpu_custom_call.1} parent=11 // pred_check_branch
        %417 = sbr.rel (%p415) target = $region60
      $region59: #{tpu_custom_call.1} parent=11 // pred_region
        _
      $region60: #{tpu_custom_call.1} parent=11 // pred_fallthru
        _
      // Predicated region
      $region61: #{tpu_custom_call.1} parent=11 // pred_check
        %p418 = pneg %p320
      $region62: #{tpu_custom_call.1} parent=11 // pred_check_branch
        %420 = sbr.rel (%p418) target = $region64
      $region63: #{tpu_custom_call.1} parent=11 // pred_region
        _
      $region64: #{tpu_custom_call.1} parent=11 // pred_fallthru
        _
      // Predicated region
      $region65: #{tpu_custom_call.1} parent=11 // pred_check
        %p421 = pneg %p341
      $region66: #{tpu_custom_call.1} parent=11 // pred_check_branch
        %423 = sbr.rel (%p421) target = $region68
      $region67: #{tpu_custom_call.1} parent=11 // pred_region
        _
      $region68: #{tpu_custom_call.1} parent=11 // pred_fallthru
        _
    $region12: #{tpu_custom_call.1} parent=5 // pred_fallthru
      _
    %p424 = scmp.lt.s32.totalorder %s21, 2
    // Predicated region
    $region69: #{tpu_custom_call.1} parent=5 // pred_check
      %p425 = pneg %p424
    $region70: #{tpu_custom_call.1} parent=5 // pred_check_branch
      %427 = sbr.rel (%p425) target = $region72
    $region71: #{tpu_custom_call.1} parent=5 // pred_region
      // Predicated region
      $region73: #{tpu_custom_call.1} parent=71 // pred_check
        %p428 = pneg %p41
      $region74: #{tpu_custom_call.1} parent=71 // pred_check_branch
        %430 = sbr.rel (%p428) target = $region76
      $region75: #{tpu_custom_call.1} parent=71 // pred_region
        %p431 = scmp.lt.s32.totalorder %s21, 1
        %s432 = scalar_select %p431, %s21, 1
        %s433 = smul.addr %s432, 8
        %s434 = smul.addr %s433, 4
        %s435 = scalar_lea.vmem %s0, %s434
      $region76: #{tpu_custom_call.1} parent=71 // pred_fallthru
        _
    $region72: #{tpu_custom_call.1} parent=5 // pred_fallthru
      _
    %p436 = scmp.le.s32.totalorder 1, %s21
    %p437 = scmp.lt.s32.totalorder %s21, 3
    %p438 = pnand %p436, %p437
    %p439 = pneg %p438
    // Predicated region
    $region77: #{tpu_custom_call.1} parent=5 // pred_check
      _
    $region78: #{tpu_custom_call.1} parent=5 // pred_check_branch
      %441 = sbr.rel (%p438) target = $region80
    $region79: #{tpu_custom_call.1} parent=5 // pred_region
      %s442 = ssub.s32 %s21, 1
      %p443 = scmp.lt.s32.totalorder %s26, 1
      %s444 = scalar_select %p443, %s26, 1
      %s445 = smul.addr %s444, 8
      %s446 = smul.addr %s445, 4
      %s447 = scalar_lea.vmem %s0, %s446
      %p448 = pneg %p47
      %p449 = pneg %p44
      %p450 = pneg %p68
      %p451 = pneg %p65
      %p452 = pneg %p89
      %p453 = pneg %p86
      %p454 = pneg %p110
      %p455 = pneg %p107
      %p456 = pneg %p131
      %p457 = pneg %p128
      %p458 = pneg %p152
      %p459 = pneg %p149
      %p460 = pneg %p173
      %p461 = pneg %p170
      %p462 = pneg %p194
      %p463 = pneg %p191
      %p464 = pneg %p215
      %p465 = pneg %p212
      %p466 = pneg %p236
      %p467 = pneg %p233
      %p468 = pneg %p257
      %p469 = pneg %p254
      %p470 = pneg %p278
      %p471 = pneg %p275
      %p472 = pneg %p299
      %p473 = pneg %p296
      %p474 = pneg %p320
      %p475 = pneg %p317
      %p476 = pneg %p341
      %p477 = pneg %p338
      %p478 = pneg %p367
      %p479 = pneg %p364
      %p480 = scmp.lt.s32.totalorder %s26, 1
      %s481 = scalar_select %p480, %s26, 1
      %s482 = smul.addr %s481, 8
      %s483 = smul.addr %s482, 8
      %s484 = scalar_lea.vmem %s15, %s483
      %p485 = scmp.lt.s32.totalorder %s26, 1
      %s486 = scalar_select %p485, %s26, 1
      %s487 = smul.addr %s486, 8
      %s488 = smul.addr %s487, 4
      %s489 = scalar_lea.vmem %s0, %s488
      %p490 = scmp.lt.s32.totalorder %s26, 1
      %s491 = scalar_select %p490, %s26, 1
      %s492 = smul.addr %s491, 8
      %s493 = smul.addr %s492, 8
      %s494 = scalar_lea.vmem %s15, %s493
      %v496 = vld [vmem:[%s489] sm:$0xf]
      %v497 = vld [vmem:[%s489 + $0x4] sm:$0xf]
      %v498 = vld [vmem:[%s489 + $0x8] sm:$0xf]
      %v499 = vld [vmem:[%s489 + $0xc] sm:$0xf]
      %v500 = vld [vmem:[%s489 + $0x10] sm:$0xf]
      %v501 = vld [vmem:[%s489 + $0x14] sm:$0xf]
      %v502 = vld [vmem:[%s489 + $0x18] sm:$0xf]
      %v503 = vld [vmem:[%s489 + $0x1c] sm:$0xf]
      %v504 = vld [vmem:[%s1] sm:$0xf]
      %v505 = vld [vmem:[%s2] sm:$0x1]
      %v507 = vlaneseq
      %v508 = vshrl.u32 %v507, 7
      %v509 = vsub.s32 0, %v508
      %v510 = vrot.slane %v505, %v509
      %v520 = vunpack.c.l.b16 %v496
      %v521 = vunpack.c.l.b16 %v497
      %v522 = vunpack.c.l.b16 %v498
      %v523 = vunpack.c.l.b16 %v499
      %v524 = vunpack.c.l.b16 %v500
      %v525 = vunpack.c.l.b16 %v501
      %v526 = vunpack.c.l.b16 %v502
      %v527 = vunpack.c.l.b16 %v503
      %v528 = vpack.c.b16 %v521, %v520
      %v529 = vpack.c.b16 %v523, %v522
      %v530 = vpack.c.b16 %v525, %v524
      %v531 = vpack.c.b16 %v527, %v526
      %vm532 = vcmask 64512
      %v534 = vsel %vm532, %v528, 0
      %v537 = vsel %vm532, %v529, 0
      %v540 = vsel %vm532, %v530, 0
      %v543 = vsel %vm532, %v531, 0
      %vm545 = vcmask 1043456
      %v547 = vsel %vm545, %v504, 0
      %549 = vmatprep.subr.bf16.mxu0 0
      %550 = vmatpush1.bf16.msra.mxu0 %v547
      %551 = vmatprep.subr.bf16.mxu0 0
      %552 = vmatpush1.bf16.msra.mxu0 0
      %553 = vmatprep.subr.bf16.mxu0 0
      %554 = vmatpush1.bf16.msra.mxu0 0
      %555 = vmatprep.subr.bf16.mxu0 0
      %556 = vmatpush1.bf16.msra.mxu0 0
      %557 = vmatprep.subr.bf16.mxu0 0
      %558 = vmatpush1.bf16.msra.mxu0 0
      %559 = vmatprep.subr.bf16.mxu0 0
      %560 = vmatpush1.bf16.msra.mxu0 0
      %561 = vmatprep.subr.bf16.mxu0 0
      %562 = vmatpush1.bf16.msra.mxu0 0
      %563 = vmatprep.subr.bf16.mxu0 0
      %564 = vmatpush1.bf16.msra.mxu0 0
      %565 = vmatprep.subr.bf16.mxu0 0
      %566 = vmatpush1.bf16.msra.mxu0 0
      %567 = vmatprep.subr.bf16.mxu0 0
      %568 = vmatpush1.bf16.msra.mxu0 0
      %569 = vmatprep.subr.bf16.mxu0 0
      %570 = vmatpush1.bf16.msra.mxu0 0
      %571 = vmatprep.subr.bf16.mxu0 0
      %572 = vmatpush1.bf16.msra.mxu0 0
      %573 = vmatprep.subr.bf16.mxu0 0
      %574 = vmatpush1.bf16.msra.mxu0 0
      %575 = vmatprep.subr.bf16.mxu0 0
      %576 = vmatpush1.bf16.msra.mxu0 0
      %577 = vmatprep.subr.bf16.mxu0 0
      %578 = vmatpush1.bf16.msra.mxu0 0
      %579 = vmatprep.subr.bf16.mxu0 0
      %580 = vmatpush1.bf16.msra.mxu0 0
      %581 = vmatprep.mubr.bf16.mxu0 0
      %582 = vmatmul.mubr.bf16.gmra.mrb[0].mxu0 %v534
      %v583 = vpop.f32.mrb[0].mxu0
      %v584 = vadd.f32 %v510, %v583
      %v585 = vpop.f32.mrb[0].mxu0
      %v586 = vpop.f32.mrb[0].mxu0
      %v587 = vadd.f32 %v510, %v586
      %v588 = vpop.f32.mrb[0].mxu0
      %589 = vmatprep.mubr.bf16.mxu0 0
      %590 = vmatmul.mubr.bf16.gmra.mrb[0].mxu0 %v537
      %v591 = vpop.f32.mrb[0].mxu0
      %v592 = vadd.f32 %v510, %v591
      %v593 = vpop.f32.mrb[0].mxu0
      %v594 = vpop.f32.mrb[0].mxu0
      %v595 = vadd.f32 %v510, %v594
      %v596 = vpop.f32.mrb[0].mxu0
      %597 = vmatprep.mubr.bf16.mxu0 0
      %598 = vmatmul.mubr.bf16.gmra.mrb[0].mxu0 %v540
      %v599 = vpop.f32.mrb[0].mxu0
      %v600 = vadd.f32 %v510, %v599
      %v601 = vpop.f32.mrb[0].mxu0
      %v602 = vpop.f32.mrb[0].mxu0
      %v603 = vadd.f32 %v510, %v602
      %v604 = vpop.f32.mrb[0].mxu0
      %605 = vmatprep.mubr.bf16.mxu0 0
      %606 = vmatmul.mubr.bf16.gmra.mrb[0].mxu0 %v543
      %v607 = vpop.f32.mrb[0].mxu0
      %v608 = vadd.f32 %v510, %v607
      %v609 = vpop.f32.mrb[0].mxu0
      %v610 = vpop.f32.mrb[0].mxu0
      %v611 = vadd.f32 %v510, %v610
      %v612 = vpop.f32.mrb[0].mxu0
      %613 = vdwg.mxu0
      %v614 = vmax.f32 %v584, 0.0
      %v615 = vmax.f32 %v587, 0.0
      %v616 = vmax.f32 %v592, 0.0
      %v617 = vmax.f32 %v595, 0.0
      %v618 = vmax.f32 %v600, 0.0
      %v619 = vmax.f32 %v603, 0.0
      %v620 = vmax.f32 %v608, 0.0
      %v621 = vmax.f32 %v611, 0.0
      %v622 = vld [vmem:[%s3] sm:$0xf]
      %v623 = vld [vmem:[%s4] sm:$0x1]
      %v625 = vlaneseq
      %v626 = vshrl.u32 %v625, 7
      %v627 = vsub.s32 0, %v626
      %v628 = vrot.slane %v623, %v627
      %v631 = vsel %vm545, %v622, 0
      %633 = vmatprep.subr.bf16.mxu0 0
      %634 = vmatpush1.bf16.msra.mxu0 %v631
      %635 = vmatprep.subr.bf16.mxu0 0
      %636 = vmatpush1.bf16.msra.mxu0 0
      %637 = vmatprep.subr.bf16.mxu0 0
      %638 = vmatpush1.bf16.msra.mxu0 0
      %639 = vmatprep.subr.bf16.mxu0 0
      %640 = vmatpush1.bf16.msra.mxu0 0
      %641 = vmatprep.subr.bf16.mxu0 0
      %642 = vmatpush1.bf16.msra.mxu0 0
      %643 = vmatprep.subr.bf16.mxu0 0
      %644 = vmatpush1.bf16.msra.mxu0 0
      %645 = vmatprep.subr.bf16.mxu0 0
      %646 = vmatpush1.bf16.msra.mxu0 0
      %647 = vmatprep.subr.bf16.mxu0 0
      %648 = vmatpush1.bf16.msra.mxu0 0
      %649 = vmatprep.subr.bf16.mxu0 0
      %650 = vmatpush1.bf16.msra.mxu0 0
      %651 = vmatprep.subr.bf16.mxu0 0
      %652 = vmatpush1.bf16.msra.mxu0 0
      %653 = vmatprep.subr.bf16.mxu0 0
      %654 = vmatpush1.bf16.msra.mxu0 0
      %655 = vmatprep.subr.bf16.mxu0 0
      %656 = vmatpush1.bf16.msra.mxu0 0
      %657 = vmatprep.subr.bf16.mxu0 0
      %658 = vmatpush1.bf16.msra.mxu0 0
      %659 = vmatprep.subr.bf16.mxu0 0
      %660 = vmatpush1.bf16.msra.mxu0 0
      %661 = vmatprep.subr.bf16.mxu0 0
      %662 = vmatpush1.bf16.msra.mxu0 0
      %663 = vmatprep.subr.bf16.mxu0 0
      %664 = vmatpush1.bf16.msra.mxu0 0
      %665 = vmatprep.mubr.bf16.mxu0 0
      %666 = vmatmul.mubr.bf16.gmra.mrb[0].mxu0 %v534
      %v667 = vpop.f32.mrb[0].mxu0
      %v668 = vadd.f32 %v628, %v667
      %v669 = vpop.f32.mrb[0].mxu0
      %v670 = vpop.f32.mrb[0].mxu0
      %v671 = vadd.f32 %v628, %v670
      %v672 = vpop.f32.mrb[0].mxu0
      %673 = vmatprep.mubr.bf16.mxu0 0
      %674 = vmatmul.mubr.bf16.gmra.mrb[0].mxu0 %v537
      %v675 = vpop.f32.mrb[0].mxu0
      %v676 = vadd.f32 %v628, %v675
      %v677 = vpop.f32.mrb[0].mxu0
      %v678 = vpop.f32.mrb[0].mxu0
      %v679 = vadd.f32 %v628, %v678
      %v680 = vpop.f32.mrb[0].mxu0
      %681 = vmatprep.mubr.bf16.mxu0 0
      %682 = vmatmul.mubr.bf16.gmra.mrb[0].mxu0 %v540
      %v683 = vpop.f32.mrb[0].mxu0
      %v684 = vadd.f32 %v628, %v683
      %v685 = vpop.f32.mrb[0].mxu0
      %v686 = vpop.f32.mrb[0].mxu0
      %v687 = vadd.f32 %v628, %v686
      %v688 = vpop.f32.mrb[0].mxu0
      %689 = vmatprep.mubr.bf16.mxu0 0
      %690 = vmatmul.mubr.bf16.gmra.mrb[0].mxu0 %v543
      %v691 = vpop.f32.mrb[0].mxu0
      %v692 = vadd.f32 %v628, %v691
      %v693 = vpop.f32.mrb[0].mxu0
      %v694 = vpop.f32.mrb[0].mxu0
      %v695 = vadd.f32 %v628, %v694
      %v696 = vpop.f32.mrb[0].mxu0
      %697 = vdwg.mxu0
      %v698 = vmax.f32 %v668, 0.0
      %v699 = vmax.f32 %v671, 0.0
      %v700 = vmax.f32 %v676, 0.0
      %v701 = vmax.f32 %v679, 0.0
      %v702 = vmax.f32 %v684, 0.0
      %v703 = vmax.f32 %v687, 0.0
      %v704 = vmax.f32 %v692, 0.0
      %v705 = vmax.f32 %v695, 0.0
      %v706 = vpack.c.bf16 %v699, %v698
      %v707 = vpack.c.bf16 %v701, %v700
      %v708 = vpack.c.bf16 %v703, %v702
      %v709 = vpack.c.bf16 %v705, %v704
      %v710 = vld [vmem:[%s5] sm:$0xf]
      %v712 = vsel %vm532, %v706, 0
      %v715 = vsel %vm532, %v707, 0
      %v718 = vsel %vm532, %v708, 0
      %v721 = vsel %vm532, %v709, 0
      %v724 = vsel %vm545, %v710, 0
      %726 = vmatprep.subr.bf16.mxu0 0
      %727 = vmatpush1.bf16.msra.mxu0 %v724
      %728 = vmatprep.subr.bf16.mxu0 0
      %729 = vmatpush1.bf16.msra.mxu0 0
      %730 = vmatprep.subr.bf16.mxu0 0
      %731 = vmatpush1.bf16.msra.mxu0 0
      %732 = vmatprep.subr.bf16.mxu0 0
      %733 = vmatpush1.bf16.msra.mxu0 0
      %734 = vmatprep.subr.bf16.mxu0 0
      %735 = vmatpush1.bf16.msra.mxu0 0
      %736 = vmatprep.subr.bf16.mxu0 0
      %737 = vmatpush1.bf16.msra.mxu0 0
      %738 = vmatprep.subr.bf16.mxu0 0
      %739 = vmatpush1.bf16.msra.mxu0 0
      %740 = vmatprep.subr.bf16.mxu0 0
      %741 = vmatpush1.bf16.msra.mxu0 0
      %742 = vmatprep.subr.bf16.mxu0 0
      %743 = vmatpush1.bf16.msra.mxu0 0
      %744 = vmatprep.subr.bf16.mxu0 0
      %745 = vmatpush1.bf16.msra.mxu0 0
      %746 = vmatprep.subr.bf16.mxu0 0
      %747 = vmatpush1.bf16.msra.mxu0 0
      %748 = vmatprep.subr.bf16.mxu0 0
      %749 = vmatpush1.bf16.msra.mxu0 0
      %750 = vmatprep.subr.bf16.mxu0 0
      %751 = vmatpush1.bf16.msra.mxu0 0
      %752 = vmatprep.subr.bf16.mxu0 0
      %753 = vmatpush1.bf16.msra.mxu0 0
      %754 = vmatprep.subr.bf16.mxu0 0
      %755 = vmatpush1.bf16.msra.mxu0 0
      %756 = vmatprep.subr.bf16.mxu0 0
      %757 = vmatpush1.bf16.msra.mxu0 0
      %758 = vmatprep.mubr.bf16.mxu0 0
      %759 = vmatmul.mubr.bf16.gmra.mrb[0].mxu0 %v712
      %v760 = vpop.f32.mrb[0].mxu0
      %v761 = vadd.f32 0.0, %v760
      %v762 = vpop.f32.mrb[0].mxu0
      %v763 = vpop.f32.mrb[0].mxu0
      %v764 = vadd.f32 0.0, %v763
      %v765 = vpop.f32.mrb[0].mxu0
      %766 = vmatprep.mubr.bf16.mxu0 0
      %767 = vmatmul.mubr.bf16.gmra.mrb[0].mxu0 %v715
      %v768 = vpop.f32.mrb[0].mxu0
      %v769 = vadd.f32 0.0, %v768
      %v770 = vpop.f32.mrb[0].mxu0
      %v771 = vpop.f32.mrb[0].mxu0
      %v772 = vadd.f32 0.0, %v771
      %v773 = vpop.f32.mrb[0].mxu0
      %774 = vmatprep.mubr.bf16.mxu0 0
      %775 = vmatmul.mubr.bf16.gmra.mrb[0].mxu0 %v718
      %v776 = vpop.f32.mrb[0].mxu0
      %v777 = vadd.f32 0.0, %v776
      %v778 = vpop.f32.mrb[0].mxu0
      %v779 = vpop.f32.mrb[0].mxu0
      %v780 = vadd.f32 0.0, %v779
      %v781 = vpop.f32.mrb[0].mxu0
      %782 = vmatprep.mubr.bf16.mxu0 0
      %783 = vmatmul.mubr.bf16.gmra.mrb[0].mxu0 %v721
      %v784 = vpop.f32.mrb[0].mxu0
      %v785 = vadd.f32 0.0, %v784
      %v786 = vpop.f32.mrb[0].mxu0
      %v787 = vpop.f32.mrb[0].mxu0
      %v788 = vadd.f32 0.0, %v787
      %v789 = vpop.f32.mrb[0].mxu0
      %790 = vdwg.mxu0
      %v791 = vld [vmem:[%s6] sm:$0xf]
      %v793 = vsel %vm545, %v791, 0
      %795 = vmatprep.subr.bf16.mxu0 0
      %796 = vmatpush1.bf16.msra.mxu0 %v793
      %797 = vmatprep.subr.bf16.mxu0 0
      %798 = vmatpush1.bf16.msra.mxu0 0
      %799 = vmatprep.subr.bf16.mxu0 0
      %800 = vmatpush1.bf16.msra.mxu0 0
      %801 = vmatprep.subr.bf16.mxu0 0
      %802 = vmatpush1.bf16.msra.mxu0 0
      %803 = vmatprep.subr.bf16.mxu0 0
      %804 = vmatpush1.bf16.msra.mxu0 0
      %805 = vmatprep.subr.bf16.mxu0 0
      %806 = vmatpush1.bf16.msra.mxu0 0
      %807 = vmatprep.subr.bf16.mxu0 0
      %808 = vmatpush1.bf16.msra.mxu0 0
      %809 = vmatprep.subr.bf16.mxu0 0
      %810 = vmatpush1.bf16.msra.mxu0 0
      %811 = vmatprep.subr.bf16.mxu0 0
      %812 = vmatpush1.bf16.msra.mxu0 0
      %813 = vmatprep.subr.bf16.mxu0 0
      %814 = vmatpush1.bf16.msra.mxu0 0
      %815 = vmatprep.subr.bf16.mxu0 0
      %816 = vmatpush1.bf16.msra.mxu0 0
      %817 = vmatprep.subr.bf16.mxu0 0
      %818 = vmatpush1.bf16.msra.mxu0 0
      %819 = vmatprep.subr.bf16.mxu0 0
      %820 = vmatpush1.bf16.msra.mxu0 0
      %821 = vmatprep.subr.bf16.mxu0 0
      %822 = vmatpush1.bf16.msra.mxu0 0
      %823 = vmatprep.subr.bf16.mxu0 0
      %824 = vmatpush1.bf16.msra.mxu0 0
      %825 = vmatprep.subr.bf16.mxu0 0
      %826 = vmatpush1.bf16.msra.mxu0 0
      %827 = vmatprep.mubr.bf16.mxu0 0
      %828 = vmatmul.mubr.bf16.gmra.mrb[0].mxu0 %v712
      %v829 = vpop.f32.mrb[0].mxu0
      %v830 = vadd.f32 0.0, %v829
      %v831 = vpop.f32.mrb[0].mxu0
      %v832 = vpop.f32.mrb[0].mxu0
      %v833 = vadd.f32 0.0, %v832
      %v834 = vpop.f32.mrb[0].mxu0
      %835 = vmatprep.mubr.bf16.mxu0 0
      %836 = vmatmul.mubr.bf16.gmra.mrb[0].mxu0 %v715
      %v837 = vpop.f32.mrb[0].mxu0
      %v838 = vadd.f32 0.0, %v837
      %v839 = vpop.f32.mrb[0].mxu0
      %v840 = vpop.f32.mrb[0].mxu0
      %v841 = vadd.f32 0.0, %v840
      %v842 = vpop.f32.mrb[0].mxu0
      %843 = vmatprep.mubr.bf16.mxu0 0
      %844 = vmatmul.mubr.bf16.gmra.mrb[0].mxu0 %v718
      %v845 = vpop.f32.mrb[0].mxu0
      %v846 = vadd.f32 0.0, %v845
      %v847 = vpop.f32.mrb[0].mxu0
      %v848 = vpop.f32.mrb[0].mxu0
      %v849 = vadd.f32 0.0, %v848
      %v850 = vpop.f32.mrb[0].mxu0
      %851 = vmatprep.mubr.bf16.mxu0 0
      %852 = vmatmul.mubr.bf16.gmra.mrb[0].mxu0 %v721
      %v853 = vpop.f32.mrb[0].mxu0
      %v854 = vadd.f32 0.0, %v853
      %v855 = vpop.f32.mrb[0].mxu0
      %v856 = vpop.f32.mrb[0].mxu0
      %v857 = vadd.f32 0.0, %v856
      %v858 = vpop.f32.mrb[0].mxu0
      %859 = vdwg.mxu0
      %v860 = vpack.c.bf16 %v833, %v830
      %v861 = vpack.c.bf16 %v841, %v838
      %v862 = vpack.c.bf16 %v849, %v846
      %v863 = vpack.c.bf16 %v857, %v854
      %v864 = vld [vmem:[%s7] sm:$0xf]
      %v866 = vsel %vm545, %v864, 0
      %868 = vmatprep.subr.bf16.mxu0 0
      %869 = vmatpush1.bf16.msra.mxu0 %v866
      %870 = vmatprep.subr.bf16.mxu0 0
      %871 = vmatpush1.bf16.msra.mxu0 0
      %872 = vmatprep.subr.bf16.mxu0 0
      %873 = vmatpush1.bf16.msra.mxu0 0
      %874 = vmatprep.subr.bf16.mxu0 0
      %875 = vmatpush1.bf16.msra.mxu0 0
      %876 = vmatprep.subr.bf16.mxu0 0
      %877 = vmatpush1.bf16.msra.mxu0 0
      %878 = vmatprep.subr.bf16.mxu0 0
      %879 = vmatpush1.bf16.msra.mxu0 0
      %880 = vmatprep.subr.bf16.mxu0 0
      %881 = vmatpush1.bf16.msra.mxu0 0
      %882 = vmatprep.subr.bf16.mxu0 0
      %883 = vmatpush1.bf16.msra.mxu0 0
      %884 = vmatprep.subr.bf16.mxu0 0
      %885 = vmatpush1.bf16.msra.mxu0 0
      %886 = vmatprep.subr.bf16.mxu0 0
      %887 = vmatpush1.bf16.msra.mxu0 0
      %888 = vmatprep.subr.bf16.mxu0 0
      %889 = vmatpush1.bf16.msra.mxu0 0
      %890 = vmatprep.subr.bf16.mxu0 0
      %891 = vmatpush1.bf16.msra.mxu0 0
      %892 = vmatprep.subr.bf16.mxu0 0
      %893 = vmatpush1.bf16.msra.mxu0 0
      %894 = vmatprep.subr.bf16.mxu0 0
      %895 = vmatpush1.bf16.msra.mxu0 0
      %896 = vmatprep.subr.bf16.mxu0 0
      %897 = vmatpush1.bf16.msra.mxu0 0
      %898 = vmatprep.subr.bf16.mxu0 0
      %899 = vmatpush1.bf16.msra.mxu0 0
      %900 = vmatprep.mubr.bf16.mxu0 0
      %901 = vmatmul.mubr.bf16.gmra.mrb[0].mxu0 %v712
      %v902 = vpop.f32.mrb[0].mxu0
      %v903 = vadd.f32 0.0, %v902
      %v904 = vpop.f32.mrb[0].mxu0
      %v905 = vpop.f32.mrb[0].mxu0
      %v906 = vadd.f32 0.0, %v905
      %v907 = vpop.f32.mrb[0].mxu0
      %908 = vmatprep.mubr.bf16.mxu0 0
      %909 = vmatmul.mubr.bf16.gmra.mrb[0].mxu0 %v715
      %v910 = vpop.f32.mrb[0].mxu0
      %v911 = vadd.f32 0.0, %v910
      %v912 = vpop.f32.mrb[0].mxu0
      %v913 = vpop.f32.mrb[0].mxu0
      %v914 = vadd.f32 0.0, %v913
      %v915 = vpop.f32.mrb[0].mxu0
      %916 = vmatprep.mubr.bf16.mxu0 0
      %917 = vmatmul.mubr.bf16.gmra.mrb[0].mxu0 %v718
      %v918 = vpop.f32.mrb[0].mxu0
      %v919 = vadd.f32 0.0, %v918
      %v920 = vpop.f32.mrb[0].mxu0
      %v921 = vpop.f32.mrb[0].mxu0
      %v922 = vadd.f32 0.0, %v921
      %v923 = vpop.f32.mrb[0].mxu0
      %924 = vmatprep.mubr.bf16.mxu0 0
      %925 = vmatmul.mubr.bf16.gmra.mrb[0].mxu0 %v721
      %v926 = vpop.f32.mrb[0].mxu0
      %v927 = vadd.f32 0.0, %v926
      %v928 = vpop.f32.mrb[0].mxu0
      %v929 = vpop.f32.mrb[0].mxu0
      %v930 = vadd.f32 0.0, %v929
      %v931 = vpop.f32.mrb[0].mxu0
      %932 = vdwg.mxu0
      %v933 = vpack.c.bf16 %v906, %v903
      %v934 = vpack.c.bf16 %v914, %v911
      %v935 = vpack.c.bf16 %v922, %v919
      %v936 = vpack.c.bf16 %v930, %v927
      %v937 = vpack.c.bf16 %v764, %v761
      %v938 = vpack.c.bf16 %v772, %v769
      %v939 = vpack.c.bf16 %v780, %v777
      %v940 = vpack.c.bf16 %v788, %v785
      %v945 = vunpack.c.l.b16 %v937
      %v946 = vunpack.c.h.b16 %v937
      %v947 = vunpack.c.l.b16 %v938
      %v948 = vunpack.c.h.b16 %v938
      %v949 = vunpack.c.l.b16 %v939
      %v950 = vunpack.c.h.b16 %v939
      %v951 = vunpack.c.l.b16 %v940
      %v952 = vunpack.c.h.b16 %v940
      %v953 = vpack.c.b16 %v945, %v945
      %v954 = vpack.c.b16 %v946, %v946
      %v955 = vpack.c.b16 %v947, %v947
      %v956 = vpack.c.b16 %v948, %v948
      %v957 = vpack.c.b16 %v949, %v949
      %v958 = vpack.c.b16 %v950, %v950
      %v959 = vpack.c.b16 %v951, %v951
      %v960 = vpack.c.b16 %v952, %v952
      %v961 = vld [vmem:[%s8] sm:$0xf]
      %v962 = vld [vmem:[%s8 + $0x4] sm:$0xf]
      %v963 = vld [vmem:[%s8 + $0x8] sm:$0xf]
      %v964 = vld [vmem:[%s8 + $0xc] sm:$0xf]
      %v965 = vld [vmem:[%s8 + $0x10] sm:$0xf]
      %v966 = vld [vmem:[%s8 + $0x14] sm:$0xf]
      %v967 = vld [vmem:[%s8 + $0x18] sm:$0xf]
      %v968 = vld [vmem:[%s8 + $0x1c] sm:$0xf]
      %vm969 = vcmask 130048
      %v971 = vsel %vm969, %v953, 0
      %v974 = vsel %vm969, %v961, 0
      %976 = vmatprep.subr.bf16.mxu0 0
      %977 = vmatpush1.bf16.xpose.msra.mxu0 %v974
      %978 = vmatprep.subr.bf16.mxu0 0
      %979 = vmatpush1.bf16.xpose.msra.mxu0 0
      %980 = vmatprep.subr.bf16.mxu0 0
      %981 = vmatpush1.bf16.xpose.msra.mxu0 0
      %982 = vmatprep.subr.bf16.mxu0 0
      %983 = vmatpush1.bf16.xpose.msra.mxu0 0
      %984 = vmatprep.subr.bf16.mxu0 0
      %985 = vmatpush1.bf16.xpose.msra.mxu0 0
      %986 = vmatprep.subr.bf16.mxu0 0
      %987 = vmatpush1.bf16.xpose.msra.mxu0 0
      %988 = vmatprep.subr.bf16.mxu0 0
      %989 = vmatpush1.bf16.xpose.msra.mxu0 0
      %990 = vmatprep.subr.bf16.mxu0 0
      %991 = vmatpush1.bf16.xpose.msra.mxu0 0
      %992 = vmatprep.subr.bf16.mxu0 0
      %993 = vmatpush1.bf16.xpose.msra.mxu0 0
      %994 = vmatprep.subr.bf16.mxu0 0
      %995 = vmatpush1.bf16.xpose.msra.mxu0 0
      %996 = vmatprep.subr.bf16.mxu0 0
      %997 = vmatpush1.bf16.xpose.msra.mxu0 0
      %998 = vmatprep.subr.bf16.mxu0 0
      %999 = vmatpush1.bf16.xpose.msra.mxu0 0
      %1000 = vmatprep.subr.bf16.mxu0 0
      %1001 = vmatpush1.bf16.xpose.msra.mxu0 0
      %1002 = vmatprep.subr.bf16.mxu0 0
      %1003 = vmatpush1.bf16.xpose.msra.mxu0 0
      %1004 = vmatprep.subr.bf16.mxu0 0
      %1005 = vmatpush1.bf16.xpose.msra.mxu0 0
      %1006 = vmatprep.subr.bf16.mxu0 0
      %1007 = vmatpush1.bf16.xpose.msra.mxu0 0
      %1008 = vmatprep.mubr.bf16.mxu0 0
      %1009 = vmatmul.mubr.bf16.gmra.mrb[0].mxu0 %v971
      %v1010 = vpop.f32.mrb[0].mxu0
      %v1011 = vadd.f32 0.0, %v1010
      %v1012 = vpop.f32.mrb[0].mxu0
      %v1013 = vpop.f32.mrb[0].mxu0
      %v1014 = vpop.f32.mrb[0].mxu0
      %1015 = vdwg.mxu0
      %v1017 = vsel %vm969, %v954, 0
      %v1020 = vsel %vm969, %v962, 0
      %1022 = vmatprep.subr.bf16.mxu0 0
      %1023 = vmatpush1.bf16.xpose.msra.mxu0 %v1020
      %1024 = vmatprep.subr.bf16.mxu0 0
      %1025 = vmatpush1.bf16.xpose.msra.mxu0 0
      %1026 = vmatprep.subr.bf16.mxu0 0
      %1027 = vmatpush1.bf16.xpose.msra.mxu0 0
      %1028 = vmatprep.subr.bf16.mxu0 0
      %1029 = vmatpush1.bf16.xpose.msra.mxu0 0
      %1030 = vmatprep.subr.bf16.mxu0 0
      %1031 = vmatpush1.bf16.xpose.msra.mxu0 0
      %1032 = vmatprep.subr.bf16.mxu0 0
      %1033 = vmatpush1.bf16.xpose.msra.mxu0 0
      %1034 = vmatprep.subr.bf16.mxu0 0
      %1035 = vmatpush1.bf16.xpose.msra.mxu0 0
      %1036 = vmatprep.subr.bf16.mxu0 0
      %1037 = vmatpush1.bf16.xpose.msra.mxu0 0
      %1038 = vmatprep.subr.bf16.mxu0 0
      %1039 = vmatpush1.bf16.xpose.msra.mxu0 0
      %1040 = vmatprep.subr.bf16.mxu0 0
      %1041 = vmatpush1.bf16.xpose.msra.mxu0 0
      %1042 = vmatprep.subr.bf16.mxu0 0
      %1043 = vmatpush1.bf16.xpose.msra.mxu0 0
      %1044 = vmatprep.subr.bf16.mxu0 0
      %1045 = vmatpush1.bf16.xpose.msra.mxu0 0
      %1046 = vmatprep.subr.bf16.mxu0 0
      %1047 = vmatpush1.bf16.xpose.msra.mxu0 0
      %1048 = vmatprep.subr.bf16.mxu0 0
      %1049 = vmatpush1.bf16.xpose.msra.mxu0 0
      %1050 = vmatprep.subr.bf16.mxu0 0
      %1051 = vmatpush1.bf16.xpose.msra.mxu0 0
      %1052 = vmatprep.subr.bf16.mxu0 0
      %1053 = vmatpush1.bf16.xpose.msra.mxu0 0
      %1054 = vmatprep.mubr.bf16.mxu0 0
      %1055 = vmatmul.mubr.bf16.gmra.mrb[0].mxu0 %v1017
      %v1056 = vpop.f32.mrb[0].mxu0
      %v1057 = vadd.f32 0.0, %v1056
      %v1058 = vpop.f32.mrb[0].mxu0
      %v1059 = vpop.f32.mrb[0].mxu0
      %v1060 = vpop.f32.mrb[0].mxu0
      %1061 = vdwg.mxu0
      %v1063 = vsel %vm969, %v955, 0
      %v1066 = vsel %vm969, %v963, 0
      %1068 = vmatprep.subr.bf16.mxu0 0
      %1069 = vmatpush1.bf16.xpose.msra.mxu0 %v1066
      %1070 = vmatprep.subr.bf16.mxu0 0
      %1071 = vmatpush1.bf16.xpose.msra.mxu0 0
      %1072 = vmatprep.subr.bf16.mxu0 0
      %1073 = vmatpush1.bf16.xpose.msra.mxu0 0
      %1074 = vmatprep.subr.bf16.mxu0 0
      %1075 = vmatpush1.bf16.xpose.msra.mxu0 0
      %1076 = vmatprep.subr.bf16.mxu0 0
      %1077 = vmatpush1.bf16.xpose.msra.mxu0 0
      %1078 = vmatprep.subr.bf16.mxu0 0
      %1079 = vmatpush1.bf16.xpose.msra.mxu0 0
      %1080 = vmatprep.subr.bf16.mxu0 0
      %1081 = vmatpush1.bf16.xpose.msra.mxu0 0
      %1082 = vmatprep.subr.bf16.mxu0 0
      %1083 = vmatpush1.bf16.xpose.msra.mxu0 0
      %1084 = vmatprep.subr.bf16.mxu0 0
      %1085 = vmatpush1.bf16.xpose.msra.mxu0 0
      %1086 = vmatprep.subr.bf16.mxu0 0
      %1087 = vmatpush1.bf16.xpose.msra.mxu0 0
      %1088 = vmatprep.subr.bf16.mxu0 0
      %1089 = vmatpush1.bf16.xpose.msra.mxu0 0
      %1090 = vmatprep.subr.bf16.mxu0 0
      %1091 = vmatpush1.bf16.xpose.msra.mxu0 0
      %1092 = vmatprep.subr.bf16.mxu0 0
      %1093 = vmatpush1.bf16.xpose.msra.mxu0 0
      %1094 = vmatprep.subr.bf16.mxu0 0
      %1095 = vmatpush1.bf16.xpose.msra.mxu0 0
      %1096 = vmatprep.subr.bf16.mxu0 0
      %1097 = vmatpush1.bf16.xpose.msra.mxu0 0
      %1098 = vmatprep.subr.bf16.mxu0 0
      %1099 = vmatpush1.bf16.xpose.msra.mxu0 0
      %1100 = vmatprep.mubr.bf16.mxu0 0
      %1101 = vmatmul.mubr.bf16.gmra.mrb[0].mxu0 %v1063
      %v1102 = vpop.f32.mrb[0].mxu0
      %v1103 = vadd.f32 0.0, %v1102
      %v1104 = vpop.f32.mrb[0].mxu0
      %v1105 = vpop.f32.mrb[0].mxu0
      %v1106 = vpop.f32.mrb[0].mxu0
      %1107 = vdwg.mxu0
      %v1109 = vsel %vm969, %v956, 0
      %v1112 = vsel %vm969, %v964, 0
      %1114 = vmatprep.subr.bf16.mxu0 0
      %1115 = vmatpush1.bf16.xpose.msra.mxu0 %v1112
      %1116 = vmatprep.subr.bf16.mxu0 0
      %1117 = vmatpush1.bf16.xpose.msra.mxu0 0
      %1118 = vmatprep.subr.bf16.mxu0 0
      %1119 = vmatpush1.bf16.xpose.msra.mxu0 0
      %1120 = vmatprep.subr.bf16.mxu0 0
      %1121 = vmatpush1.bf16.xpose.msra.mxu0 0
      %1122 = vmatprep.subr.bf16.mxu0 0
      %1123 = vmatpush1.bf16.xpose.msra.mxu0 0
      %1124 = vmatprep.subr.bf16.mxu0 0
      %1125 = vmatpush1.bf16.xpose.msra.mxu0 0
      %1126 = vmatprep.subr.bf16.mxu0 0
      %1127 = vmatpush1.bf16.xpose.msra.mxu0 0
      %1128 = vmatprep.subr.bf16.mxu0 0
      %1129 = vmatpush1.bf16.xpose.msra.mxu0 0
      %1130 = vmatprep.subr.bf16.mxu0 0
      %1131 = vmatpush1.bf16.xpose.msra.mxu0 0
      %1132 = vmatprep.subr.bf16.mxu0 0
      %1133 = vmatpush1.bf16.xpose.msra.mxu0 0
      %1134 = vmatprep.subr.bf16.mxu0 0
      %1135 = vmatpush1.bf16.xpose.msra.mxu0 0
      %1136 = vmatprep.subr.bf16.mxu0 0
      %1137 = vmatpush1.bf16.xpose.msra.mxu0 0
      %1138 = vmatprep.subr.bf16.mxu0 0
      %1139 = vmatpush1.bf16.xpose.msra.mxu0 0
      %1140 = vmatprep.subr.bf16.mxu0 0
      %1141 = vmatpush1.bf16.xpose.msra.mxu0 0
      %1142 = vmatprep.subr.bf16.mxu0 0
      %1143 = vmatpush1.bf16.xpose.msra.mxu0 0
      %1144 = vmatprep.subr.bf16.mxu0 0
      %1145 = vmatpush1.bf16.xpose.msra.mxu0 0
      %1146 = vmatprep.mubr.bf16.mxu0 0
      %1147 = vmatmul.mubr.bf16.gmra.mrb[0].mxu0 %v1109
      %v1148 = vpop.f32.mrb[0].mxu0
      %v1149 = vadd.f32 0.0, %v1148
      %v1150 = vpop.f32.mrb[0].mxu0
      %v1151 = vpop.f32.mrb[0].mxu0
      %v1152 = vpop.f32.mrb[0].mxu0
      %1153 = vdwg.mxu0
      %v1155 = vsel %vm969, %v957, 0
      %v1158 = vsel %vm969, %v965, 0
      %1160 = vmatprep.subr.bf16.mxu0 0
      %1161 = vmatpush1.bf16.xpose.msra.mxu0 %v1158
      %1162 = vmatprep.subr.bf16.mxu0 0
      %1163 = vmatpush1.bf16.xpose.msra.mxu0 0
      %1164 = vmatprep.subr.bf16.mxu0 0
      %1165 = vmatpush1.bf16.xpose.msra.mxu0 0
      %1166 = vmatprep.subr.bf16.mxu0 0
      %1167 = vmatpush1.bf16.xpose.msra.mxu0 0
      %1168 = vmatprep.subr.bf16.mxu0 0
      %1169 = vmatpush1.bf16.xpose.msra.mxu0 0
      %1170 = vmatprep.subr.bf16.mxu0 0
      %1171 = vmatpush1.bf16.xpose.msra.mxu0 0
      %1172 = vmatprep.subr.bf16.mxu0 0
      %1173 = vmatpush1.bf16.xpose.msra.mxu0 0
      %1174 = vmatprep.subr.bf16.mxu0 0
      %1175 = vmatpush1.bf16.xpose.msra.mxu0 0
      %1176 = vmatprep.subr.bf16.mxu0 0
      %1177 = vmatpush1.bf16.xpose.msra.mxu0 0
      %1178 = vmatprep.subr.bf16.mxu0 0
      %1179 = vmatpush1.bf16.xpose.msra.mxu0 0
      %1180 = vmatprep.subr.bf16.mxu0 0
      %1181 = vmatpush1.bf16.xpose.msra.mxu0 0
      %1182 = vmatprep.subr.bf16.mxu0 0
      %1183 = vmatpush1.bf16.xpose.msra.mxu0 0
      %1184 = vmatprep.subr.bf16.mxu0 0
      %1185 = vmatpush1.bf16.xpose.msra.mxu0 0
      %1186 = vmatprep.subr.bf16.mxu0 0
      %1187 = vmatpush1.bf16.xpose.msra.mxu0 0
      %1188 = vmatprep.subr.bf16.mxu0 0
      %1189 = vmatpush1.bf16.xpose.msra.mxu0 0
      %1190 = vmatprep.subr.bf16.mxu0 0
      %1191 = vmatpush1.bf16.xpose.msra.mxu0 0
      %1192 = vmatprep.mubr.bf16.mxu0 0
      %1193 = vmatmul.mubr.bf16.gmra.mrb[0].mxu0 %v1155
      %v1194 = vpop.f32.mrb[0].mxu0
      %v1195 = vadd.f32 0.0, %v1194
      %v1196 = vpop.f32.mrb[0].mxu0
      %v1197 = vpop.f32.mrb[0].mxu0
      %v1198 = vpop.f32.mrb[0].mxu0
      %1199 = vdwg.mxu0
      %v1201 = vsel %vm969, %v958, 0
      %v1204 = vsel %vm969, %v966, 0
      %1206 = vmatprep.subr.bf16.mxu0 0
      %1207 = vmatpush1.bf16.xpose.msra.mxu0 %v1204
      %1208 = vmatprep.subr.bf16.mxu0 0
      %1209 = vmatpush1.bf16.xpose.msra.mxu0 0
      %1210 = vmatprep.subr.bf16.mxu0 0
      %1211 = vmatpush1.bf16.xpose.msra.mxu0 0
      %1212 = vmatprep.subr.bf16.mxu0 0
      %1213 = vmatpush1.bf16.xpose.msra.mxu0 0
      %1214 = vmatprep.subr.bf16.mxu0 0
      %1215 = vmatpush1.bf16.xpose.msra.mxu0 0
      %1216 = vmatprep.subr.bf16.mxu0 0
      %1217 = vmatpush1.bf16.xpose.msra.mxu0 0
      %1218 = vmatprep.subr.bf16.mxu0 0
      %1219 = vmatpush1.bf16.xpose.msra.mxu0 0
      %1220 = vmatprep.subr.bf16.mxu0 0
      %1221 = vmatpush1.bf16.xpose.msra.mxu0 0
      %1222 = vmatprep.subr.bf16.mxu0 0
      %1223 = vmatpush1.bf16.xpose.msra.mxu0 0
      %1224 = vmatprep.subr.bf16.mxu0 0
      %1225 = vmatpush1.bf16.xpose.msra.mxu0 0
      %1226 = vmatprep.subr.bf16.mxu0 0
      %1227 = vmatpush1.bf16.xpose.msra.mxu0 0
      %1228 = vmatprep.subr.bf16.mxu0 0
      %1229 = vmatpush1.bf16.xpose.msra.mxu0 0
      %1230 = vmatprep.subr.bf16.mxu0 0
      %1231 = vmatpush1.bf16.xpose.msra.mxu0 0
      %1232 = vmatprep.subr.bf16.mxu0 0
      %1233 = vmatpush1.bf16.xpose.msra.mxu0 0
      %1234 = vmatprep.subr.bf16.mxu0 0
      %1235 = vmatpush1.bf16.xpose.msra.mxu0 0
      %1236 = vmatprep.subr.bf16.mxu0 0
      %1237 = vmatpush1.bf16.xpose.msra.mxu0 0
      %1238 = vmatprep.mubr.bf16.mxu0 0
      %1239 = vmatmul.mubr.bf16.gmra.mrb[0].mxu0 %v1201
      %v1240 = vpop.f32.mrb[0].mxu0
      %v1241 = vadd.f32 0.0, %v1240
      %v1242 = vpop.f32.mrb[0].mxu0
      %v1243 = vpop.f32.mrb[0].mxu0
      %v1244 = vpop.f32.mrb[0].mxu0
      %1245 = vdwg.mxu0
      %v1247 = vsel %vm969, %v959, 0
      %v1250 = vsel %vm969, %v967, 0
      %1252 = vmatprep.subr.bf16.mxu0 0
      %1253 = vmatpush1.bf16.xpose.msra.mxu0 %v1250
      %1254 = vmatprep.subr.bf16.mxu0 0
      %1255 = vmatpush1.bf16.xpose.msra.mxu0 0
      %1256 = vmatprep.subr.bf16.mxu0 0
      %1257 = vmatpush1.bf16.xpose.msra.mxu0 0
      %1258 = vmatprep.subr.bf16.mxu0 0
      %1259 = vmatpush1.bf16.xpose.msra.mxu0 0
      %1260 = vmatprep.subr.bf16.mxu0 0
      %1261 = vmatpush1.bf16.xpose.msra.mxu0 0
      %1262 = vmatprep.subr.bf16.mxu0 0
      %1263 = vmatpush1.bf16.xpose.msra.mxu0 0
      %1264 = vmatprep.subr.bf16.mxu0 0
      %1265 = vmatpush1.bf16.xpose.msra.mxu0 0
      %1266 = vmatprep.subr.bf16.mxu0 0
      %1267 = vmatpush1.bf16.xpose.msra.mxu0 0
      %1268 = vmatprep.subr.bf16.mxu0 0
      %1269 = vmatpush1.bf16.xpose.msra.mxu0 0
      %1270 = vmatprep.subr.bf16.mxu0 0
      %1271 = vmatpush1.bf16.xpose.msra.mxu0 0
      %1272 = vmatprep.subr.bf16.mxu0 0
      %1273 = vmatpush1.bf16.xpose.msra.mxu0 0
      %1274 = vmatprep.subr.bf16.mxu0 0
      %1275 = vmatpush1.bf16.xpose.msra.mxu0 0
      %1276 = vmatprep.subr.bf16.mxu0 0
      %1277 = vmatpush1.bf16.xpose.msra.mxu0 0
      %1278 = vmatprep.subr.bf16.mxu0 0
      %1279 = vmatpush1.bf16.xpose.msra.mxu0 0
      %1280 = vmatprep.subr.bf16.mxu0 0
      %1281 = vmatpush1.bf16.xpose.msra.mxu0 0
      %1282 = vmatprep.subr.bf16.mxu0 0
      %1283 = vmatpush1.bf16.xpose.msra.mxu0 0
      %1284 = vmatprep.mubr.bf16.mxu0 0
      %1285 = vmatmul.mubr.bf16.gmra.mrb[0].mxu0 %v1247
      %v1286 = vpop.f32.mrb[0].mxu0
      %v1287 = vadd.f32 0.0, %v1286
      %v1288 = vpop.f32.mrb[0].mxu0
      %v1289 = vpop.f32.mrb[0].mxu0
      %v1290 = vpop.f32.mrb[0].mxu0
      %1291 = vdwg.mxu0
      %v1293 = vsel %vm969, %v960, 0
      %v1296 = vsel %vm969, %v968, 0
      %1298 = vmatprep.subr.bf16.mxu0 0
      %1299 = vmatpush1.bf16.xpose.msra.mxu0 %v1296
      %1300 = vmatprep.subr.bf16.mxu0 0
      %1301 = vmatpush1.bf16.xpose.msra.mxu0 0
      %1302 = vmatprep.subr.bf16.mxu0 0
      %1303 = vmatpush1.bf16.xpose.msra.mxu0 0
      %1304 = vmatprep.subr.bf16.mxu0 0
      %1305 = vmatpush1.bf16.xpose.msra.mxu0 0
      %1306 = vmatprep.subr.bf16.mxu0 0
      %1307 = vmatpush1.bf16.xpose.msra.mxu0 0
      %1308 = vmatprep.subr.bf16.mxu0 0
      %1309 = vmatpush1.bf16.xpose.msra.mxu0 0
      %1310 = vmatprep.subr.bf16.mxu0 0
      %1311 = vmatpush1.bf16.xpose.msra.mxu0 0
      %1312 = vmatprep.subr.bf16.mxu0 0
      %1313 = vmatpush1.bf16.xpose.msra.mxu0 0
      %1314 = vmatprep.subr.bf16.mxu0 0
      %1315 = vmatpush1.bf16.xpose.msra.mxu0 0
      %1316 = vmatprep.subr.bf16.mxu0 0
      %1317 = vmatpush1.bf16.xpose.msra.mxu0 0
      %1318 = vmatprep.subr.bf16.mxu0 0
      %1319 = vmatpush1.bf16.xpose.msra.mxu0 0
      %1320 = vmatprep.subr.bf16.mxu0 0
      %1321 = vmatpush1.bf16.xpose.msra.mxu0 0
      %1322 = vmatprep.subr.bf16.mxu0 0
      %1323 = vmatpush1.bf16.xpose.msra.mxu0 0
      %1324 = vmatprep.subr.bf16.mxu0 0
      %1325 = vmatpush1.bf16.xpose.msra.mxu0 0
      %1326 = vmatprep.subr.bf16.mxu0 0
      %1327 = vmatpush1.bf16.xpose.msra.mxu0 0
      %1328 = vmatprep.subr.bf16.mxu0 0
      %1329 = vmatpush1.bf16.xpose.msra.mxu0 0
      %1330 = vmatprep.mubr.bf16.mxu0 0
      %1331 = vmatmul.mubr.bf16.gmra.mrb[0].mxu0 %v1293
      %v1332 = vpop.f32.mrb[0].mxu0
      %v1333 = vadd.f32 0.0, %v1332
      %v1334 = vpop.f32.mrb[0].mxu0
      %v1335 = vpop.f32.mrb[0].mxu0
      %v1336 = vpop.f32.mrb[0].mxu0
      %1337 = vdwg.mxu0
      %v1346 = vcombine.high %v761, %v761
      %v1348 = vunpack.c.l.s4 1966171168
      %v1349 = vunpack.c.0.s8 %v1348
      %v1350 = vlaneseq
      %v1351 = vshrl.u32 %v1350, 7
      %v1352 = vsub.s32 %v1349, %v1351
      %v1353 = vrot.slane %v761, %v1352
      %v1355 = vunpack.c.l.s4 1966171168
      %v1356 = vunpack.c.0.s8 %v1355
      %v1357 = vlaneseq
      %v1358 = vshrl.u32 %v1357, 7
      %v1359 = vsub.s32 %v1356, %v1358
      %v1360 = vrot.slane %v1346, %v1359
      %v1361 = vcombine.high %v1353, %v1353
      %v1362 = vcombine.high %v1360, %v1360
      %v1364 = vunpack.c.l.s4 1966171168
      %v1365 = vunpack.c.0.s8 %v1364
      %v1366 = vlaneseq
      %v1367 = vshrl.u32 %v1366, 7
      %v1368 = vsub.s32 %v1365, %v1367
      %v1369 = vrot.slane %v1353, %v1368
      %v1371 = vunpack.c.l.s4 1966171168
      %v1372 = vunpack.c.0.s8 %v1371
      %v1373 = vlaneseq
      %v1374 = vshrl.u32 %v1373, 7
      %v1375 = vsub.s32 %v1372, %v1374
      %v1376 = vrot.slane %v1360, %v1375
      %v1378 = vunpack.c.l.s4 1966171168
      %v1379 = vunpack.c.0.s8 %v1378
      %v1380 = vlaneseq
      %v1381 = vshrl.u32 %v1380, 7
      %v1382 = vsub.s32 %v1379, %v1381
      %v1383 = vrot.slane %v1361, %v1382
      %v1385 = vunpack.c.l.s4 1966171168
      %v1386 = vunpack.c.0.s8 %v1385
      %v1387 = vlaneseq
      %v1388 = vshrl.u32 %v1387, 7
      %v1389 = vsub.s32 %v1386, %v1388
      %v1390 = vrot.slane %v1362, %v1389
      %v1391 = vcombine.high %v1369, %v1369
      %v1392 = vcombine.high %v1376, %v1376
      %v1393 = vcombine.high %v1383, %v1383
      %v1394 = vcombine.high %v1390, %v1390
      %v1395 = vcombine.high %v764, %v764
      %v1397 = vunpack.c.l.s4 1966171168
      %v1398 = vunpack.c.0.s8 %v1397
      %v1399 = vlaneseq
      %v1400 = vshrl.u32 %v1399, 7
      %v1401 = vsub.s32 %v1398, %v1400
      %v1402 = vrot.slane %v764, %v1401
      %v1404 = vunpack.c.l.s4 1966171168
      %v1405 = vunpack.c.0.s8 %v1404
      %v1406 = vlaneseq
      %v1407 = vshrl.u32 %v1406, 7
      %v1408 = vsub.s32 %v1405, %v1407
      %v1409 = vrot.slane %v1395, %v1408
      %v1410 = vcombine.high %v1402, %v1402
      %v1411 = vcombine.high %v1409, %v1409
      %v1413 = vunpack.c.l.s4 1966171168
      %v1414 = vunpack.c.0.s8 %v1413
      %v1415 = vlaneseq
      %v1416 = vshrl.u32 %v1415, 7
      %v1417 = vsub.s32 %v1414, %v1416
      %v1418 = vrot.slane %v1402, %v1417
      %v1420 = vunpack.c.l.s4 1966171168
      %v1421 = vunpack.c.0.s8 %v1420
      %v1422 = vlaneseq
      %v1423 = vshrl.u32 %v1422, 7
      %v1424 = vsub.s32 %v1421, %v1423
      %v1425 = vrot.slane %v1409, %v1424
      %v1427 = vunpack.c.l.s4 1966171168
      %v1428 = vunpack.c.0.s8 %v1427
      %v1429 = vlaneseq
      %v1430 = vshrl.u32 %v1429, 7
      %v1431 = vsub.s32 %v1428, %v1430
      %v1432 = vrot.slane %v1410, %v1431
      %v1434 = vunpack.c.l.s4 1966171168
      %v1435 = vunpack.c.0.s8 %v1434
      %v1436 = vlaneseq
      %v1437 = vshrl.u32 %v1436, 7
      %v1438 = vsub.s32 %v1435, %v1437
      %v1439 = vrot.slane %v1411, %v1438
      %v1440 = vcombine.high %v1418, %v1418
      %v1441 = vcombine.high %v1425, %v1425
      %v1442 = vcombine.high %v1432, %v1432
      %v1443 = vcombine.high %v1439, %v1439
      %v1444 = vcombine.high %v769, %v769
      %v1446 = vunpack.c.l.s4 1966171168
      %v1447 = vunpack.c.0.s8 %v1446
      %v1448 = vlaneseq
      %v1449 = vshrl.u32 %v1448, 7
      %v1450 = vsub.s32 %v1447, %v1449
      %v1451 = vrot.slane %v769, %v1450
      %v1453 = vunpack.c.l.s4 1966171168
      %v1454 = vunpack.c.0.s8 %v1453
      %v1455 = vlaneseq
      %v1456 = vshrl.u32 %v1455, 7
      %v1457 = vsub.s32 %v1454, %v1456
      %v1458 = vrot.slane %v1444, %v1457
      %v1459 = vcombine.high %v1451, %v1451
      %v1460 = vcombine.high %v1458, %v1458
      %v1462 = vunpack.c.l.s4 1966171168
      %v1463 = vunpack.c.0.s8 %v1462
      %v1464 = vlaneseq
      %v1465 = vshrl.u32 %v1464, 7
      %v1466 = vsub.s32 %v1463, %v1465
      %v1467 = vrot.slane %v1451, %v1466
      %v1469 = vunpack.c.l.s4 1966171168
      %v1470 = vunpack.c.0.s8 %v1469
      %v1471 = vlaneseq
      %v1472 = vshrl.u32 %v1471, 7
      %v1473 = vsub.s32 %v1470, %v1472
      %v1474 = vrot.slane %v1458, %v1473
      %v1476 = vunpack.c.l.s4 1966171168
      %v1477 = vunpack.c.0.s8 %v1476
      %v1478 = vlaneseq
      %v1479 = vshrl.u32 %v1478, 7
      %v1480 = vsub.s32 %v1477, %v1479
      %v1481 = vrot.slane %v1459, %v1480
      %v1483 = vunpack.c.l.s4 1966171168
      %v1484 = vunpack.c.0.s8 %v1483
      %v1485 = vlaneseq
      %v1486 = vshrl.u32 %v1485, 7
      %v1487 = vsub.s32 %v1484, %v1486
      %v1488 = vrot.slane %v1460, %v1487
      %v1489 = vcombine.high %v1467, %v1467
      %v1490 = vcombine.high %v1474, %v1474
      %v1491 = vcombine.high %v1481, %v1481
      %v1492 = vcombine.high %v1488, %v1488
      %v1493 = vcombine.high %v772, %v772
      %v1495 = vunpack.c.l.s4 1966171168
      %v1496 = vunpack.c.0.s8 %v1495
      %v1497 = vlaneseq
      %v1498 = vshrl.u32 %v1497, 7
      %v1499 = vsub.s32 %v1496, %v1498
      %v1500 = vrot.slane %v772, %v1499
      %v1502 = vunpack.c.l.s4 1966171168
      %v1503 = vunpack.c.0.s8 %v1502
      %v1504 = vlaneseq
      %v1505 = vshrl.u32 %v1504, 7
      %v1506 = vsub.s32 %v1503, %v1505
      %v1507 = vrot.slane %v1493, %v1506
      %v1508 = vcombine.high %v1500, %v1500
      %v1509 = vcombine.high %v1507, %v1507
      %v1511 = vunpack.c.l.s4 1966171168
      %v1512 = vunpack.c.0.s8 %v1511
      %v1513 = vlaneseq
      %v1514 = vshrl.u32 %v1513, 7
      %v1515 = vsub.s32 %v1512, %v1514
      %v1516 = vrot.slane %v1500, %v1515
      %v1518 = vunpack.c.l.s4 1966171168
      %v1519 = vunpack.c.0.s8 %v1518
      %v1520 = vlaneseq
      %v1521 = vshrl.u32 %v1520, 7
      %v1522 = vsub.s32 %v1519, %v1521
      %v1523 = vrot.slane %v1507, %v1522
      %v1525 = vunpack.c.l.s4 1966171168
      %v1526 = vunpack.c.0.s8 %v1525
      %v1527 = vlaneseq
      %v1528 = vshrl.u32 %v1527, 7
      %v1529 = vsub.s32 %v1526, %v1528
      %v1530 = vrot.slane %v1508, %v1529
      %v1532 = vunpack.c.l.s4 1966171168
      %v1533 = vunpack.c.0.s8 %v1532
      %v1534 = vlaneseq
      %v1535 = vshrl.u32 %v1534, 7
      %v1536 = vsub.s32 %v1533, %v1535
      %v1537 = vrot.slane %v1509, %v1536
      %v1538 = vcombine.high %v1516, %v1516
      %v1539 = vcombine.high %v1523, %v1523
      %v1540 = vcombine.high %v1530, %v1530
      %v1541 = vcombine.high %v1537, %v1537
      %v1542 = vcombine.high %v777, %v777
      %v1544 = vunpack.c.l.s4 1966171168
      %v1545 = vunpack.c.0.s8 %v1544
      %v1546 = vlaneseq
      %v1547 = vshrl.u32 %v1546, 7
      %v1548 = vsub.s32 %v1545, %v1547
      %v1549 = vrot.slane %v777, %v1548
      %v1551 = vunpack.c.l.s4 1966171168
      %v1552 = vunpack.c.0.s8 %v1551
      %v1553 = vlaneseq
      %v1554 = vshrl.u32 %v1553, 7
      %v1555 = vsub.s32 %v1552, %v1554
      %v1556 = vrot.slane %v1542, %v1555
      %v1557 = vcombine.high %v1549, %v1549
      %v1558 = vcombine.high %v1556, %v1556
      %v1560 = vunpack.c.l.s4 1966171168
      %v1561 = vunpack.c.0.s8 %v1560
      %v1562 = vlaneseq
      %v1563 = vshrl.u32 %v1562, 7
      %v1564 = vsub.s32 %v1561, %v1563
      %v1565 = vrot.slane %v1549, %v1564
      %v1567 = vunpack.c.l.s4 1966171168
      %v1568 = vunpack.c.0.s8 %v1567
      %v1569 = vlaneseq
      %v1570 = vshrl.u32 %v1569, 7
      %v1571 = vsub.s32 %v1568, %v1570
      %v1572 = vrot.slane %v1556, %v1571
      %v1574 = vunpack.c.l.s4 1966171168
      %v1575 = vunpack.c.0.s8 %v1574
      %v1576 = vlaneseq
      %v1577 = vshrl.u32 %v1576, 7
      %v1578 = vsub.s32 %v1575, %v1577
      %v1579 = vrot.slane %v1557, %v1578
      %v1581 = vunpack.c.l.s4 1966171168
      %v1582 = vunpack.c.0.s8 %v1581
      %v1583 = vlaneseq
      %v1584 = vshrl.u32 %v1583, 7
      %v1585 = vsub.s32 %v1582, %v1584
      %v1586 = vrot.slane %v1558, %v1585
      %v1587 = vcombine.high %v1565, %v1565
      %v1588 = vcombine.high %v1572, %v1572
      %v1589 = vcombine.high %v1579, %v1579
      %v1590 = vcombine.high %v1586, %v1586
      %v1591 = vcombine.high %v780, %v780
      %v1593 = vunpack.c.l.s4 1966171168
      %v1594 = vunpack.c.0.s8 %v1593
      %v1595 = vlaneseq
      %v1596 = vshrl.u32 %v1595, 7
      %v1597 = vsub.s32 %v1594, %v1596
      %v1598 = vrot.slane %v780, %v1597
      %v1600 = vunpack.c.l.s4 1966171168
      %v1601 = vunpack.c.0.s8 %v1600
      %v1602 = vlaneseq
      %v1603 = vshrl.u32 %v1602, 7
      %v1604 = vsub.s32 %v1601, %v1603
      %v1605 = vrot.slane %v1591, %v1604
      %v1606 = vcombine.high %v1598, %v1598
      %v1607 = vcombine.high %v1605, %v1605
      %v1609 = vunpack.c.l.s4 1966171168
      %v1610 = vunpack.c.0.s8 %v1609
      %v1611 = vlaneseq
      %v1612 = vshrl.u32 %v1611, 7
      %v1613 = vsub.s32 %v1610, %v1612
      %v1614 = vrot.slane %v1598, %v1613
      %v1616 = vunpack.c.l.s4 1966171168
      %v1617 = vunpack.c.0.s8 %v1616
      %v1618 = vlaneseq
      %v1619 = vshrl.u32 %v1618, 7
      %v1620 = vsub.s32 %v1617, %v1619
      %v1621 = vrot.slane %v1605, %v1620
      %v1623 = vunpack.c.l.s4 1966171168
      %v1624 = vunpack.c.0.s8 %v1623
      %v1625 = vlaneseq
      %v1626 = vshrl.u32 %v1625, 7
      %v1627 = vsub.s32 %v1624, %v1626
      %v1628 = vrot.slane %v1606, %v1627
      %v1630 = vunpack.c.l.s4 1966171168
      %v1631 = vunpack.c.0.s8 %v1630
      %v1632 = vlaneseq
      %v1633 = vshrl.u32 %v1632, 7
      %v1634 = vsub.s32 %v1631, %v1633
      %v1635 = vrot.slane %v1607, %v1634
      %v1636 = vcombine.high %v1614, %v1614
      %v1637 = vcombine.high %v1621, %v1621
      %v1638 = vcombine.high %v1628, %v1628
      %v1639 = vcombine.high %v1635, %v1635
      %v1640 = vcombine.high %v785, %v785
      %v1642 = vunpack.c.l.s4 1966171168
      %v1643 = vunpack.c.0.s8 %v1642
      %v1644 = vlaneseq
      %v1645 = vshrl.u32 %v1644, 7
      %v1646 = vsub.s32 %v1643, %v1645
      %v1647 = vrot.slane %v785, %v1646
      %v1649 = vunpack.c.l.s4 1966171168
      %v1650 = vunpack.c.0.s8 %v1649
      %v1651 = vlaneseq
      %v1652 = vshrl.u32 %v1651, 7
      %v1653 = vsub.s32 %v1650, %v1652
      %v1654 = vrot.slane %v1640, %v1653
      %v1655 = vcombine.high %v1647, %v1647
      %v1656 = vcombine.high %v1654, %v1654
      %v1658 = vunpack.c.l.s4 1966171168
      %v1659 = vunpack.c.0.s8 %v1658
      %v1660 = vlaneseq
      %v1661 = vshrl.u32 %v1660, 7
      %v1662 = vsub.s32 %v1659, %v1661
      %v1663 = vrot.slane %v1647, %v1662
      %v1665 = vunpack.c.l.s4 1966171168
      %v1666 = vunpack.c.0.s8 %v1665
      %v1667 = vlaneseq
      %v1668 = vshrl.u32 %v1667, 7
      %v1669 = vsub.s32 %v1666, %v1668
      %v1670 = vrot.slane %v1654, %v1669
      %v1672 = vunpack.c.l.s4 1966171168
      %v1673 = vunpack.c.0.s8 %v1672
      %v1674 = vlaneseq
      %v1675 = vshrl.u32 %v1674, 7
      %v1676 = vsub.s32 %v1673, %v1675
      %v1677 = vrot.slane %v1655, %v1676
      %v1679 = vunpack.c.l.s4 1966171168
      %v1680 = vunpack.c.0.s8 %v1679
      %v1681 = vlaneseq
      %v1682 = vshrl.u32 %v1681, 7
      %v1683 = vsub.s32 %v1680, %v1682
      %v1684 = vrot.slane %v1656, %v1683
      %v1685 = vcombine.high %v1663, %v1663
      %v1686 = vcombine.high %v1670, %v1670
      %v1687 = vcombine.high %v1677, %v1677
      %v1688 = vcombine.high %v1684, %v1684
      %v1689 = vcombine.high %v788, %v788
      %v1691 = vunpack.c.l.s4 1966171168
      %v1692 = vunpack.c.0.s8 %v1691
      %v1693 = vlaneseq
      %v1694 = vshrl.u32 %v1693, 7
      %v1695 = vsub.s32 %v1692, %v1694
      %v1696 = vrot.slane %v788, %v1695
      %v1698 = vunpack.c.l.s4 1966171168
      %v1699 = vunpack.c.0.s8 %v1698
      %v1700 = vlaneseq
      %v1701 = vshrl.u32 %v1700, 7
      %v1702 = vsub.s32 %v1699, %v1701
      %v1703 = vrot.slane %v1689, %v1702
      %v1704 = vcombine.high %v1696, %v1696
      %v1705 = vcombine.high %v1703, %v1703
      %v1707 = vunpack.c.l.s4 1966171168
      %v1708 = vunpack.c.0.s8 %v1707
      %v1709 = vlaneseq
      %v1710 = vshrl.u32 %v1709, 7
      %v1711 = vsub.s32 %v1708, %v1710
      %v1712 = vrot.slane %v1696, %v1711
      %v1714 = vunpack.c.l.s4 1966171168
      %v1715 = vunpack.c.0.s8 %v1714
      %v1716 = vlaneseq
      %v1717 = vshrl.u32 %v1716, 7
      %v1718 = vsub.s32 %v1715, %v1717
      %v1719 = vrot.slane %v1703, %v1718
      %v1721 = vunpack.c.l.s4 1966171168
      %v1722 = vunpack.c.0.s8 %v1721
      %v1723 = vlaneseq
      %v1724 = vshrl.u32 %v1723, 7
      %v1725 = vsub.s32 %v1722, %v1724
      %v1726 = vrot.slane %v1704, %v1725
      %v1728 = vunpack.c.l.s4 1966171168
      %v1729 = vunpack.c.0.s8 %v1728
      %v1730 = vlaneseq
      %v1731 = vshrl.u32 %v1730, 7
      %v1732 = vsub.s32 %v1729, %v1731
      %v1733 = vrot.slane %v1705, %v1732
      %v1734 = vcombine.high %v1712, %v1712
      %v1735 = vcombine.high %v1719, %v1719
      %v1736 = vcombine.high %v1726, %v1726
      %v1737 = vcombine.high %v1733, %v1733
      %v1738 = vld [vmem:[%s9] sm:$0xff]
      %v1739 = vld [vmem:[%s9 + $0x8] sm:$0xff]
      %v1740 = vld [vmem:[%s9 + $0x10] sm:$0xff]
      %v1741 = vld [vmem:[%s9 + $0x18] sm:$0xff]
      %v1742 = vld [vmem:[%s9 + $0x20] sm:$0xff]
      %v1743 = vld [vmem:[%s9 + $0x28] sm:$0xff]
      %v1744 = vld [vmem:[%s9 + $0x30] sm:$0xff]
      %v1745 = vld [vmem:[%s9 + $0x38] sm:$0xff]
      %v1746 = vld [vmem:[%s9 + $0x40] sm:$0xff]
      %v1747 = vld [vmem:[%s9 + $0x48] sm:$0xff]
      %v1748 = vld [vmem:[%s9 + $0x50] sm:$0xff]
      %v1749 = vld [vmem:[%s9 + $0x58] sm:$0xff]
      %v1750 = vld [vmem:[%s9 + $0x60] sm:$0xff]
      %v1751 = vld [vmem:[%s9 + $0x68] sm:$0xff]
      %v1752 = vld [vmem:[%s9 + $0x70] sm:$0xff]
      %v1753 = vld [vmem:[%s9 + $0x78] sm:$0xff]
      %v1754 = vld [vmem:[%s9 + $0x80] sm:$0xff]
      %v1755 = vld [vmem:[%s9 + $0x88] sm:$0xff]
      %v1756 = vld [vmem:[%s9 + $0x90] sm:$0xff]
      %v1757 = vld [vmem:[%s9 + $0x98] sm:$0xff]
      %v1758 = vld [vmem:[%s9 + $0xa0] sm:$0xff]
      %v1759 = vld [vmem:[%s9 + $0xa8] sm:$0xff]
      %v1760 = vld [vmem:[%s9 + $0xb0] sm:$0xff]
      %v1761 = vld [vmem:[%s9 + $0xb8] sm:$0xff]
      %v1762 = vld [vmem:[%s9 + $0xc0] sm:$0xff]
      %v1763 = vld [vmem:[%s9 + $0xc8] sm:$0xff]
      %v1764 = vld [vmem:[%s9 + $0xd0] sm:$0xff]
      %v1765 = vld [vmem:[%s9 + $0xd8] sm:$0xff]
      %v1766 = vld [vmem:[%s9 + $0xe0] sm:$0xff]
      %v1767 = vld [vmem:[%s9 + $0xe8] sm:$0xff]
      %v1768 = vld [vmem:[%s9 + $0xf0] sm:$0xff]
      %v1769 = vld [vmem:[%s9 + $0xf8] sm:$0xff]
      %v1770 = vld [vmem:[%s9 + $0x100] sm:$0xff]
      %v1771 = vld [vmem:[%s9 + $0x108] sm:$0xff]
      %v1772 = vld [vmem:[%s9 + $0x110] sm:$0xff]
      %v1773 = vld [vmem:[%s9 + $0x118] sm:$0xff]
      %v1774 = vld [vmem:[%s9 + $0x120] sm:$0xff]
      %v1775 = vld [vmem:[%s9 + $0x128] sm:$0xff]
      %v1776 = vld [vmem:[%s9 + $0x130] sm:$0xff]
      %v1777 = vld [vmem:[%s9 + $0x138] sm:$0xff]
      %v1778 = vld [vmem:[%s9 + $0x140] sm:$0xff]
      %v1779 = vld [vmem:[%s9 + $0x148] sm:$0xff]
      %v1780 = vld [vmem:[%s9 + $0x150] sm:$0xff]
      %v1781 = vld [vmem:[%s9 + $0x158] sm:$0xff]
      %v1782 = vld [vmem:[%s9 + $0x160] sm:$0xff]
      %v1783 = vld [vmem:[%s9 + $0x168] sm:$0xff]
      %v1784 = vld [vmem:[%s9 + $0x170] sm:$0xff]
      %v1785 = vld [vmem:[%s9 + $0x178] sm:$0xff]
      %v1786 = vld [vmem:[%s9 + $0x180] sm:$0xff]
      %v1787 = vld [vmem:[%s9 + $0x188] sm:$0xff]
      %v1788 = vld [vmem:[%s9 + $0x190] sm:$0xff]
      %v1789 = vld [vmem:[%s9 + $0x198] sm:$0xff]
      %v1790 = vld [vmem:[%s9 + $0x1a0] sm:$0xff]
      %v1791 = vld [vmem:[%s9 + $0x1a8] sm:$0xff]
      %v1792 = vld [vmem:[%s9 + $0x1b0] sm:$0xff]
      %v1793 = vld [vmem:[%s9 + $0x1b8] sm:$0xff]
      %v1794 = vld [vmem:[%s9 + $0x1c0] sm:$0xff]
      %v1795 = vld [vmem:[%s9 + $0x1c8] sm:$0xff]
      %v1796 = vld [vmem:[%s9 + $0x1d0] sm:$0xff]
      %v1797 = vld [vmem:[%s9 + $0x1d8] sm:$0xff]
      %v1798 = vld [vmem:[%s9 + $0x1e0] sm:$0xff]
      %v1799 = vld [vmem:[%s9 + $0x1e8] sm:$0xff]
      %v1800 = vld [vmem:[%s9 + $0x1f0] sm:$0xff]
      %v1801 = vld [vmem:[%s9 + $0x1f8] sm:$0xff]
      %v1802 = vlaneseq
      %v1803 = vshrl.u32 %v1802, 7
      %v1804 = vsub.s32 0, %v1803
      %v1805 = vrot.slane %v1369, %v1804
      %v1806 = vlaneseq
      %v1807 = vshrl.u32 %v1806, 7
      %v1808 = vsub.s32 0, %v1807
      %v1809 = vrot.slane %v1383, %v1808
      %v1810 = vlaneseq
      %v1811 = vshrl.u32 %v1810, 7
      %v1812 = vsub.s32 0, %v1811
      %v1813 = vrot.slane %v1391, %v1812
      %v1814 = vlaneseq
      %v1815 = vshrl.u32 %v1814, 7
      %v1816 = vsub.s32 0, %v1815
      %v1817 = vrot.slane %v1393, %v1816
      %v1818 = vlaneseq
      %v1819 = vshrl.u32 %v1818, 7
      %v1820 = vsub.s32 0, %v1819
      %v1821 = vrot.slane %v1376, %v1820
      %v1822 = vlaneseq
      %v1823 = vshrl.u32 %v1822, 7
      %v1824 = vsub.s32 0, %v1823
      %v1825 = vrot.slane %v1390, %v1824
      %v1826 = vlaneseq
      %v1827 = vshrl.u32 %v1826, 7
      %v1828 = vsub.s32 0, %v1827
      %v1829 = vrot.slane %v1392, %v1828
      %v1830 = vlaneseq
      %v1831 = vshrl.u32 %v1830, 7
      %v1832 = vsub.s32 0, %v1831
      %v1833 = vrot.slane %v1394, %v1832
      %v1834 = vlaneseq
      %v1835 = vshrl.u32 %v1834, 7
      %v1836 = vsub.s32 0, %v1835
      %v1837 = vrot.slane %v1418, %v1836
      %v1838 = vlaneseq
      %v1839 = vshrl.u32 %v1838, 7
      %v1840 = vsub.s32 0, %v1839
      %v1841 = vrot.slane %v1432, %v1840
      %v1842 = vlaneseq
      %v1843 = vshrl.u32 %v1842, 7
      %v1844 = vsub.s32 0, %v1843
      %v1845 = vrot.slane %v1440, %v1844
      %v1846 = vlaneseq
      %v1847 = vshrl.u32 %v1846, 7
      %v1848 = vsub.s32 0, %v1847
      %v1849 = vrot.slane %v1442, %v1848
      %v1850 = vlaneseq
      %v1851 = vshrl.u32 %v1850, 7
      %v1852 = vsub.s32 0, %v1851
      %v1853 = vrot.slane %v1425, %v1852
      %v1854 = vlaneseq
      %v1855 = vshrl.u32 %v1854, 7
      %v1856 = vsub.s32 0, %v1855
      %v1857 = vrot.slane %v1439, %v1856
      %v1858 = vlaneseq
      %v1859 = vshrl.u32 %v1858, 7
      %v1860 = vsub.s32 0, %v1859
      %v1861 = vrot.slane %v1441, %v1860
      %v1862 = vlaneseq
      %v1863 = vshrl.u32 %v1862, 7
      %v1864 = vsub.s32 0, %v1863
      %v1865 = vrot.slane %v1443, %v1864
      %v1866 = vlaneseq
      %v1867 = vshrl.u32 %v1866, 7
      %v1868 = vsub.s32 0, %v1867
      %v1869 = vrot.slane %v1467, %v1868
      %v1870 = vlaneseq
      %v1871 = vshrl.u32 %v1870, 7
      %v1872 = vsub.s32 0, %v1871
      %v1873 = vrot.slane %v1481, %v1872
      %v1874 = vlaneseq
      %v1875 = vshrl.u32 %v1874, 7
      %v1876 = vsub.s32 0, %v1875
      %v1877 = vrot.slane %v1489, %v1876
      %v1878 = vlaneseq
      %v1879 = vshrl.u32 %v1878, 7
      %v1880 = vsub.s32 0, %v1879
      %v1881 = vrot.slane %v1491, %v1880
      %v1882 = vlaneseq
      %v1883 = vshrl.u32 %v1882, 7
      %v1884 = vsub.s32 0, %v1883
      %v1885 = vrot.slane %v1474, %v1884
      %v1886 = vlaneseq
      %v1887 = vshrl.u32 %v1886, 7
      %v1888 = vsub.s32 0, %v1887
      %v1889 = vrot.slane %v1488, %v1888
      %v1890 = vlaneseq
      %v1891 = vshrl.u32 %v1890, 7
      %v1892 = vsub.s32 0, %v1891
      %v1893 = vrot.slane %v1490, %v1892
      %v1894 = vlaneseq
      %v1895 = vshrl.u32 %v1894, 7
      %v1896 = vsub.s32 0, %v1895
      %v1897 = vrot.slane %v1492, %v1896
      %v1898 = vlaneseq
      %v1899 = vshrl.u32 %v1898, 7
      %v1900 = vsub.s32 0, %v1899
      %v1901 = vrot.slane %v1516, %v1900
      %v1902 = vlaneseq
      %v1903 = vshrl.u32 %v1902, 7
      %v1904 = vsub.s32 0, %v1903
      %v1905 = vrot.slane %v1530, %v1904
      %v1906 = vlaneseq
      %v1907 = vshrl.u32 %v1906, 7
      %v1908 = vsub.s32 0, %v1907
      %v1909 = vrot.slane %v1538, %v1908
      %v1910 = vlaneseq
      %v1911 = vshrl.u32 %v1910, 7
      %v1912 = vsub.s32 0, %v1911
      %v1913 = vrot.slane %v1540, %v1912
      %v1914 = vlaneseq
      %v1915 = vshrl.u32 %v1914, 7
      %v1916 = vsub.s32 0, %v1915
      %v1917 = vrot.slane %v1523, %v1916
      %v1918 = vlaneseq
      %v1919 = vshrl.u32 %v1918, 7
      %v1920 = vsub.s32 0, %v1919
      %v1921 = vrot.slane %v1537, %v1920
      %v1922 = vlaneseq
      %v1923 = vshrl.u32 %v1922, 7
      %v1924 = vsub.s32 0, %v1923
      %v1925 = vrot.slane %v1539, %v1924
      %v1926 = vlaneseq
      %v1927 = vshrl.u32 %v1926, 7
      %v1928 = vsub.s32 0, %v1927
      %v1929 = vrot.slane %v1541, %v1928
      %v1930 = vlaneseq
      %v1931 = vshrl.u32 %v1930, 7
      %v1932 = vsub.s32 0, %v1931
      %v1933 = vrot.slane %v1565, %v1932
      %v1934 = vlaneseq
      %v1935 = vshrl.u32 %v1934, 7
      %v1936 = vsub.s32 0, %v1935
      %v1937 = vrot.slane %v1579, %v1936
      %v1938 = vlaneseq
      %v1939 = vshrl.u32 %v1938, 7
      %v1940 = vsub.s32 0, %v1939
      %v1941 = vrot.slane %v1587, %v1940
      %v1942 = vlaneseq
      %v1943 = vshrl.u32 %v1942, 7
      %v1944 = vsub.s32 0, %v1943
      %v1945 = vrot.slane %v1589, %v1944
      %v1946 = vlaneseq
      %v1947 = vshrl.u32 %v1946, 7
      %v1948 = vsub.s32 0, %v1947
      %v1949 = vrot.slane %v1572, %v1948
      %v1950 = vlaneseq
      %v1951 = vshrl.u32 %v1950, 7
      %v1952 = vsub.s32 0, %v1951
      %v1953 = vrot.slane %v1586, %v1952
      %v1954 = vlaneseq
      %v1955 = vshrl.u32 %v1954, 7
      %v1956 = vsub.s32 0, %v1955
      %v1957 = vrot.slane %v1588, %v1956
      %v1958 = vlaneseq
      %v1959 = vshrl.u32 %v1958, 7
      %v1960 = vsub.s32 0, %v1959
      %v1961 = vrot.slane %v1590, %v1960
      %v1962 = vlaneseq
      %v1963 = vshrl.u32 %v1962, 7
      %v1964 = vsub.s32 0, %v1963
      %v1965 = vrot.slane %v1614, %v1964
      %v1966 = vlaneseq
      %v1967 = vshrl.u32 %v1966, 7
      %v1968 = vsub.s32 0, %v1967
      %v1969 = vrot.slane %v1628, %v1968
      %v1970 = vlaneseq
      %v1971 = vshrl.u32 %v1970, 7
      %v1972 = vsub.s32 0, %v1971
      %v1973 = vrot.slane %v1636, %v1972
      %v1974 = vlaneseq
      %v1975 = vshrl.u32 %v1974, 7
      %v1976 = vsub.s32 0, %v1975
      %v1977 = vrot.slane %v1638, %v1976
      %v1978 = vlaneseq
      %v1979 = vshrl.u32 %v1978, 7
      %v1980 = vsub.s32 0, %v1979
      %v1981 = vrot.slane %v1621, %v1980
      %v1982 = vlaneseq
      %v1983 = vshrl.u32 %v1982, 7
      %v1984 = vsub.s32 0, %v1983
      %v1985 = vrot.slane %v1635, %v1984
      %v1986 = vlaneseq
      %v1987 = vshrl.u32 %v1986, 7
      %v1988 = vsub.s32 0, %v1987
      %v1989 = vrot.slane %v1637, %v1988
      %v1990 = vlaneseq
      %v1991 = vshrl.u32 %v1990, 7
      %v1992 = vsub.s32 0, %v1991
      %v1993 = vrot.slane %v1639, %v1992
      %v1994 = vlaneseq
      %v1995 = vshrl.u32 %v1994, 7
      %v1996 = vsub.s32 0, %v1995
      %v1997 = vrot.slane %v1663, %v1996
      %v1998 = vlaneseq
      %v1999 = vshrl.u32 %v1998, 7
      %v2000 = vsub.s32 0, %v1999
      %v2001 = vrot.slane %v1677, %v2000
      %v2002 = vlaneseq
      %v2003 = vshrl.u32 %v2002, 7
      %v2004 = vsub.s32 0, %v2003
      %v2005 = vrot.slane %v1685, %v2004
      %v2006 = vlaneseq
      %v2007 = vshrl.u32 %v2006, 7
      %v2008 = vsub.s32 0, %v2007
      %v2009 = vrot.slane %v1687, %v2008
      %v2010 = vlaneseq
      %v2011 = vshrl.u32 %v2010, 7
      %v2012 = vsub.s32 0, %v2011
      %v2013 = vrot.slane %v1670, %v2012
      %v2014 = vlaneseq
      %v2015 = vshrl.u32 %v2014, 7
      %v2016 = vsub.s32 0, %v2015
      %v2017 = vrot.slane %v1684, %v2016
      %v2018 = vlaneseq
      %v2019 = vshrl.u32 %v2018, 7
      %v2020 = vsub.s32 0, %v2019
      %v2021 = vrot.slane %v1686, %v2020
      %v2022 = vlaneseq
      %v2023 = vshrl.u32 %v2022, 7
      %v2024 = vsub.s32 0, %v2023
      %v2025 = vrot.slane %v1688, %v2024
      %v2026 = vlaneseq
      %v2027 = vshrl.u32 %v2026, 7
      %v2028 = vsub.s32 0, %v2027
      %v2029 = vrot.slane %v1712, %v2028
      %v2030 = vlaneseq
      %v2031 = vshrl.u32 %v2030, 7
      %v2032 = vsub.s32 0, %v2031
      %v2033 = vrot.slane %v1726, %v2032
      %v2034 = vlaneseq
      %v2035 = vshrl.u32 %v2034, 7
      %v2036 = vsub.s32 0, %v2035
      %v2037 = vrot.slane %v1734, %v2036
      %v2038 = vlaneseq
      %v2039 = vshrl.u32 %v2038, 7
      %v2040 = vsub.s32 0, %v2039
      %v2041 = vrot.slane %v1736, %v2040
      %v2042 = vlaneseq
      %v2043 = vshrl.u32 %v2042, 7
      %v2044 = vsub.s32 0, %v2043
      %v2045 = vrot.slane %v1719, %v2044
      %v2046 = vlaneseq
      %v2047 = vshrl.u32 %v2046, 7
      %v2048 = vsub.s32 0, %v2047
      %v2049 = vrot.slane %v1733, %v2048
      %v2050 = vlaneseq
      %v2051 = vshrl.u32 %v2050, 7
      %v2052 = vsub.s32 0, %v2051
      %v2053 = vrot.slane %v1735, %v2052
      %v2054 = vlaneseq
      %v2055 = vshrl.u32 %v2054, 7
      %v2056 = vsub.s32 0, %v2055
      %v2057 = vrot.slane %v1737, %v2056
      %v2122 = vmul.f32 %v1805, %v1738
      %v2123 = vmul.f32 %v1809, %v1739
      %v2124 = vmul.f32 %v1813, %v1740
      %v2125 = vmul.f32 %v1817, %v1741
      %v2126 = vmul.f32 %v1821, %v1742
      %v2127 = vmul.f32 %v1825, %v1743
      %v2128 = vmul.f32 %v1829, %v1744
      %v2129 = vmul.f32 %v1833, %v1745
      %v2130 = vmul.f32 %v1837, %v1746
      %v2131 = vmul.f32 %v1841, %v1747
      %v2132 = vmul.f32 %v1845, %v1748
      %v2133 = vmul.f32 %v1849, %v1749
      %v2134 = vmul.f32 %v1853, %v1750
      %v2135 = vmul.f32 %v1857, %v1751
      %v2136 = vmul.f32 %v1861, %v1752
      %v2137 = vmul.f32 %v1865, %v1753
      %v2138 = vmul.f32 %v1869, %v1754
      %v2139 = vmul.f32 %v1873, %v1755
      %v2140 = vmul.f32 %v1877, %v1756
      %v2141 = vmul.f32 %v1881, %v1757
      %v2142 = vmul.f32 %v1885, %v1758
      %v2143 = vmul.f32 %v1889, %v1759
      %v2144 = vmul.f32 %v1893, %v1760
      %v2145 = vmul.f32 %v1897, %v1761
      %v2146 = vmul.f32 %v1901, %v1762
      %v2147 = vmul.f32 %v1905, %v1763
      %v2148 = vmul.f32 %v1909, %v1764
      %v2149 = vmul.f32 %v1913, %v1765
      %v2150 = vmul.f32 %v1917, %v1766
      %v2151 = vmul.f32 %v1921, %v1767
      %v2152 = vmul.f32 %v1925, %v1768
      %v2153 = vmul.f32 %v1929, %v1769
      %v2154 = vmul.f32 %v1933, %v1770
      %v2155 = vmul.f32 %v1937, %v1771
      %v2156 = vmul.f32 %v1941, %v1772
      %v2157 = vmul.f32 %v1945, %v1773
      %v2158 = vmul.f32 %v1949, %v1774
      %v2159 = vmul.f32 %v1953, %v1775
      %v2160 = vmul.f32 %v1957, %v1776
      %v2161 = vmul.f32 %v1961, %v1777
      %v2162 = vmul.f32 %v1965, %v1778
      %v2163 = vmul.f32 %v1969, %v1779
      %v2164 = vmul.f32 %v1973, %v1780
      %v2165 = vmul.f32 %v1977, %v1781
      %v2166 = vmul.f32 %v1981, %v1782
      %v2167 = vmul.f32 %v1985, %v1783
      %v2168 = vmul.f32 %v1989, %v1784
      %v2169 = vmul.f32 %v1993, %v1785
      %v2170 = vmul.f32 %v1997, %v1786
      %v2171 = vmul.f32 %v2001, %v1787
      %v2172 = vmul.f32 %v2005, %v1788
      %v2173 = vmul.f32 %v2009, %v1789
      %v2174 = vmul.f32 %v2013, %v1790
      %v2175 = vmul.f32 %v2017, %v1791
      %v2176 = vmul.f32 %v2021, %v1792
      %v2177 = vmul.f32 %v2025, %v1793
      %v2178 = vmul.f32 %v2029, %v1794
      %v2179 = vmul.f32 %v2033, %v1795
      %v2180 = vmul.f32 %v2037, %v1796
      %v2181 = vmul.f32 %v2041, %v1797
      %v2182 = vmul.f32 %v2045, %v1798
      %v2183 = vmul.f32 %v2049, %v1799
      %v2184 = vmul.f32 %v2053, %v1800
      %v2185 = vmul.f32 %v2057, %v1801
      %v2186 = vsel %vm969, %v2122, 0.0
      %2187 = vadd.xlane.f32.xlu0 %v2186
      %v2188 = vpop.xlane.xlu0 %2187
      %v2189 = vsel %vm969, %v2123, 0.0
      %2190 = vadd.xlane.f32.xlu0 %v2189
      %v2191 = vpop.xlane.xlu0 %2190
      %v2192 = vsel %vm969, %v2124, 0.0
      %2193 = vadd.xlane.f32.xlu0 %v2192
      %v2194 = vpop.xlane.xlu0 %2193
      %v2195 = vsel %vm969, %v2125, 0.0
      %2196 = vadd.xlane.f32.xlu0 %v2195
      %v2197 = vpop.xlane.xlu0 %2196
      %v2198 = vsel %vm969, %v2126, 0.0
      %2199 = vadd.xlane.f32.xlu0 %v2198
      %v2200 = vpop.xlane.xlu0 %2199
      %v2201 = vsel %vm969, %v2127, 0.0
      %2202 = vadd.xlane.f32.xlu0 %v2201
      %v2203 = vpop.xlane.xlu0 %2202
      %v2204 = vsel %vm969, %v2128, 0.0
      %2205 = vadd.xlane.f32.xlu0 %v2204
      %v2206 = vpop.xlane.xlu0 %2205
      %v2207 = vsel %vm969, %v2129, 0.0
      %2208 = vadd.xlane.f32.xlu0 %v2207
      %v2209 = vpop.xlane.xlu0 %2208
      %v2210 = vsel %vm969, %v2130, 0.0
      %2211 = vadd.xlane.f32.xlu0 %v2210
      %v2212 = vpop.xlane.xlu0 %2211
      %v2213 = vsel %vm969, %v2131, 0.0
      %2214 = vadd.xlane.f32.xlu0 %v2213
      %v2215 = vpop.xlane.xlu0 %2214
      %v2216 = vsel %vm969, %v2132, 0.0
      %2217 = vadd.xlane.f32.xlu0 %v2216
      %v2218 = vpop.xlane.xlu0 %2217
      %v2219 = vsel %vm969, %v2133, 0.0
      %2220 = vadd.xlane.f32.xlu0 %v2219
      %v2221 = vpop.xlane.xlu0 %2220
      %v2222 = vsel %vm969, %v2134, 0.0
      %2223 = vadd.xlane.f32.xlu0 %v2222
      %v2224 = vpop.xlane.xlu0 %2223
      %v2225 = vsel %vm969, %v2135, 0.0
      %2226 = vadd.xlane.f32.xlu0 %v2225
      %v2227 = vpop.xlane.xlu0 %2226
      %v2228 = vsel %vm969, %v2136, 0.0
      %2229 = vadd.xlane.f32.xlu0 %v2228
      %v2230 = vpop.xlane.xlu0 %2229
      %v2231 = vsel %vm969, %v2137, 0.0
      %2232 = vadd.xlane.f32.xlu0 %v2231
      %v2233 = vpop.xlane.xlu0 %2232
      %v2234 = vsel %vm969, %v2138, 0.0
      %2235 = vadd.xlane.f32.xlu0 %v2234
      %v2236 = vpop.xlane.xlu0 %2235
      %v2237 = vsel %vm969, %v2139, 0.0
      %2238 = vadd.xlane.f32.xlu0 %v2237
      %v2239 = vpop.xlane.xlu0 %2238
      %v2240 = vsel %vm969, %v2140, 0.0
      %2241 = vadd.xlane.f32.xlu0 %v2240
      %v2242 = vpop.xlane.xlu0 %2241
      %v2243 = vsel %vm969, %v2141, 0.0
      %2244 = vadd.xlane.f32.xlu0 %v2243
      %v2245 = vpop.xlane.xlu0 %2244
      %v2246 = vsel %vm969, %v2142, 0.0
      %2247 = vadd.xlane.f32.xlu0 %v2246
      %v2248 = vpop.xlane.xlu0 %2247
      %v2249 = vsel %vm969, %v2143, 0.0
      %2250 = vadd.xlane.f32.xlu0 %v2249
      %v2251 = vpop.xlane.xlu0 %2250
      %v2252 = vsel %vm969, %v2144, 0.0
      %2253 = vadd.xlane.f32.xlu0 %v2252
      %v2254 = vpop.xlane.xlu0 %2253
      %v2255 = vsel %vm969, %v2145, 0.0
      %2256 = vadd.xlane.f32.xlu0 %v2255
      %v2257 = vpop.xlane.xlu0 %2256
      %v2258 = vsel %vm969, %v2146, 0.0
      %2259 = vadd.xlane.f32.xlu0 %v2258
      %v2260 = vpop.xlane.xlu0 %2259
      %v2261 = vsel %vm969, %v2147, 0.0
      %2262 = vadd.xlane.f32.xlu0 %v2261
      %v2263 = vpop.xlane.xlu0 %2262
      %v2264 = vsel %vm969, %v2148, 0.0
      %2265 = vadd.xlane.f32.xlu0 %v2264
      %v2266 = vpop.xlane.xlu0 %2265
      %v2267 = vsel %vm969, %v2149, 0.0
      %2268 = vadd.xlane.f32.xlu0 %v2267
      %v2269 = vpop.xlane.xlu0 %2268
      %v2270 = vsel %vm969, %v2150, 0.0
      %2271 = vadd.xlane.f32.xlu0 %v2270
      %v2272 = vpop.xlane.xlu0 %2271
      %v2273 = vsel %vm969, %v2151, 0.0
      %2274 = vadd.xlane.f32.xlu0 %v2273
      %v2275 = vpop.xlane.xlu0 %2274
      %v2276 = vsel %vm969, %v2152, 0.0
      %2277 = vadd.xlane.f32.xlu0 %v2276
      %v2278 = vpop.xlane.xlu0 %2277
      %v2279 = vsel %vm969, %v2153, 0.0
      %2280 = vadd.xlane.f32.xlu0 %v2279
      %v2281 = vpop.xlane.xlu0 %2280
      %v2282 = vsel %vm969, %v2154, 0.0
      %2283 = vadd.xlane.f32.xlu0 %v2282
      %v2284 = vpop.xlane.xlu0 %2283
      %v2285 = vsel %vm969, %v2155, 0.0
      %2286 = vadd.xlane.f32.xlu0 %v2285
      %v2287 = vpop.xlane.xlu0 %2286
      %v2288 = vsel %vm969, %v2156, 0.0
      %2289 = vadd.xlane.f32.xlu0 %v2288
      %v2290 = vpop.xlane.xlu0 %2289
      %v2291 = vsel %vm969, %v2157, 0.0
      %2292 = vadd.xlane.f32.xlu0 %v2291
      %v2293 = vpop.xlane.xlu0 %2292
      %v2294 = vsel %vm969, %v2158, 0.0
      %2295 = vadd.xlane.f32.xlu0 %v2294
      %v2296 = vpop.xlane.xlu0 %2295
      %v2297 = vsel %vm969, %v2159, 0.0
      %2298 = vadd.xlane.f32.xlu0 %v2297
      %v2299 = vpop.xlane.xlu0 %2298
      %v2300 = vsel %vm969, %v2160, 0.0
      %2301 = vadd.xlane.f32.xlu0 %v2300
      %v2302 = vpop.xlane.xlu0 %2301
      %v2303 = vsel %vm969, %v2161, 0.0
      %2304 = vadd.xlane.f32.xlu0 %v2303
      %v2305 = vpop.xlane.xlu0 %2304
      %v2306 = vsel %vm969, %v2162, 0.0
      %2307 = vadd.xlane.f32.xlu0 %v2306
      %v2308 = vpop.xlane.xlu0 %2307
      %v2309 = vsel %vm969, %v2163, 0.0
      %2310 = vadd.xlane.f32.xlu0 %v2309
      %v2311 = vpop.xlane.xlu0 %2310
      %v2312 = vsel %vm969, %v2164, 0.0
      %2313 = vadd.xlane.f32.xlu0 %v2312
      %v2314 = vpop.xlane.xlu0 %2313
      %v2315 = vsel %vm969, %v2165, 0.0
      %2316 = vadd.xlane.f32.xlu0 %v2315
      %v2317 = vpop.xlane.xlu0 %2316
      %v2318 = vsel %vm969, %v2166, 0.0
      %2319 = vadd.xlane.f32.xlu0 %v2318
      %v2320 = vpop.xlane.xlu0 %2319
      %v2321 = vsel %vm969, %v2167, 0.0
      %2322 = vadd.xlane.f32.xlu0 %v2321
      %v2323 = vpop.xlane.xlu0 %2322
      %v2324 = vsel %vm969, %v2168, 0.0
      %2325 = vadd.xlane.f32.xlu0 %v2324
      %v2326 = vpop.xlane.xlu0 %2325
      %v2327 = vsel %vm969, %v2169, 0.0
      %2328 = vadd.xlane.f32.xlu0 %v2327
      %v2329 = vpop.xlane.xlu0 %2328
      %v2330 = vsel %vm969, %v2170, 0.0
      %2331 = vadd.xlane.f32.xlu0 %v2330
      %v2332 = vpop.xlane.xlu0 %2331
      %v2333 = vsel %vm969, %v2171, 0.0
      %2334 = vadd.xlane.f32.xlu0 %v2333
      %v2335 = vpop.xlane.xlu0 %2334
      %v2336 = vsel %vm969, %v2172, 0.0
      %2337 = vadd.xlane.f32.xlu0 %v2336
      %v2338 = vpop.xlane.xlu0 %2337
      %v2339 = vsel %vm969, %v2173, 0.0
      %2340 = vadd.xlane.f32.xlu0 %v2339
      %v2341 = vpop.xlane.xlu0 %2340
      %v2342 = vsel %vm969, %v2174, 0.0
      %2343 = vadd.xlane.f32.xlu0 %v2342
      %v2344 = vpop.xlane.xlu0 %2343
      %v2345 = vsel %vm969, %v2175, 0.0
      %2346 = vadd.xlane.f32.xlu0 %v2345
      %v2347 = vpop.xlane.xlu0 %2346
      %v2348 = vsel %vm969, %v2176, 0.0
      %2349 = vadd.xlane.f32.xlu0 %v2348
      %v2350 = vpop.xlane.xlu0 %2349
      %v2351 = vsel %vm969, %v2177, 0.0
      %2352 = vadd.xlane.f32.xlu0 %v2351
      %v2353 = vpop.xlane.xlu0 %2352
      %v2354 = vsel %vm969, %v2178, 0.0
      %2355 = vadd.xlane.f32.xlu0 %v2354
      %v2356 = vpop.xlane.xlu0 %2355
      %v2357 = vsel %vm969, %v2179, 0.0
      %2358 = vadd.xlane.f32.xlu0 %v2357
      %v2359 = vpop.xlane.xlu0 %2358
      %v2360 = vsel %vm969, %v2180, 0.0
      %2361 = vadd.xlane.f32.xlu0 %v2360
      %v2362 = vpop.xlane.xlu0 %2361
      %v2363 = vsel %vm969, %v2181, 0.0
      %2364 = vadd.xlane.f32.xlu0 %v2363
      %v2365 = vpop.xlane.xlu0 %2364
      %v2366 = vsel %vm969, %v2182, 0.0
      %2367 = vadd.xlane.f32.xlu0 %v2366
      %v2368 = vpop.xlane.xlu0 %2367
      %v2369 = vsel %vm969, %v2183, 0.0
      %2370 = vadd.xlane.f32.xlu0 %v2369
      %v2371 = vpop.xlane.xlu0 %2370
      %v2372 = vsel %vm969, %v2184, 0.0
      %2373 = vadd.xlane.f32.xlu0 %v2372
      %v2374 = vpop.xlane.xlu0 %2373
      %v2375 = vsel %vm969, %v2185, 0.0
      %2376 = vadd.xlane.f32.xlu0 %v2375
      %v2377 = vpop.xlane.xlu0 %2376
      %v2442 = vlaneseq
      %v2443 = vand.u32 %v2442, 127
      %v2444 = vadd.s32 %v2443, 4294967288
      %v2445 = vlaneseq
      %v2446 = vshrl.u32 %v2445, 7
      %v2447 = vsub.s32 %v2444, %v2446
      %v2448 = vrot.slane %v2188, %v2447
      %v2449 = vlaneseq
      %v2450 = vshrl.u32 %v2449, 7
      %v2451 = vsub.s32 %v2444, %v2450
      %v2452 = vrot.slane %v2191, %v2451
      %v2453 = vlaneseq
      %v2454 = vshrl.u32 %v2453, 7
      %v2455 = vsub.s32 %v2444, %v2454
      %v2456 = vrot.slane %v2194, %v2455
      %v2457 = vlaneseq
      %v2458 = vshrl.u32 %v2457, 7
      %v2459 = vsub.s32 %v2444, %v2458
      %v2460 = vrot.slane %v2197, %v2459
      %v2461 = vlaneseq
      %v2462 = vshrl.u32 %v2461, 7
      %v2463 = vsub.s32 %v2444, %v2462
      %v2464 = vrot.slane %v2200, %v2463
      %v2465 = vlaneseq
      %v2466 = vshrl.u32 %v2465, 7
      %v2467 = vsub.s32 %v2444, %v2466
      %v2468 = vrot.slane %v2203, %v2467
      %v2469 = vlaneseq
      %v2470 = vshrl.u32 %v2469, 7
      %v2471 = vsub.s32 %v2444, %v2470
      %v2472 = vrot.slane %v2206, %v2471
      %v2473 = vlaneseq
      %v2474 = vshrl.u32 %v2473, 7
      %v2475 = vsub.s32 %v2444, %v2474
      %v2476 = vrot.slane %v2209, %v2475
      %v2477 = vlaneseq
      %v2478 = vshrl.u32 %v2477, 7
      %v2479 = vsub.s32 %v2444, %v2478
      %v2480 = vrot.slane %v2212, %v2479
      %v2481 = vlaneseq
      %v2482 = vshrl.u32 %v2481, 7
      %v2483 = vsub.s32 %v2444, %v2482
      %v2484 = vrot.slane %v2215, %v2483
      %v2485 = vlaneseq
      %v2486 = vshrl.u32 %v2485, 7
      %v2487 = vsub.s32 %v2444, %v2486
      %v2488 = vrot.slane %v2218, %v2487
      %v2489 = vlaneseq
      %v2490 = vshrl.u32 %v2489, 7
      %v2491 = vsub.s32 %v2444, %v2490
      %v2492 = vrot.slane %v2221, %v2491
      %v2493 = vlaneseq
      %v2494 = vshrl.u32 %v2493, 7
      %v2495 = vsub.s32 %v2444, %v2494
      %v2496 = vrot.slane %v2224, %v2495
      %v2497 = vlaneseq
      %v2498 = vshrl.u32 %v2497, 7
      %v2499 = vsub.s32 %v2444, %v2498
      %v2500 = vrot.slane %v2227, %v2499
      %v2501 = vlaneseq
      %v2502 = vshrl.u32 %v2501, 7
      %v2503 = vsub.s32 %v2444, %v2502
      %v2504 = vrot.slane %v2230, %v2503
      %v2505 = vlaneseq
      %v2506 = vshrl.u32 %v2505, 7
      %v2507 = vsub.s32 %v2444, %v2506
      %v2508 = vrot.slane %v2233, %v2507
      %v2509 = vlaneseq
      %v2510 = vshrl.u32 %v2509, 7
      %v2511 = vsub.s32 %v2444, %v2510
      %v2512 = vrot.slane %v2236, %v2511
      %v2513 = vlaneseq
      %v2514 = vshrl.u32 %v2513, 7
      %v2515 = vsub.s32 %v2444, %v2514
      %v2516 = vrot.slane %v2239, %v2515
      %v2517 = vlaneseq
      %v2518 = vshrl.u32 %v2517, 7
      %v2519 = vsub.s32 %v2444, %v2518
      %v2520 = vrot.slane %v2242, %v2519
      %v2521 = vlaneseq
      %v2522 = vshrl.u32 %v2521, 7
      %v2523 = vsub.s32 %v2444, %v2522
      %v2524 = vrot.slane %v2245, %v2523
      %v2525 = vlaneseq
      %v2526 = vshrl.u32 %v2525, 7
      %v2527 = vsub.s32 %v2444, %v2526
      %v2528 = vrot.slane %v2248, %v2527
      %v2529 = vlaneseq
      %v2530 = vshrl.u32 %v2529, 7
      %v2531 = vsub.s32 %v2444, %v2530
      %v2532 = vrot.slane %v2251, %v2531
      %v2533 = vlaneseq
      %v2534 = vshrl.u32 %v2533, 7
      %v2535 = vsub.s32 %v2444, %v2534
      %v2536 = vrot.slane %v2254, %v2535
      %v2537 = vlaneseq
      %v2538 = vshrl.u32 %v2537, 7
      %v2539 = vsub.s32 %v2444, %v2538
      %v2540 = vrot.slane %v2257, %v2539
      %v2541 = vlaneseq
      %v2542 = vshrl.u32 %v2541, 7
      %v2543 = vsub.s32 %v2444, %v2542
      %v2544 = vrot.slane %v2260, %v2543
      %v2545 = vlaneseq
      %v2546 = vshrl.u32 %v2545, 7
      %v2547 = vsub.s32 %v2444, %v2546
      %v2548 = vrot.slane %v2263, %v2547
      %v2549 = vlaneseq
      %v2550 = vshrl.u32 %v2549, 7
      %v2551 = vsub.s32 %v2444, %v2550
      %v2552 = vrot.slane %v2266, %v2551
      %v2553 = vlaneseq
      %v2554 = vshrl.u32 %v2553, 7
      %v2555 = vsub.s32 %v2444, %v2554
      %v2556 = vrot.slane %v2269, %v2555
      %v2557 = vlaneseq
      %v2558 = vshrl.u32 %v2557, 7
      %v2559 = vsub.s32 %v2444, %v2558
      %v2560 = vrot.slane %v2272, %v2559
      %v2561 = vlaneseq
      %v2562 = vshrl.u32 %v2561, 7
      %v2563 = vsub.s32 %v2444, %v2562
      %v2564 = vrot.slane %v2275, %v2563
      %v2565 = vlaneseq
      %v2566 = vshrl.u32 %v2565, 7
      %v2567 = vsub.s32 %v2444, %v2566
      %v2568 = vrot.slane %v2278, %v2567
      %v2569 = vlaneseq
      %v2570 = vshrl.u32 %v2569, 7
      %v2571 = vsub.s32 %v2444, %v2570
      %v2572 = vrot.slane %v2281, %v2571
      %v2573 = vlaneseq
      %v2574 = vshrl.u32 %v2573, 7
      %v2575 = vsub.s32 %v2444, %v2574
      %v2576 = vrot.slane %v2284, %v2575
      %v2577 = vlaneseq
      %v2578 = vshrl.u32 %v2577, 7
      %v2579 = vsub.s32 %v2444, %v2578
      %v2580 = vrot.slane %v2287, %v2579
      %v2581 = vlaneseq
      %v2582 = vshrl.u32 %v2581, 7
      %v2583 = vsub.s32 %v2444, %v2582
      %v2584 = vrot.slane %v2290, %v2583
      %v2585 = vlaneseq
      %v2586 = vshrl.u32 %v2585, 7
      %v2587 = vsub.s32 %v2444, %v2586
      %v2588 = vrot.slane %v2293, %v2587
      %v2589 = vlaneseq
      %v2590 = vshrl.u32 %v2589, 7
      %v2591 = vsub.s32 %v2444, %v2590
      %v2592 = vrot.slane %v2296, %v2591
      %v2593 = vlaneseq
      %v2594 = vshrl.u32 %v2593, 7
      %v2595 = vsub.s32 %v2444, %v2594
      %v2596 = vrot.slane %v2299, %v2595
      %v2597 = vlaneseq
      %v2598 = vshrl.u32 %v2597, 7
      %v2599 = vsub.s32 %v2444, %v2598
      %v2600 = vrot.slane %v2302, %v2599
      %v2601 = vlaneseq
      %v2602 = vshrl.u32 %v2601, 7
      %v2603 = vsub.s32 %v2444, %v2602
      %v2604 = vrot.slane %v2305, %v2603
      %v2605 = vlaneseq
      %v2606 = vshrl.u32 %v2605, 7
      %v2607 = vsub.s32 %v2444, %v2606
      %v2608 = vrot.slane %v2308, %v2607
      %v2609 = vlaneseq
      %v2610 = vshrl.u32 %v2609, 7
      %v2611 = vsub.s32 %v2444, %v2610
      %v2612 = vrot.slane %v2311, %v2611
      %v2613 = vlaneseq
      %v2614 = vshrl.u32 %v2613, 7
      %v2615 = vsub.s32 %v2444, %v2614
      %v2616 = vrot.slane %v2314, %v2615
      %v2617 = vlaneseq
      %v2618 = vshrl.u32 %v2617, 7
      %v2619 = vsub.s32 %v2444, %v2618
      %v2620 = vrot.slane %v2317, %v2619
      %v2621 = vlaneseq
      %v2622 = vshrl.u32 %v2621, 7
      %v2623 = vsub.s32 %v2444, %v2622
      %v2624 = vrot.slane %v2320, %v2623
      %v2625 = vlaneseq
      %v2626 = vshrl.u32 %v2625, 7
      %v2627 = vsub.s32 %v2444, %v2626
      %v2628 = vrot.slane %v2323, %v2627
      %v2629 = vlaneseq
      %v2630 = vshrl.u32 %v2629, 7
      %v2631 = vsub.s32 %v2444, %v2630
      %v2632 = vrot.slane %v2326, %v2631
      %v2633 = vlaneseq
      %v2634 = vshrl.u32 %v2633, 7
      %v2635 = vsub.s32 %v2444, %v2634
      %v2636 = vrot.slane %v2329, %v2635
      %v2637 = vlaneseq
      %v2638 = vshrl.u32 %v2637, 7
      %v2639 = vsub.s32 %v2444, %v2638
      %v2640 = vrot.slane %v2332, %v2639
      %v2641 = vlaneseq
      %v2642 = vshrl.u32 %v2641, 7
      %v2643 = vsub.s32 %v2444, %v2642
      %v2644 = vrot.slane %v2335, %v2643
      %v2645 = vlaneseq
      %v2646 = vshrl.u32 %v2645, 7
      %v2647 = vsub.s32 %v2444, %v2646
      %v2648 = vrot.slane %v2338, %v2647
      %v2649 = vlaneseq
      %v2650 = vshrl.u32 %v2649, 7
      %v2651 = vsub.s32 %v2444, %v2650
      %v2652 = vrot.slane %v2341, %v2651
      %v2653 = vlaneseq
      %v2654 = vshrl.u32 %v2653, 7
      %v2655 = vsub.s32 %v2444, %v2654
      %v2656 = vrot.slane %v2344, %v2655
      %v2657 = vlaneseq
      %v2658 = vshrl.u32 %v2657, 7
      %v2659 = vsub.s32 %v2444, %v2658
      %v2660 = vrot.slane %v2347, %v2659
      %v2661 = vlaneseq
      %v2662 = vshrl.u32 %v2661, 7
      %v2663 = vsub.s32 %v2444, %v2662
      %v2664 = vrot.slane %v2350, %v2663
      %v2665 = vlaneseq
      %v2666 = vshrl.u32 %v2665, 7
      %v2667 = vsub.s32 %v2444, %v2666
      %v2668 = vrot.slane %v2353, %v2667
      %v2669 = vlaneseq
      %v2670 = vshrl.u32 %v2669, 7
      %v2671 = vsub.s32 %v2444, %v2670
      %v2672 = vrot.slane %v2356, %v2671
      %v2673 = vlaneseq
      %v2674 = vshrl.u32 %v2673, 7
      %v2675 = vsub.s32 %v2444, %v2674
      %v2676 = vrot.slane %v2359, %v2675
      %v2677 = vlaneseq
      %v2678 = vshrl.u32 %v2677, 7
      %v2679 = vsub.s32 %v2444, %v2678
      %v2680 = vrot.slane %v2362, %v2679
      %v2681 = vlaneseq
      %v2682 = vshrl.u32 %v2681, 7
      %v2683 = vsub.s32 %v2444, %v2682
      %v2684 = vrot.slane %v2365, %v2683
      %v2685 = vlaneseq
      %v2686 = vshrl.u32 %v2685, 7
      %v2687 = vsub.s32 %v2444, %v2686
      %v2688 = vrot.slane %v2368, %v2687
      %v2689 = vlaneseq
      %v2690 = vshrl.u32 %v2689, 7
      %v2691 = vsub.s32 %v2444, %v2690
      %v2692 = vrot.slane %v2371, %v2691
      %v2693 = vlaneseq
      %v2694 = vshrl.u32 %v2693, 7
      %v2695 = vsub.s32 %v2444, %v2694
      %v2696 = vrot.slane %v2374, %v2695
      %v2697 = vlaneseq
      %v2698 = vshrl.u32 %v2697, 7
      %v2699 = vsub.s32 %v2444, %v2698
      %v2700 = vrot.slane %v2377, %v2699
      %vm2701 = vcmask 1041409
      %v2702 = vsel %vm2701, %v2452, %v2448
      %vm2703 = vcmask 1042434
      %v2704 = vsel %vm2703, %v2456, %v2702
      %vm2705 = vcmask 1043459
      %v2706 = vsel %vm2705, %v2460, %v2704
      %vm2707 = vcmask 1044484
      %v2708 = vsel %vm2707, %v2464, %v2706
      %vm2709 = vcmask 1045509
      %v2710 = vsel %vm2709, %v2468, %v2708
      %vm2711 = vcmask 1046534
      %v2712 = vsel %vm2711, %v2472, %v2710
      %vm2713 = vcmask 1047559
      %v2714 = vsel %vm2713, %v2476, %v2712
      %v2715 = vsel %vm2701, %v2484, %v2480
      %v2716 = vsel %vm2703, %v2488, %v2715
      %v2717 = vsel %vm2705, %v2492, %v2716
      %v2718 = vsel %vm2707, %v2496, %v2717
      %v2719 = vsel %vm2709, %v2500, %v2718
      %v2720 = vsel %vm2711, %v2504, %v2719
      %v2721 = vsel %vm2713, %v2508, %v2720
      %v2722 = vsel %vm2701, %v2516, %v2512
      %v2723 = vsel %vm2703, %v2520, %v2722
      %v2724 = vsel %vm2705, %v2524, %v2723
      %v2725 = vsel %vm2707, %v2528, %v2724
      %v2726 = vsel %vm2709, %v2532, %v2725
      %v2727 = vsel %vm2711, %v2536, %v2726
      %v2728 = vsel %vm2713, %v2540, %v2727
      %v2729 = vsel %vm2701, %v2548, %v2544
      %v2730 = vsel %vm2703, %v2552, %v2729
      %v2731 = vsel %vm2705, %v2556, %v2730
      %v2732 = vsel %vm2707, %v2560, %v2731
      %v2733 = vsel %vm2709, %v2564, %v2732
      %v2734 = vsel %vm2711, %v2568, %v2733
      %v2735 = vsel %vm2713, %v2572, %v2734
      %v2736 = vsel %vm2701, %v2580, %v2576
      %v2737 = vsel %vm2703, %v2584, %v2736
      %v2738 = vsel %vm2705, %v2588, %v2737
      %v2739 = vsel %vm2707, %v2592, %v2738
      %v2740 = vsel %vm2709, %v2596, %v2739
      %v2741 = vsel %vm2711, %v2600, %v2740
      %v2742 = vsel %vm2713, %v2604, %v2741
      %v2743 = vsel %vm2701, %v2612, %v2608
      %v2744 = vsel %vm2703, %v2616, %v2743
      %v2745 = vsel %vm2705, %v2620, %v2744
      %v2746 = vsel %vm2707, %v2624, %v2745
      %v2747 = vsel %vm2709, %v2628, %v2746
      %v2748 = vsel %vm2711, %v2632, %v2747
      %v2749 = vsel %vm2713, %v2636, %v2748
      %v2750 = vsel %vm2701, %v2644, %v2640
      %v2751 = vsel %vm2703, %v2648, %v2750
      %v2752 = vsel %vm2705, %v2652, %v2751
      %v2753 = vsel %vm2707, %v2656, %v2752
      %v2754 = vsel %vm2709, %v2660, %v2753
      %v2755 = vsel %vm2711, %v2664, %v2754
      %v2756 = vsel %vm2713, %v2668, %v2755
      %v2757 = vsel %vm2701, %v2676, %v2672
      %v2758 = vsel %vm2703, %v2680, %v2757
      %v2759 = vsel %vm2705, %v2684, %v2758
      %v2760 = vsel %vm2707, %v2688, %v2759
      %v2761 = vsel %vm2709, %v2692, %v2760
      %v2762 = vsel %vm2711, %v2696, %v2761
      %v2763 = vsel %vm2713, %v2700, %v2762
      %v2772 = vsel %vm532, %v1011, %v2714
      %v2773 = vsel %vm532, %v1057, %v2721
      %v2774 = vsel %vm532, %v1103, %v2728
      %v2775 = vsel %vm532, %v1149, %v2735
      %v2776 = vsel %vm532, %v1195, %v2742
      %v2777 = vsel %vm532, %v1241, %v2749
      %v2778 = vsel %vm532, %v1287, %v2756
      %v2779 = vsel %vm532, %v1333, %v2763
      %v2780 = vpack.c.bf16 %v2773, %v2772
      %v2781 = vpack.c.bf16 %v2775, %v2774
      %v2782 = vpack.c.bf16 %v2777, %v2776
      %v2783 = vpack.c.bf16 %v2779, %v2778
      %v2784 = vld [vmem:[%s10] sm:$0xf]
      %v2785 = vld [vmem:[%s10 + $0x4] sm:$0xf]
      %v2788 = vunpack.c.l.b16 %v2784
      %v2789 = vunpack.c.l.b16 %v2785
      %v2790 = vpack.c.b16 %v2789, %v2788
      %v2793 = vsel %vm969, %v2780, 0
      %v2796 = vsel %vm969, %v2781, 0
      %v2799 = vsel %vm969, %v2782, 0
      %v2802 = vsel %vm969, %v2783, 0
      %2804 = vmatprep.subr.bf16.mxu0 0
      %2805 = vmatpush1.bf16.msra.mxu0 %v2790
      %2806 = vmatprep.subr.bf16.mxu0 0
      %2807 = vmatpush1.bf16.msra.mxu0 0
      %2808 = vmatprep.subr.bf16.mxu0 0
      %2809 = vmatpush1.bf16.msra.mxu0 0
      %2810 = vmatprep.subr.bf16.mxu0 0
      %2811 = vmatpush1.bf16.msra.mxu0 0
      %2812 = vmatprep.subr.bf16.mxu0 0
      %2813 = vmatpush1.bf16.msra.mxu0 0
      %2814 = vmatprep.subr.bf16.mxu0 0
      %2815 = vmatpush1.bf16.msra.mxu0 0
      %2816 = vmatprep.subr.bf16.mxu0 0
      %2817 = vmatpush1.bf16.msra.mxu0 0
      %2818 = vmatprep.subr.bf16.mxu0 0
      %2819 = vmatpush1.bf16.msra.mxu0 0
      %2820 = vmatprep.subr.bf16.mxu0 0
      %2821 = vmatpush1.bf16.msra.mxu0 0
      %2822 = vmatprep.subr.bf16.mxu0 0
      %2823 = vmatpush1.bf16.msra.mxu0 0
      %2824 = vmatprep.subr.bf16.mxu0 0
      %2825 = vmatpush1.bf16.msra.mxu0 0
      %2826 = vmatprep.subr.bf16.mxu0 0
      %2827 = vmatpush1.bf16.msra.mxu0 0
      %2828 = vmatprep.subr.bf16.mxu0 0
      %2829 = vmatpush1.bf16.msra.mxu0 0
      %2830 = vmatprep.subr.bf16.mxu0 0
      %2831 = vmatpush1.bf16.msra.mxu0 0
      %2832 = vmatprep.subr.bf16.mxu0 0
      %2833 = vmatpush1.bf16.msra.mxu0 0
      %2834 = vmatprep.subr.bf16.mxu0 0
      %2835 = vmatpush1.bf16.msra.mxu0 0
      %2836 = vmatprep.mubr.bf16.mxu0 0
      %2837 = vmatmul.mubr.bf16.gmra.mrb[0].mxu0 %v2793
      %v2838 = vpop.f32.mrb[0].mxu0
      %v2839 = vadd.f32 0.0, %v2838
      %v2840 = vpop.f32.mrb[0].mxu0
      %v2841 = vpop.f32.mrb[0].mxu0
      %v2842 = vadd.f32 0.0, %v2841
      %v2843 = vpop.f32.mrb[0].mxu0
      %2844 = vmatprep.mubr.bf16.mxu0 0
      %2845 = vmatmul.mubr.bf16.gmra.mrb[0].mxu0 %v2796
      %v2846 = vpop.f32.mrb[0].mxu0
      %v2847 = vadd.f32 0.0, %v2846
      %v2848 = vpop.f32.mrb[0].mxu0
      %v2849 = vpop.f32.mrb[0].mxu0
      %v2850 = vadd.f32 0.0, %v2849
      %v2851 = vpop.f32.mrb[0].mxu0
      %2852 = vmatprep.mubr.bf16.mxu0 0
      %2853 = vmatmul.mubr.bf16.gmra.mrb[0].mxu0 %v2799
      %v2854 = vpop.f32.mrb[0].mxu0
      %v2855 = vadd.f32 0.0, %v2854
      %v2856 = vpop.f32.mrb[0].mxu0
      %v2857 = vpop.f32.mrb[0].mxu0
      %v2858 = vadd.f32 0.0, %v2857
      %v2859 = vpop.f32.mrb[0].mxu0
      %2860 = vmatprep.mubr.bf16.mxu0 0
      %2861 = vmatmul.mubr.bf16.gmra.mrb[0].mxu0 %v2802
      %v2862 = vpop.f32.mrb[0].mxu0
      %v2863 = vadd.f32 0.0, %v2862
      %v2864 = vpop.f32.mrb[0].mxu0
      %v2865 = vpop.f32.mrb[0].mxu0
      %v2866 = vadd.f32 0.0, %v2865
      %v2867 = vpop.f32.mrb[0].mxu0
      %2868 = vdwg.mxu0
      %v2870 = vsel %vm969, %v937, 0
      %v2873 = vsel %vm969, %v938, 0
      %v2876 = vsel %vm969, %v939, 0
      %v2879 = vsel %vm969, %v940, 0
      %v2882 = vsel %vm969, %v860, 0
      %v2885 = vsel %vm969, %v861, 0
      %v2888 = vsel %vm969, %v862, 0
      %v2891 = vsel %vm969, %v863, 0
      %2893 = vmatprep.subr.bf16.mxu0 0
      %2894 = vmatpush1.bf16.xpose.msra.mxu0 %v2882
      %2895 = vmatprep.subr.bf16.mxu0 0
      %2896 = vmatpush1.bf16.xpose.msra.mxu0 %v2885
      %2897 = vmatprep.subr.bf16.mxu0 0
      %2898 = vmatpush1.bf16.xpose.msra.mxu0 %v2888
      %2899 = vmatprep.subr.bf16.mxu0 0
      %2900 = vmatpush1.bf16.xpose.msra.mxu0 %v2891
      %2901 = vmatprep.subr.bf16.mxu0 0
      %2902 = vmatpush1.bf16.xpose.msra.mxu0 0
      %2903 = vmatprep.subr.bf16.mxu0 0
      %2904 = vmatpush1.bf16.xpose.msra.mxu0 0
      %2905 = vmatprep.subr.bf16.mxu0 0
      %2906 = vmatpush1.bf16.xpose.msra.mxu0 0
      %2907 = vmatprep.subr.bf16.mxu0 0
      %2908 = vmatpush1.bf16.xpose.msra.mxu0 0
      %2909 = vmatprep.subr.bf16.mxu0 0
      %2910 = vmatpush1.bf16.xpose.msra.mxu0 0
      %2911 = vmatprep.subr.bf16.mxu0 0
      %2912 = vmatpush1.bf16.xpose.msra.mxu0 0
      %2913 = vmatprep.subr.bf16.mxu0 0
      %2914 = vmatpush1.bf16.xpose.msra.mxu0 0
      %2915 = vmatprep.subr.bf16.mxu0 0
      %2916 = vmatpush1.bf16.xpose.msra.mxu0 0
      %2917 = vmatprep.subr.bf16.mxu0 0
      %2918 = vmatpush1.bf16.xpose.msra.mxu0 0
      %2919 = vmatprep.subr.bf16.mxu0 0
      %2920 = vmatpush1.bf16.xpose.msra.mxu0 0
      %2921 = vmatprep.subr.bf16.mxu0 0
      %2922 = vmatpush1.bf16.xpose.msra.mxu0 0
      %2923 = vmatprep.subr.bf16.mxu0 0
      %2924 = vmatpush1.bf16.xpose.msra.mxu0 0
      %2925 = vmatprep.mubr.bf16.mxu0 0
      %2926 = vmatmul.mubr.bf16.gmra.mrb[0].mxu0 %v2870
      %v2927 = vpop.f32.mrb[0].mxu0
      %v2928 = vadd.f32 %v2839, %v2927
      %v2929 = vpop.f32.mrb[0].mxu0
      %v2930 = vpop.f32.mrb[0].mxu0
      %v2931 = vadd.f32 %v2842, %v2930
      %v2932 = vpop.f32.mrb[0].mxu0
      %2933 = vmatprep.mubr.bf16.mxu0 0
      %2934 = vmatmul.mubr.bf16.gmra.mrb[0].mxu0 %v2873
      %v2935 = vpop.f32.mrb[0].mxu0
      %v2936 = vadd.f32 %v2847, %v2935
      %v2937 = vpop.f32.mrb[0].mxu0
      %v2938 = vpop.f32.mrb[0].mxu0
      %v2939 = vadd.f32 %v2850, %v2938
      %v2940 = vpop.f32.mrb[0].mxu0
      %2941 = vmatprep.mubr.bf16.mxu0 0
      %2942 = vmatmul.mubr.bf16.gmra.mrb[0].mxu0 %v2876
      %v2943 = vpop.f32.mrb[0].mxu0
      %v2944 = vadd.f32 %v2855, %v2943
      %v2945 = vpop.f32.mrb[0].mxu0
      %v2946 = vpop.f32.mrb[0].mxu0
      %v2947 = vadd.f32 %v2858, %v2946
      %v2948 = vpop.f32.mrb[0].mxu0
      %2949 = vmatprep.mubr.bf16.mxu0 0
      %2950 = vmatmul.mubr.bf16.gmra.mrb[0].mxu0 %v2879
      %v2951 = vpop.f32.mrb[0].mxu0
      %v2952 = vadd.f32 %v2863, %v2951
      %v2953 = vpop.f32.mrb[0].mxu0
      %v2954 = vpop.f32.mrb[0].mxu0
      %v2955 = vadd.f32 %v2866, %v2954
      %v2956 = vpop.f32.mrb[0].mxu0
      %2957 = vdwg.mxu0
      %vm2958 = vcmask 523264
      %v2959 = vsel %vm2958, %v2928, -inf
      %2960 = vmax.xlane.f32.xlu0 %v2959
      %v2961 = vpop.xlane.xlu0 %2960
      %v2962 = vsel %vm2958, %v2931, -inf
      %2963 = vmax.xlane.f32.xlu0 %v2962
      %v2964 = vpop.xlane.xlu0 %2963
      %v2965 = vsel %vm2958, %v2936, -inf
      %2966 = vmax.xlane.f32.xlu0 %v2965
      %v2967 = vpop.xlane.xlu0 %2966
      %v2968 = vsel %vm2958, %v2939, -inf
      %2969 = vmax.xlane.f32.xlu0 %v2968
      %v2970 = vpop.xlane.xlu0 %2969
      %v2971 = vsel %vm2958, %v2944, -inf
      %2972 = vmax.xlane.f32.xlu0 %v2971
      %v2973 = vpop.xlane.xlu0 %2972
      %v2974 = vsel %vm2958, %v2947, -inf
      %2975 = vmax.xlane.f32.xlu0 %v2974
      %v2976 = vpop.xlane.xlu0 %2975
      %v2977 = vsel %vm2958, %v2952, -inf
      %2978 = vmax.xlane.f32.xlu0 %v2977
      %v2979 = vpop.xlane.xlu0 %2978
      %v2980 = vsel %vm2958, %v2955, -inf
      %2981 = vmax.xlane.f32.xlu0 %v2980
      %v2982 = vpop.xlane.xlu0 %2981
      %v2983 = vsub.f32 %v2928, %v2961
      %v2984 = vsub.f32 %v2931, %v2964
      %v2985 = vsub.f32 %v2936, %v2967
      %v2986 = vsub.f32 %v2939, %v2970
      %v2987 = vsub.f32 %v2944, %v2973
      %v2988 = vsub.f32 %v2947, %v2976
      %v2989 = vsub.f32 %v2952, %v2979
      %v2990 = vsub.f32 %v2955, %v2982
      %v2991 = vmul.f32 %v2983, 1.442695
      %v2992 = vpow.pop %v2991
      %v2993 = vmul.f32 %v2984, 1.442695
      %v2994 = vpow.pop %v2993
      %v2995 = vmul.f32 %v2985, 1.442695
      %v2996 = vpow.pop %v2995
      %v2997 = vmul.f32 %v2986, 1.442695
      %v2998 = vpow.pop %v2997
      %v2999 = vmul.f32 %v2987, 1.442695
      %v3000 = vpow.pop %v2999
      %v3001 = vmul.f32 %v2988, 1.442695
      %v3002 = vpow.pop %v3001
      %v3003 = vmul.f32 %v2989, 1.442695
      %v3004 = vpow.pop %v3003
      %v3005 = vmul.f32 %v2990, 1.442695
      %v3006 = vpow.pop %v3005
      %v3007 = vsel %vm2958, %v2992, 0.0
      %3008 = vadd.xlane.f32.xlu0 %v3007
      %v3009 = vpop.xlane.xlu0 %3008
      %v3010 = vsel %vm2958, %v2994, 0.0
      %3011 = vadd.xlane.f32.xlu0 %v3010
      %v3012 = vpop.xlane.xlu0 %3011
      %v3013 = vsel %vm2958, %v2996, 0.0
      %3014 = vadd.xlane.f32.xlu0 %v3013
      %v3015 = vpop.xlane.xlu0 %3014
      %v3016 = vsel %vm2958, %v2998, 0.0
      %3017 = vadd.xlane.f32.xlu0 %v3016
      %v3018 = vpop.xlane.xlu0 %3017
      %v3019 = vsel %vm2958, %v3000, 0.0
      %3020 = vadd.xlane.f32.xlu0 %v3019
      %v3021 = vpop.xlane.xlu0 %3020
      %v3022 = vsel %vm2958, %v3002, 0.0
      %3023 = vadd.xlane.f32.xlu0 %v3022
      %v3024 = vpop.xlane.xlu0 %3023
      %v3025 = vsel %vm2958, %v3004, 0.0
      %3026 = vadd.xlane.f32.xlu0 %v3025
      %v3027 = vpop.xlane.xlu0 %3026
      %v3028 = vsel %vm2958, %v3006, 0.0
      %3029 = vadd.xlane.f32.xlu0 %v3028
      %v3030 = vpop.xlane.xlu0 %3029
      %v3031 = vrcp.pop %v3009
      %v3032 = vrcp.pop %v3012
      %v3033 = vrcp.pop %v3015
      %v3034 = vrcp.pop %v3018
      %v3035 = vrcp.pop %v3021
      %v3036 = vrcp.pop %v3024
      %v3037 = vrcp.pop %v3027
      %v3038 = vrcp.pop %v3030
      %v3039 = vmul.f32 %v2992, %v3031
      %v3040 = vmul.f32 %v2994, %v3032
      %v3041 = vmul.f32 %v2996, %v3033
      %v3042 = vmul.f32 %v2998, %v3034
      %v3043 = vmul.f32 %v3000, %v3035
      %v3044 = vmul.f32 %v3002, %v3036
      %v3045 = vmul.f32 %v3004, %v3037
      %v3046 = vmul.f32 %v3006, %v3038
      %v3047 = vpack.c.bf16 %v3040, %v3039
      %v3048 = vpack.c.bf16 %v3042, %v3041
      %v3049 = vpack.c.bf16 %v3044, %v3043
      %v3050 = vpack.c.bf16 %v3046, %v3045
      %v3052 = vsel %vm2958, %v3047, 0
      %v3055 = vsel %vm2958, %v3048, 0
      %v3058 = vsel %vm2958, %v3049, 0
      %v3061 = vsel %vm2958, %v3050, 0
      %3063 = vmatprep.subr.bf16.mxu0 0
      %3064 = vmatpush1.bf16.msra.mxu0 %v933
      %3065 = vmatprep.subr.bf16.mxu0 0
      %3066 = vmatpush1.bf16.msra.mxu0 %v934
      %3067 = vmatprep.subr.bf16.mxu0 0
      %3068 = vmatpush1.bf16.msra.mxu0 %v935
      %3069 = vmatprep.subr.bf16.mxu0 0
      %3070 = vmatpush1.bf16.msra.mxu0 %v936
      %3071 = vmatprep.subr.bf16.mxu0 0
      %3072 = vmatpush1.bf16.msra.mxu0 0
      %3073 = vmatprep.subr.bf16.mxu0 0
      %3074 = vmatpush1.bf16.msra.mxu0 0
      %3075 = vmatprep.subr.bf16.mxu0 0
      %3076 = vmatpush1.bf16.msra.mxu0 0
      %3077 = vmatprep.subr.bf16.mxu0 0
      %3078 = vmatpush1.bf16.msra.mxu0 0
      %3079 = vmatprep.subr.bf16.mxu0 0
      %3080 = vmatpush1.bf16.msra.mxu0 0
      %3081 = vmatprep.subr.bf16.mxu0 0
      %3082 = vmatpush1.bf16.msra.mxu0 0
      %3083 = vmatprep.subr.bf16.mxu0 0
      %3084 = vmatpush1.bf16.msra.mxu0 0
      %3085 = vmatprep.subr.bf16.mxu0 0
      %3086 = vmatpush1.bf16.msra.mxu0 0
      %3087 = vmatprep.subr.bf16.mxu0 0
      %3088 = vmatpush1.bf16.msra.mxu0 0
      %3089 = vmatprep.subr.bf16.mxu0 0
      %3090 = vmatpush1.bf16.msra.mxu0 0
      %3091 = vmatprep.subr.bf16.mxu0 0
      %3092 = vmatpush1.bf16.msra.mxu0 0
      %3093 = vmatprep.subr.bf16.mxu0 0
      %3094 = vmatpush1.bf16.msra.mxu0 0
      %3095 = vmatprep.mubr.bf16.mxu0 0
      %3096 = vmatmul.mubr.bf16.gmra.mrb[0].mxu0 %v3052
      %v3097 = vpop.f32.mrb[0].mxu0
      %v3098 = vadd.f32 0.0, %v3097
      %v3099 = vpop.f32.mrb[0].mxu0
      %v3100 = vpop.f32.mrb[0].mxu0
      %v3101 = vadd.f32 0.0, %v3100
      %v3102 = vpop.f32.mrb[0].mxu0
      %3103 = vmatprep.mubr.bf16.mxu0 0
      %3104 = vmatmul.mubr.bf16.gmra.mrb[0].mxu0 %v3055
      %v3105 = vpop.f32.mrb[0].mxu0
      %v3106 = vadd.f32 0.0, %v3105
      %v3107 = vpop.f32.mrb[0].mxu0
      %v3108 = vpop.f32.mrb[0].mxu0
      %v3109 = vadd.f32 0.0, %v3108
      %v3110 = vpop.f32.mrb[0].mxu0
      %3111 = vmatprep.mubr.bf16.mxu0 0
      %3112 = vmatmul.mubr.bf16.gmra.mrb[0].mxu0 %v3058
      %v3113 = vpop.f32.mrb[0].mxu0
      %v3114 = vadd.f32 0.0, %v3113
      %v3115 = vpop.f32.mrb[0].mxu0
      %v3116 = vpop.f32.mrb[0].mxu0
      %v3117 = vadd.f32 0.0, %v3116
      %v3118 = vpop.f32.mrb[0].mxu0
      %3119 = vmatprep.mubr.bf16.mxu0 0
      %3120 = vmatmul.mubr.bf16.gmra.mrb[0].mxu0 %v3061
      %v3121 = vpop.f32.mrb[0].mxu0
      %v3122 = vadd.f32 0.0, %v3121
      %v3123 = vpop.f32.mrb[0].mxu0
      %v3124 = vpop.f32.mrb[0].mxu0
      %v3125 = vadd.f32 0.0, %v3124
      %v3126 = vpop.f32.mrb[0].mxu0
      %3127 = vdwg.mxu0
      %v3128 = vpack.c.bf16 %v3101, %v3098
      %v3129 = vpack.c.bf16 %v3109, %v3106
      %v3130 = vpack.c.bf16 %v3117, %v3114
      %v3131 = vpack.c.bf16 %v3125, %v3122
      %v3132 = vld [vmem:[%s11] sm:$0xf]
      %v3133 = vld [vmem:[%s11 + $0x4] sm:$0xf]
      %s3134 = scalar_lea.vmem %s5, 4
      %v3135 = vld [vmem:[%s3134] sm:$0xf]
      %v3137 = vsel %vm545, %v3135, 0
      %3139 = vmatprep.subr.bf16.mxu0 0
      %3140 = vmatpush1.bf16.msra.mxu0 %v3137
      %3141 = vmatprep.subr.bf16.mxu0 0
      %3142 = vmatpush1.bf16.msra.mxu0 0
      %3143 = vmatprep.subr.bf16.mxu0 0
      %3144 = vmatpush1.bf16.msra.mxu0 0
      %3145 = vmatprep.subr.bf16.mxu0 0
      %3146 = vmatpush1.bf16.msra.mxu0 0
      %3147 = vmatprep.subr.bf16.mxu0 0
      %3148 = vmatpush1.bf16.msra.mxu0 0
      %3149 = vmatprep.subr.bf16.mxu0 0
      %3150 = vmatpush1.bf16.msra.mxu0 0
      %3151 = vmatprep.subr.bf16.mxu0 0
      %3152 = vmatpush1.bf16.msra.mxu0 0
      %3153 = vmatprep.subr.bf16.mxu0 0
      %3154 = vmatpush1.bf16.msra.mxu0 0
      %3155 = vmatprep.subr.bf16.mxu0 0
      %3156 = vmatpush1.bf16.msra.mxu0 0
      %3157 = vmatprep.subr.bf16.mxu0 0
      %3158 = vmatpush1.bf16.msra.mxu0 0
      %3159 = vmatprep.subr.bf16.mxu0 0
      %3160 = vmatpush1.bf16.msra.mxu0 0
      %3161 = vmatprep.subr.bf16.mxu0 0
      %3162 = vmatpush1.bf16.msra.mxu0 0
      %3163 = vmatprep.subr.bf16.mxu0 0
      %3164 = vmatpush1.bf16.msra.mxu0 0
      %3165 = vmatprep.subr.bf16.mxu0 0
      %3166 = vmatpush1.bf16.msra.mxu0 0
      %3167 = vmatprep.subr.bf16.mxu0 0
      %3168 = vmatpush1.bf16.msra.mxu0 0
      %3169 = vmatprep.subr.bf16.mxu0 0
      %3170 = vmatpush1.bf16.msra.mxu0 0
      %3171 = vmatprep.mubr.bf16.mxu0 0
      %3172 = vmatmul.mubr.bf16.gmra.mrb[0].mxu0 %v712
      %v3173 = vpop.f32.mrb[0].mxu0
      %v3174 = vadd.f32 0.0, %v3173
      %v3175 = vpop.f32.mrb[0].mxu0
      %v3176 = vpop.f32.mrb[0].mxu0
      %v3177 = vadd.f32 0.0, %v3176
      %v3178 = vpop.f32.mrb[0].mxu0
      %3179 = vmatprep.mubr.bf16.mxu0 0
      %3180 = vmatmul.mubr.bf16.gmra.mrb[0].mxu0 %v715
      %v3181 = vpop.f32.mrb[0].mxu0
      %v3182 = vadd.f32 0.0, %v3181
      %v3183 = vpop.f32.mrb[0].mxu0
      %v3184 = vpop.f32.mrb[0].mxu0
      %v3185 = vadd.f32 0.0, %v3184
      %v3186 = vpop.f32.mrb[0].mxu0
      %3187 = vmatprep.mubr.bf16.mxu0 0
      %3188 = vmatmul.mubr.bf16.gmra.mrb[0].mxu0 %v718
      %v3189 = vpop.f32.mrb[0].mxu0
      %v3190 = vadd.f32 0.0, %v3189
      %v3191 = vpop.f32.mrb[0].mxu0
      %v3192 = vpop.f32.mrb[0].mxu0
      %v3193 = vadd.f32 0.0, %v3192
      %v3194 = vpop.f32.mrb[0].mxu0
      %3195 = vmatprep.mubr.bf16.mxu0 0
      %3196 = vmatmul.mubr.bf16.gmra.mrb[0].mxu0 %v721
      %v3197 = vpop.f32.mrb[0].mxu0
      %v3198 = vadd.f32 0.0, %v3197
      %v3199 = vpop.f32.mrb[0].mxu0
      %v3200 = vpop.f32.mrb[0].mxu0
      %v3201 = vadd.f32 0.0, %v3200
      %v3202 = vpop.f32.mrb[0].mxu0
      %3203 = vdwg.mxu0
      %s3204 = scalar_lea.vmem %s6, 4
      %v3205 = vld [vmem:[%s3204] sm:$0xf]
      %v3207 = vsel %vm545, %v3205, 0
      %3209 = vmatprep.subr.bf16.mxu0 0
      %3210 = vmatpush1.bf16.msra.mxu0 %v3207
      %3211 = vmatprep.subr.bf16.mxu0 0
      %3212 = vmatpush1.bf16.msra.mxu0 0
      %3213 = vmatprep.subr.bf16.mxu0 0
      %3214 = vmatpush1.bf16.msra.mxu0 0
      %3215 = vmatprep.subr.bf16.mxu0 0
      %3216 = vmatpush1.bf16.msra.mxu0 0
      %3217 = vmatprep.subr.bf16.mxu0 0
      %3218 = vmatpush1.bf16.msra.mxu0 0
      %3219 = vmatprep.subr.bf16.mxu0 0
      %3220 = vmatpush1.bf16.msra.mxu0 0
      %3221 = vmatprep.subr.bf16.mxu0 0
      %3222 = vmatpush1.bf16.msra.mxu0 0
      %3223 = vmatprep.subr.bf16.mxu0 0
      %3224 = vmatpush1.bf16.msra.mxu0 0
      %3225 = vmatprep.subr.bf16.mxu0 0
      %3226 = vmatpush1.bf16.msra.mxu0 0
      %3227 = vmatprep.subr.bf16.mxu0 0
      %3228 = vmatpush1.bf16.msra.mxu0 0
      %3229 = vmatprep.subr.bf16.mxu0 0
      %3230 = vmatpush1.bf16.msra.mxu0 0
      %3231 = vmatprep.subr.bf16.mxu0 0
      %3232 = vmatpush1.bf16.msra.mxu0 0
      %3233 = vmatprep.subr.bf16.mxu0 0
      %3234 = vmatpush1.bf16.msra.mxu0 0
      %3235 = vmatprep.subr.bf16.mxu0 0
      %3236 = vmatpush1.bf16.msra.mxu0 0
      %3237 = vmatprep.subr.bf16.mxu0 0
      %3238 = vmatpush1.bf16.msra.mxu0 0
      %3239 = vmatprep.subr.bf16.mxu0 0
      %3240 = vmatpush1.bf16.msra.mxu0 0
      %3241 = vmatprep.mubr.bf16.mxu0 0
      %3242 = vmatmul.mubr.bf16.gmra.mrb[0].mxu0 %v712
      %v3243 = vpop.f32.mrb[0].mxu0
      %v3244 = vadd.f32 0.0, %v3243
      %v3245 = vpop.f32.mrb[0].mxu0
      %v3246 = vpop.f32.mrb[0].mxu0
      %v3247 = vadd.f32 0.0, %v3246
      %v3248 = vpop.f32.mrb[0].mxu0
      %3249 = vmatprep.mubr.bf16.mxu0 0
      %3250 = vmatmul.mubr.bf16.gmra.mrb[0].mxu0 %v715
      %v3251 = vpop.f32.mrb[0].mxu0
      %v3252 = vadd.f32 0.0, %v3251
      %v3253 = vpop.f32.mrb[0].mxu0
      %v3254 = vpop.f32.mrb[0].mxu0
      %v3255 = vadd.f32 0.0, %v3254
      %v3256 = vpop.f32.mrb[0].mxu0
      %3257 = vmatprep.mubr.bf16.mxu0 0
      %3258 = vmatmul.mubr.bf16.gmra.mrb[0].mxu0 %v718
      %v3259 = vpop.f32.mrb[0].mxu0
      %v3260 = vadd.f32 0.0, %v3259
      %v3261 = vpop.f32.mrb[0].mxu0
      %v3262 = vpop.f32.mrb[0].mxu0
      %v3263 = vadd.f32 0.0, %v3262
      %v3264 = vpop.f32.mrb[0].mxu0
      %3265 = vmatprep.mubr.bf16.mxu0 0
      %3266 = vmatmul.mubr.bf16.gmra.mrb[0].mxu0 %v721
      %v3267 = vpop.f32.mrb[0].mxu0
      %v3268 = vadd.f32 0.0, %v3267
      %v3269 = vpop.f32.mrb[0].mxu0
      %v3270 = vpop.f32.mrb[0].mxu0
      %v3271 = vadd.f32 0.0, %v3270
      %v3272 = vpop.f32.mrb[0].mxu0
      %3273 = vdwg.mxu0
      %v3274 = vpack.c.bf16 %v3247, %v3244
      %v3275 = vpack.c.bf16 %v3255, %v3252
      %v3276 = vpack.c.bf16 %v3263, %v3260
      %v3277 = vpack.c.bf16 %v3271, %v3268
      %s3278 = scalar_lea.vmem %s7, 4
      %v3279 = vld [vmem:[%s3278] sm:$0xf]
      %v3281 = vsel %vm545, %v3279, 0
      %3283 = vmatprep.subr.bf16.mxu0 0
      %3284 = vmatpush1.bf16.msra.mxu0 %v3281
      %3285 = vmatprep.subr.bf16.mxu0 0
      %3286 = vmatpush1.bf16.msra.mxu0 0
      %3287 = vmatprep.subr.bf16.mxu0 0
      %3288 = vmatpush1.bf16.msra.mxu0 0
      %3289 = vmatprep.subr.bf16.mxu0 0
      %3290 = vmatpush1.bf16.msra.mxu0 0
      %3291 = vmatprep.subr.bf16.mxu0 0
      %3292 = vmatpush1.bf16.msra.mxu0 0
      %3293 = vmatprep.subr.bf16.mxu0 0
      %3294 = vmatpush1.bf16.msra.mxu0 0
      %3295 = vmatprep.subr.bf16.mxu0 0
      %3296 = vmatpush1.bf16.msra.mxu0 0
      %3297 = vmatprep.subr.bf16.mxu0 0
      %3298 = vmatpush1.bf16.msra.mxu0 0
      %3299 = vmatprep.subr.bf16.mxu0 0
      %3300 = vmatpush1.bf16.msra.mxu0 0
      %3301 = vmatprep.subr.bf16.mxu0 0
      %3302 = vmatpush1.bf16.msra.mxu0 0
      %3303 = vmatprep.subr.bf16.mxu0 0
      %3304 = vmatpush1.bf16.msra.mxu0 0
      %3305 = vmatprep.subr.bf16.mxu0 0
      %3306 = vmatpush1.bf16.msra.mxu0 0
      %3307 = vmatprep.subr.bf16.mxu0 0
      %3308 = vmatpush1.bf16.msra.mxu0 0
      %3309 = vmatprep.subr.bf16.mxu0 0
      %3310 = vmatpush1.bf16.msra.mxu0 0
      %3311 = vmatprep.subr.bf16.mxu0 0
      %3312 = vmatpush1.bf16.msra.mxu0 0
      %3313 = vmatprep.subr.bf16.mxu0 0
      %3314 = vmatpush1.bf16.msra.mxu0 0
      %3315 = vmatprep.mubr.bf16.mxu0 0
      %3316 = vmatmul.mubr.bf16.gmra.mrb[0].mxu0 %v712
      %v3317 = vpop.f32.mrb[0].mxu0
      %v3318 = vadd.f32 0.0, %v3317
      %v3319 = vpop.f32.mrb[0].mxu0
      %v3320 = vpop.f32.mrb[0].mxu0
      %v3321 = vadd.f32 0.0, %v3320
      %v3322 = vpop.f32.mrb[0].mxu0
      %3323 = vmatprep.mubr.bf16.mxu0 0
      %3324 = vmatmul.mubr.bf16.gmra.mrb[0].mxu0 %v715
      %v3325 = vpop.f32.mrb[0].mxu0
      %v3326 = vadd.f32 0.0, %v3325
      %v3327 = vpop.f32.mrb[0].mxu0
      %v3328 = vpop.f32.mrb[0].mxu0
      %v3329 = vadd.f32 0.0, %v3328
      %v3330 = vpop.f32.mrb[0].mxu0
      %3331 = vmatprep.mubr.bf16.mxu0 0
      %3332 = vmatmul.mubr.bf16.gmra.mrb[0].mxu0 %v718
      %v3333 = vpop.f32.mrb[0].mxu0
      %v3334 = vadd.f32 0.0, %v3333
      %v3335 = vpop.f32.mrb[0].mxu0
      %v3336 = vpop.f32.mrb[0].mxu0
      %v3337 = vadd.f32 0.0, %v3336
      %v3338 = vpop.f32.mrb[0].mxu0
      %3339 = vmatprep.mubr.bf16.mxu0 0
      %3340 = vmatmul.mubr.bf16.gmra.mrb[0].mxu0 %v721
      %v3341 = vpop.f32.mrb[0].mxu0
      %v3342 = vadd.f32 0.0, %v3341
      %v3343 = vpop.f32.mrb[0].mxu0
      %v3344 = vpop.f32.mrb[0].mxu0
      %v3345 = vadd.f32 0.0, %v3344
      %v3346 = vpop.f32.mrb[0].mxu0
      %3347 = vdwg.mxu0
      %v3348 = vpack.c.bf16 %v3321, %v3318
      %v3349 = vpack.c.bf16 %v3329, %v3326
      %v3350 = vpack.c.bf16 %v3337, %v3334
      %v3351 = vpack.c.bf16 %v3345, %v3342
      %v3352 = vpack.c.bf16 %v3177, %v3174
      %v3353 = vpack.c.bf16 %v3185, %v3182
      %v3354 = vpack.c.bf16 %v3193, %v3190
      %v3355 = vpack.c.bf16 %v3201, %v3198
      %v3360 = vunpack.c.l.b16 %v3352
      %v3361 = vunpack.c.h.b16 %v3352
      %v3362 = vunpack.c.l.b16 %v3353
      %v3363 = vunpack.c.h.b16 %v3353
      %v3364 = vunpack.c.l.b16 %v3354
      %v3365 = vunpack.c.h.b16 %v3354
      %v3366 = vunpack.c.l.b16 %v3355
      %v3367 = vunpack.c.h.b16 %v3355
      %v3368 = vpack.c.b16 %v3360, %v3360
      %v3369 = vpack.c.b16 %v3361, %v3361
      %v3370 = vpack.c.b16 %v3362, %v3362
      %v3371 = vpack.c.b16 %v3363, %v3363
      %v3372 = vpack.c.b16 %v3364, %v3364
      %v3373 = vpack.c.b16 %v3365, %v3365
      %v3374 = vpack.c.b16 %v3366, %v3366
      %v3375 = vpack.c.b16 %v3367, %v3367
      %v3376 = vld [vmem:[%s8] sm:$0xf]
      %v3377 = vld [vmem:[%s8 + $0x4] sm:$0xf]
      %v3378 = vld [vmem:[%s8 + $0x8] sm:$0xf]
      %v3379 = vld [vmem:[%s8 + $0xc] sm:$0xf]
      %v3380 = vld [vmem:[%s8 + $0x10] sm:$0xf]
      %v3381 = vld [vmem:[%s8 + $0x14] sm:$0xf]
      %v3382 = vld [vmem:[%s8 + $0x18] sm:$0xf]
      %v3383 = vld [vmem:[%s8 + $0x1c] sm:$0xf]
      %v3385 = vsel %vm969, %v3368, 0
      %v3388 = vsel %vm969, %v3376, 0
      %3390 = vmatprep.subr.bf16.mxu0 0
      %3391 = vmatpush1.bf16.xpose.msra.mxu0 %v3388
      %3392 = vmatprep.subr.bf16.mxu0 0
      %3393 = vmatpush1.bf16.xpose.msra.mxu0 0
      %3394 = vmatprep.subr.bf16.mxu0 0
      %3395 = vmatpush1.bf16.xpose.msra.mxu0 0
      %3396 = vmatprep.subr.bf16.mxu0 0
      %3397 = vmatpush1.bf16.xpose.msra.mxu0 0
      %3398 = vmatprep.subr.bf16.mxu0 0
      %3399 = vmatpush1.bf16.xpose.msra.mxu0 0
      %3400 = vmatprep.subr.bf16.mxu0 0
      %3401 = vmatpush1.bf16.xpose.msra.mxu0 0
      %3402 = vmatprep.subr.bf16.mxu0 0
      %3403 = vmatpush1.bf16.xpose.msra.mxu0 0
      %3404 = vmatprep.subr.bf16.mxu0 0
      %3405 = vmatpush1.bf16.xpose.msra.mxu0 0
      %3406 = vmatprep.subr.bf16.mxu0 0
      %3407 = vmatpush1.bf16.xpose.msra.mxu0 0
      %3408 = vmatprep.subr.bf16.mxu0 0
      %3409 = vmatpush1.bf16.xpose.msra.mxu0 0
      %3410 = vmatprep.subr.bf16.mxu0 0
      %3411 = vmatpush1.bf16.xpose.msra.mxu0 0
      %3412 = vmatprep.subr.bf16.mxu0 0
      %3413 = vmatpush1.bf16.xpose.msra.mxu0 0
      %3414 = vmatprep.subr.bf16.mxu0 0
      %3415 = vmatpush1.bf16.xpose.msra.mxu0 0
      %3416 = vmatprep.subr.bf16.mxu0 0
      %3417 = vmatpush1.bf16.xpose.msra.mxu0 0
      %3418 = vmatprep.subr.bf16.mxu0 0
      %3419 = vmatpush1.bf16.xpose.msra.mxu0 0
      %3420 = vmatprep.subr.bf16.mxu0 0
      %3421 = vmatpush1.bf16.xpose.msra.mxu0 0
      %3422 = vmatprep.mubr.bf16.mxu0 0
      %3423 = vmatmul.mubr.bf16.gmra.mrb[0].mxu0 %v3385
      %v3424 = vpop.f32.mrb[0].mxu0
      %v3425 = vadd.f32 0.0, %v3424
      %v3426 = vpop.f32.mrb[0].mxu0
      %v3427 = vpop.f32.mrb[0].mxu0
      %v3428 = vpop.f32.mrb[0].mxu0
      %3429 = vdwg.mxu0
      %v3431 = vsel %vm969, %v3369, 0
      %v3434 = vsel %vm969, %v3377, 0
      %3436 = vmatprep.subr.bf16.mxu0 0
      %3437 = vmatpush1.bf16.xpose.msra.mxu0 %v3434
      %3438 = vmatprep.subr.bf16.mxu0 0
      %3439 = vmatpush1.bf16.xpose.msra.mxu0 0
      %3440 = vmatprep.subr.bf16.mxu0 0
      %3441 = vmatpush1.bf16.xpose.msra.mxu0 0
      %3442 = vmatprep.subr.bf16.mxu0 0
      %3443 = vmatpush1.bf16.xpose.msra.mxu0 0
      %3444 = vmatprep.subr.bf16.mxu0 0
      %3445 = vmatpush1.bf16.xpose.msra.mxu0 0
      %3446 = vmatprep.subr.bf16.mxu0 0
      %3447 = vmatpush1.bf16.xpose.msra.mxu0 0
      %3448 = vmatprep.subr.bf16.mxu0 0
      %3449 = vmatpush1.bf16.xpose.msra.mxu0 0
      %3450 = vmatprep.subr.bf16.mxu0 0
      %3451 = vmatpush1.bf16.xpose.msra.mxu0 0
      %3452 = vmatprep.subr.bf16.mxu0 0
      %3453 = vmatpush1.bf16.xpose.msra.mxu0 0
      %3454 = vmatprep.subr.bf16.mxu0 0
      %3455 = vmatpush1.bf16.xpose.msra.mxu0 0
      %3456 = vmatprep.subr.bf16.mxu0 0
      %3457 = vmatpush1.bf16.xpose.msra.mxu0 0
      %3458 = vmatprep.subr.bf16.mxu0 0
      %3459 = vmatpush1.bf16.xpose.msra.mxu0 0
      %3460 = vmatprep.subr.bf16.mxu0 0
      %3461 = vmatpush1.bf16.xpose.msra.mxu0 0
      %3462 = vmatprep.subr.bf16.mxu0 0
      %3463 = vmatpush1.bf16.xpose.msra.mxu0 0
      %3464 = vmatprep.subr.bf16.mxu0 0
      %3465 = vmatpush1.bf16.xpose.msra.mxu0 0
      %3466 = vmatprep.subr.bf16.mxu0 0
      %3467 = vmatpush1.bf16.xpose.msra.mxu0 0
      %3468 = vmatprep.mubr.bf16.mxu0 0
      %3469 = vmatmul.mubr.bf16.gmra.mrb[0].mxu0 %v3431
      %v3470 = vpop.f32.mrb[0].mxu0
      %v3471 = vadd.f32 0.0, %v3470
      %v3472 = vpop.f32.mrb[0].mxu0
      %v3473 = vpop.f32.mrb[0].mxu0
      %v3474 = vpop.f32.mrb[0].mxu0
      %3475 = vdwg.mxu0
      %v3477 = vsel %vm969, %v3370, 0
      %v3480 = vsel %vm969, %v3378, 0
      %3482 = vmatprep.subr.bf16.mxu0 0
      %3483 = vmatpush1.bf16.xpose.msra.mxu0 %v3480
      %3484 = vmatprep.subr.bf16.mxu0 0
      %3485 = vmatpush1.bf16.xpose.msra.mxu0 0
      %3486 = vmatprep.subr.bf16.mxu0 0
      %3487 = vmatpush1.bf16.xpose.msra.mxu0 0
      %3488 = vmatprep.subr.bf16.mxu0 0
      %3489 = vmatpush1.bf16.xpose.msra.mxu0 0
      %3490 = vmatprep.subr.bf16.mxu0 0
      %3491 = vmatpush1.bf16.xpose.msra.mxu0 0
      %3492 = vmatprep.subr.bf16.mxu0 0
      %3493 = vmatpush1.bf16.xpose.msra.mxu0 0
      %3494 = vmatprep.subr.bf16.mxu0 0
      %3495 = vmatpush1.bf16.xpose.msra.mxu0 0
      %3496 = vmatprep.subr.bf16.mxu0 0
      %3497 = vmatpush1.bf16.xpose.msra.mxu0 0
      %3498 = vmatprep.subr.bf16.mxu0 0
      %3499 = vmatpush1.bf16.xpose.msra.mxu0 0
      %3500 = vmatprep.subr.bf16.mxu0 0
      %3501 = vmatpush1.bf16.xpose.msra.mxu0 0
      %3502 = vmatprep.subr.bf16.mxu0 0
      %3503 = vmatpush1.bf16.xpose.msra.mxu0 0
      %3504 = vmatprep.subr.bf16.mxu0 0
      %3505 = vmatpush1.bf16.xpose.msra.mxu0 0
      %3506 = vmatprep.subr.bf16.mxu0 0
      %3507 = vmatpush1.bf16.xpose.msra.mxu0 0
      %3508 = vmatprep.subr.bf16.mxu0 0
      %3509 = vmatpush1.bf16.xpose.msra.mxu0 0
      %3510 = vmatprep.subr.bf16.mxu0 0
      %3511 = vmatpush1.bf16.xpose.msra.mxu0 0
      %3512 = vmatprep.subr.bf16.mxu0 0
      %3513 = vmatpush1.bf16.xpose.msra.mxu0 0
      %3514 = vmatprep.mubr.bf16.mxu0 0
      %3515 = vmatmul.mubr.bf16.gmra.mrb[0].mxu0 %v3477
      %v3516 = vpop.f32.mrb[0].mxu0
      %v3517 = vadd.f32 0.0, %v3516
      %v3518 = vpop.f32.mrb[0].mxu0
      %v3519 = vpop.f32.mrb[0].mxu0
      %v3520 = vpop.f32.mrb[0].mxu0
      %3521 = vdwg.mxu0
      %v3523 = vsel %vm969, %v3371, 0
      %v3526 = vsel %vm969, %v3379, 0
      %3528 = vmatprep.subr.bf16.mxu0 0
      %3529 = vmatpush1.bf16.xpose.msra.mxu0 %v3526
      %3530 = vmatprep.subr.bf16.mxu0 0
      %3531 = vmatpush1.bf16.xpose.msra.mxu0 0
      %3532 = vmatprep.subr.bf16.mxu0 0
      %3533 = vmatpush1.bf16.xpose.msra.mxu0 0
      %3534 = vmatprep.subr.bf16.mxu0 0
      %3535 = vmatpush1.bf16.xpose.msra.mxu0 0
      %3536 = vmatprep.subr.bf16.mxu0 0
      %3537 = vmatpush1.bf16.xpose.msra.mxu0 0
      %3538 = vmatprep.subr.bf16.mxu0 0
      %3539 = vmatpush1.bf16.xpose.msra.mxu0 0
      %3540 = vmatprep.subr.bf16.mxu0 0
      %3541 = vmatpush1.bf16.xpose.msra.mxu0 0
      %3542 = vmatprep.subr.bf16.mxu0 0
      %3543 = vmatpush1.bf16.xpose.msra.mxu0 0
      %3544 = vmatprep.subr.bf16.mxu0 0
      %3545 = vmatpush1.bf16.xpose.msra.mxu0 0
      %3546 = vmatprep.subr.bf16.mxu0 0
      %3547 = vmatpush1.bf16.xpose.msra.mxu0 0
      %3548 = vmatprep.subr.bf16.mxu0 0
      %3549 = vmatpush1.bf16.xpose.msra.mxu0 0
      %3550 = vmatprep.subr.bf16.mxu0 0
      %3551 = vmatpush1.bf16.xpose.msra.mxu0 0
      %3552 = vmatprep.subr.bf16.mxu0 0
      %3553 = vmatpush1.bf16.xpose.msra.mxu0 0
      %3554 = vmatprep.subr.bf16.mxu0 0
      %3555 = vmatpush1.bf16.xpose.msra.mxu0 0
      %3556 = vmatprep.subr.bf16.mxu0 0
      %3557 = vmatpush1.bf16.xpose.msra.mxu0 0
      %3558 = vmatprep.subr.bf16.mxu0 0
      %3559 = vmatpush1.bf16.xpose.msra.mxu0 0
      %3560 = vmatprep.mubr.bf16.mxu0 0
      %3561 = vmatmul.mubr.bf16.gmra.mrb[0].mxu0 %v3523
      %v3562 = vpop.f32.mrb[0].mxu0
      %v3563 = vadd.f32 0.0, %v3562
      %v3564 = vpop.f32.mrb[0].mxu0
      %v3565 = vpop.f32.mrb[0].mxu0
      %v3566 = vpop.f32.mrb[0].mxu0
      %3567 = vdwg.mxu0
      %v3569 = vsel %vm969, %v3372, 0
      %v3572 = vsel %vm969, %v3380, 0
      %3574 = vmatprep.subr.bf16.mxu0 0
      %3575 = vmatpush1.bf16.xpose.msra.mxu0 %v3572
      %3576 = vmatprep.subr.bf16.mxu0 0
      %3577 = vmatpush1.bf16.xpose.msra.mxu0 0
      %3578 = vmatprep.subr.bf16.mxu0 0
      %3579 = vmatpush1.bf16.xpose.msra.mxu0 0
      %3580 = vmatprep.subr.bf16.mxu0 0
      %3581 = vmatpush1.bf16.xpose.msra.mxu0 0
      %3582 = vmatprep.subr.bf16.mxu0 0
      %3583 = vmatpush1.bf16.xpose.msra.mxu0 0
      %3584 = vmatprep.subr.bf16.mxu0 0
      %3585 = vmatpush1.bf16.xpose.msra.mxu0 0
      %3586 = vmatprep.subr.bf16.mxu0 0
      %3587 = vmatpush1.bf16.xpose.msra.mxu0 0
      %3588 = vmatprep.subr.bf16.mxu0 0
      %3589 = vmatpush1.bf16.xpose.msra.mxu0 0
      %3590 = vmatprep.subr.bf16.mxu0 0
      %3591 = vmatpush1.bf16.xpose.msra.mxu0 0
      %3592 = vmatprep.subr.bf16.mxu0 0
      %3593 = vmatpush1.bf16.xpose.msra.mxu0 0
      %3594 = vmatprep.subr.bf16.mxu0 0
      %3595 = vmatpush1.bf16.xpose.msra.mxu0 0
      %3596 = vmatprep.subr.bf16.mxu0 0
      %3597 = vmatpush1.bf16.xpose.msra.mxu0 0
      %3598 = vmatprep.subr.bf16.mxu0 0
      %3599 = vmatpush1.bf16.xpose.msra.mxu0 0
      %3600 = vmatprep.subr.bf16.mxu0 0
      %3601 = vmatpush1.bf16.xpose.msra.mxu0 0
      %3602 = vmatprep.subr.bf16.mxu0 0
      %3603 = vmatpush1.bf16.xpose.msra.mxu0 0
      %3604 = vmatprep.subr.bf16.mxu0 0
      %3605 = vmatpush1.bf16.xpose.msra.mxu0 0
      %3606 = vmatprep.mubr.bf16.mxu0 0
      %3607 = vmatmul.mubr.bf16.gmra.mrb[0].mxu0 %v3569
      %v3608 = vpop.f32.mrb[0].mxu0
      %v3609 = vadd.f32 0.0, %v3608
      %v3610 = vpop.f32.mrb[0].mxu0
      %v3611 = vpop.f32.mrb[0].mxu0
      %v3612 = vpop.f32.mrb[0].mxu0
      %3613 = vdwg.mxu0
      %v3615 = vsel %vm969, %v3373, 0
      %v3618 = vsel %vm969, %v3381, 0
      %3620 = vmatprep.subr.bf16.mxu0 0
      %3621 = vmatpush1.bf16.xpose.msra.mxu0 %v3618
      %3622 = vmatprep.subr.bf16.mxu0 0
      %3623 = vmatpush1.bf16.xpose.msra.mxu0 0
      %3624 = vmatprep.subr.bf16.mxu0 0
      %3625 = vmatpush1.bf16.xpose.msra.mxu0 0
      %3626 = vmatprep.subr.bf16.mxu0 0
      %3627 = vmatpush1.bf16.xpose.msra.mxu0 0
      %3628 = vmatprep.subr.bf16.mxu0 0
      %3629 = vmatpush1.bf16.xpose.msra.mxu0 0
      %3630 = vmatprep.subr.bf16.mxu0 0
      %3631 = vmatpush1.bf16.xpose.msra.mxu0 0
      %3632 = vmatprep.subr.bf16.mxu0 0
      %3633 = vmatpush1.bf16.xpose.msra.mxu0 0
      %3634 = vmatprep.subr.bf16.mxu0 0
      %3635 = vmatpush1.bf16.xpose.msra.mxu0 0
      %3636 = vmatprep.subr.bf16.mxu0 0
      %3637 = vmatpush1.bf16.xpose.msra.mxu0 0
      %3638 = vmatprep.subr.bf16.mxu0 0
      %3639 = vmatpush1.bf16.xpose.msra.mxu0 0
      %3640 = vmatprep.subr.bf16.mxu0 0
      %3641 = vmatpush1.bf16.xpose.msra.mxu0 0
      %3642 = vmatprep.subr.bf16.mxu0 0
      %3643 = vmatpush1.bf16.xpose.msra.mxu0 0
      %3644 = vmatprep.subr.bf16.mxu0 0
      %3645 = vmatpush1.bf16.xpose.msra.mxu0 0
      %3646 = vmatprep.subr.bf16.mxu0 0
      %3647 = vmatpush1.bf16.xpose.msra.mxu0 0
      %3648 = vmatprep.subr.bf16.mxu0 0
      %3649 = vmatpush1.bf16.xpose.msra.mxu0 0
      %3650 = vmatprep.subr.bf16.mxu0 0
      %3651 = vmatpush1.bf16.xpose.msra.mxu0 0
      %3652 = vmatprep.mubr.bf16.mxu0 0
      %3653 = vmatmul.mubr.bf16.gmra.mrb[0].mxu0 %v3615
      %v3654 = vpop.f32.mrb[0].mxu0
      %v3655 = vadd.f32 0.0, %v3654
      %v3656 = vpop.f32.mrb[0].mxu0
      %v3657 = vpop.f32.mrb[0].mxu0
      %v3658 = vpop.f32.mrb[0].mxu0
      %3659 = vdwg.mxu0
      %v3661 = vsel %vm969, %v3374, 0
      %v3664 = vsel %vm969, %v3382, 0
      %3666 = vmatprep.subr.bf16.mxu0 0
      %3667 = vmatpush1.bf16.xpose.msra.mxu0 %v3664
      %3668 = vmatprep.subr.bf16.mxu0 0
      %3669 = vmatpush1.bf16.xpose.msra.mxu0 0
      %3670 = vmatprep.subr.bf16.mxu0 0
      %3671 = vmatpush1.bf16.xpose.msra.mxu0 0
      %3672 = vmatprep.subr.bf16.mxu0 0
      %3673 = vmatpush1.bf16.xpose.msra.mxu0 0
      %3674 = vmatprep.subr.bf16.mxu0 0
      %3675 = vmatpush1.bf16.xpose.msra.mxu0 0
      %3676 = vmatprep.subr.bf16.mxu0 0
      %3677 = vmatpush1.bf16.xpose.msra.mxu0 0
      %3678 = vmatprep.subr.bf16.mxu0 0
      %3679 = vmatpush1.bf16.xpose.msra.mxu0 0
      %3680 = vmatprep.subr.bf16.mxu0 0
      %3681 = vmatpush1.bf16.xpose.msra.mxu0 0
      %3682 = vmatprep.subr.bf16.mxu0 0
      %3683 = vmatpush1.bf16.xpose.msra.mxu0 0
      %3684 = vmatprep.subr.bf16.mxu0 0
      %3685 = vmatpush1.bf16.xpose.msra.mxu0 0
      %3686 = vmatprep.subr.bf16.mxu0 0
      %3687 = vmatpush1.bf16.xpose.msra.mxu0 0
      %3688 = vmatprep.subr.bf16.mxu0 0
      %3689 = vmatpush1.bf16.xpose.msra.mxu0 0
      %3690 = vmatprep.subr.bf16.mxu0 0
      %3691 = vmatpush1.bf16.xpose.msra.mxu0 0
      %3692 = vmatprep.subr.bf16.mxu0 0
      %3693 = vmatpush1.bf16.xpose.msra.mxu0 0
      %3694 = vmatprep.subr.bf16.mxu0 0
      %3695 = vmatpush1.bf16.xpose.msra.mxu0 0
      %3696 = vmatprep.subr.bf16.mxu0 0
      %3697 = vmatpush1.bf16.xpose.msra.mxu0 0
      %3698 = vmatprep.mubr.bf16.mxu0 0
      %3699 = vmatmul.mubr.bf16.gmra.mrb[0].mxu0 %v3661
      %v3700 = vpop.f32.mrb[0].mxu0
      %v3701 = vadd.f32 0.0, %v3700
      %v3702 = vpop.f32.mrb[0].mxu0
      %v3703 = vpop.f32.mrb[0].mxu0
      %v3704 = vpop.f32.mrb[0].mxu0
      %3705 = vdwg.mxu0
      %v3707 = vsel %vm969, %v3375, 0
      %v3710 = vsel %vm969, %v3383, 0
      %3712 = vmatprep.subr.bf16.mxu0 0
      %3713 = vmatpush1.bf16.xpose.msra.mxu0 %v3710
      %3714 = vmatprep.subr.bf16.mxu0 0
      %3715 = vmatpush1.bf16.xpose.msra.mxu0 0
      %3716 = vmatprep.subr.bf16.mxu0 0
      %3717 = vmatpush1.bf16.xpose.msra.mxu0 0
      %3718 = vmatprep.subr.bf16.mxu0 0
      %3719 = vmatpush1.bf16.xpose.msra.mxu0 0
      %3720 = vmatprep.subr.bf16.mxu0 0
      %3721 = vmatpush1.bf16.xpose.msra.mxu0 0
      %3722 = vmatprep.subr.bf16.mxu0 0
      %3723 = vmatpush1.bf16.xpose.msra.mxu0 0
      %3724 = vmatprep.subr.bf16.mxu0 0
      %3725 = vmatpush1.bf16.xpose.msra.mxu0 0
      %3726 = vmatprep.subr.bf16.mxu0 0
      %3727 = vmatpush1.bf16.xpose.msra.mxu0 0
      %3728 = vmatprep.subr.bf16.mxu0 0
      %3729 = vmatpush1.bf16.xpose.msra.mxu0 0
      %3730 = vmatprep.subr.bf16.mxu0 0
      %3731 = vmatpush1.bf16.xpose.msra.mxu0 0
      %3732 = vmatprep.subr.bf16.mxu0 0
      %3733 = vmatpush1.bf16.xpose.msra.mxu0 0
      %3734 = vmatprep.subr.bf16.mxu0 0
      %3735 = vmatpush1.bf16.xpose.msra.mxu0 0
      %3736 = vmatprep.subr.bf16.mxu0 0
      %3737 = vmatpush1.bf16.xpose.msra.mxu0 0
      %3738 = vmatprep.subr.bf16.mxu0 0
      %3739 = vmatpush1.bf16.xpose.msra.mxu0 0
      %3740 = vmatprep.subr.bf16.mxu0 0
      %3741 = vmatpush1.bf16.xpose.msra.mxu0 0
      %3742 = vmatprep.subr.bf16.mxu0 0
      %3743 = vmatpush1.bf16.xpose.msra.mxu0 0
      %3744 = vmatprep.mubr.bf16.mxu0 0
      %3745 = vmatmul.mubr.bf16.gmra.mrb[0].mxu0 %v3707
      %v3746 = vpop.f32.mrb[0].mxu0
      %v3747 = vadd.f32 0.0, %v3746
      %v3748 = vpop.f32.mrb[0].mxu0
      %v3749 = vpop.f32.mrb[0].mxu0
      %v3750 = vpop.f32.mrb[0].mxu0
      %3751 = vdwg.mxu0
      %v3760 = vcombine.high %v3174, %v3174
      %v3762 = vunpack.c.l.s4 1966171168
      %v3763 = vunpack.c.0.s8 %v3762
      %v3764 = vlaneseq
      %v3765 = vshrl.u32 %v3764, 7
      %v3766 = vsub.s32 %v3763, %v3765
      %v3767 = vrot.slane %v3174, %v3766
      %v3769 = vunpack.c.l.s4 1966171168
      %v3770 = vunpack.c.0.s8 %v3769
      %v3771 = vlaneseq
      %v3772 = vshrl.u32 %v3771, 7
      %v3773 = vsub.s32 %v3770, %v3772
      %v3774 = vrot.slane %v3760, %v3773
      %v3775 = vcombine.high %v3767, %v3767
      %v3776 = vcombine.high %v3774, %v3774
      %v3778 = vunpack.c.l.s4 1966171168
      %v3779 = vunpack.c.0.s8 %v3778
      %v3780 = vlaneseq
      %v3781 = vshrl.u32 %v3780, 7
      %v3782 = vsub.s32 %v3779, %v3781
      %v3783 = vrot.slane %v3767, %v3782
      %v3785 = vunpack.c.l.s4 1966171168
      %v3786 = vunpack.c.0.s8 %v3785
      %v3787 = vlaneseq
      %v3788 = vshrl.u32 %v3787, 7
      %v3789 = vsub.s32 %v3786, %v3788
      %v3790 = vrot.slane %v3774, %v3789
      %v3792 = vunpack.c.l.s4 1966171168
      %v3793 = vunpack.c.0.s8 %v3792
      %v3794 = vlaneseq
      %v3795 = vshrl.u32 %v3794, 7
      %v3796 = vsub.s32 %v3793, %v3795
      %v3797 = vrot.slane %v3775, %v3796
      %v3799 = vunpack.c.l.s4 1966171168
      %v3800 = vunpack.c.0.s8 %v3799
      %v3801 = vlaneseq
      %v3802 = vshrl.u32 %v3801, 7
      %v3803 = vsub.s32 %v3800, %v3802
      %v3804 = vrot.slane %v3776, %v3803
      %v3805 = vcombine.high %v3783, %v3783
      %v3806 = vcombine.high %v3790, %v3790
      %v3807 = vcombine.high %v3797, %v3797
      %v3808 = vcombine.high %v3804, %v3804
      %v3809 = vcombine.high %v3177, %v3177
      %v3811 = vunpack.c.l.s4 1966171168
      %v3812 = vunpack.c.0.s8 %v3811
      %v3813 = vlaneseq
      %v3814 = vshrl.u32 %v3813, 7
      %v3815 = vsub.s32 %v3812, %v3814
      %v3816 = vrot.slane %v3177, %v3815
      %v3818 = vunpack.c.l.s4 1966171168
      %v3819 = vunpack.c.0.s8 %v3818
      %v3820 = vlaneseq
      %v3821 = vshrl.u32 %v3820, 7
      %v3822 = vsub.s32 %v3819, %v3821
      %v3823 = vrot.slane %v3809, %v3822
      %v3824 = vcombine.high %v3816, %v3816
      %v3825 = vcombine.high %v3823, %v3823
      %v3827 = vunpack.c.l.s4 1966171168
      %v3828 = vunpack.c.0.s8 %v3827
      %v3829 = vlaneseq
      %v3830 = vshrl.u32 %v3829, 7
      %v3831 = vsub.s32 %v3828, %v3830
      %v3832 = vrot.slane %v3816, %v3831
      %v3834 = vunpack.c.l.s4 1966171168
      %v3835 = vunpack.c.0.s8 %v3834
      %v3836 = vlaneseq
      %v3837 = vshrl.u32 %v3836, 7
      %v3838 = vsub.s32 %v3835, %v3837
      %v3839 = vrot.slane %v3823, %v3838
      %v3841 = vunpack.c.l.s4 1966171168
      %v3842 = vunpack.c.0.s8 %v3841
      %v3843 = vlaneseq
      %v3844 = vshrl.u32 %v3843, 7
      %v3845 = vsub.s32 %v3842, %v3844
      %v3846 = vrot.slane %v3824, %v3845
      %v3848 = vunpack.c.l.s4 1966171168
      %v3849 = vunpack.c.0.s8 %v3848
      %v3850 = vlaneseq
      %v3851 = vshrl.u32 %v3850, 7
      %v3852 = vsub.s32 %v3849, %v3851
      %v3853 = vrot.slane %v3825, %v3852
      %v3854 = vcombine.high %v3832, %v3832
      %v3855 = vcombine.high %v3839, %v3839
      %v3856 = vcombine.high %v3846, %v3846
      %v3857 = vcombine.high %v3853, %v3853
      %v3858 = vcombine.high %v3182, %v3182
      %v3860 = vunpack.c.l.s4 1966171168
      %v3861 = vunpack.c.0.s8 %v3860
      %v3862 = vlaneseq
      %v3863 = vshrl.u32 %v3862, 7
      %v3864 = vsub.s32 %v3861, %v3863
      %v3865 = vrot.slane %v3182, %v3864
      %v3867 = vunpack.c.l.s4 1966171168
      %v3868 = vunpack.c.0.s8 %v3867
      %v3869 = vlaneseq
      %v3870 = vshrl.u32 %v3869, 7
      %v3871 = vsub.s32 %v3868, %v3870
      %v3872 = vrot.slane %v3858, %v3871
      %v3873 = vcombine.high %v3865, %v3865
      %v3874 = vcombine.high %v3872, %v3872
      %v3876 = vunpack.c.l.s4 1966171168
      %v3877 = vunpack.c.0.s8 %v3876
      %v3878 = vlaneseq
      %v3879 = vshrl.u32 %v3878, 7
      %v3880 = vsub.s32 %v3877, %v3879
      %v3881 = vrot.slane %v3865, %v3880
      %v3883 = vunpack.c.l.s4 1966171168
      %v3884 = vunpack.c.0.s8 %v3883
      %v3885 = vlaneseq
      %v3886 = vshrl.u32 %v3885, 7
      %v3887 = vsub.s32 %v3884, %v3886
      %v3888 = vrot.slane %v3872, %v3887
      %v3890 = vunpack.c.l.s4 1966171168
      %v3891 = vunpack.c.0.s8 %v3890
      %v3892 = vlaneseq
      %v3893 = vshrl.u32 %v3892, 7
      %v3894 = vsub.s32 %v3891, %v3893
      %v3895 = vrot.slane %v3873, %v3894
      %v3897 = vunpack.c.l.s4 1966171168
      %v3898 = vunpack.c.0.s8 %v3897
      %v3899 = vlaneseq
      %v3900 = vshrl.u32 %v3899, 7
      %v3901 = vsub.s32 %v3898, %v3900
      %v3902 = vrot.slane %v3874, %v3901
      %v3903 = vcombine.high %v3881, %v3881
      %v3904 = vcombine.high %v3888, %v3888
      %v3905 = vcombine.high %v3895, %v3895
      %v3906 = vcombine.high %v3902, %v3902
      %v3907 = vcombine.high %v3185, %v3185
      %v3909 = vunpack.c.l.s4 1966171168
      %v3910 = vunpack.c.0.s8 %v3909
      %v3911 = vlaneseq
      %v3912 = vshrl.u32 %v3911, 7
      %v3913 = vsub.s32 %v3910, %v3912
      %v3914 = vrot.slane %v3185, %v3913
      %v3916 = vunpack.c.l.s4 1966171168
      %v3917 = vunpack.c.0.s8 %v3916
      %v3918 = vlaneseq
      %v3919 = vshrl.u32 %v3918, 7
      %v3920 = vsub.s32 %v3917, %v3919
      %v3921 = vrot.slane %v3907, %v3920
      %v3922 = vcombine.high %v3914, %v3914
      %v3923 = vcombine.high %v3921, %v3921
      %v3925 = vunpack.c.l.s4 1966171168
      %v3926 = vunpack.c.0.s8 %v3925
      %v3927 = vlaneseq
      %v3928 = vshrl.u32 %v3927, 7
      %v3929 = vsub.s32 %v3926, %v3928
      %v3930 = vrot.slane %v3914, %v3929
      %v3932 = vunpack.c.l.s4 1966171168
      %v3933 = vunpack.c.0.s8 %v3932
      %v3934 = vlaneseq
      %v3935 = vshrl.u32 %v3934, 7
      %v3936 = vsub.s32 %v3933, %v3935
      %v3937 = vrot.slane %v3921, %v3936
      %v3939 = vunpack.c.l.s4 1966171168
      %v3940 = vunpack.c.0.s8 %v3939
      %v3941 = vlaneseq
      %v3942 = vshrl.u32 %v3941, 7
      %v3943 = vsub.s32 %v3940, %v3942
      %v3944 = vrot.slane %v3922, %v3943
      %v3946 = vunpack.c.l.s4 1966171168
      %v3947 = vunpack.c.0.s8 %v3946
      %v3948 = vlaneseq
      %v3949 = vshrl.u32 %v3948, 7
      %v3950 = vsub.s32 %v3947, %v3949
      %v3951 = vrot.slane %v3923, %v3950
      %v3952 = vcombine.high %v3930, %v3930
      %v3953 = vcombine.high %v3937, %v3937
      %v3954 = vcombine.high %v3944, %v3944
      %v3955 = vcombine.high %v3951, %v3951
      %v3956 = vcombine.high %v3190, %v3190
      %v3958 = vunpack.c.l.s4 1966171168
      %v3959 = vunpack.c.0.s8 %v3958
      %v3960 = vlaneseq
      %v3961 = vshrl.u32 %v3960, 7
      %v3962 = vsub.s32 %v3959, %v3961
      %v3963 = vrot.slane %v3190, %v3962
      %v3965 = vunpack.c.l.s4 1966171168
      %v3966 = vunpack.c.0.s8 %v3965
      %v3967 = vlaneseq
      %v3968 = vshrl.u32 %v3967, 7
      %v3969 = vsub.s32 %v3966, %v3968
      %v3970 = vrot.slane %v3956, %v3969
      %v3971 = vcombine.high %v3963, %v3963
      %v3972 = vcombine.high %v3970, %v3970
      %v3974 = vunpack.c.l.s4 1966171168
      %v3975 = vunpack.c.0.s8 %v3974
      %v3976 = vlaneseq
      %v3977 = vshrl.u32 %v3976, 7
      %v3978 = vsub.s32 %v3975, %v3977
      %v3979 = vrot.slane %v3963, %v3978
      %v3981 = vunpack.c.l.s4 1966171168
      %v3982 = vunpack.c.0.s8 %v3981
      %v3983 = vlaneseq
      %v3984 = vshrl.u32 %v3983, 7
      %v3985 = vsub.s32 %v3982, %v3984
      %v3986 = vrot.slane %v3970, %v3985
      %v3988 = vunpack.c.l.s4 1966171168
      %v3989 = vunpack.c.0.s8 %v3988
      %v3990 = vlaneseq
      %v3991 = vshrl.u32 %v3990, 7
      %v3992 = vsub.s32 %v3989, %v3991
      %v3993 = vrot.slane %v3971, %v3992
      %v3995 = vunpack.c.l.s4 1966171168
      %v3996 = vunpack.c.0.s8 %v3995
      %v3997 = vlaneseq
      %v3998 = vshrl.u32 %v3997, 7
      %v3999 = vsub.s32 %v3996, %v3998
      %v4000 = vrot.slane %v3972, %v3999
      %v4001 = vcombine.high %v3979, %v3979
      %v4002 = vcombine.high %v3986, %v3986
      %v4003 = vcombine.high %v3993, %v3993
      %v4004 = vcombine.high %v4000, %v4000
      %v4005 = vcombine.high %v3193, %v3193
      %v4007 = vunpack.c.l.s4 1966171168
      %v4008 = vunpack.c.0.s8 %v4007
      %v4009 = vlaneseq
      %v4010 = vshrl.u32 %v4009, 7
      %v4011 = vsub.s32 %v4008, %v4010
      %v4012 = vrot.slane %v3193, %v4011
      %v4014 = vunpack.c.l.s4 1966171168
      %v4015 = vunpack.c.0.s8 %v4014
      %v4016 = vlaneseq
      %v4017 = vshrl.u32 %v4016, 7
      %v4018 = vsub.s32 %v4015, %v4017
      %v4019 = vrot.slane %v4005, %v4018
      %v4020 = vcombine.high %v4012, %v4012
      %v4021 = vcombine.high %v4019, %v4019
      %v4023 = vunpack.c.l.s4 1966171168
      %v4024 = vunpack.c.0.s8 %v4023
      %v4025 = vlaneseq
      %v4026 = vshrl.u32 %v4025, 7
      %v4027 = vsub.s32 %v4024, %v4026
      %v4028 = vrot.slane %v4012, %v4027
      %v4030 = vunpack.c.l.s4 1966171168
      %v4031 = vunpack.c.0.s8 %v4030
      %v4032 = vlaneseq
      %v4033 = vshrl.u32 %v4032, 7
      %v4034 = vsub.s32 %v4031, %v4033
      %v4035 = vrot.slane %v4019, %v4034
      %v4037 = vunpack.c.l.s4 1966171168
      %v4038 = vunpack.c.0.s8 %v4037
      %v4039 = vlaneseq
      %v4040 = vshrl.u32 %v4039, 7
      %v4041 = vsub.s32 %v4038, %v4040
      %v4042 = vrot.slane %v4020, %v4041
      %v4044 = vunpack.c.l.s4 1966171168
      %v4045 = vunpack.c.0.s8 %v4044
      %v4046 = vlaneseq
      %v4047 = vshrl.u32 %v4046, 7
      %v4048 = vsub.s32 %v4045, %v4047
      %v4049 = vrot.slane %v4021, %v4048
      %v4050 = vcombine.high %v4028, %v4028
      %v4051 = vcombine.high %v4035, %v4035
      %v4052 = vcombine.high %v4042, %v4042
      %v4053 = vcombine.high %v4049, %v4049
      %v4054 = vcombine.high %v3198, %v3198
      %v4056 = vunpack.c.l.s4 1966171168
      %v4057 = vunpack.c.0.s8 %v4056
      %v4058 = vlaneseq
      %v4059 = vshrl.u32 %v4058, 7
      %v4060 = vsub.s32 %v4057, %v4059
      %v4061 = vrot.slane %v3198, %v4060
      %v4063 = vunpack.c.l.s4 1966171168
      %v4064 = vunpack.c.0.s8 %v4063
      %v4065 = vlaneseq
      %v4066 = vshrl.u32 %v4065, 7
      %v4067 = vsub.s32 %v4064, %v4066
      %v4068 = vrot.slane %v4054, %v4067
      %v4069 = vcombine.high %v4061, %v4061
      %v4070 = vcombine.high %v4068, %v4068
      %v4072 = vunpack.c.l.s4 1966171168
      %v4073 = vunpack.c.0.s8 %v4072
      %v4074 = vlaneseq
      %v4075 = vshrl.u32 %v4074, 7
      %v4076 = vsub.s32 %v4073, %v4075
      %v4077 = vrot.slane %v4061, %v4076
      %v4079 = vunpack.c.l.s4 1966171168
      %v4080 = vunpack.c.0.s8 %v4079
      %v4081 = vlaneseq
      %v4082 = vshrl.u32 %v4081, 7
      %v4083 = vsub.s32 %v4080, %v4082
      %v4084 = vrot.slane %v4068, %v4083
      %v4086 = vunpack.c.l.s4 1966171168
      %v4087 = vunpack.c.0.s8 %v4086
      %v4088 = vlaneseq
      %v4089 = vshrl.u32 %v4088, 7
      %v4090 = vsub.s32 %v4087, %v4089
      %v4091 = vrot.slane %v4069, %v4090
      %v4093 = vunpack.c.l.s4 1966171168
      %v4094 = vunpack.c.0.s8 %v4093
      %v4095 = vlaneseq
      %v4096 = vshrl.u32 %v4095, 7
      %v4097 = vsub.s32 %v4094, %v4096
      %v4098 = vrot.slane %v4070, %v4097
      %v4099 = vcombine.high %v4077, %v4077
      %v4100 = vcombine.high %v4084, %v4084
      %v4101 = vcombine.high %v4091, %v4091
      %v4102 = vcombine.high %v4098, %v4098
      %v4103 = vcombine.high %v3201, %v3201
      %v4105 = vunpack.c.l.s4 1966171168
      %v4106 = vunpack.c.0.s8 %v4105
      %v4107 = vlaneseq
      %v4108 = vshrl.u32 %v4107, 7
      %v4109 = vsub.s32 %v4106, %v4108
      %v4110 = vrot.slane %v3201, %v4109
      %v4112 = vunpack.c.l.s4 1966171168
      %v4113 = vunpack.c.0.s8 %v4112
      %v4114 = vlaneseq
      %v4115 = vshrl.u32 %v4114, 7
      %v4116 = vsub.s32 %v4113, %v4115
      %v4117 = vrot.slane %v4103, %v4116
      %v4118 = vcombine.high %v4110, %v4110
      %v4119 = vcombine.high %v4117, %v4117
      %v4121 = vunpack.c.l.s4 1966171168
      %v4122 = vunpack.c.0.s8 %v4121
      %v4123 = vlaneseq
      %v4124 = vshrl.u32 %v4123, 7
      %v4125 = vsub.s32 %v4122, %v4124
      %v4126 = vrot.slane %v4110, %v4125
      %v4128 = vunpack.c.l.s4 1966171168
      %v4129 = vunpack.c.0.s8 %v4128
      %v4130 = vlaneseq
      %v4131 = vshrl.u32 %v4130, 7
      %v4132 = vsub.s32 %v4129, %v4131
      %v4133 = vrot.slane %v4117, %v4132
      %v4135 = vunpack.c.l.s4 1966171168
      %v4136 = vunpack.c.0.s8 %v4135
      %v4137 = vlaneseq
      %v4138 = vshrl.u32 %v4137, 7
      %v4139 = vsub.s32 %v4136, %v4138
      %v4140 = vrot.slane %v4118, %v4139
      %v4142 = vunpack.c.l.s4 1966171168
      %v4143 = vunpack.c.0.s8 %v4142
      %v4144 = vlaneseq
      %v4145 = vshrl.u32 %v4144, 7
      %v4146 = vsub.s32 %v4143, %v4145
      %v4147 = vrot.slane %v4119, %v4146
      %v4148 = vcombine.high %v4126, %v4126
      %v4149 = vcombine.high %v4133, %v4133
      %v4150 = vcombine.high %v4140, %v4140
      %v4151 = vcombine.high %v4147, %v4147
      %v4152 = vld [vmem:[%s9] sm:$0xff]
      %v4153 = vld [vmem:[%s9 + $0x8] sm:$0xff]
      %v4154 = vld [vmem:[%s9 + $0x10] sm:$0xff]
      %v4155 = vld [vmem:[%s9 + $0x18] sm:$0xff]
      %v4156 = vld [vmem:[%s9 + $0x20] sm:$0xff]
      %v4157 = vld [vmem:[%s9 + $0x28] sm:$0xff]
      %v4158 = vld [vmem:[%s9 + $0x30] sm:$0xff]
      %v4159 = vld [vmem:[%s9 + $0x38] sm:$0xff]
      %v4160 = vld [vmem:[%s9 + $0x40] sm:$0xff]
      %v4161 = vld [vmem:[%s9 + $0x48] sm:$0xff]
      %v4162 = vld [vmem:[%s9 + $0x50] sm:$0xff]
      %v4163 = vld [vmem:[%s9 + $0x58] sm:$0xff]
      %v4164 = vld [vmem:[%s9 + $0x60] sm:$0xff]
      %v4165 = vld [vmem:[%s9 + $0x68] sm:$0xff]
      %v4166 = vld [vmem:[%s9 + $0x70] sm:$0xff]
      %v4167 = vld [vmem:[%s9 + $0x78] sm:$0xff]
      %v4168 = vld [vmem:[%s9 + $0x80] sm:$0xff]
      %v4169 = vld [vmem:[%s9 + $0x88] sm:$0xff]
      %v4170 = vld [vmem:[%s9 + $0x90] sm:$0xff]
      %v4171 = vld [vmem:[%s9 + $0x98] sm:$0xff]
      %v4172 = vld [vmem:[%s9 + $0xa0] sm:$0xff]
      %v4173 = vld [vmem:[%s9 + $0xa8] sm:$0xff]
      %v4174 = vld [vmem:[%s9 + $0xb0] sm:$0xff]
      %v4175 = vld [vmem:[%s9 + $0xb8] sm:$0xff]
      %v4176 = vld [vmem:[%s9 + $0xc0] sm:$0xff]
      %v4177 = vld [vmem:[%s9 + $0xc8] sm:$0xff]
      %v4178 = vld [vmem:[%s9 + $0xd0] sm:$0xff]
      %v4179 = vld [vmem:[%s9 + $0xd8] sm:$0xff]
      %v4180 = vld [vmem:[%s9 + $0xe0] sm:$0xff]
      %v4181 = vld [vmem:[%s9 + $0xe8] sm:$0xff]
      %v4182 = vld [vmem:[%s9 + $0xf0] sm:$0xff]
      %v4183 = vld [vmem:[%s9 + $0xf8] sm:$0xff]
      %v4184 = vld [vmem:[%s9 + $0x100] sm:$0xff]
      %v4185 = vld [vmem:[%s9 + $0x108] sm:$0xff]
      %v4186 = vld [vmem:[%s9 + $0x110] sm:$0xff]
      %v4187 = vld [vmem:[%s9 + $0x118] sm:$0xff]
      %v4188 = vld [vmem:[%s9 + $0x120] sm:$0xff]
      %v4189 = vld [vmem:[%s9 + $0x128] sm:$0xff]
      %v4190 = vld [vmem:[%s9 + $0x130] sm:$0xff]
      %v4191 = vld [vmem:[%s9 + $0x138] sm:$0xff]
      %v4192 = vld [vmem:[%s9 + $0x140] sm:$0xff]
      %v4193 = vld [vmem:[%s9 + $0x148] sm:$0xff]
      %v4194 = vld [vmem:[%s9 + $0x150] sm:$0xff]
      %v4195 = vld [vmem:[%s9 + $0x158] sm:$0xff]
      %v4196 = vld [vmem:[%s9 + $0x160] sm:$0xff]
      %v4197 = vld [vmem:[%s9 + $0x168] sm:$0xff]
      %v4198 = vld [vmem:[%s9 + $0x170] sm:$0xff]
      %v4199 = vld [vmem:[%s9 + $0x178] sm:$0xff]
      %v4200 = vld [vmem:[%s9 + $0x180] sm:$0xff]
      %v4201 = vld [vmem:[%s9 + $0x188] sm:$0xff]
      %v4202 = vld [vmem:[%s9 + $0x190] sm:$0xff]
      %v4203 = vld [vmem:[%s9 + $0x198] sm:$0xff]
      %v4204 = vld [vmem:[%s9 + $0x1a0] sm:$0xff]
      %v4205 = vld [vmem:[%s9 + $0x1a8] sm:$0xff]
      %v4206 = vld [vmem:[%s9 + $0x1b0] sm:$0xff]
      %v4207 = vld [vmem:[%s9 + $0x1b8] sm:$0xff]
      %v4208 = vld [vmem:[%s9 + $0x1c0] sm:$0xff]
      %v4209 = vld [vmem:[%s9 + $0x1c8] sm:$0xff]
      %v4210 = vld [vmem:[%s9 + $0x1d0] sm:$0xff]
      %v4211 = vld [vmem:[%s9 + $0x1d8] sm:$0xff]
      %v4212 = vld [vmem:[%s9 + $0x1e0] sm:$0xff]
      %v4213 = vld [vmem:[%s9 + $0x1e8] sm:$0xff]
      %v4214 = vld [vmem:[%s9 + $0x1f0] sm:$0xff]
      %v4215 = vld [vmem:[%s9 + $0x1f8] sm:$0xff]
      %v4216 = vlaneseq
      %v4217 = vshrl.u32 %v4216, 7
      %v4218 = vsub.s32 0, %v4217
      %v4219 = vrot.slane %v3783, %v4218
      %v4220 = vlaneseq
      %v4221 = vshrl.u32 %v4220, 7
      %v4222 = vsub.s32 0, %v4221
      %v4223 = vrot.slane %v3797, %v4222
      %v4224 = vlaneseq
      %v4225 = vshrl.u32 %v4224, 7
      %v4226 = vsub.s32 0, %v4225
      %v4227 = vrot.slane %v3805, %v4226
      %v4228 = vlaneseq
      %v4229 = vshrl.u32 %v4228, 7
      %v4230 = vsub.s32 0, %v4229
      %v4231 = vrot.slane %v3807, %v4230
      %v4232 = vlaneseq
      %v4233 = vshrl.u32 %v4232, 7
      %v4234 = vsub.s32 0, %v4233
      %v4235 = vrot.slane %v3790, %v4234
      %v4236 = vlaneseq
      %v4237 = vshrl.u32 %v4236, 7
      %v4238 = vsub.s32 0, %v4237
      %v4239 = vrot.slane %v3804, %v4238
      %v4240 = vlaneseq
      %v4241 = vshrl.u32 %v4240, 7
      %v4242 = vsub.s32 0, %v4241
      %v4243 = vrot.slane %v3806, %v4242
      %v4244 = vlaneseq
      %v4245 = vshrl.u32 %v4244, 7
      %v4246 = vsub.s32 0, %v4245
      %v4247 = vrot.slane %v3808, %v4246
      %v4248 = vlaneseq
      %v4249 = vshrl.u32 %v4248, 7
      %v4250 = vsub.s32 0, %v4249
      %v4251 = vrot.slane %v3832, %v4250
      %v4252 = vlaneseq
      %v4253 = vshrl.u32 %v4252, 7
      %v4254 = vsub.s32 0, %v4253
      %v4255 = vrot.slane %v3846, %v4254
      %v4256 = vlaneseq
      %v4257 = vshrl.u32 %v4256, 7
      %v4258 = vsub.s32 0, %v4257
      %v4259 = vrot.slane %v3854, %v4258
      %v4260 = vlaneseq
      %v4261 = vshrl.u32 %v4260, 7
      %v4262 = vsub.s32 0, %v4261
      %v4263 = vrot.slane %v3856, %v4262
      %v4264 = vlaneseq
      %v4265 = vshrl.u32 %v4264, 7
      %v4266 = vsub.s32 0, %v4265
      %v4267 = vrot.slane %v3839, %v4266
      %v4268 = vlaneseq
      %v4269 = vshrl.u32 %v4268, 7
      %v4270 = vsub.s32 0, %v4269
      %v4271 = vrot.slane %v3853, %v4270
      %v4272 = vlaneseq
      %v4273 = vshrl.u32 %v4272, 7
      %v4274 = vsub.s32 0, %v4273
      %v4275 = vrot.slane %v3855, %v4274
      %v4276 = vlaneseq
      %v4277 = vshrl.u32 %v4276, 7
      %v4278 = vsub.s32 0, %v4277
      %v4279 = vrot.slane %v3857, %v4278
      %v4280 = vlaneseq
      %v4281 = vshrl.u32 %v4280, 7
      %v4282 = vsub.s32 0, %v4281
      %v4283 = vrot.slane %v3881, %v4282
      %v4284 = vlaneseq
      %v4285 = vshrl.u32 %v4284, 7
      %v4286 = vsub.s32 0, %v4285
      %v4287 = vrot.slane %v3895, %v4286
      %v4288 = vlaneseq
      %v4289 = vshrl.u32 %v4288, 7
      %v4290 = vsub.s32 0, %v4289
      %v4291 = vrot.slane %v3903, %v4290
      %v4292 = vlaneseq
      %v4293 = vshrl.u32 %v4292, 7
      %v4294 = vsub.s32 0, %v4293
      %v4295 = vrot.slane %v3905, %v4294
      %v4296 = vlaneseq
      %v4297 = vshrl.u32 %v4296, 7
      %v4298 = vsub.s32 0, %v4297
      %v4299 = vrot.slane %v3888, %v4298
      %v4300 = vlaneseq
      %v4301 = vshrl.u32 %v4300, 7
      %v4302 = vsub.s32 0, %v4301
      %v4303 = vrot.slane %v3902, %v4302
      %v4304 = vlaneseq
      %v4305 = vshrl.u32 %v4304, 7
      %v4306 = vsub.s32 0, %v4305
      %v4307 = vrot.slane %v3904, %v4306
      %v4308 = vlaneseq
      %v4309 = vshrl.u32 %v4308, 7
      %v4310 = vsub.s32 0, %v4309
      %v4311 = vrot.slane %v3906, %v4310
      %v4312 = vlaneseq
      %v4313 = vshrl.u32 %v4312, 7
      %v4314 = vsub.s32 0, %v4313
      %v4315 = vrot.slane %v3930, %v4314
      %v4316 = vlaneseq
      %v4317 = vshrl.u32 %v4316, 7
      %v4318 = vsub.s32 0, %v4317
      %v4319 = vrot.slane %v3944, %v4318
      %v4320 = vlaneseq
      %v4321 = vshrl.u32 %v4320, 7
      %v4322 = vsub.s32 0, %v4321
      %v4323 = vrot.slane %v3952, %v4322
      %v4324 = vlaneseq
      %v4325 = vshrl.u32 %v4324, 7
      %v4326 = vsub.s32 0, %v4325
      %v4327 = vrot.slane %v3954, %v4326
      %v4328 = vlaneseq
      %v4329 = vshrl.u32 %v4328, 7
      %v4330 = vsub.s32 0, %v4329
      %v4331 = vrot.slane %v3937, %v4330
      %v4332 = vlaneseq
      %v4333 = vshrl.u32 %v4332, 7
      %v4334 = vsub.s32 0, %v4333
      %v4335 = vrot.slane %v3951, %v4334
      %v4336 = vlaneseq
      %v4337 = vshrl.u32 %v4336, 7
      %v4338 = vsub.s32 0, %v4337
      %v4339 = vrot.slane %v3953, %v4338
      %v4340 = vlaneseq
      %v4341 = vshrl.u32 %v4340, 7
      %v4342 = vsub.s32 0, %v4341
      %v4343 = vrot.slane %v3955, %v4342
      %v4344 = vlaneseq
      %v4345 = vshrl.u32 %v4344, 7
      %v4346 = vsub.s32 0, %v4345
      %v4347 = vrot.slane %v3979, %v4346
      %v4348 = vlaneseq
      %v4349 = vshrl.u32 %v4348, 7
      %v4350 = vsub.s32 0, %v4349
      %v4351 = vrot.slane %v3993, %v4350
      %v4352 = vlaneseq
      %v4353 = vshrl.u32 %v4352, 7
      %v4354 = vsub.s32 0, %v4353
      %v4355 = vrot.slane %v4001, %v4354
      %v4356 = vlaneseq
      %v4357 = vshrl.u32 %v4356, 7
      %v4358 = vsub.s32 0, %v4357
      %v4359 = vrot.slane %v4003, %v4358
      %v4360 = vlaneseq
      %v4361 = vshrl.u32 %v4360, 7
      %v4362 = vsub.s32 0, %v4361
      %v4363 = vrot.slane %v3986, %v4362
      %v4364 = vlaneseq
      %v4365 = vshrl.u32 %v4364, 7
      %v4366 = vsub.s32 0, %v4365
      %v4367 = vrot.slane %v4000, %v4366
      %v4368 = vlaneseq
      %v4369 = vshrl.u32 %v4368, 7
      %v4370 = vsub.s32 0, %v4369
      %v4371 = vrot.slane %v4002, %v4370
      %v4372 = vlaneseq
      %v4373 = vshrl.u32 %v4372, 7
      %v4374 = vsub.s32 0, %v4373
      %v4375 = vrot.slane %v4004, %v4374
      %v4376 = vlaneseq
      %v4377 = vshrl.u32 %v4376, 7
      %v4378 = vsub.s32 0, %v4377
      %v4379 = vrot.slane %v4028, %v4378
      %v4380 = vlaneseq
      %v4381 = vshrl.u32 %v4380, 7
      %v4382 = vsub.s32 0, %v4381
      %v4383 = vrot.slane %v4042, %v4382
      %v4384 = vlaneseq
      %v4385 = vshrl.u32 %v4384, 7
      %v4386 = vsub.s32 0, %v4385
      %v4387 = vrot.slane %v4050, %v4386
      %v4388 = vlaneseq
      %v4389 = vshrl.u32 %v4388, 7
      %v4390 = vsub.s32 0, %v4389
      %v4391 = vrot.slane %v4052, %v4390
      %v4392 = vlaneseq
      %v4393 = vshrl.u32 %v4392, 7
      %v4394 = vsub.s32 0, %v4393
      %v4395 = vrot.slane %v4035, %v4394
      %v4396 = vlaneseq
      %v4397 = vshrl.u32 %v4396, 7
      %v4398 = vsub.s32 0, %v4397
      %v4399 = vrot.slane %v4049, %v4398
      %v4400 = vlaneseq
      %v4401 = vshrl.u32 %v4400, 7
      %v4402 = vsub.s32 0, %v4401
      %v4403 = vrot.slane %v4051, %v4402
      %v4404 = vlaneseq
      %v4405 = vshrl.u32 %v4404, 7
      %v4406 = vsub.s32 0, %v4405
      %v4407 = vrot.slane %v4053, %v4406
      %v4408 = vlaneseq
      %v4409 = vshrl.u32 %v4408, 7
      %v4410 = vsub.s32 0, %v4409
      %v4411 = vrot.slane %v4077, %v4410
      %v4412 = vlaneseq
      %v4413 = vshrl.u32 %v4412, 7
      %v4414 = vsub.s32 0, %v4413
      %v4415 = vrot.slane %v4091, %v4414
      %v4416 = vlaneseq
      %v4417 = vshrl.u32 %v4416, 7
      %v4418 = vsub.s32 0, %v4417
      %v4419 = vrot.slane %v4099, %v4418
      %v4420 = vlaneseq
      %v4421 = vshrl.u32 %v4420, 7
      %v4422 = vsub.s32 0, %v4421
      %v4423 = vrot.slane %v4101, %v4422
      %v4424 = vlaneseq
      %v4425 = vshrl.u32 %v4424, 7
      %v4426 = vsub.s32 0, %v4425
      %v4427 = vrot.slane %v4084, %v4426
      %v4428 = vlaneseq
      %v4429 = vshrl.u32 %v4428, 7
      %v4430 = vsub.s32 0, %v4429
      %v4431 = vrot.slane %v4098, %v4430
      %v4432 = vlaneseq
      %v4433 = vshrl.u32 %v4432, 7
      %v4434 = vsub.s32 0, %v4433
      %v4435 = vrot.slane %v4100, %v4434
      %v4436 = vlaneseq
      %v4437 = vshrl.u32 %v4436, 7
      %v4438 = vsub.s32 0, %v4437
      %v4439 = vrot.slane %v4102, %v4438
      %v4440 = vlaneseq
      %v4441 = vshrl.u32 %v4440, 7
      %v4442 = vsub.s32 0, %v4441
      %v4443 = vrot.slane %v4126, %v4442
      %v4444 = vlaneseq
      %v4445 = vshrl.u32 %v4444, 7
      %v4446 = vsub.s32 0, %v4445
      %v4447 = vrot.slane %v4140, %v4446
      %v4448 = vlaneseq
      %v4449 = vshrl.u32 %v4448, 7
      %v4450 = vsub.s32 0, %v4449
      %v4451 = vrot.slane %v4148, %v4450
      %v4452 = vlaneseq
      %v4453 = vshrl.u32 %v4452, 7
      %v4454 = vsub.s32 0, %v4453
      %v4455 = vrot.slane %v4150, %v4454
      %v4456 = vlaneseq
      %v4457 = vshrl.u32 %v4456, 7
      %v4458 = vsub.s32 0, %v4457
      %v4459 = vrot.slane %v4133, %v4458
      %v4460 = vlaneseq
      %v4461 = vshrl.u32 %v4460, 7
      %v4462 = vsub.s32 0, %v4461
      %v4463 = vrot.slane %v4147, %v4462
      %v4464 = vlaneseq
      %v4465 = vshrl.u32 %v4464, 7
      %v4466 = vsub.s32 0, %v4465
      %v4467 = vrot.slane %v4149, %v4466
      %v4468 = vlaneseq
      %v4469 = vshrl.u32 %v4468, 7
      %v4470 = vsub.s32 0, %v4469
      %v4471 = vrot.slane %v4151, %v4470
      %v4536 = vmul.f32 %v4219, %v4152
      %v4537 = vmul.f32 %v4223, %v4153
      %v4538 = vmul.f32 %v4227, %v4154
      %v4539 = vmul.f32 %v4231, %v4155
      %v4540 = vmul.f32 %v4235, %v4156
      %v4541 = vmul.f32 %v4239, %v4157
      %v4542 = vmul.f32 %v4243, %v4158
      %v4543 = vmul.f32 %v4247, %v4159
      %v4544 = vmul.f32 %v4251, %v4160
      %v4545 = vmul.f32 %v4255, %v4161
      %v4546 = vmul.f32 %v4259, %v4162
      %v4547 = vmul.f32 %v4263, %v4163
      %v4548 = vmul.f32 %v4267, %v4164
      %v4549 = vmul.f32 %v4271, %v4165
      %v4550 = vmul.f32 %v4275, %v4166
      %v4551 = vmul.f32 %v4279, %v4167
      %v4552 = vmul.f32 %v4283, %v4168
      %v4553 = vmul.f32 %v4287, %v4169
      %v4554 = vmul.f32 %v4291, %v4170
      %v4555 = vmul.f32 %v4295, %v4171
      %v4556 = vmul.f32 %v4299, %v4172
      %v4557 = vmul.f32 %v4303, %v4173
      %v4558 = vmul.f32 %v4307, %v4174
      %v4559 = vmul.f32 %v4311, %v4175
      %v4560 = vmul.f32 %v4315, %v4176
      %v4561 = vmul.f32 %v4319, %v4177
      %v4562 = vmul.f32 %v4323, %v4178
      %v4563 = vmul.f32 %v4327, %v4179
      %v4564 = vmul.f32 %v4331, %v4180
      %v4565 = vmul.f32 %v4335, %v4181
      %v4566 = vmul.f32 %v4339, %v4182
      %v4567 = vmul.f32 %v4343, %v4183
      %v4568 = vmul.f32 %v4347, %v4184
      %v4569 = vmul.f32 %v4351, %v4185
      %v4570 = vmul.f32 %v4355, %v4186
      %v4571 = vmul.f32 %v4359, %v4187
      %v4572 = vmul.f32 %v4363, %v4188
      %v4573 = vmul.f32 %v4367, %v4189
      %v4574 = vmul.f32 %v4371, %v4190
      %v4575 = vmul.f32 %v4375, %v4191
      %v4576 = vmul.f32 %v4379, %v4192
      %v4577 = vmul.f32 %v4383, %v4193
      %v4578 = vmul.f32 %v4387, %v4194
      %v4579 = vmul.f32 %v4391, %v4195
      %v4580 = vmul.f32 %v4395, %v4196
      %v4581 = vmul.f32 %v4399, %v4197
      %v4582 = vmul.f32 %v4403, %v4198
      %v4583 = vmul.f32 %v4407, %v4199
      %v4584 = vmul.f32 %v4411, %v4200
      %v4585 = vmul.f32 %v4415, %v4201
      %v4586 = vmul.f32 %v4419, %v4202
      %v4587 = vmul.f32 %v4423, %v4203
      %v4588 = vmul.f32 %v4427, %v4204
      %v4589 = vmul.f32 %v4431, %v4205
      %v4590 = vmul.f32 %v4435, %v4206
      %v4591 = vmul.f32 %v4439, %v4207
      %v4592 = vmul.f32 %v4443, %v4208
      %v4593 = vmul.f32 %v4447, %v4209
      %v4594 = vmul.f32 %v4451, %v4210
      %v4595 = vmul.f32 %v4455, %v4211
      %v4596 = vmul.f32 %v4459, %v4212
      %v4597 = vmul.f32 %v4463, %v4213
      %v4598 = vmul.f32 %v4467, %v4214
      %v4599 = vmul.f32 %v4471, %v4215
      %v4600 = vsel %vm969, %v4536, 0.0
      %4601 = vadd.xlane.f32.xlu0 %v4600
      %v4602 = vpop.xlane.xlu0 %4601
      %v4603 = vsel %vm969, %v4537, 0.0
      %4604 = vadd.xlane.f32.xlu0 %v4603
      %v4605 = vpop.xlane.xlu0 %4604
      %v4606 = vsel %vm969, %v4538, 0.0
      %4607 = vadd.xlane.f32.xlu0 %v4606
      %v4608 = vpop.xlane.xlu0 %4607
      %v4609 = vsel %vm969, %v4539, 0.0
      %4610 = vadd.xlane.f32.xlu0 %v4609
      %v4611 = vpop.xlane.xlu0 %4610
      %v4612 = vsel %vm969, %v4540, 0.0
      %4613 = vadd.xlane.f32.xlu0 %v4612
      %v4614 = vpop.xlane.xlu0 %4613
      %v4615 = vsel %vm969, %v4541, 0.0
      %4616 = vadd.xlane.f32.xlu0 %v4615
      %v4617 = vpop.xlane.xlu0 %4616
      %v4618 = vsel %vm969, %v4542, 0.0
      %4619 = vadd.xlane.f32.xlu0 %v4618
      %v4620 = vpop.xlane.xlu0 %4619
      %v4621 = vsel %vm969, %v4543, 0.0
      %4622 = vadd.xlane.f32.xlu0 %v4621
      %v4623 = vpop.xlane.xlu0 %4622
      %v4624 = vsel %vm969, %v4544, 0.0
      %4625 = vadd.xlane.f32.xlu0 %v4624
      %v4626 = vpop.xlane.xlu0 %4625
      %v4627 = vsel %vm969, %v4545, 0.0
      %4628 = vadd.xlane.f32.xlu0 %v4627
      %v4629 = vpop.xlane.xlu0 %4628
      %v4630 = vsel %vm969, %v4546, 0.0
      %4631 = vadd.xlane.f32.xlu0 %v4630
      %v4632 = vpop.xlane.xlu0 %4631
      %v4633 = vsel %vm969, %v4547, 0.0
      %4634 = vadd.xlane.f32.xlu0 %v4633
      %v4635 = vpop.xlane.xlu0 %4634
      %v4636 = vsel %vm969, %v4548, 0.0
      %4637 = vadd.xlane.f32.xlu0 %v4636
      %v4638 = vpop.xlane.xlu0 %4637
      %v4639 = vsel %vm969, %v4549, 0.0
      %4640 = vadd.xlane.f32.xlu0 %v4639
      %v4641 = vpop.xlane.xlu0 %4640
      %v4642 = vsel %vm969, %v4550, 0.0
      %4643 = vadd.xlane.f32.xlu0 %v4642
      %v4644 = vpop.xlane.xlu0 %4643
      %v4645 = vsel %vm969, %v4551, 0.0
      %4646 = vadd.xlane.f32.xlu0 %v4645
      %v4647 = vpop.xlane.xlu0 %4646
      %v4648 = vsel %vm969, %v4552, 0.0
      %4649 = vadd.xlane.f32.xlu0 %v4648
      %v4650 = vpop.xlane.xlu0 %4649
      %v4651 = vsel %vm969, %v4553, 0.0
      %4652 = vadd.xlane.f32.xlu0 %v4651
      %v4653 = vpop.xlane.xlu0 %4652
      %v4654 = vsel %vm969, %v4554, 0.0
      %4655 = vadd.xlane.f32.xlu0 %v4654
      %v4656 = vpop.xlane.xlu0 %4655
      %v4657 = vsel %vm969, %v4555, 0.0
      %4658 = vadd.xlane.f32.xlu0 %v4657
      %v4659 = vpop.xlane.xlu0 %4658
      %v4660 = vsel %vm969, %v4556, 0.0
      %4661 = vadd.xlane.f32.xlu0 %v4660
      %v4662 = vpop.xlane.xlu0 %4661
      %v4663 = vsel %vm969, %v4557, 0.0
      %4664 = vadd.xlane.f32.xlu0 %v4663
      %v4665 = vpop.xlane.xlu0 %4664
      %v4666 = vsel %vm969, %v4558, 0.0
      %4667 = vadd.xlane.f32.xlu0 %v4666
      %v4668 = vpop.xlane.xlu0 %4667
      %v4669 = vsel %vm969, %v4559, 0.0
      %4670 = vadd.xlane.f32.xlu0 %v4669
      %v4671 = vpop.xlane.xlu0 %4670
      %v4672 = vsel %vm969, %v4560, 0.0
      %4673 = vadd.xlane.f32.xlu0 %v4672
      %v4674 = vpop.xlane.xlu0 %4673
      %v4675 = vsel %vm969, %v4561, 0.0
      %4676 = vadd.xlane.f32.xlu0 %v4675
      %v4677 = vpop.xlane.xlu0 %4676
      %v4678 = vsel %vm969, %v4562, 0.0
      %4679 = vadd.xlane.f32.xlu0 %v4678
      %v4680 = vpop.xlane.xlu0 %4679
      %v4681 = vsel %vm969, %v4563, 0.0
      %4682 = vadd.xlane.f32.xlu0 %v4681
      %v4683 = vpop.xlane.xlu0 %4682
      %v4684 = vsel %vm969, %v4564, 0.0
      %4685 = vadd.xlane.f32.xlu0 %v4684
      %v4686 = vpop.xlane.xlu0 %4685
      %v4687 = vsel %vm969, %v4565, 0.0
      %4688 = vadd.xlane.f32.xlu0 %v4687
      %v4689 = vpop.xlane.xlu0 %4688
      %v4690 = vsel %vm969, %v4566, 0.0
      %4691 = vadd.xlane.f32.xlu0 %v4690
      %v4692 = vpop.xlane.xlu0 %4691
      %v4693 = vsel %vm969, %v4567, 0.0
      %4694 = vadd.xlane.f32.xlu0 %v4693
      %v4695 = vpop.xlane.xlu0 %4694
      %v4696 = vsel %vm969, %v4568, 0.0
      %4697 = vadd.xlane.f32.xlu0 %v4696
      %v4698 = vpop.xlane.xlu0 %4697
      %v4699 = vsel %vm969, %v4569, 0.0
      %4700 = vadd.xlane.f32.xlu0 %v4699
      %v4701 = vpop.xlane.xlu0 %4700
      %v4702 = vsel %vm969, %v4570, 0.0
      %4703 = vadd.xlane.f32.xlu0 %v4702
      %v4704 = vpop.xlane.xlu0 %4703
      %v4705 = vsel %vm969, %v4571, 0.0
      %4706 = vadd.xlane.f32.xlu0 %v4705
      %v4707 = vpop.xlane.xlu0 %4706
      %v4708 = vsel %vm969, %v4572, 0.0
      %4709 = vadd.xlane.f32.xlu0 %v4708
      %v4710 = vpop.xlane.xlu0 %4709
      %v4711 = vsel %vm969, %v4573, 0.0
      %4712 = vadd.xlane.f32.xlu0 %v4711
      %v4713 = vpop.xlane.xlu0 %4712
      %v4714 = vsel %vm969, %v4574, 0.0
      %4715 = vadd.xlane.f32.xlu0 %v4714
      %v4716 = vpop.xlane.xlu0 %4715
      %v4717 = vsel %vm969, %v4575, 0.0
      %4718 = vadd.xlane.f32.xlu0 %v4717
      %v4719 = vpop.xlane.xlu0 %4718
      %v4720 = vsel %vm969, %v4576, 0.0
      %4721 = vadd.xlane.f32.xlu0 %v4720
      %v4722 = vpop.xlane.xlu0 %4721
      %v4723 = vsel %vm969, %v4577, 0.0
      %4724 = vadd.xlane.f32.xlu0 %v4723
      %v4725 = vpop.xlane.xlu0 %4724
      %v4726 = vsel %vm969, %v4578, 0.0
      %4727 = vadd.xlane.f32.xlu0 %v4726
      %v4728 = vpop.xlane.xlu0 %4727
      %v4729 = vsel %vm969, %v4579, 0.0
      %4730 = vadd.xlane.f32.xlu0 %v4729
      %v4731 = vpop.xlane.xlu0 %4730
      %v4732 = vsel %vm969, %v4580, 0.0
      %4733 = vadd.xlane.f32.xlu0 %v4732
      %v4734 = vpop.xlane.xlu0 %4733
      %v4735 = vsel %vm969, %v4581, 0.0
      %4736 = vadd.xlane.f32.xlu0 %v4735
      %v4737 = vpop.xlane.xlu0 %4736
      %v4738 = vsel %vm969, %v4582, 0.0
      %4739 = vadd.xlane.f32.xlu0 %v4738
      %v4740 = vpop.xlane.xlu0 %4739
      %v4741 = vsel %vm969, %v4583, 0.0
      %4742 = vadd.xlane.f32.xlu0 %v4741
      %v4743 = vpop.xlane.xlu0 %4742
      %v4744 = vsel %vm969, %v4584, 0.0
      %4745 = vadd.xlane.f32.xlu0 %v4744
      %v4746 = vpop.xlane.xlu0 %4745
      %v4747 = vsel %vm969, %v4585, 0.0
      %4748 = vadd.xlane.f32.xlu0 %v4747
      %v4749 = vpop.xlane.xlu0 %4748
      %v4750 = vsel %vm969, %v4586, 0.0
      %4751 = vadd.xlane.f32.xlu0 %v4750
      %v4752 = vpop.xlane.xlu0 %4751
      %v4753 = vsel %vm969, %v4587, 0.0
      %4754 = vadd.xlane.f32.xlu0 %v4753
      %v4755 = vpop.xlane.xlu0 %4754
      %v4756 = vsel %vm969, %v4588, 0.0
      %4757 = vadd.xlane.f32.xlu0 %v4756
      %v4758 = vpop.xlane.xlu0 %4757
      %v4759 = vsel %vm969, %v4589, 0.0
      %4760 = vadd.xlane.f32.xlu0 %v4759
      %v4761 = vpop.xlane.xlu0 %4760
      %v4762 = vsel %vm969, %v4590, 0.0
      %4763 = vadd.xlane.f32.xlu0 %v4762
      %v4764 = vpop.xlane.xlu0 %4763
      %v4765 = vsel %vm969, %v4591, 0.0
      %4766 = vadd.xlane.f32.xlu0 %v4765
      %v4767 = vpop.xlane.xlu0 %4766
      %v4768 = vsel %vm969, %v4592, 0.0
      %4769 = vadd.xlane.f32.xlu0 %v4768
      %v4770 = vpop.xlane.xlu0 %4769
      %v4771 = vsel %vm969, %v4593, 0.0
      %4772 = vadd.xlane.f32.xlu0 %v4771
      %v4773 = vpop.xlane.xlu0 %4772
      %v4774 = vsel %vm969, %v4594, 0.0
      %4775 = vadd.xlane.f32.xlu0 %v4774
      %v4776 = vpop.xlane.xlu0 %4775
      %v4777 = vsel %vm969, %v4595, 0.0
      %4778 = vadd.xlane.f32.xlu0 %v4777
      %v4779 = vpop.xlane.xlu0 %4778
      %v4780 = vsel %vm969, %v4596, 0.0
      %4781 = vadd.xlane.f32.xlu0 %v4780
      %v4782 = vpop.xlane.xlu0 %4781
      %v4783 = vsel %vm969, %v4597, 0.0
      %4784 = vadd.xlane.f32.xlu0 %v4783
      %v4785 = vpop.xlane.xlu0 %4784
      %v4786 = vsel %vm969, %v4598, 0.0
      %4787 = vadd.xlane.f32.xlu0 %v4786
      %v4788 = vpop.xlane.xlu0 %4787
      %v4789 = vsel %vm969, %v4599, 0.0
      %4790 = vadd.xlane.f32.xlu0 %v4789
      %v4791 = vpop.xlane.xlu0 %4790
      %v4856 = vlaneseq
      %v4857 = vshrl.u32 %v4856, 7
      %v4858 = vsub.s32 %v2444, %v4857
      %v4859 = vrot.slane %v4602, %v4858
      %v4860 = vlaneseq
      %v4861 = vshrl.u32 %v4860, 7
      %v4862 = vsub.s32 %v2444, %v4861
      %v4863 = vrot.slane %v4605, %v4862
      %v4864 = vlaneseq
      %v4865 = vshrl.u32 %v4864, 7
      %v4866 = vsub.s32 %v2444, %v4865
      %v4867 = vrot.slane %v4608, %v4866
      %v4868 = vlaneseq
      %v4869 = vshrl.u32 %v4868, 7
      %v4870 = vsub.s32 %v2444, %v4869
      %v4871 = vrot.slane %v4611, %v4870
      %v4872 = vlaneseq
      %v4873 = vshrl.u32 %v4872, 7
      %v4874 = vsub.s32 %v2444, %v4873
      %v4875 = vrot.slane %v4614, %v4874
      %v4876 = vlaneseq
      %v4877 = vshrl.u32 %v4876, 7
      %v4878 = vsub.s32 %v2444, %v4877
      %v4879 = vrot.slane %v4617, %v4878
      %v4880 = vlaneseq
      %v4881 = vshrl.u32 %v4880, 7
      %v4882 = vsub.s32 %v2444, %v4881
      %v4883 = vrot.slane %v4620, %v4882
      %v4884 = vlaneseq
      %v4885 = vshrl.u32 %v4884, 7
      %v4886 = vsub.s32 %v2444, %v4885
      %v4887 = vrot.slane %v4623, %v4886
      %v4888 = vlaneseq
      %v4889 = vshrl.u32 %v4888, 7
      %v4890 = vsub.s32 %v2444, %v4889
      %v4891 = vrot.slane %v4626, %v4890
      %v4892 = vlaneseq
      %v4893 = vshrl.u32 %v4892, 7
      %v4894 = vsub.s32 %v2444, %v4893
      %v4895 = vrot.slane %v4629, %v4894
      %v4896 = vlaneseq
      %v4897 = vshrl.u32 %v4896, 7
      %v4898 = vsub.s32 %v2444, %v4897
      %v4899 = vrot.slane %v4632, %v4898
      %v4900 = vlaneseq
      %v4901 = vshrl.u32 %v4900, 7
      %v4902 = vsub.s32 %v2444, %v4901
      %v4903 = vrot.slane %v4635, %v4902
      %v4904 = vlaneseq
      %v4905 = vshrl.u32 %v4904, 7
      %v4906 = vsub.s32 %v2444, %v4905
      %v4907 = vrot.slane %v4638, %v4906
      %v4908 = vlaneseq
      %v4909 = vshrl.u32 %v4908, 7
      %v4910 = vsub.s32 %v2444, %v4909
      %v4911 = vrot.slane %v4641, %v4910
      %v4912 = vlaneseq
      %v4913 = vshrl.u32 %v4912, 7
      %v4914 = vsub.s32 %v2444, %v4913
      %v4915 = vrot.slane %v4644, %v4914
      %v4916 = vlaneseq
      %v4917 = vshrl.u32 %v4916, 7
      %v4918 = vsub.s32 %v2444, %v4917
      %v4919 = vrot.slane %v4647, %v4918
      %v4920 = vlaneseq
      %v4921 = vshrl.u32 %v4920, 7
      %v4922 = vsub.s32 %v2444, %v4921
      %v4923 = vrot.slane %v4650, %v4922
      %v4924 = vlaneseq
      %v4925 = vshrl.u32 %v4924, 7
      %v4926 = vsub.s32 %v2444, %v4925
      %v4927 = vrot.slane %v4653, %v4926
      %v4928 = vlaneseq
      %v4929 = vshrl.u32 %v4928, 7
      %v4930 = vsub.s32 %v2444, %v4929
      %v4931 = vrot.slane %v4656, %v4930
      %v4932 = vlaneseq
      %v4933 = vshrl.u32 %v4932, 7
      %v4934 = vsub.s32 %v2444, %v4933
      %v4935 = vrot.slane %v4659, %v4934
      %v4936 = vlaneseq
      %v4937 = vshrl.u32 %v4936, 7
      %v4938 = vsub.s32 %v2444, %v4937
      %v4939 = vrot.slane %v4662, %v4938
      %v4940 = vlaneseq
      %v4941 = vshrl.u32 %v4940, 7
      %v4942 = vsub.s32 %v2444, %v4941
      %v4943 = vrot.slane %v4665, %v4942
      %v4944 = vlaneseq
      %v4945 = vshrl.u32 %v4944, 7
      %v4946 = vsub.s32 %v2444, %v4945
      %v4947 = vrot.slane %v4668, %v4946
      %v4948 = vlaneseq
      %v4949 = vshrl.u32 %v4948, 7
      %v4950 = vsub.s32 %v2444, %v4949
      %v4951 = vrot.slane %v4671, %v4950
      %v4952 = vlaneseq
      %v4953 = vshrl.u32 %v4952, 7
      %v4954 = vsub.s32 %v2444, %v4953
      %v4955 = vrot.slane %v4674, %v4954
      %v4956 = vlaneseq
      %v4957 = vshrl.u32 %v4956, 7
      %v4958 = vsub.s32 %v2444, %v4957
      %v4959 = vrot.slane %v4677, %v4958
      %v4960 = vlaneseq
      %v4961 = vshrl.u32 %v4960, 7
      %v4962 = vsub.s32 %v2444, %v4961
      %v4963 = vrot.slane %v4680, %v4962
      %v4964 = vlaneseq
      %v4965 = vshrl.u32 %v4964, 7
      %v4966 = vsub.s32 %v2444, %v4965
      %v4967 = vrot.slane %v4683, %v4966
      %v4968 = vlaneseq
      %v4969 = vshrl.u32 %v4968, 7
      %v4970 = vsub.s32 %v2444, %v4969
      %v4971 = vrot.slane %v4686, %v4970
      %v4972 = vlaneseq
      %v4973 = vshrl.u32 %v4972, 7
      %v4974 = vsub.s32 %v2444, %v4973
      %v4975 = vrot.slane %v4689, %v4974
      %v4976 = vlaneseq
      %v4977 = vshrl.u32 %v4976, 7
      %v4978 = vsub.s32 %v2444, %v4977
      %v4979 = vrot.slane %v4692, %v4978
      %v4980 = vlaneseq
      %v4981 = vshrl.u32 %v4980, 7
      %v4982 = vsub.s32 %v2444, %v4981
      %v4983 = vrot.slane %v4695, %v4982
      %v4984 = vlaneseq
      %v4985 = vshrl.u32 %v4984, 7
      %v4986 = vsub.s32 %v2444, %v4985
      %v4987 = vrot.slane %v4698, %v4986
      %v4988 = vlaneseq
      %v4989 = vshrl.u32 %v4988, 7
      %v4990 = vsub.s32 %v2444, %v4989
      %v4991 = vrot.slane %v4701, %v4990
      %v4992 = vlaneseq
      %v4993 = vshrl.u32 %v4992, 7
      %v4994 = vsub.s32 %v2444, %v4993
      %v4995 = vrot.slane %v4704, %v4994
      %v4996 = vlaneseq
      %v4997 = vshrl.u32 %v4996, 7
      %v4998 = vsub.s32 %v2444, %v4997
      %v4999 = vrot.slane %v4707, %v4998
      %v5000 = vlaneseq
      %v5001 = vshrl.u32 %v5000, 7
      %v5002 = vsub.s32 %v2444, %v5001
      %v5003 = vrot.slane %v4710, %v5002
      %v5004 = vlaneseq
      %v5005 = vshrl.u32 %v5004, 7
      %v5006 = vsub.s32 %v2444, %v5005
      %v5007 = vrot.slane %v4713, %v5006
      %v5008 = vlaneseq
      %v5009 = vshrl.u32 %v5008, 7
      %v5010 = vsub.s32 %v2444, %v5009
      %v5011 = vrot.slane %v4716, %v5010
      %v5012 = vlaneseq
      %v5013 = vshrl.u32 %v5012, 7
      %v5014 = vsub.s32 %v2444, %v5013
      %v5015 = vrot.slane %v4719, %v5014
      %v5016 = vlaneseq
      %v5017 = vshrl.u32 %v5016, 7
      %v5018 = vsub.s32 %v2444, %v5017
      %v5019 = vrot.slane %v4722, %v5018
      %v5020 = vlaneseq
      %v5021 = vshrl.u32 %v5020, 7
      %v5022 = vsub.s32 %v2444, %v5021
      %v5023 = vrot.slane %v4725, %v5022
      %v5024 = vlaneseq
      %v5025 = vshrl.u32 %v5024, 7
      %v5026 = vsub.s32 %v2444, %v5025
      %v5027 = vrot.slane %v4728, %v5026
      %v5028 = vlaneseq
      %v5029 = vshrl.u32 %v5028, 7
      %v5030 = vsub.s32 %v2444, %v5029
      %v5031 = vrot.slane %v4731, %v5030
      %v5032 = vlaneseq
      %v5033 = vshrl.u32 %v5032, 7
      %v5034 = vsub.s32 %v2444, %v5033
      %v5035 = vrot.slane %v4734, %v5034
      %v5036 = vlaneseq
      %v5037 = vshrl.u32 %v5036, 7
      %v5038 = vsub.s32 %v2444, %v5037
      %v5039 = vrot.slane %v4737, %v5038
      %v5040 = vlaneseq
      %v5041 = vshrl.u32 %v5040, 7
      %v5042 = vsub.s32 %v2444, %v5041
      %v5043 = vrot.slane %v4740, %v5042
      %v5044 = vlaneseq
      %v5045 = vshrl.u32 %v5044, 7
      %v5046 = vsub.s32 %v2444, %v5045
      %v5047 = vrot.slane %v4743, %v5046
      %v5048 = vlaneseq
      %v5049 = vshrl.u32 %v5048, 7
      %v5050 = vsub.s32 %v2444, %v5049
      %v5051 = vrot.slane %v4746, %v5050
      %v5052 = vlaneseq
      %v5053 = vshrl.u32 %v5052, 7
      %v5054 = vsub.s32 %v2444, %v5053
      %v5055 = vrot.slane %v4749, %v5054
      %v5056 = vlaneseq
      %v5057 = vshrl.u32 %v5056, 7
      %v5058 = vsub.s32 %v2444, %v5057
      %v5059 = vrot.slane %v4752, %v5058
      %v5060 = vlaneseq
      %v5061 = vshrl.u32 %v5060, 7
      %v5062 = vsub.s32 %v2444, %v5061
      %v5063 = vrot.slane %v4755, %v5062
      %v5064 = vlaneseq
      %v5065 = vshrl.u32 %v5064, 7
      %v5066 = vsub.s32 %v2444, %v5065
      %v5067 = vrot.slane %v4758, %v5066
      %v5068 = vlaneseq
      %v5069 = vshrl.u32 %v5068, 7
      %v5070 = vsub.s32 %v2444, %v5069
      %v5071 = vrot.slane %v4761, %v5070
      %v5072 = vlaneseq
      %v5073 = vshrl.u32 %v5072, 7
      %v5074 = vsub.s32 %v2444, %v5073
      %v5075 = vrot.slane %v4764, %v5074
      %v5076 = vlaneseq
      %v5077 = vshrl.u32 %v5076, 7
      %v5078 = vsub.s32 %v2444, %v5077
      %v5079 = vrot.slane %v4767, %v5078
      %v5080 = vlaneseq
      %v5081 = vshrl.u32 %v5080, 7
      %v5082 = vsub.s32 %v2444, %v5081
      %v5083 = vrot.slane %v4770, %v5082
      %v5084 = vlaneseq
      %v5085 = vshrl.u32 %v5084, 7
      %v5086 = vsub.s32 %v2444, %v5085
      %v5087 = vrot.slane %v4773, %v5086
      %v5088 = vlaneseq
      %v5089 = vshrl.u32 %v5088, 7
      %v5090 = vsub.s32 %v2444, %v5089
      %v5091 = vrot.slane %v4776, %v5090
      %v5092 = vlaneseq
      %v5093 = vshrl.u32 %v5092, 7
      %v5094 = vsub.s32 %v2444, %v5093
      %v5095 = vrot.slane %v4779, %v5094
      %v5096 = vlaneseq
      %v5097 = vshrl.u32 %v5096, 7
      %v5098 = vsub.s32 %v2444, %v5097
      %v5099 = vrot.slane %v4782, %v5098
      %v5100 = vlaneseq
      %v5101 = vshrl.u32 %v5100, 7
      %v5102 = vsub.s32 %v2444, %v5101
      %v5103 = vrot.slane %v4785, %v5102
      %v5104 = vlaneseq
      %v5105 = vshrl.u32 %v5104, 7
      %v5106 = vsub.s32 %v2444, %v5105
      %v5107 = vrot.slane %v4788, %v5106
      %v5108 = vlaneseq
      %v5109 = vshrl.u32 %v5108, 7
      %v5110 = vsub.s32 %v2444, %v5109
      %v5111 = vrot.slane %v4791, %v5110
      %v5112 = vsel %vm2701, %v4863, %v4859
      %v5113 = vsel %vm2703, %v4867, %v5112
      %v5114 = vsel %vm2705, %v4871, %v5113
      %v5115 = vsel %vm2707, %v4875, %v5114
      %v5116 = vsel %vm2709, %v4879, %v5115
      %v5117 = vsel %vm2711, %v4883, %v5116
      %v5118 = vsel %vm2713, %v4887, %v5117
      %v5119 = vsel %vm2701, %v4895, %v4891
      %v5120 = vsel %vm2703, %v4899, %v5119
      %v5121 = vsel %vm2705, %v4903, %v5120
      %v5122 = vsel %vm2707, %v4907, %v5121
      %v5123 = vsel %vm2709, %v4911, %v5122
      %v5124 = vsel %vm2711, %v4915, %v5123
      %v5125 = vsel %vm2713, %v4919, %v5124
      %v5126 = vsel %vm2701, %v4927, %v4923
      %v5127 = vsel %vm2703, %v4931, %v5126
      %v5128 = vsel %vm2705, %v4935, %v5127
      %v5129 = vsel %vm2707, %v4939, %v5128
      %v5130 = vsel %vm2709, %v4943, %v5129
      %v5131 = vsel %vm2711, %v4947, %v5130
      %v5132 = vsel %vm2713, %v4951, %v5131
      %v5133 = vsel %vm2701, %v4959, %v4955
      %v5134 = vsel %vm2703, %v4963, %v5133
      %v5135 = vsel %vm2705, %v4967, %v5134
      %v5136 = vsel %vm2707, %v4971, %v5135
      %v5137 = vsel %vm2709, %v4975, %v5136
      %v5138 = vsel %vm2711, %v4979, %v5137
      %v5139 = vsel %vm2713, %v4983, %v5138
      %v5140 = vsel %vm2701, %v4991, %v4987
      %v5141 = vsel %vm2703, %v4995, %v5140
      %v5142 = vsel %vm2705, %v4999, %v5141
      %v5143 = vsel %vm2707, %v5003, %v5142
      %v5144 = vsel %vm2709, %v5007, %v5143
      %v5145 = vsel %vm2711, %v5011, %v5144
      %v5146 = vsel %vm2713, %v5015, %v5145
      %v5147 = vsel %vm2701, %v5023, %v5019
      %v5148 = vsel %vm2703, %v5027, %v5147
      %v5149 = vsel %vm2705, %v5031, %v5148
      %v5150 = vsel %vm2707, %v5035, %v5149
      %v5151 = vsel %vm2709, %v5039, %v5150
      %v5152 = vsel %vm2711, %v5043, %v5151
      %v5153 = vsel %vm2713, %v5047, %v5152
      %v5154 = vsel %vm2701, %v5055, %v5051
      %v5155 = vsel %vm2703, %v5059, %v5154
      %v5156 = vsel %vm2705, %v5063, %v5155
      %v5157 = vsel %vm2707, %v5067, %v5156
      %v5158 = vsel %vm2709, %v5071, %v5157
      %v5159 = vsel %vm2711, %v5075, %v5158
      %v5160 = vsel %vm2713, %v5079, %v5159
      %v5161 = vsel %vm2701, %v5087, %v5083
      %v5162 = vsel %vm2703, %v5091, %v5161
      %v5163 = vsel %vm2705, %v5095, %v5162
      %v5164 = vsel %vm2707, %v5099, %v5163
      %v5165 = vsel %vm2709, %v5103, %v5164
      %v5166 = vsel %vm2711, %v5107, %v5165
      %v5167 = vsel %vm2713, %v5111, %v5166
      %v5176 = vsel %vm532, %v3425, %v5118
      %v5177 = vsel %vm532, %v3471, %v5125
      %v5178 = vsel %vm532, %v3517, %v5132
      %v5179 = vsel %vm532, %v3563, %v5139
      %v5180 = vsel %vm532, %v3609, %v5146
      %v5181 = vsel %vm532, %v3655, %v5153
      %v5182 = vsel %vm532, %v3701, %v5160
      %v5183 = vsel %vm532, %v3747, %v5167
      %v5184 = vpack.c.bf16 %v5177, %v5176
      %v5185 = vpack.c.bf16 %v5179, %v5178
      %v5186 = vpack.c.bf16 %v5181, %v5180
      %v5187 = vpack.c.bf16 %v5183, %v5182
      %v5188 = vld [vmem:[%s10] sm:$0xf]
      %v5189 = vld [vmem:[%s10 + $0x4] sm:$0xf]
      %v5192 = vunpack.c.l.b16 %v5188
      %v5193 = vunpack.c.l.b16 %v5189
      %v5194 = vpack.c.b16 %v5193, %v5192
      %v5197 = vsel %vm969, %v5184, 0
      %v5200 = vsel %vm969, %v5185, 0
      %v5203 = vsel %vm969, %v5186, 0
      %v5206 = vsel %vm969, %v5187, 0
      %5208 = vmatprep.subr.bf16.mxu0 0
      %5209 = vmatpush1.bf16.msra.mxu0 %v5194
      %5210 = vmatprep.subr.bf16.mxu0 0
      %5211 = vmatpush1.bf16.msra.mxu0 0
      %5212 = vmatprep.subr.bf16.mxu0 0
      %5213 = vmatpush1.bf16.msra.mxu0 0
      %5214 = vmatprep.subr.bf16.mxu0 0
      %5215 = vmatpush1.bf16.msra.mxu0 0
      %5216 = vmatprep.subr.bf16.mxu0 0
      %5217 = vmatpush1.bf16.msra.mxu0 0
      %5218 = vmatprep.subr.bf16.mxu0 0
      %5219 = vmatpush1.bf16.msra.mxu0 0
      %5220 = vmatprep.subr.bf16.mxu0 0
      %5221 = vmatpush1.bf16.msra.mxu0 0
      %5222 = vmatprep.subr.bf16.mxu0 0
      %5223 = vmatpush1.bf16.msra.mxu0 0
      %5224 = vmatprep.subr.bf16.mxu0 0
      %5225 = vmatpush1.bf16.msra.mxu0 0
      %5226 = vmatprep.subr.bf16.mxu0 0
      %5227 = vmatpush1.bf16.msra.mxu0 0
      %5228 = vmatprep.subr.bf16.mxu0 0
      %5229 = vmatpush1.bf16.msra.mxu0 0
      %5230 = vmatprep.subr.bf16.mxu0 0
      %5231 = vmatpush1.bf16.msra.mxu0 0
      %5232 = vmatprep.subr.bf16.mxu0 0
      %5233 = vmatpush1.bf16.msra.mxu0 0
      %5234 = vmatprep.subr.bf16.mxu0 0
      %5235 = vmatpush1.bf16.msra.mxu0 0
      %5236 = vmatprep.subr.bf16.mxu0 0
      %5237 = vmatpush1.bf16.msra.mxu0 0
      %5238 = vmatprep.subr.bf16.mxu0 0
      %5239 = vmatpush1.bf16.msra.mxu0 0
      %5240 = vmatprep.mubr.bf16.mxu0 0
      %5241 = vmatmul.mubr.bf16.gmra.mrb[0].mxu0 %v5197
      %v5242 = vpop.f32.mrb[0].mxu0
      %v5243 = vadd.f32 0.0, %v5242
      %v5244 = vpop.f32.mrb[0].mxu0
      %v5245 = vpop.f32.mrb[0].mxu0
      %v5246 = vadd.f32 0.0, %v5245
      %v5247 = vpop.f32.mrb[0].mxu0
      %5248 = vmatprep.mubr.bf16.mxu0 0
      %5249 = vmatmul.mubr.bf16.gmra.mrb[0].mxu0 %v5200
      %v5250 = vpop.f32.mrb[0].mxu0
      %v5251 = vadd.f32 0.0, %v5250
      %v5252 = vpop.f32.mrb[0].mxu0
      %v5253 = vpop.f32.mrb[0].mxu0
      %v5254 = vadd.f32 0.0, %v5253
      %v5255 = vpop.f32.mrb[0].mxu0
      %5256 = vmatprep.mubr.bf16.mxu0 0
      %5257 = vmatmul.mubr.bf16.gmra.mrb[0].mxu0 %v5203
      %v5258 = vpop.f32.mrb[0].mxu0
      %v5259 = vadd.f32 0.0, %v5258
      %v5260 = vpop.f32.mrb[0].mxu0
      %v5261 = vpop.f32.mrb[0].mxu0
      %v5262 = vadd.f32 0.0, %v5261
      %v5263 = vpop.f32.mrb[0].mxu0
      %5264 = vmatprep.mubr.bf16.mxu0 0
      %5265 = vmatmul.mubr.bf16.gmra.mrb[0].mxu0 %v5206
      %v5266 = vpop.f32.mrb[0].mxu0
      %v5267 = vadd.f32 0.0, %v5266
      %v5268 = vpop.f32.mrb[0].mxu0
      %v5269 = vpop.f32.mrb[0].mxu0
      %v5270 = vadd.f32 0.0, %v5269
      %v5271 = vpop.f32.mrb[0].mxu0
      %5272 = vdwg.mxu0
      %v5274 = vsel %vm969, %v3352, 0
      %v5277 = vsel %vm969, %v3353, 0
      %v5280 = vsel %vm969, %v3354, 0
      %v5283 = vsel %vm969, %v3355, 0
      %v5286 = vsel %vm969, %v3274, 0
      %v5289 = vsel %vm969, %v3275, 0
      %v5292 = vsel %vm969, %v3276, 0
      %v5295 = vsel %vm969, %v3277, 0
      %5297 = vmatprep.subr.bf16.mxu0 0
      %5298 = vmatpush1.bf16.xpose.msra.mxu0 %v5286
      %5299 = vmatprep.subr.bf16.mxu0 0
      %5300 = vmatpush1.bf16.xpose.msra.mxu0 %v5289
      %5301 = vmatprep.subr.bf16.mxu0 0
      %5302 = vmatpush1.bf16.xpose.msra.mxu0 %v5292
      %5303 = vmatprep.subr.bf16.mxu0 0
      %5304 = vmatpush1.bf16.xpose.msra.mxu0 %v5295
      %5305 = vmatprep.subr.bf16.mxu0 0
      %5306 = vmatpush1.bf16.xpose.msra.mxu0 0
      %5307 = vmatprep.subr.bf16.mxu0 0
      %5308 = vmatpush1.bf16.xpose.msra.mxu0 0
      %5309 = vmatprep.subr.bf16.mxu0 0
      %5310 = vmatpush1.bf16.xpose.msra.mxu0 0
      %5311 = vmatprep.subr.bf16.mxu0 0
      %5312 = vmatpush1.bf16.xpose.msra.mxu0 0
      %5313 = vmatprep.subr.bf16.mxu0 0
      %5314 = vmatpush1.bf16.xpose.msra.mxu0 0
      %5315 = vmatprep.subr.bf16.mxu0 0
      %5316 = vmatpush1.bf16.xpose.msra.mxu0 0
      %5317 = vmatprep.subr.bf16.mxu0 0
      %5318 = vmatpush1.bf16.xpose.msra.mxu0 0
      %5319 = vmatprep.subr.bf16.mxu0 0
      %5320 = vmatpush1.bf16.xpose.msra.mxu0 0
      %5321 = vmatprep.subr.bf16.mxu0 0
      %5322 = vmatpush1.bf16.xpose.msra.mxu0 0
      %5323 = vmatprep.subr.bf16.mxu0 0
      %5324 = vmatpush1.bf16.xpose.msra.mxu0 0
      %5325 = vmatprep.subr.bf16.mxu0 0
      %5326 = vmatpush1.bf16.xpose.msra.mxu0 0
      %5327 = vmatprep.subr.bf16.mxu0 0
      %5328 = vmatpush1.bf16.xpose.msra.mxu0 0
      %5329 = vmatprep.mubr.bf16.mxu0 0
      %5330 = vmatmul.mubr.bf16.gmra.mrb[0].mxu0 %v5274
      %v5331 = vpop.f32.mrb[0].mxu0
      %v5332 = vadd.f32 %v5243, %v5331
      %v5333 = vpop.f32.mrb[0].mxu0
      %v5334 = vpop.f32.mrb[0].mxu0
      %v5335 = vadd.f32 %v5246, %v5334
      %v5336 = vpop.f32.mrb[0].mxu0
      %5337 = vmatprep.mubr.bf16.mxu0 0
      %5338 = vmatmul.mubr.bf16.gmra.mrb[0].mxu0 %v5277
      %v5339 = vpop.f32.mrb[0].mxu0
      %v5340 = vadd.f32 %v5251, %v5339
      %v5341 = vpop.f32.mrb[0].mxu0
      %v5342 = vpop.f32.mrb[0].mxu0
      %v5343 = vadd.f32 %v5254, %v5342
      %v5344 = vpop.f32.mrb[0].mxu0
      %5345 = vmatprep.mubr.bf16.mxu0 0
      %5346 = vmatmul.mubr.bf16.gmra.mrb[0].mxu0 %v5280
      %v5347 = vpop.f32.mrb[0].mxu0
      %v5348 = vadd.f32 %v5259, %v5347
      %v5349 = vpop.f32.mrb[0].mxu0
      %v5350 = vpop.f32.mrb[0].mxu0
      %v5351 = vadd.f32 %v5262, %v5350
      %v5352 = vpop.f32.mrb[0].mxu0
      %5353 = vmatprep.mubr.bf16.mxu0 0
      %5354 = vmatmul.mubr.bf16.gmra.mrb[0].mxu0 %v5283
      %v5355 = vpop.f32.mrb[0].mxu0
      %v5356 = vadd.f32 %v5267, %v5355
      %v5357 = vpop.f32.mrb[0].mxu0
      %v5358 = vpop.f32.mrb[0].mxu0
      %v5359 = vadd.f32 %v5270, %v5358
      %v5360 = vpop.f32.mrb[0].mxu0
      %5361 = vdwg.mxu0
      %v5362 = vsel %vm2958, %v5332, -inf
      %5363 = vmax.xlane.f32.xlu0 %v5362
      %v5364 = vpop.xlane.xlu0 %5363
      %v5365 = vsel %vm2958, %v5335, -inf
      %5366 = vmax.xlane.f32.xlu0 %v5365
      %v5367 = vpop.xlane.xlu0 %5366
      %v5368 = vsel %vm2958, %v5340, -inf
      %5369 = vmax.xlane.f32.xlu0 %v5368
      %v5370 = vpop.xlane.xlu0 %5369
      %v5371 = vsel %vm2958, %v5343, -inf
      %5372 = vmax.xlane.f32.xlu0 %v5371
      %v5373 = vpop.xlane.xlu0 %5372
      %v5374 = vsel %vm2958, %v5348, -inf
      %5375 = vmax.xlane.f32.xlu0 %v5374
      %v5376 = vpop.xlane.xlu0 %5375
      %v5377 = vsel %vm2958, %v5351, -inf
      %5378 = vmax.xlane.f32.xlu0 %v5377
      %v5379 = vpop.xlane.xlu0 %5378
      %v5380 = vsel %vm2958, %v5356, -inf
      %5381 = vmax.xlane.f32.xlu0 %v5380
      %v5382 = vpop.xlane.xlu0 %5381
      %v5383 = vsel %vm2958, %v5359, -inf
      %5384 = vmax.xlane.f32.xlu0 %v5383
      %v5385 = vpop.xlane.xlu0 %5384
      %v5386 = vsub.f32 %v5332, %v5364
      %v5387 = vsub.f32 %v5335, %v5367
      %v5388 = vsub.f32 %v5340, %v5370
      %v5389 = vsub.f32 %v5343, %v5373
      %v5390 = vsub.f32 %v5348, %v5376
      %v5391 = vsub.f32 %v5351, %v5379
      %v5392 = vsub.f32 %v5356, %v5382
      %v5393 = vsub.f32 %v5359, %v5385
      %v5394 = vmul.f32 %v5386, 1.442695
      %v5395 = vpow.pop %v5394
      %v5396 = vmul.f32 %v5387, 1.442695
      %v5397 = vpow.pop %v5396
      %v5398 = vmul.f32 %v5388, 1.442695
      %v5399 = vpow.pop %v5398
      %v5400 = vmul.f32 %v5389, 1.442695
      %v5401 = vpow.pop %v5400
      %v5402 = vmul.f32 %v5390, 1.442695
      %v5403 = vpow.pop %v5402
      %v5404 = vmul.f32 %v5391, 1.442695
      %v5405 = vpow.pop %v5404
      %v5406 = vmul.f32 %v5392, 1.442695
      %v5407 = vpow.pop %v5406
      %v5408 = vmul.f32 %v5393, 1.442695
      %v5409 = vpow.pop %v5408
      %v5410 = vsel %vm2958, %v5395, 0.0
      %5411 = vadd.xlane.f32.xlu0 %v5410
      %v5412 = vpop.xlane.xlu0 %5411
      %v5413 = vsel %vm2958, %v5397, 0.0
      %5414 = vadd.xlane.f32.xlu0 %v5413
      %v5415 = vpop.xlane.xlu0 %5414
      %v5416 = vsel %vm2958, %v5399, 0.0
      %5417 = vadd.xlane.f32.xlu0 %v5416
      %v5418 = vpop.xlane.xlu0 %5417
      %v5419 = vsel %vm2958, %v5401, 0.0
      %5420 = vadd.xlane.f32.xlu0 %v5419
      %v5421 = vpop.xlane.xlu0 %5420
      %v5422 = vsel %vm2958, %v5403, 0.0
      %5423 = vadd.xlane.f32.xlu0 %v5422
      %v5424 = vpop.xlane.xlu0 %5423
      %v5425 = vsel %vm2958, %v5405, 0.0
      %5426 = vadd.xlane.f32.xlu0 %v5425
      %v5427 = vpop.xlane.xlu0 %5426
      %v5428 = vsel %vm2958, %v5407, 0.0
      %5429 = vadd.xlane.f32.xlu0 %v5428
      %v5430 = vpop.xlane.xlu0 %5429
      %v5431 = vsel %vm2958, %v5409, 0.0
      %5432 = vadd.xlane.f32.xlu0 %v5431
      %v5433 = vpop.xlane.xlu0 %5432
      %v5434 = vrcp.pop %v5412
      %v5435 = vrcp.pop %v5415
      %v5436 = vrcp.pop %v5418
      %v5437 = vrcp.pop %v5421
      %v5438 = vrcp.pop %v5424
      %v5439 = vrcp.pop %v5427
      %v5440 = vrcp.pop %v5430
      %v5441 = vrcp.pop %v5433
      %v5442 = vmul.f32 %v5395, %v5434
      %v5443 = vmul.f32 %v5397, %v5435
      %v5444 = vmul.f32 %v5399, %v5436
      %v5445 = vmul.f32 %v5401, %v5437
      %v5446 = vmul.f32 %v5403, %v5438
      %v5447 = vmul.f32 %v5405, %v5439
      %v5448 = vmul.f32 %v5407, %v5440
      %v5449 = vmul.f32 %v5409, %v5441
      %v5450 = vpack.c.bf16 %v5443, %v5442
      %v5451 = vpack.c.bf16 %v5445, %v5444
      %v5452 = vpack.c.bf16 %v5447, %v5446
      %v5453 = vpack.c.bf16 %v5449, %v5448
      %v5455 = vsel %vm2958, %v5450, 0
      %v5458 = vsel %vm2958, %v5451, 0
      %v5461 = vsel %vm2958, %v5452, 0
      %v5464 = vsel %vm2958, %v5453, 0
      %5466 = vmatprep.subr.bf16.mxu0 0
      %5467 = vmatpush1.bf16.msra.mxu0 %v3348
      %5468 = vmatprep.subr.bf16.mxu0 0
      %5469 = vmatpush1.bf16.msra.mxu0 %v3349
      %5470 = vmatprep.subr.bf16.mxu0 0
      %5471 = vmatpush1.bf16.msra.mxu0 %v3350
      %5472 = vmatprep.subr.bf16.mxu0 0
      %5473 = vmatpush1.bf16.msra.mxu0 %v3351
      %5474 = vmatprep.subr.bf16.mxu0 0
      %5475 = vmatpush1.bf16.msra.mxu0 0
      %5476 = vmatprep.subr.bf16.mxu0 0
      %5477 = vmatpush1.bf16.msra.mxu0 0
      %5478 = vmatprep.subr.bf16.mxu0 0
      %5479 = vmatpush1.bf16.msra.mxu0 0
      %5480 = vmatprep.subr.bf16.mxu0 0
      %5481 = vmatpush1.bf16.msra.mxu0 0
      %5482 = vmatprep.subr.bf16.mxu0 0
      %5483 = vmatpush1.bf16.msra.mxu0 0
      %5484 = vmatprep.subr.bf16.mxu0 0
      %5485 = vmatpush1.bf16.msra.mxu0 0
      %5486 = vmatprep.subr.bf16.mxu0 0
      %5487 = vmatpush1.bf16.msra.mxu0 0
      %5488 = vmatprep.subr.bf16.mxu0 0
      %5489 = vmatpush1.bf16.msra.mxu0 0
      %5490 = vmatprep.subr.bf16.mxu0 0
      %5491 = vmatpush1.bf16.msra.mxu0 0
      %5492 = vmatprep.subr.bf16.mxu0 0
      %5493 = vmatpush1.bf16.msra.mxu0 0
      %5494 = vmatprep.subr.bf16.mxu0 0
      %5495 = vmatpush1.bf16.msra.mxu0 0
      %5496 = vmatprep.subr.bf16.mxu0 0
      %5497 = vmatpush1.bf16.msra.mxu0 0
      %5498 = vmatprep.mubr.bf16.mxu0 0
      %5499 = vmatmul.mubr.bf16.gmra.mrb[0].mxu0 %v5455
      %v5500 = vpop.f32.mrb[0].mxu0
      %v5501 = vadd.f32 0.0, %v5500
      %v5502 = vpop.f32.mrb[0].mxu0
      %v5503 = vpop.f32.mrb[0].mxu0
      %v5504 = vadd.f32 0.0, %v5503
      %v5505 = vpop.f32.mrb[0].mxu0
      %5506 = vmatprep.mubr.bf16.mxu0 0
      %5507 = vmatmul.mubr.bf16.gmra.mrb[0].mxu0 %v5458
      %v5508 = vpop.f32.mrb[0].mxu0
      %v5509 = vadd.f32 0.0, %v5508
      %v5510 = vpop.f32.mrb[0].mxu0
      %v5511 = vpop.f32.mrb[0].mxu0
      %v5512 = vadd.f32 0.0, %v5511
      %v5513 = vpop.f32.mrb[0].mxu0
      %5514 = vmatprep.mubr.bf16.mxu0 0
      %5515 = vmatmul.mubr.bf16.gmra.mrb[0].mxu0 %v5461
      %v5516 = vpop.f32.mrb[0].mxu0
      %v5517 = vadd.f32 0.0, %v5516
      %v5518 = vpop.f32.mrb[0].mxu0
      %v5519 = vpop.f32.mrb[0].mxu0
      %v5520 = vadd.f32 0.0, %v5519
      %v5521 = vpop.f32.mrb[0].mxu0
      %5522 = vmatprep.mubr.bf16.mxu0 0
      %5523 = vmatmul.mubr.bf16.gmra.mrb[0].mxu0 %v5464
      %v5524 = vpop.f32.mrb[0].mxu0
      %v5525 = vadd.f32 0.0, %v5524
      %v5526 = vpop.f32.mrb[0].mxu0
      %v5527 = vpop.f32.mrb[0].mxu0
      %v5528 = vadd.f32 0.0, %v5527
      %v5529 = vpop.f32.mrb[0].mxu0
      %5530 = vdwg.mxu0
      %v5531 = vpack.c.bf16 %v5504, %v5501
      %v5532 = vpack.c.bf16 %v5512, %v5509
      %v5533 = vpack.c.bf16 %v5520, %v5517
      %v5534 = vpack.c.bf16 %v5528, %v5525
      %s5535 = scalar_lea.vmem %s11, 8
      %v5536 = vld [vmem:[%s5535] sm:$0xf]
      %v5537 = vld [vmem:[%s5535 + $0x4] sm:$0xf]
      %v5540 = vunpack.c.l.b16 %v5536
      %v5541 = vunpack.c.l.b16 %v5537
      %v5542 = vpack.c.b16 %v5541, %v5540
      %v5545 = vsel %vm969, %v5531, 0
      %v5548 = vsel %vm969, %v5532, 0
      %v5551 = vsel %vm969, %v5533, 0
      %v5554 = vsel %vm969, %v5534, 0
      %5556 = vmatprep.subr.bf16.mxu0 0
      %5557 = vmatpush1.bf16.msra.mxu0 %v5542
      %5558 = vmatprep.subr.bf16.mxu0 0
      %5559 = vmatpush1.bf16.msra.mxu0 0
      %5560 = vmatprep.subr.bf16.mxu0 0
      %5561 = vmatpush1.bf16.msra.mxu0 0
      %5562 = vmatprep.subr.bf16.mxu0 0
      %5563 = vmatpush1.bf16.msra.mxu0 0
      %5564 = vmatprep.subr.bf16.mxu0 0
      %5565 = vmatpush1.bf16.msra.mxu0 0
      %5566 = vmatprep.subr.bf16.mxu0 0
      %5567 = vmatpush1.bf16.msra.mxu0 0
      %5568 = vmatprep.subr.bf16.mxu0 0
      %5569 = vmatpush1.bf16.msra.mxu0 0
      %5570 = vmatprep.subr.bf16.mxu0 0
      %5571 = vmatpush1.bf16.msra.mxu0 0
      %5572 = vmatprep.subr.bf16.mxu0 0
      %5573 = vmatpush1.bf16.msra.mxu0 0
      %5574 = vmatprep.subr.bf16.mxu0 0
      %5575 = vmatpush1.bf16.msra.mxu0 0
      %5576 = vmatprep.subr.bf16.mxu0 0
      %5577 = vmatpush1.bf16.msra.mxu0 0
      %5578 = vmatprep.subr.bf16.mxu0 0
      %5579 = vmatpush1.bf16.msra.mxu0 0
      %5580 = vmatprep.subr.bf16.mxu0 0
      %5581 = vmatpush1.bf16.msra.mxu0 0
      %5582 = vmatprep.subr.bf16.mxu0 0
      %5583 = vmatpush1.bf16.msra.mxu0 0
      %5584 = vmatprep.subr.bf16.mxu0 0
      %5585 = vmatpush1.bf16.msra.mxu0 0
      %5586 = vmatprep.subr.bf16.mxu0 0
      %5587 = vmatpush1.bf16.msra.mxu0 0
      %5588 = vmatprep.mubr.bf16.mxu0 0
      %5589 = vmatmul.mubr.bf16.gmra.mrb[0].mxu0 %v5545
      %v5590 = vpop.f32.mrb[0].mxu0
      %v5591 = vadd.f32 0.0, %v5590
      %v5592 = vpop.f32.mrb[0].mxu0
      %v5593 = vpop.f32.mrb[0].mxu0
      %v5594 = vadd.f32 0.0, %v5593
      %v5595 = vpop.f32.mrb[0].mxu0
      %5596 = vmatprep.mubr.bf16.mxu0 0
      %5597 = vmatmul.mubr.bf16.gmra.mrb[0].mxu0 %v5548
      %v5598 = vpop.f32.mrb[0].mxu0
      %v5599 = vadd.f32 0.0, %v5598
      %v5600 = vpop.f32.mrb[0].mxu0
      %v5601 = vpop.f32.mrb[0].mxu0
      %v5602 = vadd.f32 0.0, %v5601
      %v5603 = vpop.f32.mrb[0].mxu0
      %5604 = vmatprep.mubr.bf16.mxu0 0
      %5605 = vmatmul.mubr.bf16.gmra.mrb[0].mxu0 %v5551
      %v5606 = vpop.f32.mrb[0].mxu0
      %v5607 = vadd.f32 0.0, %v5606
      %v5608 = vpop.f32.mrb[0].mxu0
      %v5609 = vpop.f32.mrb[0].mxu0
      %v5610 = vadd.f32 0.0, %v5609
      %v5611 = vpop.f32.mrb[0].mxu0
      %5612 = vmatprep.mubr.bf16.mxu0 0
      %5613 = vmatmul.mubr.bf16.gmra.mrb[0].mxu0 %v5554
      %v5614 = vpop.f32.mrb[0].mxu0
      %v5615 = vadd.f32 0.0, %v5614
      %v5616 = vpop.f32.mrb[0].mxu0
      %v5617 = vpop.f32.mrb[0].mxu0
      %v5618 = vadd.f32 0.0, %v5617
      %v5619 = vpop.f32.mrb[0].mxu0
      %5620 = vdwg.mxu0
      %v5623 = vunpack.c.l.b16 %v3132
      %v5624 = vunpack.c.l.b16 %v3133
      %v5625 = vpack.c.b16 %v5624, %v5623
      %v5628 = vsel %vm969, %v3128, 0
      %v5631 = vsel %vm969, %v3129, 0
      %v5634 = vsel %vm969, %v3130, 0
      %v5637 = vsel %vm969, %v3131, 0
      %5639 = vmatprep.subr.bf16.mxu0 0
      %5640 = vmatpush1.bf16.msra.mxu0 %v5625
      %5641 = vmatprep.subr.bf16.mxu0 0
      %5642 = vmatpush1.bf16.msra.mxu0 0
      %5643 = vmatprep.subr.bf16.mxu0 0
      %5644 = vmatpush1.bf16.msra.mxu0 0
      %5645 = vmatprep.subr.bf16.mxu0 0
      %5646 = vmatpush1.bf16.msra.mxu0 0
      %5647 = vmatprep.subr.bf16.mxu0 0
      %5648 = vmatpush1.bf16.msra.mxu0 0
      %5649 = vmatprep.subr.bf16.mxu0 0
      %5650 = vmatpush1.bf16.msra.mxu0 0
      %5651 = vmatprep.subr.bf16.mxu0 0
      %5652 = vmatpush1.bf16.msra.mxu0 0
      %5653 = vmatprep.subr.bf16.mxu0 0
      %5654 = vmatpush1.bf16.msra.mxu0 0
      %5655 = vmatprep.subr.bf16.mxu0 0
      %5656 = vmatpush1.bf16.msra.mxu0 0
      %5657 = vmatprep.subr.bf16.mxu0 0
      %5658 = vmatpush1.bf16.msra.mxu0 0
      %5659 = vmatprep.subr.bf16.mxu0 0
      %5660 = vmatpush1.bf16.msra.mxu0 0
      %5661 = vmatprep.subr.bf16.mxu0 0
      %5662 = vmatpush1.bf16.msra.mxu0 0
      %5663 = vmatprep.subr.bf16.mxu0 0
      %5664 = vmatpush1.bf16.msra.mxu0 0
      %5665 = vmatprep.subr.bf16.mxu0 0
      %5666 = vmatpush1.bf16.msra.mxu0 0
      %5667 = vmatprep.subr.bf16.mxu0 0
      %5668 = vmatpush1.bf16.msra.mxu0 0
      %5669 = vmatprep.subr.bf16.mxu0 0
      %5670 = vmatpush1.bf16.msra.mxu0 0
      %5671 = vmatprep.mubr.bf16.mxu0 0
      %5672 = vmatmul.mubr.bf16.gmra.mrb[0].mxu0 %v5628
      %v5673 = vpop.f32.mrb[0].mxu0
      %v5674 = vadd.f32 %v5591, %v5673
      %v5675 = vpop.f32.mrb[0].mxu0
      %v5676 = vpop.f32.mrb[0].mxu0
      %v5677 = vadd.f32 %v5594, %v5676
      %v5678 = vpop.f32.mrb[0].mxu0
      %5679 = vmatprep.mubr.bf16.mxu0 0
      %5680 = vmatmul.mubr.bf16.gmra.mrb[0].mxu0 %v5631
      %v5681 = vpop.f32.mrb[0].mxu0
      %v5682 = vadd.f32 %v5599, %v5681
      %v5683 = vpop.f32.mrb[0].mxu0
      %v5684 = vpop.f32.mrb[0].mxu0
      %v5685 = vadd.f32 %v5602, %v5684
      %v5686 = vpop.f32.mrb[0].mxu0
      %5687 = vmatprep.mubr.bf16.mxu0 0
      %5688 = vmatmul.mubr.bf16.gmra.mrb[0].mxu0 %v5634
      %v5689 = vpop.f32.mrb[0].mxu0
      %v5690 = vadd.f32 %v5607, %v5689
      %v5691 = vpop.f32.mrb[0].mxu0
      %v5692 = vpop.f32.mrb[0].mxu0
      %v5693 = vadd.f32 %v5610, %v5692
      %v5694 = vpop.f32.mrb[0].mxu0
      %5695 = vmatprep.mubr.bf16.mxu0 0
      %5696 = vmatmul.mubr.bf16.gmra.mrb[0].mxu0 %v5637
      %v5697 = vpop.f32.mrb[0].mxu0
      %v5698 = vadd.f32 %v5615, %v5697
      %v5699 = vpop.f32.mrb[0].mxu0
      %v5700 = vpop.f32.mrb[0].mxu0
      %v5701 = vadd.f32 %v5618, %v5700
      %v5702 = vpop.f32.mrb[0].mxu0
      %5703 = vdwg.mxu0
      %v5704 = vld [vmem:[%s12] sm:$0x1]
      %v5706 = vlaneseq
      %v5707 = vshrl.u32 %v5706, 7
      %v5708 = vsub.s32 0, %v5707
      %v5709 = vrot.slane %v5704, %v5708
      %v5711 = vadd.f32 %v5674, %v5709
      %v5712 = vadd.f32 %v5677, %v5709
      %v5713 = vadd.f32 %v5682, %v5709
      %v5714 = vadd.f32 %v5685, %v5709
      %v5715 = vadd.f32 %v5690, %v5709
      %v5716 = vadd.f32 %v5693, %v5709
      %v5717 = vadd.f32 %v5698, %v5709
      %v5718 = vadd.f32 %v5701, %v5709
      %v5719 = vmax.f32 %v5711, 0.0
      %v5720 = vmax.f32 %v5712, 0.0
      %v5721 = vmax.f32 %v5713, 0.0
      %v5722 = vmax.f32 %v5714, 0.0
      %v5723 = vmax.f32 %v5715, 0.0
      %v5724 = vmax.f32 %v5716, 0.0
      %v5725 = vmax.f32 %v5717, 0.0
      %v5726 = vmax.f32 %v5718, 0.0
      %v5727 = vpack.c.bf16 %v5720, %v5719
      %v5728 = vpack.c.bf16 %v5722, %v5721
      %v5729 = vpack.c.bf16 %v5724, %v5723
      %v5730 = vpack.c.bf16 %v5726, %v5725
      %v5731 = vld [vmem:[%s13] sm:$0xf]
      %v5732 = vld [vmem:[%s14] sm:$0x1]
      %v5734 = vlaneseq
      %v5735 = vshrl.u32 %v5734, 7
      %v5736 = vsub.s32 0, %v5735
      %v5737 = vrot.slane %v5732, %v5736
      %v5740 = vsel %vm532, %v5727, 0
      %v5743 = vsel %vm532, %v5728, 0
      %v5746 = vsel %vm532, %v5729, 0
      %v5749 = vsel %vm532, %v5730, 0
      %v5752 = vsel %vm545, %v5731, 0
      %5754 = vmatprep.subr.bf16.mxu0 0
      %5755 = vmatpush1.bf16.msra.mxu0 %v5752
      %5756 = vmatprep.subr.bf16.mxu0 0
      %5757 = vmatpush1.bf16.msra.mxu0 0
      %5758 = vmatprep.subr.bf16.mxu0 0
      %5759 = vmatpush1.bf16.msra.mxu0 0
      %5760 = vmatprep.subr.bf16.mxu0 0
      %5761 = vmatpush1.bf16.msra.mxu0 0
      %5762 = vmatprep.subr.bf16.mxu0 0
      %5763 = vmatpush1.bf16.msra.mxu0 0
      %5764 = vmatprep.subr.bf16.mxu0 0
      %5765 = vmatpush1.bf16.msra.mxu0 0
      %5766 = vmatprep.subr.bf16.mxu0 0
      %5767 = vmatpush1.bf16.msra.mxu0 0
      %5768 = vmatprep.subr.bf16.mxu0 0
      %5769 = vmatpush1.bf16.msra.mxu0 0
      %5770 = vmatprep.subr.bf16.mxu0 0
      %5771 = vmatpush1.bf16.msra.mxu0 0
      %5772 = vmatprep.subr.bf16.mxu0 0
      %5773 = vmatpush1.bf16.msra.mxu0 0
      %5774 = vmatprep.subr.bf16.mxu0 0
      %5775 = vmatpush1.bf16.msra.mxu0 0
      %5776 = vmatprep.subr.bf16.mxu0 0
      %5777 = vmatpush1.bf16.msra.mxu0 0
      %5778 = vmatprep.subr.bf16.mxu0 0
      %5779 = vmatpush1.bf16.msra.mxu0 0
      %5780 = vmatprep.subr.bf16.mxu0 0
      %5781 = vmatpush1.bf16.msra.mxu0 0
      %5782 = vmatprep.subr.bf16.mxu0 0
      %5783 = vmatpush1.bf16.msra.mxu0 0
      %5784 = vmatprep.subr.bf16.mxu0 0
      %5785 = vmatpush1.bf16.msra.mxu0 0
      %5786 = vmatprep.mubr.bf16.mxu0 0
      %5787 = vmatmul.mubr.bf16.gmra.mrb[0].mxu0 %v5740
      %v5788 = vpop.f32.mrb[0].mxu0
      %v5789 = vadd.f32 %v5737, %v5788
      %v5790 = vpop.f32.mrb[0].mxu0
      %v5791 = vpop.f32.mrb[0].mxu0
      %v5792 = vadd.f32 %v5737, %v5791
      %v5793 = vpop.f32.mrb[0].mxu0
      %5794 = vmatprep.mubr.bf16.mxu0 0
      %5795 = vmatmul.mubr.bf16.gmra.mrb[0].mxu0 %v5743
      %v5796 = vpop.f32.mrb[0].mxu0
      %v5797 = vadd.f32 %v5737, %v5796
      %v5798 = vpop.f32.mrb[0].mxu0
      %v5799 = vpop.f32.mrb[0].mxu0
      %v5800 = vadd.f32 %v5737, %v5799
      %v5801 = vpop.f32.mrb[0].mxu0
      %5802 = vmatprep.mubr.bf16.mxu0 0
      %5803 = vmatmul.mubr.bf16.gmra.mrb[0].mxu0 %v5746
      %v5804 = vpop.f32.mrb[0].mxu0
      %v5805 = vadd.f32 %v5737, %v5804
      %v5806 = vpop.f32.mrb[0].mxu0
      %v5807 = vpop.f32.mrb[0].mxu0
      %v5808 = vadd.f32 %v5737, %v5807
      %v5809 = vpop.f32.mrb[0].mxu0
      %5810 = vmatprep.mubr.bf16.mxu0 0
      %5811 = vmatmul.mubr.bf16.gmra.mrb[0].mxu0 %v5749
      %v5812 = vpop.f32.mrb[0].mxu0
      %v5813 = vadd.f32 %v5737, %v5812
      %v5814 = vpop.f32.mrb[0].mxu0
      %v5815 = vpop.f32.mrb[0].mxu0
      %v5816 = vadd.f32 %v5737, %v5815
      %v5817 = vpop.f32.mrb[0].mxu0
      %5818 = vdwg.mxu0
      %v5819 = vadd.f32 %v5789, %v614
      %v5820 = vadd.f32 %v5792, %v615
      %v5821 = vadd.f32 %v5797, %v616
      %v5822 = vadd.f32 %v5800, %v617
      %v5823 = vadd.f32 %v5805, %v618
      %v5824 = vadd.f32 %v5808, %v619
      %v5825 = vadd.f32 %v5813, %v620
      %v5826 = vadd.f32 %v5816, %v621
      %v5827 = vmax.f32 %v5819, 0.0
      %v5828 = vmax.f32 %v5820, 0.0
      %v5829 = vmax.f32 %v5821, 0.0
      %v5830 = vmax.f32 %v5822, 0.0
      %v5831 = vmax.f32 %v5823, 0.0
      %v5832 = vmax.f32 %v5824, 0.0
      %v5833 = vmax.f32 %v5825, 0.0
      %v5834 = vmax.f32 %v5826, 0.0
      %5835 = vst.msk [vmem:[%s494] sm:$0xff] %vm969, %v5827
      %5836 = vst.msk [vmem:[%s494 + $0x8] sm:$0xff] %vm969, %v5828
      %5837 = vst.msk [vmem:[%s494 + $0x10] sm:$0xff] %vm969, %v5829
      %5838 = vst.msk [vmem:[%s494 + $0x18] sm:$0xff] %vm969, %v5830
      %5839 = vst.msk [vmem:[%s494 + $0x20] sm:$0xff] %vm969, %v5831
      %5840 = vst.msk [vmem:[%s494 + $0x28] sm:$0xff] %vm969, %v5832
      %5841 = vst.msk [vmem:[%s494 + $0x30] sm:$0xff] %vm969, %v5833
      %5842 = vst.msk [vmem:[%s494 + $0x38] sm:$0xff] %vm969, %v5834
      %p5843 = scmp.lt.s32.totalorder %s26, 1
      %s5844 = scalar_select %p5843, %s26, 1
      %s5845 = smul.addr %s5844, 8
      %s5846 = smul.addr %s5845, 8
      %s5847 = scalar_lea.vmem %s15, %s5846
      // Predicated region
      $region81: #{tpu_custom_call.1} parent=79 // pred_check
        %p5848 = pneg %p364
      $region82: #{tpu_custom_call.1} parent=79 // pred_check_branch
        %5850 = sbr.rel (%p5848) target = $region84
      $region83: #{tpu_custom_call.1} parent=79 // pred_region
        _
      $region84: #{tpu_custom_call.1} parent=79 // pred_fallthru
        _
    $region80: #{tpu_custom_call.1} parent=5 // pred_fallthru
      _
    %p5851 = scmp.le.s32.totalorder 2, %s21
    // Predicated region
    $region85: #{tpu_custom_call.1} parent=5 // pred_check
      %p5852 = pneg %p5851
    $region86: #{tpu_custom_call.1} parent=5 // pred_check_branch
      %5854 = sbr.rel (%p5852) target = $region88
    $region87: #{tpu_custom_call.1} parent=5 // pred_region
      %s5855 = ssub.s32 %s21, 2
      // Predicated region
      $region89: #{tpu_custom_call.1} parent=87 // pred_check
        %p5856 = pneg %p370
      $region90: #{tpu_custom_call.1} parent=87 // pred_check_branch
        %5858 = sbr.rel (%p5856) target = $region92
      $region91: #{tpu_custom_call.1} parent=87 // pred_region
        %p5859 = scmp.lt.s32.totalorder %s27, 1
        %s5860 = scalar_select %p5859, %s27, 1
        %s5861 = smul.addr %s5860, 8
        %s5862 = smul.addr %s5861, 8
        %s5863 = scalar_lea.vmem %s15, %s5862
      $region92: #{tpu_custom_call.1} parent=87 // pred_fallthru
        _
    $region88: #{tpu_custom_call.1} parent=5 // pred_fallthru
      _
  $region6: #{tpu_custom_call.1} parent=0 // loop_footer
    %s25 = sadd.s32 1, %s21
  $region7: #{tpu_custom_call.1} parent=0 // loop_footer_branch
    %20 = sbr.rel target = $region3
  $region8: #{tpu_custom_call.1} parent=0 // loop_exit
    _

</llo_original>
